<compile_context>
chip_gen: v7x
topology: tpu7x:2x2x1
jax: 0.10.0
libtpu: 0.0.40
codegen_flags: <defaults>
</compile_context>

<pallas_src>
import math
import functools

import jax
import jax.numpy as jnp
from jax.experimental import pallas as pl
from jax.experimental.pallas import tpu as pltpu


EPS = 1e-6
NEG_INF = -1e9


# ----------------------------------------------------------------------------
# In-kernel helpers (traced inside the fused kernels)
# ----------------------------------------------------------------------------

def _prenorm(x, alpha, beta):
    """molGCT Norm: alpha*(x-mean)/(unbiased_std + eps) + beta (torch ddof=1)."""
    d = x.shape[-1]
    mean = jnp.mean(x, axis=-1, keepdims=True)
    var = jnp.sum((x - mean) ** 2, axis=-1, keepdims=True) * (1.0 / (d - 1))
    return alpha * (x - mean) / (jnp.sqrt(var) + EPS) + beta


def _mha_packed(xq, xkv, bias, wqkv, bqkv, wo, bo, h, *, self_attn):
    """Multi-head attention with packed projections.

    wqkv : (D, 3D)  columns = [Wq*scale | Wk | Wv]   (scale folded at init)
    bqkv : (1, 3D)
    wo   : (D, D)   output projection
    bo   : (1, D)
    bias : (1, Lk) or (Lq, Lk) additive mask bias (0 valid / -1e9 masked)
    """
    D = wo.shape[0]
    dk = D // h
    if self_attn:
        qkv = jnp.dot(xq, wqkv, preferred_element_type=jnp.float32) + bqkv   # (Lq, 3D)
        q = qkv[:, :D]
        k = qkv[:, D:2 * D]
        v = qkv[:, 2 * D:]
    else:
        q = jnp.dot(xq, wqkv[:, :D], preferred_element_type=jnp.float32) + bqkv[:, :D]
        kv = jnp.dot(xkv, wqkv[:, D:], preferred_element_type=jnp.float32) + bqkv[:, D:]
        k = kv[:, :D]
        v = kv[:, D:]

    heads = []
    for i in range(h):
        qi = q[:, i * dk:(i + 1) * dk]
        ki = k[:, i * dk:(i + 1) * dk]
        vi = v[:, i * dk:(i + 1) * dk]
        s = jax.lax.dot_general(qi, ki, (((1,), (1,)), ((), ())),
                                preferred_element_type=jnp.float32)          # (Lq, Lk)
        s = s + bias
        s = s - jnp.max(s, axis=-1, keepdims=True)
        p = jnp.exp(s)
        p = p / jnp.sum(p, axis=-1, keepdims=True)
        heads.append(jnp.dot(p, vi, preferred_element_type=jnp.float32))     # (Lq, dk)
    o = jnp.concatenate(heads, axis=-1)                                      # (Lq, D)
    return jnp.dot(o, wo, preferred_element_type=jnp.float32) + bo


def _feed_forward(x2, w1, b1, w2, b2):
    hid = jnp.dot(x2, w1, preferred_element_type=jnp.float32) + b1
    hid = jnp.maximum(hid, 0.0)
    return jnp.dot(hid, w2, preferred_element_type=jnp.float32) + b2


# ----------------------------------------------------------------------------
# Fused stack kernels: ALL layers in one pallas_call, grid=(B, N_layers)
# ----------------------------------------------------------------------------

def _encoder_stack_kernel(x_ref, mb_ref, norms_ref,
                          wqkv_ref, bqkv_ref, wo_ref, bo_ref,
                          w1_ref, b1_ref, w2_ref, b2_ref,
                          o_ref, xs_ref, *, h):
    l = pl.program_id(1)

    @pl.when(l == 0)
    def _():
        xs_ref[...] = x_ref[0]                 # load embeddings once per batch row

    x = xs_ref[...]                            # (L, D) carried across layers in VMEM
    mbias = mb_ref[0]                          # (1, L) additive mask bias
    norms = norms_ref[0]                       # (4, 1, D)

    x2 = _prenorm(x, norms[0], norms[1])
    x = x + _mha_packed(x2, x2, mbias, wqkv_ref[0], bqkv_ref[0],
                        wo_ref[0], bo_ref[0], h, self_attn=True)

    x2 = _prenorm(x, norms[2], norms[3])
    x = x + _feed_forward(x2, w1_ref[0], b1_ref[0], w2_ref[0], b2_ref[0])

    xs_ref[...] = x

    @pl.when(l == pl.num_programs(1) - 1)
    def _():
        o_ref[0] = x.astype(o_ref.dtype)


def _decoder_stack_kernel(x_ref, e_ref, sb_ref, tb_ref, norms_ref,
                          wqkv1_ref, bqkv1_ref, wo1_ref, bo1_ref,
                          wqkv2_ref, bqkv2_ref, wo2_ref, bo2_ref,
                          w1_ref, b1_ref, w2_ref, b2_ref,
                          o_ref, xs_ref, *, h):
    l = pl.program_id(1)

    @pl.when(l == 0)
    def _():
        xs_ref[...] = x_ref[0]

    x = xs_ref[...]                            # (Lt, D)
    e = e_ref[0]                               # (Le, D)  (resident across layers)
    sbias = sb_ref[0]                          # (1, Le)
    tbias = tb_ref[0]                          # (Lt, Lt)
    norms = norms_ref[0]                       # (6, 1, D)

    x2 = _prenorm(x, norms[0], norms[1])
    x = x + _mha_packed(x2, x2, tbias, wqkv1_ref[0], bqkv1_ref[0],
                        wo1_ref[0], bo1_ref[0], h, self_attn=True)

    x2 = _prenorm(x, norms[2], norms[3])
    x = x + _mha_packed(x2, e, sbias, wqkv2_ref[0], bqkv2_ref[0],
                        wo2_ref[0], bo2_ref[0], h, self_attn=False)

    x2 = _prenorm(x, norms[4], norms[5])
    x = x + _feed_forward(x2, w1_ref[0], b1_ref[0], w2_ref[0], b2_ref[0])

    xs_ref[...] = x

    @pl.when(l == pl.num_programs(1) - 1)
    def _():
        o_ref[0] = x.astype(o_ref.dtype)


def _layer_spec(arr):
    """Weight stacked on a leading layer axis: stream layer l, full trailing dims."""
    nd = arr.ndim
    return pl.BlockSpec((1,) + arr.shape[1:], lambda b, l: (l,) + (0,) * (nd - 1))


def _batch_spec(arr):
    nd = arr.ndim
    return pl.BlockSpec((1,) + arr.shape[1:], lambda b, l: (b,) + (0,) * (nd - 1))


_ENC_KEYS = ("norms", "wqkv", "bqkv", "wo", "bo", "w1", "b1", "w2", "b2")
_DEC_KEYS = ("norms", "wqkv1", "bqkv1", "wo1", "bo1",
             "wqkv2", "bqkv2", "wo2", "bo2", "w1", "b1", "w2", "b2")


def encoder_stack(x, mask_bias, stack, h):
    B, L, D = x.shape
    n_layers = stack["wqkv"].shape[0]
    weights = [stack[k] for k in _ENC_KEYS]
    return pl.pallas_call(
        functools.partial(_encoder_stack_kernel, h=h),
        grid=(B, n_layers),
        in_specs=[_batch_spec(x), _batch_spec(mask_bias)] + [_layer_spec(w) for w in weights],
        out_specs=pl.BlockSpec((1, L, D), lambda b, l: (b, 0, 0)),
        out_shape=jax.ShapeDtypeStruct((B, L, D), jnp.float32),
        scratch_shapes=[pltpu.VMEM((L, D), jnp.float32)],
        compiler_params=pltpu.CompilerParams(
            dimension_semantics=("parallel", "arbitrary")),
    )(x, mask_bias, *weights)


def decoder_stack(x, e_out, src_bias, trg_bias, stack, h):
    B, Lt, D = x.shape
    n_layers = stack["wqkv1"].shape[0]
    weights = [stack[k] for k in _DEC_KEYS]
    return pl.pallas_call(
        functools.partial(_decoder_stack_kernel, h=h),
        grid=(B, n_layers),
        in_specs=[_batch_spec(x), _batch_spec(e_out),
                  _batch_spec(src_bias), _batch_spec(trg_bias)]
                 + [_layer_spec(w) for w in weights],
        out_specs=pl.BlockSpec((1, Lt, D), lambda b, l: (b, 0, 0)),
        out_shape=jax.ShapeDtypeStruct((B, Lt, D), jnp.float32),
        scratch_shapes=[pltpu.VMEM((Lt, D), jnp.float32)],
        compiler_params=pltpu.CompilerParams(
            dimension_semantics=("parallel", "arbitrary")),
    )(x, e_out, src_bias, trg_bias, *weights)


# ----------------------------------------------------------------------------
# Fused final Norm + Linear heads (mu|log_var head, output head)
# ----------------------------------------------------------------------------

def _norm_linear_kernel(x_ref, a_ref, c_ref, w_ref, b_ref, o_ref):
    xn = _prenorm(x_ref[...], a_ref[...], c_ref[...])
    o_ref[...] = (jnp.dot(xn, w_ref[...], preferred_element_type=jnp.float32)
                  + b_ref[...]).astype(o_ref.dtype)


def pallas_norm_linear(x, alpha, beta, w, b):
    lead = x.shape[:-1]
    D = x.shape[-1]
    N = w.shape[-1]
    x2 = x.reshape(-1, D)
    M = x2.shape[0]
    # TODO(synk): if trg_vocab grows past a few hundred, tile the N (vocab) axis in
    # 128-lane multiples with a parallel grid axis to keep the output lane-dense.
    out = pl.pallas_call(
        _norm_linear_kernel,
        grid=(1,),
        in_specs=[pl.BlockSpec((M, D), lambda i: (0, 0)),
                  pl.BlockSpec((1, D), lambda i: (0, 0)),
                  pl.BlockSpec((1, D), lambda i: (0, 0)),
                  pl.BlockSpec((D, N), lambda i: (0, 0)),
                  pl.BlockSpec((1, N), lambda i: (0, 0))],
        out_specs=pl.BlockSpec((M, N), lambda i: (0, 0)),
        out_shape=jax.ShapeDtypeStruct((M, N), jnp.float32),
    )(x2, alpha, beta, w, b)
    return out.reshape(lead + (N,))


# ----------------------------------------------------------------------------
# Model forward (glue: embedding gathers, PE add, tiny linears, reparameterize)
# ----------------------------------------------------------------------------

def positional_encoding_table(max_len, d_model):
    pos = jnp.arange(max_len, dtype=jnp.float32)[:, None]
    div = jnp.exp(jnp.arange(0, d_model, 2, dtype=jnp.float32)
                  * (-math.log(10000.0) / d_model))
    pe = jnp.zeros((max_len, d_model), jnp.float32)
    pe = pe.at[:, 0::2].set(jnp.sin(pos * div))
    pe = pe.at[:, 1::2].set(jnp.cos(pos * div))
    return pe


def encoder_forward(params, src, src_bias, econds, eps_key, cfg):
    B = src.shape[0]
    d = cfg["d_model"]
    nconds = cfg["nconds"]
    latent = cfg["latent_dim"]
    ep = params["enc"]
    # cond2enc ((B,3)@(3,96)) is smaller than a vreg: plain jnp, let XLA fuse it.
    cond2enc = (econds @ ep["cond_w"] + ep["cond_b"]).reshape(B, nconds, d)
    # TODO(synk): embedding gather stays as jnp.take glue (no dense Pallas form at this size).
    x = jnp.take(ep["embed"], src, axis=0) * math.sqrt(d)
    x = jnp.concatenate([cond2enc, x], axis=1)
    x = x + params["pe"][None, : x.shape[1], :]          # PositionalEncoding (dropout = eval)
    x = encoder_stack(x, src_bias, ep["stack"], cfg["h"])
    # Final Norm + fc_mu|fc_log_var fused into one kernel (weights concatenated on N).
    mulv = pallas_norm_linear(x, ep["norm_a"], ep["norm_b"], ep["mulv_w"], ep["mulv_b"])
    mu = mulv[..., :latent]
    log_var = mulv[..., latent:]
    std = jnp.exp(0.5 * log_var)
    eps = jax.random.normal(eps_key, std.shape, dtype=std.dtype)
    z = eps * std + mu                                   # reparameterization (variational=True)
    return z, mu, log_var


def decoder_forward(params, trg, e_outputs, src_bias, trg_bias, dconds, cfg):
    d = cfg["d_model"]
    dp = params["dec"]
    x = jnp.take(dp["embed"], trg, axis=0) * math.sqrt(d)
    e_outputs = e_outputs @ dp["fcz_w"] + dp["fcz_b"]    # tiny fc_z: plain jnp
    # use_cond2dec = use_cond2lat = False (module defaults): no cond concatenation.
    x = x + params["pe"][None, : x.shape[1], :]
    return decoder_stack(x, e_outputs, src_bias, trg_bias, dp["stack"], cfg["h"])


def cvae_forward(params, src, trg, src_mask, trg_mask, econds, dconds, eps_key, cfg):
    # Additive mask bias computed once, reused by every layer/head.
    src_bias = jnp.where(src_mask, 0.0, NEG_INF).astype(jnp.float32)   # (B, 1, Le)
    trg_bias = jnp.where(trg_mask, 0.0, NEG_INF).astype(jnp.float32)   # (B, Lt, Lt)
    z, mu, log_var = encoder_forward(params, src, src_bias, econds, eps_key, cfg)
    dec_x = decoder_forward(params, trg, z, src_bias, trg_bias, dconds, cfg)
    # Decoder final Norm + out Linear fused into one kernel.
    output = pallas_norm_linear(dec_x, params["dec"]["norm_a"], params["dec"]["norm_b"],
                                params["out_w"], params["out_b"])
    output_prop = jnp.zeros((output.shape[0], cfg["nconds"], 1), jnp.float32)
    output_mol = output
    return output_prop, output_mol, mu, log_var, z


# ----------------------------------------------------------------------------
# Deterministic parameter init (xavier-uniform for dim>1 like reset_parameters;
# biases zero, Norm alpha=1 / bias=0), packed for the fused kernels:
#   wqkv = [Wq*(1/sqrt(dk)) | Wk | Wv]  (D, 3D);  wo (D, D);  per-layer weights
#   stacked along a leading layer axis.
# ----------------------------------------------------------------------------

def _xavier(key, shape):
    limit = math.sqrt(6.0 / (shape[0] + shape[1]))
    return jax.random.uniform(key, shape, jnp.float32, -limit, limit)


def _pack_mha(key, d, h):
    dk = d // h
    scale = 1.0 / math.sqrt(dk)
    kq, kk, kv, ko = jax.random.split(key, 4)
    wq = _xavier(kq, (d, d)) * scale                    # score scale folded into Wq
    wk = _xavier(kk, (d, d))
    wv = _xavier(kv, (d, d))
    return dict(wqkv=jnp.concatenate([wq, wk, wv], axis=1),
                bqkv=jnp.zeros((1, 3 * d), jnp.float32),
                wo=_xavier(ko, (d, d)),
                bo=jnp.zeros((1, d), jnp.float32))


def _init_enc_layer(key, d, dff, h):
    k1, k2, k3 = jax.random.split(key, 3)
    m = _pack_mha(k1, d, h)
    ones = jnp.ones((1, d), jnp.float32)
    zeros = jnp.zeros((1, d), jnp.float32)
    return dict(norms=jnp.stack([ones, zeros, ones, zeros], axis=0),
                wqkv=m["wqkv"], bqkv=m["bqkv"], wo=m["wo"], bo=m["bo"],
                w1=_xavier(k2, (d, dff)), b1=jnp.zeros((1, dff), jnp.float32),
                w2=_xavier(k3, (dff, d)), b2=jnp.zeros((1, d), jnp.float32))


def _init_dec_layer(key, d, dff, h):
    k1, k2, k3, k4 = jax.random.split(key, 4)
    m1 = _pack_mha(k1, d, h)
    m2 = _pack_mha(k2, d, h)
    ones = jnp.ones((1, d), jnp.float32)
    zeros = jnp.zeros((1, d), jnp.float32)
    return dict(norms=jnp.stack([ones, zeros, ones, zeros, ones, zeros], axis=0),
                wqkv1=m1["wqkv"], bqkv1=m1["bqkv"], wo1=m1["wo"], bo1=m1["bo"],
                wqkv2=m2["wqkv"], bqkv2=m2["bqkv"], wo2=m2["wo"], bo2=m2["bo"],
                w1=_xavier(k3, (d, dff)), b1=jnp.zeros((1, dff), jnp.float32),
                w2=_xavier(k4, (dff, d)), b2=jnp.zeros((1, d), jnp.float32))


def _stack_layers(layer_list):
    return {k: jnp.stack([lp[k] for lp in layer_list], axis=0) for k in layer_list[0]}


def init_params(key, cfg, max_len=64):
    d, dff, N, h = cfg["d_model"], cfg["dff"], cfg["N"], cfg["h"]
    nconds, latent = cfg["nconds"], cfg["latent_dim"]
    keys = jax.random.split(key, 12)
    enc = dict(
        embed=_xavier(keys[0], (cfg["src_vocab"], d)),
        cond_w=_xavier(keys[1], (nconds, d * nconds)),
        cond_b=jnp.zeros((1, d * nconds), jnp.float32),
        norm_a=jnp.ones((1, d), jnp.float32), norm_b=jnp.zeros((1, d), jnp.float32),
        # fc_mu | fc_log_var concatenated along N (split after the fused kernel)
        mulv_w=jnp.concatenate([_xavier(keys[2], (d, latent)),
                                _xavier(keys[3], (d, latent))], axis=1),
        mulv_b=jnp.zeros((1, 2 * latent), jnp.float32),
        stack=_stack_layers([_init_enc_layer(k, d, dff, h)
                             for k in jax.random.split(keys[4], N)]),
    )
    dec = dict(
        embed=_xavier(keys[5], (cfg["trg_vocab"], d)),
        fcz_w=_xavier(keys[6], (latent, d)), fcz_b=jnp.zeros((1, d), jnp.float32),
        norm_a=jnp.ones((1, d), jnp.float32), norm_b=jnp.zeros((1, d), jnp.float32),
        stack=_stack_layers([_init_dec_layer(k, d, dff, h)
                             for k in jax.random.split(keys[7], N)]),
    )
    return dict(
        enc=enc, dec=dec,
        out_w=_xavier(keys[8], (d, cfg["trg_vocab"])),
        out_b=jnp.zeros((1, cfg["trg_vocab"]), jnp.float32),
        pe=positional_encoding_table(max_len, d),
    )


# ----------------------------------------------------------------------------
# Main
# ----------------------------------------------------------------------------

if __name__ == "__main__":
    cfg = dict(src_vocab=24, trg_vocab=28, N=2, d_model=32, dff=64, h=4,
               latent_dim=16, nconds=3)
    B, src_len, trg_len = 2, 8, 8

    key = jax.random.PRNGKey(0)
    pkey, skey, tkey, ck1, ck2, ekey = jax.random.split(key, 6)
    params = init_params(pkey, cfg)

    src = jax.random.randint(skey, (B, src_len), 0, cfg["src_vocab"], dtype=jnp.int32)
    trg = jax.random.randint(tkey, (B, trg_len), 0, cfg["trg_vocab"], dtype=jnp.int32)
    econds = jax.random.normal(ck1, (B, cfg["nconds"]), jnp.float32)
    dconds = jax.random.normal(ck2, (B, cfg["nconds"]), jnp.float32)

    # src_mask already includes the nconds "condition" positions (all valid),
    # matching molGCT's create_source_mask; trg_mask is the causal nopeak mask.
    src_mask = jnp.ones((B, 1, cfg["nconds"] + src_len), dtype=bool)
    trg_mask = jnp.broadcast_to(
        jnp.tril(jnp.ones((trg_len, trg_len), dtype=bool))[None], (B, trg_len, trg_len))

    forward = jax.jit(
        lambda p, s, t, sm, tm, ec, dc, k: cvae_forward(p, s, t, sm, tm, ec, dc, k, cfg))

    out_prop, out_mol, mu, log_var, z = forward(
        params, src, trg, src_mask, trg_mask, econds, dconds, ekey)

    jax.block_until_ready((out_prop, out_mol, mu, log_var, z))
    assert out_prop.shape == (B, cfg["nconds"], 1)
    assert out_mol.shape == (B, trg_len, cfg["trg_vocab"])
    assert mu.shape == (B, cfg["nconds"] + src_len, cfg["latent_dim"])
    assert log_var.shape == mu.shape and z.shape == mu.shape
    assert bool(jnp.all(jnp.isfinite(out_mol)))
    print("KERNEL_OK")
</pallas_src>

<mosaic_0001>
module attributes {stable_mosaic.version = 11 : i64} {
  func.func @_encoder_stack_kernel(%arg0: i32, %arg1: i32, %arg2: memref<1x11x32xf32, #tpu.memory_space<vmem>>, %arg3: memref<1x1x11xf32, #tpu.memory_space<vmem>>, %arg4: memref<1x4x1x32xf32, #tpu.memory_space<vmem>>, %arg5: memref<1x32x96xf32, #tpu.memory_space<vmem>>, %arg6: memref<1x1x96xf32, #tpu.memory_space<vmem>>, %arg7: memref<1x32x32xf32, #tpu.memory_space<vmem>>, %arg8: memref<1x1x32xf32, #tpu.memory_space<vmem>>, %arg9: memref<1x32x64xf32, #tpu.memory_space<vmem>>, %arg10: memref<1x1x64xf32, #tpu.memory_space<vmem>>, %arg11: memref<1x64x32xf32, #tpu.memory_space<vmem>>, %arg12: memref<1x1x32xf32, #tpu.memory_space<vmem>>, %arg13: memref<1x11x32xf32, #tpu.memory_space<vmem>>, %arg14: memref<11x32xf32, #tpu.memory_space<vmem>>) attributes {dimension_semantics = [#tpu.dimension_semantics<parallel>, #tpu.dimension_semantics<arbitrary>], iteration_bounds = array<i64: 2, 2>, scalar_prefetch = 0 : i64, scratch_operands = 1 : i64, tpu.core_type = #tpu.core_type<tc>, window_params = [{transform_indices = @transform_0, window_bounds = array<i64: 1, 11, 32>}, {transform_indices = @transform_1, window_bounds = array<i64: 1, 1, 11>}, {transform_indices = @transform_2, window_bounds = array<i64: 1, 4, 1, 32>}, {transform_indices = @transform_3, window_bounds = array<i64: 1, 32, 96>}, {transform_indices = @transform_4, window_bounds = array<i64: 1, 1, 96>}, {transform_indices = @transform_5, window_bounds = array<i64: 1, 32, 32>}, {transform_indices = @transform_6, window_bounds = array<i64: 1, 1, 32>}, {transform_indices = @transform_7, window_bounds = array<i64: 1, 32, 64>}, {transform_indices = @transform_8, window_bounds = array<i64: 1, 1, 64>}, {transform_indices = @transform_9, window_bounds = array<i64: 1, 64, 32>}, {transform_indices = @transform_10, window_bounds = array<i64: 1, 1, 32>}, {transform_indices = @transform_11, window_bounds = array<i64: 1, 11, 32>}]} {
    %c0_i32 = arith.constant 0 : i32
    %0 = arith.cmpi eq, %arg1, %c0_i32 : i32
    %1 = arith.extui %0 : i1 to i32
    %c0_i32_0 = arith.constant 0 : i32
    %2 = arith.cmpi ne, %1, %c0_i32_0 : i32
    scf.if %2 {
      %c0_66 = arith.constant 0 : index
      %c0_67 = arith.constant 0 : index
      %c0_68 = arith.constant 0 : index
      %164 = vector.load %arg2[%c0_66, %c0_67, %c0_68] : memref<1x11x32xf32, #tpu.memory_space<vmem>>, vector<1x11x32xf32>
      %165 = vector.shape_cast %164 : vector<1x11x32xf32> to vector<11x32xf32>
      %c0_69 = arith.constant 0 : index
      %c0_70 = arith.constant 0 : index
      %166 = vector.load %arg14[%c0_69, %c0_70] : memref<11x32xf32, #tpu.memory_space<vmem>>, vector<11x32xf32>
      tpu.vector_store %arg14[%c0_69, %c0_70], %165 {strides = array<i32>} : memref<11x32xf32, #tpu.memory_space<vmem>>, vector<11x32xf32>,
    } else {
    }
    %c0 = arith.constant 0 : index
    %c0_1 = arith.constant 0 : index
    %3 = vector.load %arg14[%c0, %c0_1] : memref<11x32xf32, #tpu.memory_space<vmem>>, vector<11x32xf32>
    %c0_2 = arith.constant 0 : index
    %c0_3 = arith.constant 0 : index
    %c0_4 = arith.constant 0 : index
    %4 = vector.load %arg3[%c0_2, %c0_3, %c0_4] : memref<1x1x11xf32, #tpu.memory_space<vmem>>, vector<1x1x11xf32>
    %5 = vector.shape_cast %4 : vector<1x1x11xf32> to vector<1x11xf32>
    %c0_5 = arith.constant 0 : index
    %c0_6 = arith.constant 0 : index
    %c0_7 = arith.constant 0 : index
    %c0_8 = arith.constant 0 : index
    %6 = vector.load %arg4[%c0_5, %c0_6, %c0_7, %c0_8] : memref<1x4x1x32xf32, #tpu.memory_space<vmem>>, vector<1x4x1x32xf32>
    %7 = vector.shape_cast %6 : vector<1x4x1x32xf32> to vector<4x1x32xf32>
    %8 = vector.extract_strided_slice %7 {offsets = [0, 0, 0], sizes = [1, 1, 32], strides = [1, 1, 1]} : vector<4x1x32xf32> to vector<1x1x32xf32>
    %9 = vector.shape_cast %8 : vector<1x1x32xf32> to vector<1x32xf32>
    %10 = vector.extract_strided_slice %7 {offsets = [1, 0, 0], sizes = [1, 1, 32], strides = [1, 1, 1]} : vector<4x1x32xf32> to vector<1x1x32xf32>
    %11 = vector.shape_cast %10 : vector<1x1x32xf32> to vector<1x32xf32>
    %cst = arith.constant dense<0.000000e+00> : vector<11xf32>
    %12 = vector.multi_reduction <add>, %3, %cst [1] : vector<11x32xf32> to vector<11xf32>
    %13 = vector.shape_cast %12 : vector<11xf32> to vector<11x1xf32>
    %cst_9 = arith.constant 3.200000e+01 : f32
    %14 = vector.broadcast %cst_9 : f32 to vector<11x1xf32>
    %15 = arith.divf %13, %14 : vector<11x1xf32>
    %16 = vector.broadcast %15 : vector<11x1xf32> to vector<11x32xf32>
    %17 = arith.subf %3, %16 : vector<11x32xf32>
    %18 = arith.mulf %17, %17 : vector<11x32xf32>
    %cst_10 = arith.constant dense<0.000000e+00> : vector<11xf32>
    %19 = vector.multi_reduction <add>, %18, %cst_10 [1] : vector<11x32xf32> to vector<11xf32>
    %20 = vector.shape_cast %19 : vector<11xf32> to vector<11x1xf32>
    %cst_11 = arith.constant 0.0322580636 : f32
    %21 = vector.broadcast %cst_11 : f32 to vector<11x1xf32>
    %22 = arith.mulf %20, %21 : vector<11x1xf32>
    %23 = vector.broadcast %15 : vector<11x1xf32> to vector<11x32xf32>
    %24 = arith.subf %3, %23 : vector<11x32xf32>
    %25 = vector.broadcast %9 : vector<1x32xf32> to vector<11x32xf32>
    %26 = arith.mulf %25, %24 : vector<11x32xf32>
    %27 = math.sqrt %22 : vector<11x1xf32>
    %cst_12 = arith.constant 9.99999997E-7 : f32
    %28 = vector.broadcast %cst_12 : f32 to vector<11x1xf32>
    %29 = arith.addf %27, %28 : vector<11x1xf32>
    %30 = vector.broadcast %29 : vector<11x1xf32> to vector<11x32xf32>
    %31 = arith.divf %26, %30 : vector<11x32xf32>
    %32 = vector.broadcast %11 : vector<1x32xf32> to vector<11x32xf32>
    %33 = arith.addf %31, %32 : vector<11x32xf32>
    %c0_13 = arith.constant 0 : index
    %c0_14 = arith.constant 0 : index
    %c0_15 = arith.constant 0 : index
    %34 = vector.load %arg5[%c0_13, %c0_14, %c0_15] : memref<1x32x96xf32, #tpu.memory_space<vmem>>, vector<1x32x96xf32>
    %35 = vector.shape_cast %34 : vector<1x32x96xf32> to vector<32x96xf32>
    %c0_16 = arith.constant 0 : index
    %c0_17 = arith.constant 0 : index
    %c0_18 = arith.constant 0 : index
    %36 = vector.load %arg6[%c0_16, %c0_17, %c0_18] : memref<1x1x96xf32, #tpu.memory_space<vmem>>, vector<1x1x96xf32>
    %37 = vector.shape_cast %36 : vector<1x1x96xf32> to vector<1x96xf32>
    %c0_19 = arith.constant 0 : index
    %c0_20 = arith.constant 0 : index
    %c0_21 = arith.constant 0 : index
    %38 = vector.load %arg7[%c0_19, %c0_20, %c0_21] : memref<1x32x32xf32, #tpu.memory_space<vmem>>, vector<1x32x32xf32>
    %39 = vector.shape_cast %38 : vector<1x32x32xf32> to vector<32x32xf32>
    %c0_22 = arith.constant 0 : index
    %c0_23 = arith.constant 0 : index
    %c0_24 = arith.constant 0 : index
    %40 = vector.load %arg8[%c0_22, %c0_23, %c0_24] : memref<1x1x32xf32, #tpu.memory_space<vmem>>, vector<1x1x32xf32>
    %41 = vector.shape_cast %40 : vector<1x1x32xf32> to vector<1x32xf32>
    %cst_25 = arith.constant dense<0.000000e+00> : vector<11x96xf32>
    %42 = tpu.matmul %33, %35, %cst_25 {dimension_numbers = #tpu.dot_dimension_numbers<[1], [0], [0], [1], [0, 0, 1, 1], [], []>} : vector<11x32xf32>, vector<32x96xf32>, vector<11x96xf32> -> vector<11x96xf32>
    %43 = vector.broadcast %37 : vector<1x96xf32> to vector<11x96xf32>
    %44 = arith.addf %42, %43 : vector<11x96xf32>
    %45 = vector.extract_strided_slice %44 {offsets = [0, 0], sizes = [11, 32], strides = [1, 1]} : vector<11x96xf32> to vector<11x32xf32>
    %46 = vector.extract_strided_slice %44 {offsets = [0, 32], sizes = [11, 32], strides = [1, 1]} : vector<11x96xf32> to vector<11x32xf32>
    %47 = vector.extract_strided_slice %44 {offsets = [0, 64], sizes = [11, 32], strides = [1, 1]} : vector<11x96xf32> to vector<11x32xf32>
    %48 = vector.extract_strided_slice %45 {offsets = [0, 0], sizes = [11, 8], strides = [1, 1]} : vector<11x32xf32> to vector<11x8xf32>
    %49 = vector.extract_strided_slice %46 {offsets = [0, 0], sizes = [11, 8], strides = [1, 1]} : vector<11x32xf32> to vector<11x8xf32>
    %50 = vector.extract_strided_slice %47 {offsets = [0, 0], sizes = [11, 8], strides = [1, 1]} : vector<11x32xf32> to vector<11x8xf32>
    %cst_26 = arith.constant dense<0.000000e+00> : vector<11x11xf32>
    %51 = tpu.matmul %48, %49, %cst_26 {dimension_numbers = #tpu.dot_dimension_numbers<[1], [1], [0], [0], [0, 0, 1, 0], [], []>} : vector<11x8xf32>, vector<11x8xf32>, vector<11x11xf32> -> vector<11x11xf32>
    %52 = vector.broadcast %5 : vector<1x11xf32> to vector<11x11xf32>
    %53 = arith.addf %51, %52 : vector<11x11xf32>
    %cst_27 = arith.constant dense<0xFF800000> : vector<11xf32>
    %54 = vector.multi_reduction <maximumf>, %53, %cst_27 [1] : vector<11x11xf32> to vector<11xf32>
    %55 = vector.shape_cast %54 : vector<11xf32> to vector<11x1xf32>
    %56 = vector.broadcast %55 : vector<11x1xf32> to vector<11x11xf32>
    %57 = arith.subf %53, %56 : vector<11x11xf32>
    %58 = math.exp %57 : vector<11x11xf32>
    %cst_28 = arith.constant dense<0.000000e+00> : vector<11xf32>
    %59 = vector.multi_reduction <add>, %58, %cst_28 [1] : vector<11x11xf32> to vector<11xf32>
    %60 = vector.shape_cast %59 : vector<11xf32> to vector<11x1xf32>
    %61 = vector.broadcast %60 : vector<11x1xf32> to vector<11x11xf32>
    %62 = arith.divf %58, %61 : vector<11x11xf32>
    %cst_29 = arith.constant dense<0.000000e+00> : vector<11x8xf32>
    %63 = tpu.matmul %62, %50, %cst_29 {dimension_numbers = #tpu.dot_dimension_numbers<[1], [0], [0], [1], [0, 0, 1, 1], [], []>} : vector<11x11xf32>, vector<11x8xf32>, vector<11x8xf32> -> vector<11x8xf32>
    %64 = vector.extract_strided_slice %45 {offsets = [0, 8], sizes = [11, 8], strides = [1, 1]} : vector<11x32xf32> to vector<11x8xf32>
    %65 = vector.extract_strided_slice %46 {offsets = [0, 8], sizes = [11, 8], strides = [1, 1]} : vector<11x32xf32> to vector<11x8xf32>
    %66 = vector.extract_strided_slice %47 {offsets = [0, 8], sizes = [11, 8], strides = [1, 1]} : vector<11x32xf32> to vector<11x8xf32>
    %cst_30 = arith.constant dense<0.000000e+00> : vector<11x11xf32>
    %67 = tpu.matmul %64, %65, %cst_30 {dimension_numbers = #tpu.dot_dimension_numbers<[1], [1], [0], [0], [0, 0, 1, 0], [], []>} : vector<11x8xf32>, vector<11x8xf32>, vector<11x11xf32> -> vector<11x11xf32>
    %68 = vector.broadcast %5 : vector<1x11xf32> to vector<11x11xf32>
    %69 = arith.addf %67, %68 : vector<11x11xf32>
    %cst_31 = arith.constant dense<0xFF800000> : vector<11xf32>
    %70 = vector.multi_reduction <maximumf>, %69, %cst_31 [1] : vector<11x11xf32> to vector<11xf32>
    %71 = vector.shape_cast %70 : vector<11xf32> to vector<11x1xf32>
    %72 = vector.broadcast %71 : vector<11x1xf32> to vector<11x11xf32>
    %73 = arith.subf %69, %72 : vector<11x11xf32>
    %74 = math.exp %73 : vector<11x11xf32>
    %cst_32 = arith.constant dense<0.000000e+00> : vector<11xf32>
    %75 = vector.multi_reduction <add>, %74, %cst_32 [1] : vector<11x11xf32> to vector<11xf32>
    %76 = vector.shape_cast %75 : vector<11xf32> to vector<11x1xf32>
    %77 = vector.broadcast %76 : vector<11x1xf32> to vector<11x11xf32>
    %78 = arith.divf %74, %77 : vector<11x11xf32>
    %cst_33 = arith.constant dense<0.000000e+00> : vector<11x8xf32>
    %79 = tpu.matmul %78, %66, %cst_33 {dimension_numbers = #tpu.dot_dimension_numbers<[1], [0], [0], [1], [0, 0, 1, 1], [], []>} : vector<11x11xf32>, vector<11x8xf32>, vector<11x8xf32> -> vector<11x8xf32>
    %80 = vector.extract_strided_slice %45 {offsets = [0, 16], sizes = [11, 8], strides = [1, 1]} : vector<11x32xf32> to vector<11x8xf32>
    %81 = vector.extract_strided_slice %46 {offsets = [0, 16], sizes = [11, 8], strides = [1, 1]} : vector<11x32xf32> to vector<11x8xf32>
    %82 = vector.extract_strided_slice %47 {offsets = [0, 16], sizes = [11, 8], strides = [1, 1]} : vector<11x32xf32> to vector<11x8xf32>
    %cst_34 = arith.constant dense<0.000000e+00> : vector<11x11xf32>
    %83 = tpu.matmul %80, %81, %cst_34 {dimension_numbers = #tpu.dot_dimension_numbers<[1], [1], [0], [0], [0, 0, 1, 0], [], []>} : vector<11x8xf32>, vector<11x8xf32>, vector<11x11xf32> -> vector<11x11xf32>
    %84 = vector.broadcast %5 : vector<1x11xf32> to vector<11x11xf32>
    %85 = arith.addf %83, %84 : vector<11x11xf32>
    %cst_35 = arith.constant dense<0xFF800000> : vector<11xf32>
    %86 = vector.multi_reduction <maximumf>, %85, %cst_35 [1] : vector<11x11xf32> to vector<11xf32>
    %87 = vector.shape_cast %86 : vector<11xf32> to vector<11x1xf32>
    %88 = vector.broadcast %87 : vector<11x1xf32> to vector<11x11xf32>
    %89 = arith.subf %85, %88 : vector<11x11xf32>
    %90 = math.exp %89 : vector<11x11xf32>
    %cst_36 = arith.constant dense<0.000000e+00> : vector<11xf32>
    %91 = vector.multi_reduction <add>, %90, %cst_36 [1] : vector<11x11xf32> to vector<11xf32>
    %92 = vector.shape_cast %91 : vector<11xf32> to vector<11x1xf32>
    %93 = vector.broadcast %92 : vector<11x1xf32> to vector<11x11xf32>
    %94 = arith.divf %90, %93 : vector<11x11xf32>
    %cst_37 = arith.constant dense<0.000000e+00> : vector<11x8xf32>
    %95 = tpu.matmul %94, %82, %cst_37 {dimension_numbers = #tpu.dot_dimension_numbers<[1], [0], [0], [1], [0, 0, 1, 1], [], []>} : vector<11x11xf32>, vector<11x8xf32>, vector<11x8xf32> -> vector<11x8xf32>
    %96 = vector.extract_strided_slice %45 {offsets = [0, 24], sizes = [11, 8], strides = [1, 1]} : vector<11x32xf32> to vector<11x8xf32>
    %97 = vector.extract_strided_slice %46 {offsets = [0, 24], sizes = [11, 8], strides = [1, 1]} : vector<11x32xf32> to vector<11x8xf32>
    %98 = vector.extract_strided_slice %47 {offsets = [0, 24], sizes = [11, 8], strides = [1, 1]} : vector<11x32xf32> to vector<11x8xf32>
    %cst_38 = arith.constant dense<0.000000e+00> : vector<11x11xf32>
    %99 = tpu.matmul %96, %97, %cst_38 {dimension_numbers = #tpu.dot_dimension_numbers<[1], [1], [0], [0], [0, 0, 1, 0], [], []>} : vector<11x8xf32>, vector<11x8xf32>, vector<11x11xf32> -> vector<11x11xf32>
    %100 = vector.broadcast %5 : vector<1x11xf32> to vector<11x11xf32>
    %101 = arith.addf %99, %100 : vector<11x11xf32>
    %cst_39 = arith.constant dense<0xFF800000> : vector<11xf32>
    %102 = vector.multi_reduction <maximumf>, %101, %cst_39 [1] : vector<11x11xf32> to vector<11xf32>
    %103 = vector.shape_cast %102 : vector<11xf32> to vector<11x1xf32>
    %104 = vector.broadcast %103 : vector<11x1xf32> to vector<11x11xf32>
    %105 = arith.subf %101, %104 : vector<11x11xf32>
    %106 = math.exp %105 : vector<11x11xf32>
    %cst_40 = arith.constant dense<0.000000e+00> : vector<11xf32>
    %107 = vector.multi_reduction <add>, %106, %cst_40 [1] : vector<11x11xf32> to vector<11xf32>
    %108 = vector.shape_cast %107 : vector<11xf32> to vector<11x1xf32>
    %109 = vector.broadcast %108 : vector<11x1xf32> to vector<11x11xf32>
    %110 = arith.divf %106, %109 : vector<11x11xf32>
    %cst_41 = arith.constant dense<0.000000e+00> : vector<11x8xf32>
    %111 = tpu.matmul %110, %98, %cst_41 {dimension_numbers = #tpu.dot_dimension_numbers<[1], [0], [0], [1], [0, 0, 1, 1], [], []>} : vector<11x11xf32>, vector<11x8xf32>, vector<11x8xf32> -> vector<11x8xf32>
    %112 = tpu.concatenate %63, %79, %95, %111 in 1 : vector<11x8xf32>, vector<11x8xf32>, vector<11x8xf32>, vector<11x8xf32> -> vector<11x32xf32>
    %cst_42 = arith.constant dense<0.000000e+00> : vector<11x32xf32>
    %113 = tpu.matmul %112, %39, %cst_42 {dimension_numbers = #tpu.dot_dimension_numbers<[1], [0], [0], [1], [0, 0, 1, 1], [], []>} : vector<11x32xf32>, vector<32x32xf32>, vector<11x32xf32> -> vector<11x32xf32>
    %114 = vector.broadcast %41 : vector<1x32xf32> to vector<11x32xf32>
    %115 = arith.addf %113, %114 : vector<11x32xf32>
    %116 = arith.addf %3, %115 : vector<11x32xf32>
    %117 = vector.extract_strided_slice %7 {offsets = [2, 0, 0], sizes = [1, 1, 32], strides = [1, 1, 1]} : vector<4x1x32xf32> to vector<1x1x32xf32>
    %118 = vector.shape_cast %117 : vector<1x1x32xf32> to vector<1x32xf32>
    %119 = vector.extract_strided_slice %7 {offsets = [3, 0, 0], sizes = [1, 1, 32], strides = [1, 1, 1]} : vector<4x1x32xf32> to vector<1x1x32xf32>
    %120 = vector.shape_cast %119 : vector<1x1x32xf32> to vector<1x32xf32>
    %cst_43 = arith.constant dense<0.000000e+00> : vector<11xf32>
    %121 = vector.multi_reduction <add>, %116, %cst_43 [1] : vector<11x32xf32> to vector<11xf32>
    %122 = vector.shape_cast %121 : vector<11xf32> to vector<11x1xf32>
    %cst_44 = arith.constant 3.200000e+01 : f32
    %123 = vector.broadcast %cst_44 : f32 to vector<11x1xf32>
    %124 = arith.divf %122, %123 : vector<11x1xf32>
    %125 = vector.broadcast %124 : vector<11x1xf32> to vector<11x32xf32>
    %126 = arith.subf %116, %125 : vector<11x32xf32>
    %127 = arith.mulf %126, %126 : vector<11x32xf32>
    %cst_45 = arith.constant dense<0.000000e+00> : vector<11xf32>
    %128 = vector.multi_reduction <add>, %127, %cst_45 [1] : vector<11x32xf32> to vector<11xf32>
    %129 = vector.shape_cast %128 : vector<11xf32> to vector<11x1xf32>
    %cst_46 = arith.constant 0.0322580636 : f32
    %130 = vector.broadcast %cst_46 : f32 to vector<11x1xf32>
    %131 = arith.mulf %129, %130 : vector<11x1xf32>
    %132 = vector.broadcast %124 : vector<11x1xf32> to vector<11x32xf32>
    %133 = arith.subf %116, %132 : vector<11x32xf32>
    %134 = vector.broadcast %118 : vector<1x32xf32> to vector<11x32xf32>
    %135 = arith.mulf %134, %133 : vector<11x32xf32>
    %136 = math.sqrt %131 : vector<11x1xf32>
    %cst_47 = arith.constant 9.99999997E-7 : f32
    %137 = vector.broadcast %cst_47 : f32 to vector<11x1xf32>
    %138 = arith.addf %136, %137 : vector<11x1xf32>
    %139 = vector.broadcast %138 : vector<11x1xf32> to vector<11x32xf32>
    %140 = arith.divf %135, %139 : vector<11x32xf32>
    %141 = vector.broadcast %120 : vector<1x32xf32> to vector<11x32xf32>
    %142 = arith.addf %140, %141 : vector<11x32xf32>
    %c0_48 = arith.constant 0 : index
    %c0_49 = arith.constant 0 : index
    %c0_50 = arith.constant 0 : index
    %143 = vector.load %arg9[%c0_48, %c0_49, %c0_50] : memref<1x32x64xf32, #tpu.memory_space<vmem>>, vector<1x32x64xf32>
    %144 = vector.shape_cast %143 : vector<1x32x64xf32> to vector<32x64xf32>
    %c0_51 = arith.constant 0 : index
    %c0_52 = arith.constant 0 : index
    %c0_53 = arith.constant 0 : index
    %145 = vector.load %arg10[%c0_51, %c0_52, %c0_53] : memref<1x1x64xf32, #tpu.memory_space<vmem>>, vector<1x1x64xf32>
    %146 = vector.shape_cast %145 : vector<1x1x64xf32> to vector<1x64xf32>
    %c0_54 = arith.constant 0 : index
    %c0_55 = arith.constant 0 : index
    %c0_56 = arith.constant 0 : index
    %147 = vector.load %arg11[%c0_54, %c0_55, %c0_56] : memref<1x64x32xf32, #tpu.memory_space<vmem>>, vector<1x64x32xf32>
    %148 = vector.shape_cast %147 : vector<1x64x32xf32> to vector<64x32xf32>
    %c0_57 = arith.constant 0 : index
    %c0_58 = arith.constant 0 : index
    %c0_59 = arith.constant 0 : index
    %149 = vector.load %arg12[%c0_57, %c0_58, %c0_59] : memref<1x1x32xf32, #tpu.memory_space<vmem>>, vector<1x1x32xf32>
    %150 = vector.shape_cast %149 : vector<1x1x32xf32> to vector<1x32xf32>
    %cst_60 = arith.constant dense<0.000000e+00> : vector<11x64xf32>
    %151 = tpu.matmul %142, %144, %cst_60 {dimension_numbers = #tpu.dot_dimension_numbers<[1], [0], [0], [1], [0, 0, 1, 1], [], []>} : vector<11x32xf32>, vector<32x64xf32>, vector<11x64xf32> -> vector<11x64xf32>
    %152 = vector.broadcast %146 : vector<1x64xf32> to vector<11x64xf32>
    %153 = arith.addf %151, %152 : vector<11x64xf32>
    %cst_61 = arith.constant 0.000000e+00 : f32
    %154 = vector.broadcast %cst_61 : f32 to vector<11x64xf32>
    %155 = arith.maximumf %153, %154 : vector<11x64xf32>
    %cst_62 = arith.constant dense<0.000000e+00> : vector<11x32xf32>
    %156 = tpu.matmul %155, %148, %cst_62 {dimension_numbers = #tpu.dot_dimension_numbers<[1], [0], [0], [1], [0, 0, 1, 1], [], []>} : vector<11x64xf32>, vector<64x32xf32>, vector<11x32xf32> -> vector<11x32xf32>
    %157 = vector.broadcast %150 : vector<1x32xf32> to vector<11x32xf32>
    %158 = arith.addf %156, %157 : vector<11x32xf32>
    %159 = arith.addf %116, %158 : vector<11x32xf32>
    %c0_63 = arith.constant 0 : index
    %c0_64 = arith.constant 0 : index
    %160 = vector.load %arg14[%c0_63, %c0_64] : memref<11x32xf32, #tpu.memory_space<vmem>>, vector<11x32xf32>
    tpu.vector_store %arg14[%c0_63, %c0_64], %159 {strides = array<i32>} : memref<11x32xf32, #tpu.memory_space<vmem>>, vector<11x32xf32>,
    %c1_i32 = arith.constant 1 : i32
    %161 = arith.cmpi eq, %arg1, %c1_i32 : i32
    %162 = arith.extui %161 : i1 to i32
    %c0_i32_65 = arith.constant 0 : i32
    %163 = arith.cmpi ne, %162, %c0_i32_65 : i32
    scf.if %163 {
      %c0_66 = arith.constant 0 : index
      %c0_67 = arith.constant 0 : index
      %c0_68 = arith.constant 0 : index
      %164 = vector.load %arg13[%c0_66, %c0_67, %c0_68] : memref<1x11x32xf32, #tpu.memory_space<vmem>>, vector<1x11x32xf32>
      %165 = vector.shape_cast %164 : vector<1x11x32xf32> to vector<11x32xf32>
      %166 = vector.shape_cast %159 : vector<11x32xf32> to vector<1x11x32xf32>
      tpu.vector_store %arg13[%c0_66, %c0_67, %c0_68], %166 {strides = array<i32>} : memref<1x11x32xf32, #tpu.memory_space<vmem>>, vector<1x11x32xf32>,
    } else {
    }
    return
  }
  func.func @transform_0(%arg0: i32, %arg1: i32) -> (i32, i32, i32) {
    %c0_i32 = arith.constant 0 : i32
    %c0_i32_0 = arith.constant 0 : i32
    %c0_i32_1 = arith.constant 0 : i32
    return %arg0, %c0_i32, %c0_i32_0 : i32, i32, i32
  }
  func.func @transform_1(%arg0: i32, %arg1: i32) -> (i32, i32, i32) {
    %c0_i32 = arith.constant 0 : i32
    %c0_i32_0 = arith.constant 0 : i32
    %c0_i32_1 = arith.constant 0 : i32
    return %arg0, %c0_i32, %c0_i32_0 : i32, i32, i32
  }
  func.func @transform_2(%arg0: i32, %arg1: i32) -> (i32, i32, i32, i32) {
    %c0_i32 = arith.constant 0 : i32
    %c0_i32_0 = arith.constant 0 : i32
    %c0_i32_1 = arith.constant 0 : i32
    %c0_i32_2 = arith.constant 0 : i32
    return %arg1, %c0_i32, %c0_i32_0, %c0_i32_1 : i32, i32, i32, i32
  }
  func.func @transform_3(%arg0: i32, %arg1: i32) -> (i32, i32, i32) {
    %c0_i32 = arith.constant 0 : i32
    %c0_i32_0 = arith.constant 0 : i32
    %c0_i32_1 = arith.constant 0 : i32
    return %arg1, %c0_i32, %c0_i32_0 : i32, i32, i32
  }
  func.func @transform_4(%arg0: i32, %arg1: i32) -> (i32, i32, i32) {
    %c0_i32 = arith.constant 0 : i32
    %c0_i32_0 = arith.constant 0 : i32
    %c0_i32_1 = arith.constant 0 : i32
    return %arg1, %c0_i32, %c0_i32_0 : i32, i32, i32
  }
  func.func @transform_5(%arg0: i32, %arg1: i32) -> (i32, i32, i32) {
    %c0_i32 = arith.constant 0 : i32
    %c0_i32_0 = arith.constant 0 : i32
    %c0_i32_1 = arith.constant 0 : i32
    return %arg1, %c0_i32, %c0_i32_0 : i32, i32, i32
  }
  func.func @transform_6(%arg0: i32, %arg1: i32) -> (i32, i32, i32) {
    %c0_i32 = arith.constant 0 : i32
    %c0_i32_0 = arith.constant 0 : i32
    %c0_i32_1 = arith.constant 0 : i32
    return %arg1, %c0_i32, %c0_i32_0 : i32, i32, i32
  }
  func.func @transform_7(%arg0: i32, %arg1: i32) -> (i32, i32, i32) {
    %c0_i32 = arith.constant 0 : i32
    %c0_i32_0 = arith.constant 0 : i32
    %c0_i32_1 = arith.constant 0 : i32
    return %arg1, %c0_i32, %c0_i32_0 : i32, i32, i32
  }
  func.func @transform_8(%arg0: i32, %arg1: i32) -> (i32, i32, i32) {
    %c0_i32 = arith.constant 0 : i32
    %c0_i32_0 = arith.constant 0 : i32
    %c0_i32_1 = arith.constant 0 : i32
    return %arg1, %c0_i32, %c0_i32_0 : i32, i32, i32
  }
  func.func @transform_9(%arg0: i32, %arg1: i32) -> (i32, i32, i32) {
    %c0_i32 = arith.constant 0 : i32
    %c0_i32_0 = arith.constant 0 : i32
    %c0_i32_1 = arith.constant 0 : i32
    return %arg1, %c0_i32, %c0_i32_0 : i32, i32, i32
  }
  func.func @transform_10(%arg0: i32, %arg1: i32) -> (i32, i32, i32) {
    %c0_i32 = arith.constant 0 : i32
    %c0_i32_0 = arith.constant 0 : i32
    %c0_i32_1 = arith.constant 0 : i32
    return %arg1, %c0_i32, %c0_i32_0 : i32, i32, i32
  }
  func.func @transform_11(%arg0: i32, %arg1: i32) -> (i32, i32, i32) {
    %c0_i32 = arith.constant 0 : i32
    %c0_i32_0 = arith.constant 0 : i32
    %c0_i32_1 = arith.constant 0 : i32
    return %arg0, %c0_i32, %c0_i32_0 : i32, i32, i32
  }
}

module attributes {stable_mosaic.version = 11 : i64} {
  func.func @_norm_linear_kernel(%arg0: i32, %arg1: memref<22x32xf32, #tpu.memory_space<vmem>>, %arg2: memref<1x32xf32, #tpu.memory_space<vmem>>, %arg3: memref<1x32xf32, #tpu.memory_space<vmem>>, %arg4: memref<32x32xf32, #tpu.memory_space<vmem>>, %arg5: memref<1x32xf32, #tpu.memory_space<vmem>>, %arg6: memref<22x32xf32, #tpu.memory_space<vmem>>) attributes {dimension_semantics = [#tpu.dimension_semantics<arbitrary>], iteration_bounds = array<i64: 1>, scalar_prefetch = 0 : i64, scratch_operands = 0 : i64, tpu.core_type = #tpu.core_type<tc>, window_params = [{pipeline_mode = #tpu.pipeline_mode<synchronous>, transform_indices = @transform_0, window_bounds = array<i64: 22, 32>}, {pipeline_mode = #tpu.pipeline_mode<synchronous>, transform_indices = @transform_1, window_bounds = array<i64: 1, 32>}, {pipeline_mode = #tpu.pipeline_mode<synchronous>, transform_indices = @transform_2, window_bounds = array<i64: 1, 32>}, {pipeline_mode = #tpu.pipeline_mode<synchronous>, transform_indices = @transform_3, window_bounds = array<i64: 32, 32>}, {pipeline_mode = #tpu.pipeline_mode<synchronous>, transform_indices = @transform_4, window_bounds = array<i64: 1, 32>}, {pipeline_mode = #tpu.pipeline_mode<synchronous>, transform_indices = @transform_5, window_bounds = array<i64: 22, 32>}]} {
    %c0 = arith.constant 0 : index
    %c0_0 = arith.constant 0 : index
    %0 = vector.load %arg1[%c0, %c0_0] : memref<22x32xf32, #tpu.memory_space<vmem>>, vector<22x32xf32>
    %c0_1 = arith.constant 0 : index
    %c0_2 = arith.constant 0 : index
    %1 = vector.load %arg2[%c0_1, %c0_2] : memref<1x32xf32, #tpu.memory_space<vmem>>, vector<1x32xf32>
    %c0_3 = arith.constant 0 : index
    %c0_4 = arith.constant 0 : index
    %2 = vector.load %arg3[%c0_3, %c0_4] : memref<1x32xf32, #tpu.memory_space<vmem>>, vector<1x32xf32>
    %cst = arith.constant dense<0.000000e+00> : vector<22xf32>
    %3 = vector.multi_reduction <add>, %0, %cst [1] : vector<22x32xf32> to vector<22xf32>
    %4 = vector.shape_cast %3 : vector<22xf32> to vector<22x1xf32>
    %cst_5 = arith.constant 3.200000e+01 : f32
    %5 = vector.broadcast %cst_5 : f32 to vector<22x1xf32>
    %6 = arith.divf %4, %5 : vector<22x1xf32>
    %7 = vector.broadcast %6 : vector<22x1xf32> to vector<22x32xf32>
    %8 = arith.subf %0, %7 : vector<22x32xf32>
    %9 = arith.mulf %8, %8 : vector<22x32xf32>
    %cst_6 = arith.constant dense<0.000000e+00> : vector<22xf32>
    %10 = vector.multi_reduction <add>, %9, %cst_6 [1] : vector<22x32xf32> to vector<22xf32>
    %11 = vector.shape_cast %10 : vector<22xf32> to vector<22x1xf32>
    %cst_7 = arith.constant 0.0322580636 : f32
    %12 = vector.broadcast %cst_7 : f32 to vector<22x1xf32>
    %13 = arith.mulf %11, %12 : vector<22x1xf32>
    %14 = vector.broadcast %6 : vector<22x1xf32> to vector<22x32xf32>
    %15 = arith.subf %0, %14 : vector<22x32xf32>
    %16 = vector.broadcast %1 : vector<1x32xf32> to vector<22x32xf32>
    %17 = arith.mulf %16, %15 : vector<22x32xf32>
    %18 = math.sqrt %13 : vector<22x1xf32>
    %cst_8 = arith.constant 9.99999997E-7 : f32
    %19 = vector.broadcast %cst_8 : f32 to vector<22x1xf32>
    %20 = arith.addf %18, %19 : vector<22x1xf32>
    %21 = vector.broadcast %20 : vector<22x1xf32> to vector<22x32xf32>
    %22 = arith.divf %17, %21 : vector<22x32xf32>
    %23 = vector.broadcast %2 : vector<1x32xf32> to vector<22x32xf32>
    %24 = arith.addf %22, %23 : vector<22x32xf32>
    %c0_9 = arith.constant 0 : index
    %c0_10 = arith.constant 0 : index
    %25 = vector.load %arg4[%c0_9, %c0_10] : memref<32x32xf32, #tpu.memory_space<vmem>>, vector<32x32xf32>
    %cst_11 = arith.constant dense<0.000000e+00> : vector<22x32xf32>
    %26 = tpu.matmul %24, %25, %cst_11 {dimension_numbers = #tpu.dot_dimension_numbers<[1], [0], [0], [1], [0, 0, 1, 1], [], []>} : vector<22x32xf32>, vector<32x32xf32>, vector<22x32xf32> -> vector<22x32xf32>
    %c0_12 = arith.constant 0 : index
    %c0_13 = arith.constant 0 : index
    %27 = vector.load %arg5[%c0_12, %c0_13] : memref<1x32xf32, #tpu.memory_space<vmem>>, vector<1x32xf32>
    %28 = vector.broadcast %27 : vector<1x32xf32> to vector<22x32xf32>
    %29 = arith.addf %26, %28 : vector<22x32xf32>
    %c0_14 = arith.constant 0 : index
    %c0_15 = arith.constant 0 : index
    %30 = vector.load %arg6[%c0_14, %c0_15] : memref<22x32xf32, #tpu.memory_space<vmem>>, vector<22x32xf32>
    tpu.vector_store %arg6[%c0_14, %c0_15], %29 {strides = array<i32>} : memref<22x32xf32, #tpu.memory_space<vmem>>, vector<22x32xf32>,
    return
  }
  func.func @transform_0(%arg0: i32) -> (i32, i32) {
    %c0_i32 = arith.constant 0 : i32
    %c0_i32_0 = arith.constant 0 : i32
    %c0_i32_1 = arith.constant 0 : i32
    return %c0_i32, %c0_i32_0 : i32, i32
  }
  func.func @transform_1(%arg0: i32) -> (i32, i32) {
    %c0_i32 = arith.constant 0 : i32
    %c0_i32_0 = arith.constant 0 : i32
    %c0_i32_1 = arith.constant 0 : i32
    return %c0_i32, %c0_i32_0 : i32, i32
  }
  func.func @transform_2(%arg0: i32) -> (i32, i32) {
    %c0_i32 = arith.constant 0 : i32
    %c0_i32_0 = arith.constant 0 : i32
    %c0_i32_1 = arith.constant 0 : i32
    return %c0_i32, %c0_i32_0 : i32, i32
  }
  func.func @transform_3(%arg0: i32) -> (i32, i32) {
    %c0_i32 = arith.constant 0 : i32
    %c0_i32_0 = arith.constant 0 : i32
    %c0_i32_1 = arith.constant 0 : i32
    return %c0_i32, %c0_i32_0 : i32, i32
  }
  func.func @transform_4(%arg0: i32) -> (i32, i32) {
    %c0_i32 = arith.constant 0 : i32
    %c0_i32_0 = arith.constant 0 : i32
    %c0_i32_1 = arith.constant 0 : i32
    return %c0_i32, %c0_i32_0 : i32, i32
  }
  func.func @transform_5(%arg0: i32) -> (i32, i32) {
    %c0_i32 = arith.constant 0 : i32
    %c0_i32_0 = arith.constant 0 : i32
    %c0_i32_1 = arith.constant 0 : i32
    return %c0_i32, %c0_i32_0 : i32, i32
  }
}

module attributes {stable_mosaic.version = 11 : i64} {
  func.func @_decoder_stack_kernel(%arg0: i32, %arg1: i32, %arg2: memref<1x8x32xf32, #tpu.memory_space<vmem>>, %arg3: memref<1x11x32xf32, #tpu.memory_space<vmem>>, %arg4: memref<1x1x11xf32, #tpu.memory_space<vmem>>, %arg5: memref<1x8x8xf32, #tpu.memory_space<vmem>>, %arg6: memref<1x6x1x32xf32, #tpu.memory_space<vmem>>, %arg7: memref<1x32x96xf32, #tpu.memory_space<vmem>>, %arg8: memref<1x1x96xf32, #tpu.memory_space<vmem>>, %arg9: memref<1x32x32xf32, #tpu.memory_space<vmem>>, %arg10: memref<1x1x32xf32, #tpu.memory_space<vmem>>, %arg11: memref<1x32x96xf32, #tpu.memory_space<vmem>>, %arg12: memref<1x1x96xf32, #tpu.memory_space<vmem>>, %arg13: memref<1x32x32xf32, #tpu.memory_space<vmem>>, %arg14: memref<1x1x32xf32, #tpu.memory_space<vmem>>, %arg15: memref<1x32x64xf32, #tpu.memory_space<vmem>>, %arg16: memref<1x1x64xf32, #tpu.memory_space<vmem>>, %arg17: memref<1x64x32xf32, #tpu.memory_space<vmem>>, %arg18: memref<1x1x32xf32, #tpu.memory_space<vmem>>, %arg19: memref<1x8x32xf32, #tpu.memory_space<vmem>>, %arg20: memref<8x32xf32, #tpu.memory_space<vmem>>) attributes {dimension_semantics = [#tpu.dimension_semantics<parallel>, #tpu.dimension_semantics<arbitrary>], iteration_bounds = array<i64: 2, 2>, scalar_prefetch = 0 : i64, scratch_operands = 1 : i64, tpu.core_type = #tpu.core_type<tc>, window_params = [{transform_indices = @transform_0, window_bounds = array<i64: 1, 8, 32>}, {transform_indices = @transform_1, window_bounds = array<i64: 1, 11, 32>}, {transform_indices = @transform_2, window_bounds = array<i64: 1, 1, 11>}, {transform_indices = @transform_3, window_bounds = array<i64: 1, 8, 8>}, {transform_indices = @transform_4, window_bounds = array<i64: 1, 6, 1, 32>}, {transform_indices = @transform_5, window_bounds = array<i64: 1, 32, 96>}, {transform_indices = @transform_6, window_bounds = array<i64: 1, 1, 96>}, {transform_indices = @transform_7, window_bounds = array<i64: 1, 32, 32>}, {transform_indices = @transform_8, window_bounds = array<i64: 1, 1, 32>}, {transform_indices = @transform_9, window_bounds = array<i64: 1, 32, 96>}, {transform_indices = @transform_10, window_bounds = array<i64: 1, 1, 96>}, {transform_indices = @transform_11, window_bounds = array<i64: 1, 32, 32>}, {transform_indices = @transform_12, window_bounds = array<i64: 1, 1, 32>}, {transform_indices = @transform_13, window_bounds = array<i64: 1, 32, 64>}, {transform_indices = @transform_14, window_bounds = array<i64: 1, 1, 64>}, {transform_indices = @transform_15, window_bounds = array<i64: 1, 64, 32>}, {transform_indices = @transform_16, window_bounds = array<i64: 1, 1, 32>}, {transform_indices = @transform_17, window_bounds = array<i64: 1, 8, 32>}]} {
    %c0_i32 = arith.constant 0 : i32
    %0 = arith.cmpi eq, %arg1, %c0_i32 : i32
    %1 = arith.extui %0 : i1 to i32
    %c0_i32_0 = arith.constant 0 : i32
    %2 = arith.cmpi ne, %1, %c0_i32_0 : i32
    scf.if %2 {
      %c0_108 = arith.constant 0 : index
      %c0_109 = arith.constant 0 : index
      %c0_110 = arith.constant 0 : index
      %279 = vector.load %arg2[%c0_108, %c0_109, %c0_110] : memref<1x8x32xf32, #tpu.memory_space<vmem>>, vector<1x8x32xf32>
      %280 = vector.shape_cast %279 : vector<1x8x32xf32> to vector<8x32xf32>
      %c0_111 = arith.constant 0 : index
      %c0_112 = arith.constant 0 : index
      %281 = vector.load %arg20[%c0_111, %c0_112] : memref<8x32xf32, #tpu.memory_space<vmem>>, vector<8x32xf32>
      tpu.vector_store %arg20[%c0_111, %c0_112], %280 {strides = array<i32>} : memref<8x32xf32, #tpu.memory_space<vmem>>, vector<8x32xf32>,
    } else {
    }
    %c0 = arith.constant 0 : index
    %c0_1 = arith.constant 0 : index
    %3 = vector.load %arg20[%c0, %c0_1] : memref<8x32xf32, #tpu.memory_space<vmem>>, vector<8x32xf32>
    %c0_2 = arith.constant 0 : index
    %c0_3 = arith.constant 0 : index
    %c0_4 = arith.constant 0 : index
    %4 = vector.load %arg3[%c0_2, %c0_3, %c0_4] : memref<1x11x32xf32, #tpu.memory_space<vmem>>, vector<1x11x32xf32>
    %5 = vector.shape_cast %4 : vector<1x11x32xf32> to vector<11x32xf32>
    %c0_5 = arith.constant 0 : index
    %c0_6 = arith.constant 0 : index
    %c0_7 = arith.constant 0 : index
    %6 = vector.load %arg4[%c0_5, %c0_6, %c0_7] : memref<1x1x11xf32, #tpu.memory_space<vmem>>, vector<1x1x11xf32>
    %7 = vector.shape_cast %6 : vector<1x1x11xf32> to vector<1x11xf32>
    %c0_8 = arith.constant 0 : index
    %c0_9 = arith.constant 0 : index
    %c0_10 = arith.constant 0 : index
    %8 = vector.load %arg5[%c0_8, %c0_9, %c0_10] : memref<1x8x8xf32, #tpu.memory_space<vmem>>, vector<1x8x8xf32>
    %9 = vector.shape_cast %8 : vector<1x8x8xf32> to vector<8x8xf32>
    %c0_11 = arith.constant 0 : index
    %c0_12 = arith.constant 0 : index
    %c0_13 = arith.constant 0 : index
    %c0_14 = arith.constant 0 : index
    %10 = vector.load %arg6[%c0_11, %c0_12, %c0_13, %c0_14] : memref<1x6x1x32xf32, #tpu.memory_space<vmem>>, vector<1x6x1x32xf32>
    %11 = vector.shape_cast %10 : vector<1x6x1x32xf32> to vector<6x1x32xf32>
    %12 = vector.extract_strided_slice %11 {offsets = [0, 0, 0], sizes = [1, 1, 32], strides = [1, 1, 1]} : vector<6x1x32xf32> to vector<1x1x32xf32>
    %13 = vector.shape_cast %12 : vector<1x1x32xf32> to vector<1x32xf32>
    %14 = vector.extract_strided_slice %11 {offsets = [1, 0, 0], sizes = [1, 1, 32], strides = [1, 1, 1]} : vector<6x1x32xf32> to vector<1x1x32xf32>
    %15 = vector.shape_cast %14 : vector<1x1x32xf32> to vector<1x32xf32>
    %cst = arith.constant dense<0.000000e+00> : vector<8xf32>
    %16 = vector.multi_reduction <add>, %3, %cst [1] : vector<8x32xf32> to vector<8xf32>
    %17 = vector.shape_cast %16 : vector<8xf32> to vector<8x1xf32>
    %cst_15 = arith.constant 3.200000e+01 : f32
    %18 = vector.broadcast %cst_15 : f32 to vector<8x1xf32>
    %19 = arith.divf %17, %18 : vector<8x1xf32>
    %20 = vector.broadcast %19 : vector<8x1xf32> to vector<8x32xf32>
    %21 = arith.subf %3, %20 : vector<8x32xf32>
    %22 = arith.mulf %21, %21 : vector<8x32xf32>
    %cst_16 = arith.constant dense<0.000000e+00> : vector<8xf32>
    %23 = vector.multi_reduction <add>, %22, %cst_16 [1] : vector<8x32xf32> to vector<8xf32>
    %24 = vector.shape_cast %23 : vector<8xf32> to vector<8x1xf32>
    %cst_17 = arith.constant 0.0322580636 : f32
    %25 = vector.broadcast %cst_17 : f32 to vector<8x1xf32>
    %26 = arith.mulf %24, %25 : vector<8x1xf32>
    %27 = vector.broadcast %19 : vector<8x1xf32> to vector<8x32xf32>
    %28 = arith.subf %3, %27 : vector<8x32xf32>
    %29 = vector.broadcast %13 : vector<1x32xf32> to vector<8x32xf32>
    %30 = arith.mulf %29, %28 : vector<8x32xf32>
    %31 = math.sqrt %26 : vector<8x1xf32>
    %cst_18 = arith.constant 9.99999997E-7 : f32
    %32 = vector.broadcast %cst_18 : f32 to vector<8x1xf32>
    %33 = arith.addf %31, %32 : vector<8x1xf32>
    %34 = vector.broadcast %33 : vector<8x1xf32> to vector<8x32xf32>
    %35 = arith.divf %30, %34 : vector<8x32xf32>
    %36 = vector.broadcast %15 : vector<1x32xf32> to vector<8x32xf32>
    %37 = arith.addf %35, %36 : vector<8x32xf32>
    %c0_19 = arith.constant 0 : index
    %c0_20 = arith.constant 0 : index
    %c0_21 = arith.constant 0 : index
    %38 = vector.load %arg7[%c0_19, %c0_20, %c0_21] : memref<1x32x96xf32, #tpu.memory_space<vmem>>, vector<1x32x96xf32>
    %39 = vector.shape_cast %38 : vector<1x32x96xf32> to vector<32x96xf32>
    %c0_22 = arith.constant 0 : index
    %c0_23 = arith.constant 0 : index
    %c0_24 = arith.constant 0 : index
    %40 = vector.load %arg8[%c0_22, %c0_23, %c0_24] : memref<1x1x96xf32, #tpu.memory_space<vmem>>, vector<1x1x96xf32>
    %41 = vector.shape_cast %40 : vector<1x1x96xf32> to vector<1x96xf32>
    %c0_25 = arith.constant 0 : index
    %c0_26 = arith.constant 0 : index
    %c0_27 = arith.constant 0 : index
    %42 = vector.load %arg9[%c0_25, %c0_26, %c0_27] : memref<1x32x32xf32, #tpu.memory_space<vmem>>, vector<1x32x32xf32>
    %43 = vector.shape_cast %42 : vector<1x32x32xf32> to vector<32x32xf32>
    %c0_28 = arith.constant 0 : index
    %c0_29 = arith.constant 0 : index
    %c0_30 = arith.constant 0 : index
    %44 = vector.load %arg10[%c0_28, %c0_29, %c0_30] : memref<1x1x32xf32, #tpu.memory_space<vmem>>, vector<1x1x32xf32>
    %45 = vector.shape_cast %44 : vector<1x1x32xf32> to vector<1x32xf32>
    %cst_31 = arith.constant dense<0.000000e+00> : vector<8x96xf32>
    %46 = tpu.matmul %37, %39, %cst_31 {dimension_numbers = #tpu.dot_dimension_numbers<[1], [0], [0], [1], [0, 0, 1, 1], [], []>} : vector<8x32xf32>, vector<32x96xf32>, vector<8x96xf32> -> vector<8x96xf32>
    %47 = vector.broadcast %41 : vector<1x96xf32> to vector<8x96xf32>
    %48 = arith.addf %46, %47 : vector<8x96xf32>
    %49 = vector.extract_strided_slice %48 {offsets = [0, 0], sizes = [8, 32], strides = [1, 1]} : vector<8x96xf32> to vector<8x32xf32>
    %50 = vector.extract_strided_slice %48 {offsets = [0, 32], sizes = [8, 32], strides = [1, 1]} : vector<8x96xf32> to vector<8x32xf32>
    %51 = vector.extract_strided_slice %48 {offsets = [0, 64], sizes = [8, 32], strides = [1, 1]} : vector<8x96xf32> to vector<8x32xf32>
    %52 = vector.extract_strided_slice %49 {offsets = [0, 0], sizes = [8, 8], strides = [1, 1]} : vector<8x32xf32> to vector<8x8xf32>
    %53 = vector.extract_strided_slice %50 {offsets = [0, 0], sizes = [8, 8], strides = [1, 1]} : vector<8x32xf32> to vector<8x8xf32>
    %54 = vector.extract_strided_slice %51 {offsets = [0, 0], sizes = [8, 8], strides = [1, 1]} : vector<8x32xf32> to vector<8x8xf32>
    %cst_32 = arith.constant dense<0.000000e+00> : vector<8x8xf32>
    %55 = tpu.matmul %52, %53, %cst_32 {dimension_numbers = #tpu.dot_dimension_numbers<[1], [1], [0], [0], [0, 0, 1, 0], [], []>} : vector<8x8xf32>, vector<8x8xf32>, vector<8x8xf32> -> vector<8x8xf32>
    %56 = arith.addf %55, %9 : vector<8x8xf32>
    %cst_33 = arith.constant dense<0xFF800000> : vector<8xf32>
    %57 = vector.multi_reduction <maximumf>, %56, %cst_33 [1] : vector<8x8xf32> to vector<8xf32>
    %58 = vector.shape_cast %57 : vector<8xf32> to vector<8x1xf32>
    %59 = vector.broadcast %58 : vector<8x1xf32> to vector<8x8xf32>
    %60 = arith.subf %56, %59 : vector<8x8xf32>
    %61 = math.exp %60 : vector<8x8xf32>
    %cst_34 = arith.constant dense<0.000000e+00> : vector<8xf32>
    %62 = vector.multi_reduction <add>, %61, %cst_34 [1] : vector<8x8xf32> to vector<8xf32>
    %63 = vector.shape_cast %62 : vector<8xf32> to vector<8x1xf32>
    %64 = vector.broadcast %63 : vector<8x1xf32> to vector<8x8xf32>
    %65 = arith.divf %61, %64 : vector<8x8xf32>
    %cst_35 = arith.constant dense<0.000000e+00> : vector<8x8xf32>
    %66 = tpu.matmul %65, %54, %cst_35 {dimension_numbers = #tpu.dot_dimension_numbers<[1], [0], [0], [1], [0, 0, 1, 1], [], []>} : vector<8x8xf32>, vector<8x8xf32>, vector<8x8xf32> -> vector<8x8xf32>
    %67 = vector.extract_strided_slice %49 {offsets = [0, 8], sizes = [8, 8], strides = [1, 1]} : vector<8x32xf32> to vector<8x8xf32>
    %68 = vector.extract_strided_slice %50 {offsets = [0, 8], sizes = [8, 8], strides = [1, 1]} : vector<8x32xf32> to vector<8x8xf32>
    %69 = vector.extract_strided_slice %51 {offsets = [0, 8], sizes = [8, 8], strides = [1, 1]} : vector<8x32xf32> to vector<8x8xf32>
    %cst_36 = arith.constant dense<0.000000e+00> : vector<8x8xf32>
    %70 = tpu.matmul %67, %68, %cst_36 {dimension_numbers = #tpu.dot_dimension_numbers<[1], [1], [0], [0], [0, 0, 1, 0], [], []>} : vector<8x8xf32>, vector<8x8xf32>, vector<8x8xf32> -> vector<8x8xf32>
    %71 = arith.addf %70, %9 : vector<8x8xf32>
    %cst_37 = arith.constant dense<0xFF800000> : vector<8xf32>
    %72 = vector.multi_reduction <maximumf>, %71, %cst_37 [1] : vector<8x8xf32> to vector<8xf32>
    %73 = vector.shape_cast %72 : vector<8xf32> to vector<8x1xf32>
    %74 = vector.broadcast %73 : vector<8x1xf32> to vector<8x8xf32>
    %75 = arith.subf %71, %74 : vector<8x8xf32>
    %76 = math.exp %75 : vector<8x8xf32>
    %cst_38 = arith.constant dense<0.000000e+00> : vector<8xf32>
    %77 = vector.multi_reduction <add>, %76, %cst_38 [1] : vector<8x8xf32> to vector<8xf32>
    %78 = vector.shape_cast %77 : vector<8xf32> to vector<8x1xf32>
    %79 = vector.broadcast %78 : vector<8x1xf32> to vector<8x8xf32>
    %80 = arith.divf %76, %79 : vector<8x8xf32>
    %cst_39 = arith.constant dense<0.000000e+00> : vector<8x8xf32>
    %81 = tpu.matmul %80, %69, %cst_39 {dimension_numbers = #tpu.dot_dimension_numbers<[1], [0], [0], [1], [0, 0, 1, 1], [], []>} : vector<8x8xf32>, vector<8x8xf32>, vector<8x8xf32> -> vector<8x8xf32>
    %82 = vector.extract_strided_slice %49 {offsets = [0, 16], sizes = [8, 8], strides = [1, 1]} : vector<8x32xf32> to vector<8x8xf32>
    %83 = vector.extract_strided_slice %50 {offsets = [0, 16], sizes = [8, 8], strides = [1, 1]} : vector<8x32xf32> to vector<8x8xf32>
    %84 = vector.extract_strided_slice %51 {offsets = [0, 16], sizes = [8, 8], strides = [1, 1]} : vector<8x32xf32> to vector<8x8xf32>
    %cst_40 = arith.constant dense<0.000000e+00> : vector<8x8xf32>
    %85 = tpu.matmul %82, %83, %cst_40 {dimension_numbers = #tpu.dot_dimension_numbers<[1], [1], [0], [0], [0, 0, 1, 0], [], []>} : vector<8x8xf32>, vector<8x8xf32>, vector<8x8xf32> -> vector<8x8xf32>
    %86 = arith.addf %85, %9 : vector<8x8xf32>
    %cst_41 = arith.constant dense<0xFF800000> : vector<8xf32>
    %87 = vector.multi_reduction <maximumf>, %86, %cst_41 [1] : vector<8x8xf32> to vector<8xf32>
    %88 = vector.shape_cast %87 : vector<8xf32> to vector<8x1xf32>
    %89 = vector.broadcast %88 : vector<8x1xf32> to vector<8x8xf32>
    %90 = arith.subf %86, %89 : vector<8x8xf32>
    %91 = math.exp %90 : vector<8x8xf32>
    %cst_42 = arith.constant dense<0.000000e+00> : vector<8xf32>
    %92 = vector.multi_reduction <add>, %91, %cst_42 [1] : vector<8x8xf32> to vector<8xf32>
    %93 = vector.shape_cast %92 : vector<8xf32> to vector<8x1xf32>
    %94 = vector.broadcast %93 : vector<8x1xf32> to vector<8x8xf32>
    %95 = arith.divf %91, %94 : vector<8x8xf32>
    %cst_43 = arith.constant dense<0.000000e+00> : vector<8x8xf32>
    %96 = tpu.matmul %95, %84, %cst_43 {dimension_numbers = #tpu.dot_dimension_numbers<[1], [0], [0], [1], [0, 0, 1, 1], [], []>} : vector<8x8xf32>, vector<8x8xf32>, vector<8x8xf32> -> vector<8x8xf32>
    %97 = vector.extract_strided_slice %49 {offsets = [0, 24], sizes = [8, 8], strides = [1, 1]} : vector<8x32xf32> to vector<8x8xf32>
    %98 = vector.extract_strided_slice %50 {offsets = [0, 24], sizes = [8, 8], strides = [1, 1]} : vector<8x32xf32> to vector<8x8xf32>
    %99 = vector.extract_strided_slice %51 {offsets = [0, 24], sizes = [8, 8], strides = [1, 1]} : vector<8x32xf32> to vector<8x8xf32>
    %cst_44 = arith.constant dense<0.000000e+00> : vector<8x8xf32>
    %100 = tpu.matmul %97, %98, %cst_44 {dimension_numbers = #tpu.dot_dimension_numbers<[1], [1], [0], [0], [0, 0, 1, 0], [], []>} : vector<8x8xf32>, vector<8x8xf32>, vector<8x8xf32> -> vector<8x8xf32>
    %101 = arith.addf %100, %9 : vector<8x8xf32>
    %cst_45 = arith.constant dense<0xFF800000> : vector<8xf32>
    %102 = vector.multi_reduction <maximumf>, %101, %cst_45 [1] : vector<8x8xf32> to vector<8xf32>
    %103 = vector.shape_cast %102 : vector<8xf32> to vector<8x1xf32>
    %104 = vector.broadcast %103 : vector<8x1xf32> to vector<8x8xf32>
    %105 = arith.subf %101, %104 : vector<8x8xf32>
    %106 = math.exp %105 : vector<8x8xf32>
    %cst_46 = arith.constant dense<0.000000e+00> : vector<8xf32>
    %107 = vector.multi_reduction <add>, %106, %cst_46 [1] : vector<8x8xf32> to vector<8xf32>
    %108 = vector.shape_cast %107 : vector<8xf32> to vector<8x1xf32>
    %109 = vector.broadcast %108 : vector<8x1xf32> to vector<8x8xf32>
    %110 = arith.divf %106, %109 : vector<8x8xf32>
    %cst_47 = arith.constant dense<0.000000e+00> : vector<8x8xf32>
    %111 = tpu.matmul %110, %99, %cst_47 {dimension_numbers = #tpu.dot_dimension_numbers<[1], [0], [0], [1], [0, 0, 1, 1], [], []>} : vector<8x8xf32>, vector<8x8xf32>, vector<8x8xf32> -> vector<8x8xf32>
    %112 = tpu.concatenate %66, %81, %96, %111 in 1 : vector<8x8xf32>, vector<8x8xf32>, vector<8x8xf32>, vector<8x8xf32> -> vector<8x32xf32>
    %cst_48 = arith.constant dense<0.000000e+00> : vector<8x32xf32>
    %113 = tpu.matmul %112, %43, %cst_48 {dimension_numbers = #tpu.dot_dimension_numbers<[1], [0], [0], [1], [0, 0, 1, 1], [], []>} : vector<8x32xf32>, vector<32x32xf32>, vector<8x32xf32> -> vector<8x32xf32>
    %114 = vector.broadcast %45 : vector<1x32xf32> to vector<8x32xf32>
    %115 = arith.addf %113, %114 : vector<8x32xf32>
    %116 = arith.addf %3, %115 : vector<8x32xf32>
    %117 = vector.extract_strided_slice %11 {offsets = [2, 0, 0], sizes = [1, 1, 32], strides = [1, 1, 1]} : vector<6x1x32xf32> to vector<1x1x32xf32>
    %118 = vector.shape_cast %117 : vector<1x1x32xf32> to vector<1x32xf32>
    %119 = vector.extract_strided_slice %11 {offsets = [3, 0, 0], sizes = [1, 1, 32], strides = [1, 1, 1]} : vector<6x1x32xf32> to vector<1x1x32xf32>
    %120 = vector.shape_cast %119 : vector<1x1x32xf32> to vector<1x32xf32>
    %cst_49 = arith.constant dense<0.000000e+00> : vector<8xf32>
    %121 = vector.multi_reduction <add>, %116, %cst_49 [1] : vector<8x32xf32> to vector<8xf32>
    %122 = vector.shape_cast %121 : vector<8xf32> to vector<8x1xf32>
    %cst_50 = arith.constant 3.200000e+01 : f32
    %123 = vector.broadcast %cst_50 : f32 to vector<8x1xf32>
    %124 = arith.divf %122, %123 : vector<8x1xf32>
    %125 = vector.broadcast %124 : vector<8x1xf32> to vector<8x32xf32>
    %126 = arith.subf %116, %125 : vector<8x32xf32>
    %127 = arith.mulf %126, %126 : vector<8x32xf32>
    %cst_51 = arith.constant dense<0.000000e+00> : vector<8xf32>
    %128 = vector.multi_reduction <add>, %127, %cst_51 [1] : vector<8x32xf32> to vector<8xf32>
    %129 = vector.shape_cast %128 : vector<8xf32> to vector<8x1xf32>
    %cst_52 = arith.constant 0.0322580636 : f32
    %130 = vector.broadcast %cst_52 : f32 to vector<8x1xf32>
    %131 = arith.mulf %129, %130 : vector<8x1xf32>
    %132 = vector.broadcast %124 : vector<8x1xf32> to vector<8x32xf32>
    %133 = arith.subf %116, %132 : vector<8x32xf32>
    %134 = vector.broadcast %118 : vector<1x32xf32> to vector<8x32xf32>
    %135 = arith.mulf %134, %133 : vector<8x32xf32>
    %136 = math.sqrt %131 : vector<8x1xf32>
    %cst_53 = arith.constant 9.99999997E-7 : f32
    %137 = vector.broadcast %cst_53 : f32 to vector<8x1xf32>
    %138 = arith.addf %136, %137 : vector<8x1xf32>
    %139 = vector.broadcast %138 : vector<8x1xf32> to vector<8x32xf32>
    %140 = arith.divf %135, %139 : vector<8x32xf32>
    %141 = vector.broadcast %120 : vector<1x32xf32> to vector<8x32xf32>
    %142 = arith.addf %140, %141 : vector<8x32xf32>
    %c0_54 = arith.constant 0 : index
    %c0_55 = arith.constant 0 : index
    %c0_56 = arith.constant 0 : index
    %143 = vector.load %arg11[%c0_54, %c0_55, %c0_56] : memref<1x32x96xf32, #tpu.memory_space<vmem>>, vector<1x32x96xf32>
    %144 = vector.shape_cast %143 : vector<1x32x96xf32> to vector<32x96xf32>
    %c0_57 = arith.constant 0 : index
    %c0_58 = arith.constant 0 : index
    %c0_59 = arith.constant 0 : index
    %145 = vector.load %arg12[%c0_57, %c0_58, %c0_59] : memref<1x1x96xf32, #tpu.memory_space<vmem>>, vector<1x1x96xf32>
    %146 = vector.shape_cast %145 : vector<1x1x96xf32> to vector<1x96xf32>
    %c0_60 = arith.constant 0 : index
    %c0_61 = arith.constant 0 : index
    %c0_62 = arith.constant 0 : index
    %147 = vector.load %arg13[%c0_60, %c0_61, %c0_62] : memref<1x32x32xf32, #tpu.memory_space<vmem>>, vector<1x32x32xf32>
    %148 = vector.shape_cast %147 : vector<1x32x32xf32> to vector<32x32xf32>
    %c0_63 = arith.constant 0 : index
    %c0_64 = arith.constant 0 : index
    %c0_65 = arith.constant 0 : index
    %149 = vector.load %arg14[%c0_63, %c0_64, %c0_65] : memref<1x1x32xf32, #tpu.memory_space<vmem>>, vector<1x1x32xf32>
    %150 = vector.shape_cast %149 : vector<1x1x32xf32> to vector<1x32xf32>
    %151 = vector.extract_strided_slice %144 {offsets = [0, 0], sizes = [32, 32], strides = [1, 1]} : vector<32x96xf32> to vector<32x32xf32>
    %cst_66 = arith.constant dense<0.000000e+00> : vector<8x32xf32>
    %152 = tpu.matmul %142, %151, %cst_66 {dimension_numbers = #tpu.dot_dimension_numbers<[1], [0], [0], [1], [0, 0, 1, 1], [], []>} : vector<8x32xf32>, vector<32x32xf32>, vector<8x32xf32> -> vector<8x32xf32>
    %153 = vector.extract_strided_slice %146 {offsets = [0, 0], sizes = [1, 32], strides = [1, 1]} : vector<1x96xf32> to vector<1x32xf32>
    %154 = vector.broadcast %153 : vector<1x32xf32> to vector<8x32xf32>
    %155 = arith.addf %152, %154 : vector<8x32xf32>
    %156 = vector.extract_strided_slice %144 {offsets = [0, 32], sizes = [32, 64], strides = [1, 1]} : vector<32x96xf32> to vector<32x64xf32>
    %cst_67 = arith.constant dense<0.000000e+00> : vector<11x64xf32>
    %157 = tpu.matmul %5, %156, %cst_67 {dimension_numbers = #tpu.dot_dimension_numbers<[1], [0], [0], [1], [0, 0, 1, 1], [], []>} : vector<11x32xf32>, vector<32x64xf32>, vector<11x64xf32> -> vector<11x64xf32>
    %158 = vector.extract_strided_slice %146 {offsets = [0, 32], sizes = [1, 64], strides = [1, 1]} : vector<1x96xf32> to vector<1x64xf32>
    %159 = vector.broadcast %158 : vector<1x64xf32> to vector<11x64xf32>
    %160 = arith.addf %157, %159 : vector<11x64xf32>
    %161 = vector.extract_strided_slice %160 {offsets = [0, 0], sizes = [11, 32], strides = [1, 1]} : vector<11x64xf32> to vector<11x32xf32>
    %162 = vector.extract_strided_slice %160 {offsets = [0, 32], sizes = [11, 32], strides = [1, 1]} : vector<11x64xf32> to vector<11x32xf32>
    %163 = vector.extract_strided_slice %155 {offsets = [0, 0], sizes = [8, 8], strides = [1, 1]} : vector<8x32xf32> to vector<8x8xf32>
    %164 = vector.extract_strided_slice %161 {offsets = [0, 0], sizes = [11, 8], strides = [1, 1]} : vector<11x32xf32> to vector<11x8xf32>
    %165 = vector.extract_strided_slice %162 {offsets = [0, 0], sizes = [11, 8], strides = [1, 1]} : vector<11x32xf32> to vector<11x8xf32>
    %cst_68 = arith.constant dense<0.000000e+00> : vector<8x11xf32>
    %166 = tpu.matmul %163, %164, %cst_68 {dimension_numbers = #tpu.dot_dimension_numbers<[1], [1], [0], [0], [0, 0, 1, 0], [], []>} : vector<8x8xf32>, vector<11x8xf32>, vector<8x11xf32> -> vector<8x11xf32>
    %167 = vector.broadcast %7 : vector<1x11xf32> to vector<8x11xf32>
    %168 = arith.addf %166, %167 : vector<8x11xf32>
    %cst_69 = arith.constant dense<0xFF800000> : vector<8xf32>
    %169 = vector.multi_reduction <maximumf>, %168, %cst_69 [1] : vector<8x11xf32> to vector<8xf32>
    %170 = vector.shape_cast %169 : vector<8xf32> to vector<8x1xf32>
    %171 = vector.broadcast %170 : vector<8x1xf32> to vector<8x11xf32>
    %172 = arith.subf %168, %171 : vector<8x11xf32>
    %173 = math.exp %172 : vector<8x11xf32>
    %cst_70 = arith.constant dense<0.000000e+00> : vector<8xf32>
    %174 = vector.multi_reduction <add>, %173, %cst_70 [1] : vector<8x11xf32> to vector<8xf32>
    %175 = vector.shape_cast %174 : vector<8xf32> to vector<8x1xf32>
    %176 = vector.broadcast %175 : vector<8x1xf32> to vector<8x11xf32>
    %177 = arith.divf %173, %176 : vector<8x11xf32>
    %cst_71 = arith.constant dense<0.000000e+00> : vector<8x8xf32>
    %178 = tpu.matmul %177, %165, %cst_71 {dimension_numbers = #tpu.dot_dimension_numbers<[1], [0], [0], [1], [0, 0, 1, 1], [], []>} : vector<8x11xf32>, vector<11x8xf32>, vector<8x8xf32> -> vector<8x8xf32>
    %179 = vector.extract_strided_slice %155 {offsets = [0, 8], sizes = [8, 8], strides = [1, 1]} : vector<8x32xf32> to vector<8x8xf32>
    %180 = vector.extract_strided_slice %161 {offsets = [0, 8], sizes = [11, 8], strides = [1, 1]} : vector<11x32xf32> to vector<11x8xf32>
    %181 = vector.extract_strided_slice %162 {offsets = [0, 8], sizes = [11, 8], strides = [1, 1]} : vector<11x32xf32> to vector<11x8xf32>
    %cst_72 = arith.constant dense<0.000000e+00> : vector<8x11xf32>
    %182 = tpu.matmul %179, %180, %cst_72 {dimension_numbers = #tpu.dot_dimension_numbers<[1], [1], [0], [0], [0, 0, 1, 0], [], []>} : vector<8x8xf32>, vector<11x8xf32>, vector<8x11xf32> -> vector<8x11xf32>
    %183 = vector.broadcast %7 : vector<1x11xf32> to vector<8x11xf32>
    %184 = arith.addf %182, %183 : vector<8x11xf32>
    %cst_73 = arith.constant dense<0xFF800000> : vector<8xf32>
    %185 = vector.multi_reduction <maximumf>, %184, %cst_73 [1] : vector<8x11xf32> to vector<8xf32>
    %186 = vector.shape_cast %185 : vector<8xf32> to vector<8x1xf32>
    %187 = vector.broadcast %186 : vector<8x1xf32> to vector<8x11xf32>
    %188 = arith.subf %184, %187 : vector<8x11xf32>
    %189 = math.exp %188 : vector<8x11xf32>
    %cst_74 = arith.constant dense<0.000000e+00> : vector<8xf32>
    %190 = vector.multi_reduction <add>, %189, %cst_74 [1] : vector<8x11xf32> to vector<8xf32>
    %191 = vector.shape_cast %190 : vector<8xf32> to vector<8x1xf32>
    %192 = vector.broadcast %191 : vector<8x1xf32> to vector<8x11xf32>
    %193 = arith.divf %189, %192 : vector<8x11xf32>
    %cst_75 = arith.constant dense<0.000000e+00> : vector<8x8xf32>
    %194 = tpu.matmul %193, %181, %cst_75 {dimension_numbers = #tpu.dot_dimension_numbers<[1], [0], [0], [1], [0, 0, 1, 1], [], []>} : vector<8x11xf32>, vector<11x8xf32>, vector<8x8xf32> -> vector<8x8xf32>
    %195 = vector.extract_strided_slice %155 {offsets = [0, 16], sizes = [8, 8], strides = [1, 1]} : vector<8x32xf32> to vector<8x8xf32>
    %196 = vector.extract_strided_slice %161 {offsets = [0, 16], sizes = [11, 8], strides = [1, 1]} : vector<11x32xf32> to vector<11x8xf32>
    %197 = vector.extract_strided_slice %162 {offsets = [0, 16], sizes = [11, 8], strides = [1, 1]} : vector<11x32xf32> to vector<11x8xf32>
    %cst_76 = arith.constant dense<0.000000e+00> : vector<8x11xf32>
    %198 = tpu.matmul %195, %196, %cst_76 {dimension_numbers = #tpu.dot_dimension_numbers<[1], [1], [0], [0], [0, 0, 1, 0], [], []>} : vector<8x8xf32>, vector<11x8xf32>, vector<8x11xf32> -> vector<8x11xf32>
    %199 = vector.broadcast %7 : vector<1x11xf32> to vector<8x11xf32>
    %200 = arith.addf %198, %199 : vector<8x11xf32>
    %cst_77 = arith.constant dense<0xFF800000> : vector<8xf32>
    %201 = vector.multi_reduction <maximumf>, %200, %cst_77 [1] : vector<8x11xf32> to vector<8xf32>
    %202 = vector.shape_cast %201 : vector<8xf32> to vector<8x1xf32>
    %203 = vector.broadcast %202 : vector<8x1xf32> to vector<8x11xf32>
    %204 = arith.subf %200, %203 : vector<8x11xf32>
    %205 = math.exp %204 : vector<8x11xf32>
    %cst_78 = arith.constant dense<0.000000e+00> : vector<8xf32>
    %206 = vector.multi_reduction <add>, %205, %cst_78 [1] : vector<8x11xf32> to vector<8xf32>
    %207 = vector.shape_cast %206 : vector<8xf32> to vector<8x1xf32>
    %208 = vector.broadcast %207 : vector<8x1xf32> to vector<8x11xf32>
    %209 = arith.divf %205, %208 : vector<8x11xf32>
    %cst_79 = arith.constant dense<0.000000e+00> : vector<8x8xf32>
    %210 = tpu.matmul %209, %197, %cst_79 {dimension_numbers = #tpu.dot_dimension_numbers<[1], [0], [0], [1], [0, 0, 1, 1], [], []>} : vector<8x11xf32>, vector<11x8xf32>, vector<8x8xf32> -> vector<8x8xf32>
    %211 = vector.extract_strided_slice %155 {offsets = [0, 24], sizes = [8, 8], strides = [1, 1]} : vector<8x32xf32> to vector<8x8xf32>
    %212 = vector.extract_strided_slice %161 {offsets = [0, 24], sizes = [11, 8], strides = [1, 1]} : vector<11x32xf32> to vector<11x8xf32>
    %213 = vector.extract_strided_slice %162 {offsets = [0, 24], sizes = [11, 8], strides = [1, 1]} : vector<11x32xf32> to vector<11x8xf32>
    %cst_80 = arith.constant dense<0.000000e+00> : vector<8x11xf32>
    %214 = tpu.matmul %211, %212, %cst_80 {dimension_numbers = #tpu.dot_dimension_numbers<[1], [1], [0], [0], [0, 0, 1, 0], [], []>} : vector<8x8xf32>, vector<11x8xf32>, vector<8x11xf32> -> vector<8x11xf32>
    %215 = vector.broadcast %7 : vector<1x11xf32> to vector<8x11xf32>
    %216 = arith.addf %214, %215 : vector<8x11xf32>
    %cst_81 = arith.constant dense<0xFF800000> : vector<8xf32>
    %217 = vector.multi_reduction <maximumf>, %216, %cst_81 [1] : vector<8x11xf32> to vector<8xf32>
    %218 = vector.shape_cast %217 : vector<8xf32> to vector<8x1xf32>
    %219 = vector.broadcast %218 : vector<8x1xf32> to vector<8x11xf32>
    %220 = arith.subf %216, %219 : vector<8x11xf32>
    %221 = math.exp %220 : vector<8x11xf32>
    %cst_82 = arith.constant dense<0.000000e+00> : vector<8xf32>
    %222 = vector.multi_reduction <add>, %221, %cst_82 [1] : vector<8x11xf32> to vector<8xf32>
    %223 = vector.shape_cast %222 : vector<8xf32> to vector<8x1xf32>
    %224 = vector.broadcast %223 : vector<8x1xf32> to vector<8x11xf32>
    %225 = arith.divf %221, %224 : vector<8x11xf32>
    %cst_83 = arith.constant dense<0.000000e+00> : vector<8x8xf32>
    %226 = tpu.matmul %225, %213, %cst_83 {dimension_numbers = #tpu.dot_dimension_numbers<[1], [0], [0], [1], [0, 0, 1, 1], [], []>} : vector<8x11xf32>, vector<11x8xf32>, vector<8x8xf32> -> vector<8x8xf32>
    %227 = tpu.concatenate %178, %194, %210, %226 in 1 : vector<8x8xf32>, vector<8x8xf32>, vector<8x8xf32>, vector<8x8xf32> -> vector<8x32xf32>
    %cst_84 = arith.constant dense<0.000000e+00> : vector<8x32xf32>
    %228 = tpu.matmul %227, %148, %cst_84 {dimension_numbers = #tpu.dot_dimension_numbers<[1], [0], [0], [1], [0, 0, 1, 1], [], []>} : vector<8x32xf32>, vector<32x32xf32>, vector<8x32xf32> -> vector<8x32xf32>
    %229 = vector.broadcast %150 : vector<1x32xf32> to vector<8x32xf32>
    %230 = arith.addf %228, %229 : vector<8x32xf32>
    %231 = arith.addf %116, %230 : vector<8x32xf32>
    %232 = vector.extract_strided_slice %11 {offsets = [4, 0, 0], sizes = [1, 1, 32], strides = [1, 1, 1]} : vector<6x1x32xf32> to vector<1x1x32xf32>
    %233 = vector.shape_cast %232 : vector<1x1x32xf32> to vector<1x32xf32>
    %234 = vector.extract_strided_slice %11 {offsets = [5, 0, 0], sizes = [1, 1, 32], strides = [1, 1, 1]} : vector<6x1x32xf32> to vector<1x1x32xf32>
    %235 = vector.shape_cast %234 : vector<1x1x32xf32> to vector<1x32xf32>
    %cst_85 = arith.constant dense<0.000000e+00> : vector<8xf32>
    %236 = vector.multi_reduction <add>, %231, %cst_85 [1] : vector<8x32xf32> to vector<8xf32>
    %237 = vector.shape_cast %236 : vector<8xf32> to vector<8x1xf32>
    %cst_86 = arith.constant 3.200000e+01 : f32
    %238 = vector.broadcast %cst_86 : f32 to vector<8x1xf32>
    %239 = arith.divf %237, %238 : vector<8x1xf32>
    %240 = vector.broadcast %239 : vector<8x1xf32> to vector<8x32xf32>
    %241 = arith.subf %231, %240 : vector<8x32xf32>
    %242 = arith.mulf %241, %241 : vector<8x32xf32>
    %cst_87 = arith.constant dense<0.000000e+00> : vector<8xf32>
    %243 = vector.multi_reduction <add>, %242, %cst_87 [1] : vector<8x32xf32> to vector<8xf32>
    %244 = vector.shape_cast %243 : vector<8xf32> to vector<8x1xf32>
    %cst_88 = arith.constant 0.0322580636 : f32
    %245 = vector.broadcast %cst_88 : f32 to vector<8x1xf32>
    %246 = arith.mulf %244, %245 : vector<8x1xf32>
    %247 = vector.broadcast %239 : vector<8x1xf32> to vector<8x32xf32>
    %248 = arith.subf %231, %247 : vector<8x32xf32>
    %249 = vector.broadcast %233 : vector<1x32xf32> to vector<8x32xf32>
    %250 = arith.mulf %249, %248 : vector<8x32xf32>
    %251 = math.sqrt %246 : vector<8x1xf32>
    %cst_89 = arith.constant 9.99999997E-7 : f32
    %252 = vector.broadcast %cst_89 : f32 to vector<8x1xf32>
    %253 = arith.addf %251, %252 : vector<8x1xf32>
    %254 = vector.broadcast %253 : vector<8x1xf32> to vector<8x32xf32>
    %255 = arith.divf %250, %254 : vector<8x32xf32>
    %256 = vector.broadcast %235 : vector<1x32xf32> to vector<8x32xf32>
    %257 = arith.addf %255, %256 : vector<8x32xf32>
    %c0_90 = arith.constant 0 : index
    %c0_91 = arith.constant 0 : index
    %c0_92 = arith.constant 0 : index
    %258 = vector.load %arg15[%c0_90, %c0_91, %c0_92] : memref<1x32x64xf32, #tpu.memory_space<vmem>>, vector<1x32x64xf32>
    %259 = vector.shape_cast %258 : vector<1x32x64xf32> to vector<32x64xf32>
    %c0_93 = arith.constant 0 : index
    %c0_94 = arith.constant 0 : index
    %c0_95 = arith.constant 0 : index
    %260 = vector.load %arg16[%c0_93, %c0_94, %c0_95] : memref<1x1x64xf32, #tpu.memory_space<vmem>>, vector<1x1x64xf32>
    %261 = vector.shape_cast %260 : vector<1x1x64xf32> to vector<1x64xf32>
    %c0_96 = arith.constant 0 : index
    %c0_97 = arith.constant 0 : index
    %c0_98 = arith.constant 0 : index
    %262 = vector.load %arg17[%c0_96, %c0_97, %c0_98] : memref<1x64x32xf32, #tpu.memory_space<vmem>>, vector<1x64x32xf32>
    %263 = vector.shape_cast %262 : vector<1x64x32xf32> to vector<64x32xf32>
    %c0_99 = arith.constant 0 : index
    %c0_100 = arith.constant 0 : index
    %c0_101 = arith.constant 0 : index
    %264 = vector.load %arg18[%c0_99, %c0_100, %c0_101] : memref<1x1x32xf32, #tpu.memory_space<vmem>>, vector<1x1x32xf32>
    %265 = vector.shape_cast %264 : vector<1x1x32xf32> to vector<1x32xf32>
    %cst_102 = arith.constant dense<0.000000e+00> : vector<8x64xf32>
    %266 = tpu.matmul %257, %259, %cst_102 {dimension_numbers = #tpu.dot_dimension_numbers<[1], [0], [0], [1], [0, 0, 1, 1], [], []>} : vector<8x32xf32>, vector<32x64xf32>, vector<8x64xf32> -> vector<8x64xf32>
    %267 = vector.broadcast %261 : vector<1x64xf32> to vector<8x64xf32>
    %268 = arith.addf %266, %267 : vector<8x64xf32>
    %cst_103 = arith.constant 0.000000e+00 : f32
    %269 = vector.broadcast %cst_103 : f32 to vector<8x64xf32>
    %270 = arith.maximumf %268, %269 : vector<8x64xf32>
    %cst_104 = arith.constant dense<0.000000e+00> : vector<8x32xf32>
    %271 = tpu.matmul %270, %263, %cst_104 {dimension_numbers = #tpu.dot_dimension_numbers<[1], [0], [0], [1], [0, 0, 1, 1], [], []>} : vector<8x64xf32>, vector<64x32xf32>, vector<8x32xf32> -> vector<8x32xf32>
    %272 = vector.broadcast %265 : vector<1x32xf32> to vector<8x32xf32>
    %273 = arith.addf %271, %272 : vector<8x32xf32>
    %274 = arith.addf %231, %273 : vector<8x32xf32>
    %c0_105 = arith.constant 0 : index
    %c0_106 = arith.constant 0 : index
    %275 = vector.load %arg20[%c0_105, %c0_106] : memref<8x32xf32, #tpu.memory_space<vmem>>, vector<8x32xf32>
    tpu.vector_store %arg20[%c0_105, %c0_106], %274 {strides = array<i32>} : memref<8x32xf32, #tpu.memory_space<vmem>>, vector<8x32xf32>,
    %c1_i32 = arith.constant 1 : i32
    %276 = arith.cmpi eq, %arg1, %c1_i32 : i32
    %277 = arith.extui %276 : i1 to i32
    %c0_i32_107 = arith.constant 0 : i32
    %278 = arith.cmpi ne, %277, %c0_i32_107 : i32
    scf.if %278 {
      %c0_108 = arith.constant 0 : index
      %c0_109 = arith.constant 0 : index
      %c0_110 = arith.constant 0 : index
      %279 = vector.load %arg19[%c0_108, %c0_109, %c0_110] : memref<1x8x32xf32, #tpu.memory_space<vmem>>, vector<1x8x32xf32>
      %280 = vector.shape_cast %279 : vector<1x8x32xf32> to vector<8x32xf32>
      %281 = vector.shape_cast %274 : vector<8x32xf32> to vector<1x8x32xf32>
      tpu.vector_store %arg19[%c0_108, %c0_109, %c0_110], %281 {strides = array<i32>} : memref<1x8x32xf32, #tpu.memory_space<vmem>>, vector<1x8x32xf32>,
    } else {
    }
    return
  }
  func.func @transform_0(%arg0: i32, %arg1: i32) -> (i32, i32, i32) {
    %c0_i32 = arith.constant 0 : i32
    %c0_i32_0 = arith.constant 0 : i32
    %c0_i32_1 = arith.constant 0 : i32
    return %arg0, %c0_i32, %c0_i32_0 : i32, i32, i32
  }
  func.func @transform_1(%arg0: i32, %arg1: i32) -> (i32, i32, i32) {
    %c0_i32 = arith.constant 0 : i32
    %c0_i32_0 = arith.constant 0 : i32
    %c0_i32_1 = arith.constant 0 : i32
    return %arg0, %c0_i32, %c0_i32_0 : i32, i32, i32
  }
  func.func @transform_2(%arg0: i32, %arg1: i32) -> (i32, i32, i32) {
    %c0_i32 = arith.constant 0 : i32
    %c0_i32_0 = arith.constant 0 : i32
    %c0_i32_1 = arith.constant 0 : i32
    return %arg0, %c0_i32, %c0_i32_0 : i32, i32, i32
  }
  func.func @transform_3(%arg0: i32, %arg1: i32) -> (i32, i32, i32) {
    %c0_i32 = arith.constant 0 : i32
    %c0_i32_0 = arith.constant 0 : i32
    %c0_i32_1 = arith.constant 0 : i32
    return %arg0, %c0_i32, %c0_i32_0 : i32, i32, i32
  }
  func.func @transform_4(%arg0: i32, %arg1: i32) -> (i32, i32, i32, i32) {
    %c0_i32 = arith.constant 0 : i32
    %c0_i32_0 = arith.constant 0 : i32
    %c0_i32_1 = arith.constant 0 : i32
    %c0_i32_2 = arith.constant 0 : i32
    return %arg1, %c0_i32, %c0_i32_0, %c0_i32_1 : i32, i32, i32, i32
  }
  func.func @transform_5(%arg0: i32, %arg1: i32) -> (i32, i32, i32) {
    %c0_i32 = arith.constant 0 : i32
    %c0_i32_0 = arith.constant 0 : i32
    %c0_i32_1 = arith.constant 0 : i32
    return %arg1, %c0_i32, %c0_i32_0 : i32, i32, i32
  }
  func.func @transform_6(%arg0: i32, %arg1: i32) -> (i32, i32, i32) {
    %c0_i32 = arith.constant 0 : i32
    %c0_i32_0 = arith.constant 0 : i32
    %c0_i32_1 = arith.constant 0 : i32
    return %arg1, %c0_i32, %c0_i32_0 : i32, i32, i32
  }
  func.func @transform_7(%arg0: i32, %arg1: i32) -> (i32, i32, i32) {
    %c0_i32 = arith.constant 0 : i32
    %c0_i32_0 = arith.constant 0 : i32
    %c0_i32_1 = arith.constant 0 : i32
    return %arg1, %c0_i32, %c0_i32_0 : i32, i32, i32
  }
  func.func @transform_8(%arg0: i32, %arg1: i32) -> (i32, i32, i32) {
    %c0_i32 = arith.constant 0 : i32
    %c0_i32_0 = arith.constant 0 : i32
    %c0_i32_1 = arith.constant 0 : i32
    return %arg1, %c0_i32, %c0_i32_0 : i32, i32, i32
  }
  func.func @transform_9(%arg0: i32, %arg1: i32) -> (i32, i32, i32) {
    %c0_i32 = arith.constant 0 : i32
    %c0_i32_0 = arith.constant 0 : i32
    %c0_i32_1 = arith.constant 0 : i32
    return %arg1, %c0_i32, %c0_i32_0 : i32, i32, i32
  }
  func.func @transform_10(%arg0: i32, %arg1: i32) -> (i32, i32, i32) {
    %c0_i32 = arith.constant 0 : i32
    %c0_i32_0 = arith.constant 0 : i32
    %c0_i32_1 = arith.constant 0 : i32
    return %arg1, %c0_i32, %c0_i32_0 : i32, i32, i32
  }
  func.func @transform_11(%arg0: i32, %arg1: i32) -> (i32, i32, i32) {
    %c0_i32 = arith.constant 0 : i32
    %c0_i32_0 = arith.constant 0 : i32
    %c0_i32_1 = arith.constant 0 : i32
    return %arg1, %c0_i32, %c0_i32_0 : i32, i32, i32
  }
  func.func @transform_12(%arg0: i32, %arg1: i32) -> (i32, i32, i32) {
    %c0_i32 = arith.constant 0 : i32
    %c0_i32_0 = arith.constant 0 : i32
    %c0_i32_1 = arith.constant 0 : i32
    return %arg1, %c0_i32, %c0_i32_0 : i32, i32, i32
  }
  func.func @transform_13(%arg0: i32, %arg1: i32) -> (i32, i32, i32) {
    %c0_i32 = arith.constant 0 : i32
    %c0_i32_0 = arith.constant 0 : i32
    %c0_i32_1 = arith.constant 0 : i32
    return %arg1, %c0_i32, %c0_i32_0 : i32, i32, i32
  }
  func.func @transform_14(%arg0: i32, %arg1: i32) -> (i32, i32, i32) {
    %c0_i32 = arith.constant 0 : i32
    %c0_i32_0 = arith.constant 0 : i32
    %c0_i32_1 = arith.constant 0 : i32
    return %arg1, %c0_i32, %c0_i32_0 : i32, i32, i32
  }
  func.func @transform_15(%arg0: i32, %arg1: i32) -> (i32, i32, i32) {
    %c0_i32 = arith.constant 0 : i32
    %c0_i32_0 = arith.constant 0 : i32
    %c0_i32_1 = arith.constant 0 : i32
    return %arg1, %c0_i32, %c0_i32_0 : i32, i32, i32
  }
  func.func @transform_16(%arg0: i32, %arg1: i32) -> (i32, i32, i32) {
    %c0_i32 = arith.constant 0 : i32
    %c0_i32_0 = arith.constant 0 : i32
    %c0_i32_1 = arith.constant 0 : i32
    return %arg1, %c0_i32, %c0_i32_0 : i32, i32, i32
  }
  func.func @transform_17(%arg0: i32, %arg1: i32) -> (i32, i32, i32) {
    %c0_i32 = arith.constant 0 : i32
    %c0_i32_0 = arith.constant 0 : i32
    %c0_i32_1 = arith.constant 0 : i32
    return %arg0, %c0_i32, %c0_i32_0 : i32, i32, i32
  }
}

module attributes {stable_mosaic.version = 11 : i64} {
  func.func @_norm_linear_kernel(%arg0: i32, %arg1: memref<16x32xf32, #tpu.memory_space<vmem>>, %arg2: memref<1x32xf32, #tpu.memory_space<vmem>>, %arg3: memref<1x32xf32, #tpu.memory_space<vmem>>, %arg4: memref<32x28xf32, #tpu.memory_space<vmem>>, %arg5: memref<1x28xf32, #tpu.memory_space<vmem>>, %arg6: memref<16x28xf32, #tpu.memory_space<vmem>>) attributes {dimension_semantics = [#tpu.dimension_semantics<arbitrary>], iteration_bounds = array<i64: 1>, scalar_prefetch = 0 : i64, scratch_operands = 0 : i64, tpu.core_type = #tpu.core_type<tc>, window_params = [{pipeline_mode = #tpu.pipeline_mode<synchronous>, transform_indices = @transform_0, window_bounds = array<i64: 16, 32>}, {pipeline_mode = #tpu.pipeline_mode<synchronous>, transform_indices = @transform_1, window_bounds = array<i64: 1, 32>}, {pipeline_mode = #tpu.pipeline_mode<synchronous>, transform_indices = @transform_2, window_bounds = array<i64: 1, 32>}, {pipeline_mode = #tpu.pipeline_mode<synchronous>, transform_indices = @transform_3, window_bounds = array<i64: 32, 28>}, {pipeline_mode = #tpu.pipeline_mode<synchronous>, transform_indices = @transform_4, window_bounds = array<i64: 1, 28>}, {pipeline_mode = #tpu.pipeline_mode<synchronous>, transform_indices = @transform_5, window_bounds = array<i64: 16, 28>}]} {
    %c0 = arith.constant 0 : index
    %c0_0 = arith.constant 0 : index
    %0 = vector.load %arg1[%c0, %c0_0] : memref<16x32xf32, #tpu.memory_space<vmem>>, vector<16x32xf32>
    %c0_1 = arith.constant 0 : index
    %c0_2 = arith.constant 0 : index
    %1 = vector.load %arg2[%c0_1, %c0_2] : memref<1x32xf32, #tpu.memory_space<vmem>>, vector<1x32xf32>
    %c0_3 = arith.constant 0 : index
    %c0_4 = arith.constant 0 : index
    %2 = vector.load %arg3[%c0_3, %c0_4] : memref<1x32xf32, #tpu.memory_space<vmem>>, vector<1x32xf32>
    %cst = arith.constant dense<0.000000e+00> : vector<16xf32>
    %3 = vector.multi_reduction <add>, %0, %cst [1] : vector<16x32xf32> to vector<16xf32>
    %4 = vector.shape_cast %3 : vector<16xf32> to vector<16x1xf32>
    %cst_5 = arith.constant 3.200000e+01 : f32
    %5 = vector.broadcast %cst_5 : f32 to vector<16x1xf32>
    %6 = arith.divf %4, %5 : vector<16x1xf32>
    %7 = vector.broadcast %6 : vector<16x1xf32> to vector<16x32xf32>
    %8 = arith.subf %0, %7 : vector<16x32xf32>
    %9 = arith.mulf %8, %8 : vector<16x32xf32>
    %cst_6 = arith.constant dense<0.000000e+00> : vector<16xf32>
    %10 = vector.multi_reduction <add>, %9, %cst_6 [1] : vector<16x32xf32> to vector<16xf32>
    %11 = vector.shape_cast %10 : vector<16xf32> to vector<16x1xf32>
    %cst_7 = arith.constant 0.0322580636 : f32
    %12 = vector.broadcast %cst_7 : f32 to vector<16x1xf32>
    %13 = arith.mulf %11, %12 : vector<16x1xf32>
    %14 = vector.broadcast %6 : vector<16x1xf32> to vector<16x32xf32>
    %15 = arith.subf %0, %14 : vector<16x32xf32>
    %16 = vector.broadcast %1 : vector<1x32xf32> to vector<16x32xf32>
    %17 = arith.mulf %16, %15 : vector<16x32xf32>
    %18 = math.sqrt %13 : vector<16x1xf32>
    %cst_8 = arith.constant 9.99999997E-7 : f32
    %19 = vector.broadcast %cst_8 : f32 to vector<16x1xf32>
    %20 = arith.addf %18, %19 : vector<16x1xf32>
    %21 = vector.broadcast %20 : vector<16x1xf32> to vector<16x32xf32>
    %22 = arith.divf %17, %21 : vector<16x32xf32>
    %23 = vector.broadcast %2 : vector<1x32xf32> to vector<16x32xf32>
    %24 = arith.addf %22, %23 : vector<16x32xf32>
    %c0_9 = arith.constant 0 : index
    %c0_10 = arith.constant 0 : index
    %25 = vector.load %arg4[%c0_9, %c0_10] : memref<32x28xf32, #tpu.memory_space<vmem>>, vector<32x28xf32>
    %cst_11 = arith.constant dense<0.000000e+00> : vector<16x28xf32>
    %26 = tpu.matmul %24, %25, %cst_11 {dimension_numbers = #tpu.dot_dimension_numbers<[1], [0], [0], [1], [0, 0, 1, 1], [], []>} : vector<16x32xf32>, vector<32x28xf32>, vector<16x28xf32> -> vector<16x28xf32>
    %c0_12 = arith.constant 0 : index
    %c0_13 = arith.constant 0 : index
    %27 = vector.load %arg5[%c0_12, %c0_13] : memref<1x28xf32, #tpu.memory_space<vmem>>, vector<1x28xf32>
    %28 = vector.broadcast %27 : vector<1x28xf32> to vector<16x28xf32>
    %29 = arith.addf %26, %28 : vector<16x28xf32>
    %c0_14 = arith.constant 0 : index
    %c0_15 = arith.constant 0 : index
    %30 = vector.load %arg6[%c0_14, %c0_15] : memref<16x28xf32, #tpu.memory_space<vmem>>, vector<16x28xf32>
    tpu.vector_store %arg6[%c0_14, %c0_15], %29 {strides = array<i32>} : memref<16x28xf32, #tpu.memory_space<vmem>>, vector<16x28xf32>,
    return
  }
  func.func @transform_0(%arg0: i32) -> (i32, i32) {
    %c0_i32 = arith.constant 0 : i32
    %c0_i32_0 = arith.constant 0 : i32
    %c0_i32_1 = arith.constant 0 : i32
    return %c0_i32, %c0_i32_0 : i32, i32
  }
  func.func @transform_1(%arg0: i32) -> (i32, i32) {
    %c0_i32 = arith.constant 0 : i32
    %c0_i32_0 = arith.constant 0 : i32
    %c0_i32_1 = arith.constant 0 : i32
    return %c0_i32, %c0_i32_0 : i32, i32
  }
  func.func @transform_2(%arg0: i32) -> (i32, i32) {
    %c0_i32 = arith.constant 0 : i32
    %c0_i32_0 = arith.constant 0 : i32
    %c0_i32_1 = arith.constant 0 : i32
    return %c0_i32, %c0_i32_0 : i32, i32
  }
  func.func @transform_3(%arg0: i32) -> (i32, i32) {
    %c0_i32 = arith.constant 0 : i32
    %c0_i32_0 = arith.constant 0 : i32
    %c0_i32_1 = arith.constant 0 : i32
    return %c0_i32, %c0_i32_0 : i32, i32
  }
  func.func @transform_4(%arg0: i32) -> (i32, i32) {
    %c0_i32 = arith.constant 0 : i32
    %c0_i32_0 = arith.constant 0 : i32
    %c0_i32_1 = arith.constant 0 : i32
    return %c0_i32, %c0_i32_0 : i32, i32
  }
  func.func @transform_5(%arg0: i32) -> (i32, i32) {
    %c0_i32 = arith.constant 0 : i32
    %c0_i32_0 = arith.constant 0 : i32
    %c0_i32_1 = arith.constant 0 : i32
    return %c0_i32, %c0_i32_0 : i32, i32
  }
}

</mosaic_0001>

<llo_original>
// kernel: _lambda_.5
$region0: #{_lambda_.5}
  #allocation0 [shape = 'u32[]', space=smem, size = 0x4, offset = 0x4, fixed_abs, tag = 'smem constant byte address 0x4 - core index']
  #allocation1 [shape = 'u32[144,128]{1,0:T(1,128)}', space=vmem, size = 0x12000, scoped, tag = 'internal scratch']
  %s0 = inlined_call_operand.vmem [shape: f32[22,32], index: 0, kind: input, shape index: {}]
  %s1 = inlined_call_operand.vmem [shape: f32[1,32], index: 1, kind: input, shape index: {}]
  %s2 = inlined_call_operand.vmem [shape: f32[1,32], index: 2, kind: input, shape index: {}]
  %s3 = inlined_call_operand.vmem [shape: f32[32,32], index: 3, kind: input, shape index: {}]
  %s4 = inlined_call_operand.vmem [shape: f32[1,32], index: 4, kind: input, shape index: {}]
  %s5 = inlined_call_operand.vmem [shape: f32[22,32], index: 5, kind: output, shape index: {}]
  %s6 = sld [smem:[#allocation0]]
  $region30: #{_lambda_.5} parent=0
    _
  %s8 = ssub.s32 1, %s6
  %s9 = scalar_select 0, %s8, %s6
  // Predicated region
  $region2: #{_lambda_.5} parent=0 // pred_check
    _
  $region3: #{_lambda_.5} parent=0 // pred_check_branch
    %11 = sbr.rel (0) target = $region5
  $region4: #{_lambda_.5} parent=0 // pred_region
    _
  $region5: #{_lambda_.5} parent=0 // pred_fallthru
    _
  // Predicated region
  $region6: #{_lambda_.5} parent=0 // pred_check
    _
  $region7: #{_lambda_.5} parent=0 // pred_check_branch
    %13 = sbr.rel (0) target = $region9
  $region8: #{_lambda_.5} parent=0 // pred_region
    _
  $region9: #{_lambda_.5} parent=0 // pred_fallthru
    _
  // Predicated region
  $region10: #{_lambda_.5} parent=0 // pred_check
    _
  $region11: #{_lambda_.5} parent=0 // pred_check_branch
    %15 = sbr.rel (0) target = $region13
  $region12: #{_lambda_.5} parent=0 // pred_region
    _
  $region13: #{_lambda_.5} parent=0 // pred_fallthru
    _
  // Predicated region
  $region14: #{_lambda_.5} parent=0 // pred_check
    _
  $region15: #{_lambda_.5} parent=0 // pred_check_branch
    %17 = sbr.rel (0) target = $region17
  $region16: #{_lambda_.5} parent=0 // pred_region
    _
  $region17: #{_lambda_.5} parent=0 // pred_fallthru
    _
  // Predicated region
  $region18: #{_lambda_.5} parent=0 // pred_check
    _
  $region19: #{_lambda_.5} parent=0 // pred_check_branch
    %19 = sbr.rel (0) target = $region21
  $region20: #{_lambda_.5} parent=0 // pred_region
    _
  $region21: #{_lambda_.5} parent=0 // pred_fallthru
    _
  %v20 = vld [vmem:[%s0] sm:$0xff]
  %v21 = vld [vmem:[%s0 + $0x8] sm:$0xff]
  %v22 = vld [vmem:[%s0 + $0x10] sm:$0x3f]
  %v23 = vld [vmem:[%s1] sm:$0x1]
  %v24 = vld [vmem:[%s2] sm:$0x1]
  %vm25 = vcmask 261120
  %v26 = vsel %vm25, %v20, 0.0
  %27 = vadd.xlane.f32.xlu0 %v26
  %v28 = vpop.xlane.xlu0 %27
  %v29 = vsel %vm25, %v21, 0.0
  %30 = vadd.xlane.f32.xlu0 %v29
  %v31 = vpop.xlane.xlu0 %30
  %vm32 = vcmask 259072
  %v33 = vsel %vm32, %v22, 0.0
  %34 = vadd.xlane.f32.xlu0 %v33
  %v35 = vpop.xlane.xlu0 %34
  %v36 = vrcp.pop 32.0
  %v37 = vmul.f32 %v28, %v36
  %v38 = vmul.f32 %v31, %v36
  %v39 = vmul.f32 %v35, %v36
  %v40 = vsub.f32 %v20, %v37
  %v41 = vsub.f32 %v21, %v38
  %v42 = vsub.f32 %v22, %v39
  %v43 = vmul.f32 %v40, %v40
  %v44 = vmul.f32 %v41, %v41
  %v45 = vmul.f32 %v42, %v42
  %v46 = vsel %vm25, %v43, 0.0
  %47 = vadd.xlane.f32.xlu0 %v46
  %v48 = vpop.xlane.xlu0 %47
  %v49 = vsel %vm25, %v44, 0.0
  %50 = vadd.xlane.f32.xlu0 %v49
  %v51 = vpop.xlane.xlu0 %50
  %v52 = vsel %vm32, %v45, 0.0
  %53 = vadd.xlane.f32.xlu0 %v52
  %v54 = vpop.xlane.xlu0 %53
  %v55 = vmul.f32 %v48, 0.032258064
  %v56 = vmul.f32 %v51, 0.032258064
  %v57 = vmul.f32 %v54, 0.032258064
  %v59 = vlaneseq
  %v60 = vshrl.u32 %v59, 7
  %v61 = vsub.s32 0, %v60
  %v62 = vrot.slane %v23, %v61
  %v64 = vmul.f32 %v62, %v40
  %v65 = vmul.f32 %v62, %v41
  %v66 = vmul.f32 %v62, %v42
  %v67 = vrsqrt.pop %v55
  %v68 = vmul.f32 %v55, %v67
  %vm69 = vcmp.eq.f32.partialorder %v55, inf
  %v70 = vsel %vm69, %v55, %v68
  %vm71 = vcmp.eq.f32.partialorder %v55, 0.0
  %v72 = vand.u32 %v55, 2147483648
  %v73 = vsel %vm71, %v72, %v70
  %v74 = vrsqrt.pop %v56
  %v75 = vmul.f32 %v56, %v74
  %vm76 = vcmp.eq.f32.partialorder %v56, inf
  %v77 = vsel %vm76, %v56, %v75
  %vm78 = vcmp.eq.f32.partialorder %v56, 0.0
  %v79 = vand.u32 %v56, 2147483648
  %v80 = vsel %vm78, %v79, %v77
  %v81 = vrsqrt.pop %v57
  %v82 = vmul.f32 %v57, %v81
  %vm83 = vcmp.eq.f32.partialorder %v57, inf
  %v84 = vsel %vm83, %v57, %v82
  %vm85 = vcmp.eq.f32.partialorder %v57, 0.0
  %v86 = vand.u32 %v57, 2147483648
  %v87 = vsel %vm85, %v86, %v84
  %v88 = vadd.f32 %v73, 1e-06
  %v89 = vadd.f32 %v80, 1e-06
  %v90 = vadd.f32 %v87, 1e-06
  %v91 = vrcp.pop %v88
  %v92 = vmul.f32 %v64, %v91
  %v93 = vrcp.pop %v89
  %v94 = vmul.f32 %v65, %v93
  %v95 = vrcp.pop %v90
  %v96 = vmul.f32 %v66, %v95
  %v98 = vlaneseq
  %v99 = vshrl.u32 %v98, 7
  %v100 = vsub.s32 0, %v99
  %v101 = vrot.slane %v24, %v100
  %v103 = vadd.f32 %v92, %v101
  %v104 = vadd.f32 %v94, %v101
  %v105 = vadd.f32 %v96, %v101
  %v106 = vld [vmem:[%s3] sm:$0xff]
  %v107 = vld [vmem:[%s3 + $0x8] sm:$0xff]
  %v108 = vld [vmem:[%s3 + $0x10] sm:$0xff]
  %v109 = vld [vmem:[%s3 + $0x18] sm:$0xff]
  %v110 = vld [vmem:[%s4] sm:$0x1]
  %v112 = vlaneseq
  %v113 = vshrl.u32 %v112, 7
  %v114 = vsub.s32 0, %v113
  %v115 = vrot.slane %v110, %v114
  %v118 = vsel %vm25, %v103, 0
  %v121 = vsel %vm25, %v104, 0
  %v124 = vsel %vm25, %v105, 0
  %126 = vmatprep.subr.mxu0 0.0
  %127 = vmatpush1.msra.mxu0 %v106
  %128 = vmatprep.subr.mxu0 0.0
  %129 = vmatpush1.msra.mxu0 %v107
  %130 = vmatprep.subr.mxu0 0.0
  %131 = vmatpush1.msra.mxu0 %v108
  %132 = vmatprep.subr.mxu0 0.0
  %133 = vmatpush1.msra.mxu0 %v109
  %134 = vmatprep.subr.mxu0 0.0
  %135 = vmatpush1.msra.mxu0 0.0
  %136 = vmatprep.subr.mxu0 0.0
  %137 = vmatpush1.msra.mxu0 0.0
  %138 = vmatprep.subr.mxu0 0.0
  %139 = vmatpush1.msra.mxu0 0.0
  %140 = vmatprep.subr.mxu0 0.0
  %141 = vmatpush1.msra.mxu0 0.0
  %142 = vmatprep.subr.mxu0 0.0
  %143 = vmatpush1.msra.mxu0 0.0
  %144 = vmatprep.subr.mxu0 0.0
  %145 = vmatpush1.msra.mxu0 0.0
  %146 = vmatprep.subr.mxu0 0.0
  %147 = vmatpush1.msra.mxu0 0.0
  %148 = vmatprep.subr.mxu0 0.0
  %149 = vmatpush1.msra.mxu0 0.0
  %150 = vmatprep.subr.mxu0 0.0
  %151 = vmatpush1.msra.mxu0 0.0
  %152 = vmatprep.subr.mxu0 0.0
  %153 = vmatpush1.msra.mxu0 0.0
  %154 = vmatprep.subr.mxu0 0.0
  %155 = vmatpush1.msra.mxu0 0.0
  %156 = vmatprep.subr.mxu0 0.0
  %157 = vmatpush1.msra.mxu0 0.0
  %158 = vmatprep.subr.mxu0 0.0
  %159 = vmatpush1.msra.mxu0 0.0
  %160 = vmatprep.subr.mxu0 0.0
  %161 = vmatpush1.msra.mxu0 0.0
  %162 = vmatprep.subr.mxu0 0.0
  %163 = vmatpush1.msra.mxu0 0.0
  %164 = vmatprep.subr.mxu0 0.0
  %165 = vmatpush1.msra.mxu0 0.0
  %166 = vmatprep.subr.mxu0 0.0
  %167 = vmatpush1.msra.mxu0 0.0
  %168 = vmatprep.subr.mxu0 0.0
  %169 = vmatpush1.msra.mxu0 0.0
  %170 = vmatprep.subr.mxu0 0.0
  %171 = vmatpush1.msra.mxu0 0.0
  %172 = vmatprep.subr.mxu0 0.0
  %173 = vmatpush1.msra.mxu0 0.0
  %174 = vmatprep.subr.mxu0 0.0
  %175 = vmatpush1.msra.mxu0 0.0
  %176 = vmatprep.subr.mxu0 0.0
  %177 = vmatpush1.msra.mxu0 0.0
  %178 = vmatprep.subr.mxu0 0.0
  %179 = vmatpush1.msra.mxu0 0.0
  %180 = vmatprep.subr.mxu0 0.0
  %181 = vmatpush1.msra.mxu0 0.0
  %182 = vmatprep.subr.mxu0 0.0
  %183 = vmatpush1.msra.mxu0 0.0
  %184 = vmatprep.subr.mxu0 0.0
  %185 = vmatpush1.msra.mxu0 0.0
  %186 = vmatprep.subr.mxu0 0.0
  %187 = vmatpush1.msra.mxu0 0.0
  %188 = vmatprep.subr.mxu0 0.0
  %189 = vmatpush1.msra.mxu0 0.0
  %190 = vmatprep.mubr.f32.mxu0 0.0
  %191 = vmatmul.mubr.f32.gmra.mrb[0].mxu0 %v118
  %v192 = vpop.f32.mrb[0].mxu0
  %v193 = vadd.f32 %v115, %v192
  %v194 = vpop.f32.mrb[0].mxu0
  %195 = vmatprep.mubr.f32.mxu0 0.0
  %196 = vmatmul.mubr.f32.gmra.mrb[0].mxu0 %v121
  %v197 = vpop.f32.mrb[0].mxu0
  %v198 = vadd.f32 %v115, %v197
  %v199 = vpop.f32.mrb[0].mxu0
  %200 = vmatprep.mubr.f32.mxu0 0.0
  %201 = vmatmul.mubr.f32.gmra.mrb[0].mxu0 %v124
  %v202 = vpop.f32.mrb[0].mxu0
  %v203 = vadd.f32 %v115, %v202
  %v204 = vpop.f32.mrb[0].mxu0
  %205 = vdwg.mxu0
  %206 = vst.msk [vmem:[%s5] sm:$0xff] %vm25, %v193
  %207 = vst.msk [vmem:[%s5 + $0x8] sm:$0xff] %vm25, %v198
  %208 = vst.msk [vmem:[%s5 + $0x10] sm:$0x3f] %vm32, %v203
  // Predicated region
  $region22: #{_lambda_.5} parent=0 // pred_check
    _
  $region23: #{_lambda_.5} parent=0 // pred_check_branch
    %210 = sbr.rel (0) target = $region25
  $region24: #{_lambda_.5} parent=0 // pred_region
    _
  $region25: #{_lambda_.5} parent=0 // pred_fallthru
    _
  // Predicated region
  $region26: #{_lambda_.5} parent=0 // pred_check
    _
  $region27: #{_lambda_.5} parent=0 // pred_check_branch
    %212 = sbr.rel (0) target = $region29
  $region28: #{_lambda_.5} parent=0 // pred_region
    _
  $region29: #{_lambda_.5} parent=0 // pred_fallthru
    _

// kernel: _lambda_.4
$region0: #{_lambda_.4}
  #allocation0 [shape = 'u32[]', space=smem, size = 0x4, offset = 0x4, fixed_abs, tag = 'smem constant byte address 0x4 - core index']
  #allocation1 [shape = 'u32[144,128]{1,0:T(1,128)}', space=vmem, size = 0x12000, scoped, tag = 'internal scratch']
  #allocation2 [shape = 'f32[11,32]{1,0:T(8,128)}', space=vmem, size = 0x2000, scoped, tag = 'scratch operand']
  %s0 = inlined_call_operand.vmem [shape: f32[2,11,32], index: 0, kind: input, shape index: {}]
  %s1 = inlined_call_operand.vmem [shape: f32[2,1,11], index: 1, kind: input, shape index: {}]
  %s2 = inlined_call_operand.vmem [shape: f32[2,4,1,32], index: 2, kind: input, shape index: {}]
  %s3 = inlined_call_operand.vmem [shape: f32[2,32,96], index: 3, kind: input, shape index: {}]
  %s4 = inlined_call_operand.vmem [shape: f32[2,1,96], index: 4, kind: input, shape index: {}]
  %s5 = inlined_call_operand.vmem [shape: f32[2,32,32], index: 5, kind: input, shape index: {}]
  %s6 = inlined_call_operand.vmem [shape: f32[2,1,32], index: 6, kind: input, shape index: {}]
  %s7 = inlined_call_operand.vmem [shape: f32[2,32,64], index: 7, kind: input, shape index: {}]
  %s8 = inlined_call_operand.vmem [shape: f32[2,1,64], index: 8, kind: input, shape index: {}]
  %s9 = inlined_call_operand.vmem [shape: f32[2,64,32], index: 9, kind: input, shape index: {}]
  %s10 = inlined_call_operand.vmem [shape: f32[2,1,32], index: 10, kind: input, shape index: {}]
  %s11 = inlined_call_operand.vmem [shape: f32[2,11,32], index: 11, kind: output, shape index: {}]
  %s12 = sld [smem:[#allocation0]]
  $region85: #{_lambda_.4} parent=0
    _
  %s14 = ssub.s32 1, %s12
  %s15 = scalar_select 0, %s14, %s12
  loop: start=0, step=1, limit=6
  $region2: #{_lambda_.4} parent=0 // loop_pre_header
    _
  $region3: #{_lambda_.4} parent=0 // loop_header
    %s17 = sphi 0, %s21
    %p18 = scmp.ge.s32.totalorder %s17, 6
    %s24 = sphi 0, %s36
    %s25 = sphi 0, %s32
    %s26 = sphi 0, %s24
    %s27 = sphi 0, %s25
    %s28 = sphi 0, %s26
    %s29 = sphi 0, %s27
    %s39 = sphi 0, %s41
    %s42 = sphi 0, %s39
    %s43 = sphi 0, %s42
    %s59 = sphi 0, %s43
    %s65 = sphi 0, %s67
    %s68 = sphi 0, %s65
    %s69 = sphi 0, %s68
    %s85 = sphi 0, %s69
    %s91 = sphi 0, %s93
    %s94 = sphi 0, %s91
    %s95 = sphi 0, %s94
    %s111 = sphi 0, %s95
    %s117 = sphi 0, %s119
    %s120 = sphi 0, %s117
    %s121 = sphi 0, %s120
    %s137 = sphi 0, %s121
    %s143 = sphi 0, %s145
    %s146 = sphi 0, %s143
    %s147 = sphi 0, %s146
    %s163 = sphi 0, %s147
    %s169 = sphi 0, %s171
    %s172 = sphi 0, %s169
    %s173 = sphi 0, %s172
    %s189 = sphi 0, %s173
    %s195 = sphi 0, %s197
    %s198 = sphi 0, %s195
    %s199 = sphi 0, %s198
    %s215 = sphi 0, %s199
    %s221 = sphi 0, %s223
    %s224 = sphi 0, %s221
    %s225 = sphi 0, %s224
    %s241 = sphi 0, %s225
    %s247 = sphi 0, %s249
    %s250 = sphi 0, %s247
    %s251 = sphi 0, %s250
    %s267 = sphi 0, %s251
    %s273 = sphi 0, %s275
    %s276 = sphi 0, %s273
    %s277 = sphi 0, %s276
    %s293 = sphi 0, %s277
    %s299 = sphi 0, %s301
    %s302 = sphi 0, %s299
    %s303 = sphi 0, %s302
    %s319 = sphi 0, %s303
    %s325 = sphi 0, %s327
    %s328 = sphi 0, %s325
    %s329 = sphi 0, %s328
    %s345 = sphi 0, %s329
  $region4: #{_lambda_.4} parent=0 // loop_header_branch
    %20 = sbr.rel (%p18) target = $region8
  $region5: #{_lambda_.4} parent=0 // loop_body
    %s22 = ssub.s32 %s17, 1
    %s23 = ssub.s32 %s17, 2
    %s30 = sadd.s32 1, %s25
    %p31 = scmp.ge.s32.totalorder %s30, 2
    %s32 = scalar_select %p31, 0, %s30
    %s33 = sadd.s32 1, %s24
    %s34 = scalar_select %p31, %s33, %s24
    %p35 = scmp.ge.s32.totalorder %s34, 2
    %s36 = scalar_select %p35, 0, %s34
    %s37 = ssub.s32 %s24, %s36
    %p38 = scmp.eq.s32.totalorder %s37, 0
    %s40 = sadd.s32 %s39, 1
    %s41 = scalar_select %p38, %s39, %s40
    %p44 = pneg %p38
    %p45 = scmp.eq.s32.totalorder %s17, 3
    %p46 = por %p44, %p45
    %p47 = scmp.ne.s32.totalorder %s39, %s42
    %p48 = scmp.eq.s32.totalorder %s17, 0
    %p49 = por %p47, %p48
    %p50 = scmp.ne.s32.totalorder %s39, %s42
    %p51 = scmp.eq.s32.totalorder %s22, 3
    %p52 = por %p50, %p51
    %p53 = scmp.ne.s32.totalorder %s42, %s43
    %p54 = scmp.eq.s32.totalorder %s22, 0
    %p55 = por %p53, %p54
    %p56 = scmp.ne.s32.totalorder %s42, %s43
    %p57 = scmp.eq.s32.totalorder %s23, 3
    %p58 = por %p56, %p57
    %p60 = scmp.ne.s32.totalorder %s43, %s59
    %p61 = scmp.eq.s32.totalorder %s23, 0
    %p62 = por %p60, %p61
    %s63 = ssub.s32 %s24, %s36
    %p64 = scmp.eq.s32.totalorder %s63, 0
    %s66 = sadd.s32 %s65, 1
    %s67 = scalar_select %p64, %s65, %s66
    %p70 = pneg %p64
    %p71 = scmp.eq.s32.totalorder %s17, 3
    %p72 = por %p70, %p71
    %p73 = scmp.ne.s32.totalorder %s65, %s68
    %p74 = scmp.eq.s32.totalorder %s17, 0
    %p75 = por %p73, %p74
    %p76 = scmp.ne.s32.totalorder %s65, %s68
    %p77 = scmp.eq.s32.totalorder %s22, 3
    %p78 = por %p76, %p77
    %p79 = scmp.ne.s32.totalorder %s68, %s69
    %p80 = scmp.eq.s32.totalorder %s22, 0
    %p81 = por %p79, %p80
    %p82 = scmp.ne.s32.totalorder %s68, %s69
    %p83 = scmp.eq.s32.totalorder %s23, 3
    %p84 = por %p82, %p83
    %p86 = scmp.ne.s32.totalorder %s69, %s85
    %p87 = scmp.eq.s32.totalorder %s23, 0
    %p88 = por %p86, %p87
    %s89 = ssub.s32 %s25, %s32
    %p90 = scmp.eq.s32.totalorder %s89, 0
    %s92 = sadd.s32 %s91, 1
    %s93 = scalar_select %p90, %s91, %s92
    %p96 = pneg %p90
    %p97 = scmp.eq.s32.totalorder %s17, 3
    %p98 = por %p96, %p97
    %p99 = scmp.ne.s32.totalorder %s91, %s94
    %p100 = scmp.eq.s32.totalorder %s17, 0
    %p101 = por %p99, %p100
    %p102 = scmp.ne.s32.totalorder %s91, %s94
    %p103 = scmp.eq.s32.totalorder %s22, 3
    %p104 = por %p102, %p103
    %p105 = scmp.ne.s32.totalorder %s94, %s95
    %p106 = scmp.eq.s32.totalorder %s22, 0
    %p107 = por %p105, %p106
    %p108 = scmp.ne.s32.totalorder %s94, %s95
    %p109 = scmp.eq.s32.totalorder %s23, 3
    %p110 = por %p108, %p109
    %p112 = scmp.ne.s32.totalorder %s95, %s111
    %p113 = scmp.eq.s32.totalorder %s23, 0
    %p114 = por %p112, %p113
    %s115 = ssub.s32 %s25, %s32
    %p116 = scmp.eq.s32.totalorder %s115, 0
    %s118 = sadd.s32 %s117, 1
    %s119 = scalar_select %p116, %s117, %s118
    %p122 = pneg %p116
    %p123 = scmp.eq.s32.totalorder %s17, 3
    %p124 = por %p122, %p123
    %p125 = scmp.ne.s32.totalorder %s117, %s120
    %p126 = scmp.eq.s32.totalorder %s17, 0
    %p127 = por %p125, %p126
    %p128 = scmp.ne.s32.totalorder %s117, %s120
    %p129 = scmp.eq.s32.totalorder %s22, 3
    %p130 = por %p128, %p129
    %p131 = scmp.ne.s32.totalorder %s120, %s121
    %p132 = scmp.eq.s32.totalorder %s22, 0
    %p133 = por %p131, %p132
    %p134 = scmp.ne.s32.totalorder %s120, %s121
    %p135 = scmp.eq.s32.totalorder %s23, 3
    %p136 = por %p134, %p135
    %p138 = scmp.ne.s32.totalorder %s121, %s137
    %p139 = scmp.eq.s32.totalorder %s23, 0
    %p140 = por %p138, %p139
    %s141 = ssub.s32 %s25, %s32
    %p142 = scmp.eq.s32.totalorder %s141, 0
    %s144 = sadd.s32 %s143, 1
    %s145 = scalar_select %p142, %s143, %s144
    %p148 = pneg %p142
    %p149 = scmp.eq.s32.totalorder %s17, 3
    %p150 = por %p148, %p149
    %p151 = scmp.ne.s32.totalorder %s143, %s146
    %p152 = scmp.eq.s32.totalorder %s17, 0
    %p153 = por %p151, %p152
    %p154 = scmp.ne.s32.totalorder %s143, %s146
    %p155 = scmp.eq.s32.totalorder %s22, 3
    %p156 = por %p154, %p155
    %p157 = scmp.ne.s32.totalorder %s146, %s147
    %p158 = scmp.eq.s32.totalorder %s22, 0
    %p159 = por %p157, %p158
    %p160 = scmp.ne.s32.totalorder %s146, %s147
    %p161 = scmp.eq.s32.totalorder %s23, 3
    %p162 = por %p160, %p161
    %p164 = scmp.ne.s32.totalorder %s147, %s163
    %p165 = scmp.eq.s32.totalorder %s23, 0
    %p166 = por %p164, %p165
    %s167 = ssub.s32 %s25, %s32
    %p168 = scmp.eq.s32.totalorder %s167, 0
    %s170 = sadd.s32 %s169, 1
    %s171 = scalar_select %p168, %s169, %s170
    %p174 = pneg %p168
    %p175 = scmp.eq.s32.totalorder %s17, 3
    %p176 = por %p174, %p175
    %p177 = scmp.ne.s32.totalorder %s169, %s172
    %p178 = scmp.eq.s32.totalorder %s17, 0
    %p179 = por %p177, %p178
    %p180 = scmp.ne.s32.totalorder %s169, %s172
    %p181 = scmp.eq.s32.totalorder %s22, 3
    %p182 = por %p180, %p181
    %p183 = scmp.ne.s32.totalorder %s172, %s173
    %p184 = scmp.eq.s32.totalorder %s22, 0
    %p185 = por %p183, %p184
    %p186 = scmp.ne.s32.totalorder %s172, %s173
    %p187 = scmp.eq.s32.totalorder %s23, 3
    %p188 = por %p186, %p187
    %p190 = scmp.ne.s32.totalorder %s173, %s189
    %p191 = scmp.eq.s32.totalorder %s23, 0
    %p192 = por %p190, %p191
    %s193 = ssub.s32 %s25, %s32
    %p194 = scmp.eq.s32.totalorder %s193, 0
    %s196 = sadd.s32 %s195, 1
    %s197 = scalar_select %p194, %s195, %s196
    %p200 = pneg %p194
    %p201 = scmp.eq.s32.totalorder %s17, 3
    %p202 = por %p200, %p201
    %p203 = scmp.ne.s32.totalorder %s195, %s198
    %p204 = scmp.eq.s32.totalorder %s17, 0
    %p205 = por %p203, %p204
    %p206 = scmp.ne.s32.totalorder %s195, %s198
    %p207 = scmp.eq.s32.totalorder %s22, 3
    %p208 = por %p206, %p207
    %p209 = scmp.ne.s32.totalorder %s198, %s199
    %p210 = scmp.eq.s32.totalorder %s22, 0
    %p211 = por %p209, %p210
    %p212 = scmp.ne.s32.totalorder %s198, %s199
    %p213 = scmp.eq.s32.totalorder %s23, 3
    %p214 = por %p212, %p213
    %p216 = scmp.ne.s32.totalorder %s199, %s215
    %p217 = scmp.eq.s32.totalorder %s23, 0
    %p218 = por %p216, %p217
    %s219 = ssub.s32 %s25, %s32
    %p220 = scmp.eq.s32.totalorder %s219, 0
    %s222 = sadd.s32 %s221, 1
    %s223 = scalar_select %p220, %s221, %s222
    %p226 = pneg %p220
    %p227 = scmp.eq.s32.totalorder %s17, 3
    %p228 = por %p226, %p227
    %p229 = scmp.ne.s32.totalorder %s221, %s224
    %p230 = scmp.eq.s32.totalorder %s17, 0
    %p231 = por %p229, %p230
    %p232 = scmp.ne.s32.totalorder %s221, %s224
    %p233 = scmp.eq.s32.totalorder %s22, 3
    %p234 = por %p232, %p233
    %p235 = scmp.ne.s32.totalorder %s224, %s225
    %p236 = scmp.eq.s32.totalorder %s22, 0
    %p237 = por %p235, %p236
    %p238 = scmp.ne.s32.totalorder %s224, %s225
    %p239 = scmp.eq.s32.totalorder %s23, 3
    %p240 = por %p238, %p239
    %p242 = scmp.ne.s32.totalorder %s225, %s241
    %p243 = scmp.eq.s32.totalorder %s23, 0
    %p244 = por %p242, %p243
    %s245 = ssub.s32 %s25, %s32
    %p246 = scmp.eq.s32.totalorder %s245, 0
    %s248 = sadd.s32 %s247, 1
    %s249 = scalar_select %p246, %s247, %s248
    %p252 = pneg %p246
    %p253 = scmp.eq.s32.totalorder %s17, 3
    %p254 = por %p252, %p253
    %p255 = scmp.ne.s32.totalorder %s247, %s250
    %p256 = scmp.eq.s32.totalorder %s17, 0
    %p257 = por %p255, %p256
    %p258 = scmp.ne.s32.totalorder %s247, %s250
    %p259 = scmp.eq.s32.totalorder %s22, 3
    %p260 = por %p258, %p259
    %p261 = scmp.ne.s32.totalorder %s250, %s251
    %p262 = scmp.eq.s32.totalorder %s22, 0
    %p263 = por %p261, %p262
    %p264 = scmp.ne.s32.totalorder %s250, %s251
    %p265 = scmp.eq.s32.totalorder %s23, 3
    %p266 = por %p264, %p265
    %p268 = scmp.ne.s32.totalorder %s251, %s267
    %p269 = scmp.eq.s32.totalorder %s23, 0
    %p270 = por %p268, %p269
    %s271 = ssub.s32 %s25, %s32
    %p272 = scmp.eq.s32.totalorder %s271, 0
    %s274 = sadd.s32 %s273, 1
    %s275 = scalar_select %p272, %s273, %s274
    %p278 = pneg %p272
    %p279 = scmp.eq.s32.totalorder %s17, 3
    %p280 = por %p278, %p279
    %p281 = scmp.ne.s32.totalorder %s273, %s276
    %p282 = scmp.eq.s32.totalorder %s17, 0
    %p283 = por %p281, %p282
    %p284 = scmp.ne.s32.totalorder %s273, %s276
    %p285 = scmp.eq.s32.totalorder %s22, 3
    %p286 = por %p284, %p285
    %p287 = scmp.ne.s32.totalorder %s276, %s277
    %p288 = scmp.eq.s32.totalorder %s22, 0
    %p289 = por %p287, %p288
    %p290 = scmp.ne.s32.totalorder %s276, %s277
    %p291 = scmp.eq.s32.totalorder %s23, 3
    %p292 = por %p290, %p291
    %p294 = scmp.ne.s32.totalorder %s277, %s293
    %p295 = scmp.eq.s32.totalorder %s23, 0
    %p296 = por %p294, %p295
    %s297 = ssub.s32 %s25, %s32
    %p298 = scmp.eq.s32.totalorder %s297, 0
    %s300 = sadd.s32 %s299, 1
    %s301 = scalar_select %p298, %s299, %s300
    %p304 = pneg %p298
    %p305 = scmp.eq.s32.totalorder %s17, 3
    %p306 = por %p304, %p305
    %p307 = scmp.ne.s32.totalorder %s299, %s302
    %p308 = scmp.eq.s32.totalorder %s17, 0
    %p309 = por %p307, %p308
    %p310 = scmp.ne.s32.totalorder %s299, %s302
    %p311 = scmp.eq.s32.totalorder %s22, 3
    %p312 = por %p310, %p311
    %p313 = scmp.ne.s32.totalorder %s302, %s303
    %p314 = scmp.eq.s32.totalorder %s22, 0
    %p315 = por %p313, %p314
    %p316 = scmp.ne.s32.totalorder %s302, %s303
    %p317 = scmp.eq.s32.totalorder %s23, 3
    %p318 = por %p316, %p317
    %p320 = scmp.ne.s32.totalorder %s303, %s319
    %p321 = scmp.eq.s32.totalorder %s23, 0
    %p322 = por %p320, %p321
    %s323 = ssub.s32 %s24, %s36
    %p324 = scmp.eq.s32.totalorder %s323, 0
    %s326 = sadd.s32 %s325, 1
    %s327 = scalar_select %p324, %s325, %s326
    %p330 = pneg %p324
    %p331 = scmp.eq.s32.totalorder %s17, 3
    %p332 = por %p330, %p331
    %p333 = scmp.ne.s32.totalorder %s325, %s328
    %p334 = scmp.eq.s32.totalorder %s17, 0
    %p335 = por %p333, %p334
    %p336 = scmp.ne.s32.totalorder %s325, %s328
    %p337 = scmp.eq.s32.totalorder %s22, 3
    %p338 = por %p336, %p337
    %p339 = scmp.ne.s32.totalorder %s328, %s329
    %p340 = scmp.eq.s32.totalorder %s22, 0
    %p341 = por %p339, %p340
    %p342 = scmp.ne.s32.totalorder %s328, %s329
    %p343 = scmp.eq.s32.totalorder %s23, 3
    %p344 = por %p342, %p343
    %p346 = scmp.ne.s32.totalorder %s329, %s345
    %p347 = scmp.eq.s32.totalorder %s23, 0
    %p348 = por %p346, %p347
    %p349 = scmp.le.s32.totalorder 1, %s17
    %p350 = scmp.lt.s32.totalorder %s17, 5
    %p351 = pnand %p349, %p350
    %p352 = pneg %p351
    // Predicated region
    $region9: #{_lambda_.4} parent=5 // pred_check
      _
    $region10: #{_lambda_.4} parent=5 // pred_check_branch
      %354 = sbr.rel (%p351) target = $region12
    $region11: #{_lambda_.4} parent=5 // pred_region
      %s355 = ssub.s32 %s17, 1
    $region12: #{_lambda_.4} parent=5 // pred_fallthru
      _
    %p356 = scmp.lt.s32.totalorder %s17, 4
    // Predicated region
    $region13: #{_lambda_.4} parent=5 // pred_check
      %p357 = pneg %p356
    $region14: #{_lambda_.4} parent=5 // pred_check_branch
      %359 = sbr.rel (%p357) target = $region16
    $region15: #{_lambda_.4} parent=5 // pred_region
      // Predicated region
      $region17: #{_lambda_.4} parent=15 // pred_check
        %p360 = pneg %p49
      $region18: #{_lambda_.4} parent=15 // pred_check_branch
        %362 = sbr.rel (%p360) target = $region20
      $region19: #{_lambda_.4} parent=15 // pred_region
        %p363 = scmp.lt.s32.totalorder %s24, 1
        %s364 = scalar_select %p363, %s24, 1
        %s365 = smul.addr %s364, 2
        %s366 = smul.addr %s365, 8
        %s367 = scalar_lea.vmem %s0, %s366
      $region20: #{_lambda_.4} parent=15 // pred_fallthru
        _
      // Predicated region
      $region21: #{_lambda_.4} parent=15 // pred_check
        %p368 = pneg %p75
      $region22: #{_lambda_.4} parent=15 // pred_check_branch
        %370 = sbr.rel (%p368) target = $region24
      $region23: #{_lambda_.4} parent=15 // pred_region
        %p371 = scmp.lt.s32.totalorder %s24, 1
        %s372 = scalar_select %p371, %s24, 1
        %s373 = scalar_lea.vmem %s1, %s372
      $region24: #{_lambda_.4} parent=15 // pred_fallthru
        _
      // Predicated region
      $region25: #{_lambda_.4} parent=15 // pred_check
        %p374 = pneg %p101
      $region26: #{_lambda_.4} parent=15 // pred_check_branch
        %376 = sbr.rel (%p374) target = $region28
      $region27: #{_lambda_.4} parent=15 // pred_region
        %p377 = scmp.lt.s32.totalorder %s25, 1
        %s378 = scalar_select %p377, %s25, 1
        %s379 = smul.addr %s378, 4
        %s380 = scalar_lea.vmem %s2, %s379
      $region28: #{_lambda_.4} parent=15 // pred_fallthru
        _
      // Predicated region
      $region29: #{_lambda_.4} parent=15 // pred_check
        %p381 = pneg %p127
      $region30: #{_lambda_.4} parent=15 // pred_check_branch
        %383 = sbr.rel (%p381) target = $region32
      $region31: #{_lambda_.4} parent=15 // pred_region
        %p384 = scmp.lt.s32.totalorder %s25, 1
        %s385 = scalar_select %p384, %s25, 1
        %s386 = smul.addr %s385, 4
        %s387 = smul.addr %s386, 8
        %s388 = scalar_lea.vmem %s3, %s387
      $region32: #{_lambda_.4} parent=15 // pred_fallthru
        _
      // Predicated region
      $region33: #{_lambda_.4} parent=15 // pred_check
        %p389 = pneg %p153
      $region34: #{_lambda_.4} parent=15 // pred_check_branch
        %391 = sbr.rel (%p389) target = $region36
      $region35: #{_lambda_.4} parent=15 // pred_region
        %p392 = scmp.lt.s32.totalorder %s25, 1
        %s393 = scalar_select %p392, %s25, 1
        %s394 = scalar_lea.vmem %s4, %s393
      $region36: #{_lambda_.4} parent=15 // pred_fallthru
        _
      // Predicated region
      $region37: #{_lambda_.4} parent=15 // pred_check
        %p395 = pneg %p179
      $region38: #{_lambda_.4} parent=15 // pred_check_branch
        %397 = sbr.rel (%p395) target = $region40
      $region39: #{_lambda_.4} parent=15 // pred_region
        %p398 = scmp.lt.s32.totalorder %s25, 1
        %s399 = scalar_select %p398, %s25, 1
        %s400 = smul.addr %s399, 4
        %s401 = smul.addr %s400, 8
        %s402 = scalar_lea.vmem %s5, %s401
      $region40: #{_lambda_.4} parent=15 // pred_fallthru
        _
      // Predicated region
      $region41: #{_lambda_.4} parent=15 // pred_check
        %p403 = pneg %p205
      $region42: #{_lambda_.4} parent=15 // pred_check_branch
        %405 = sbr.rel (%p403) target = $region44
      $region43: #{_lambda_.4} parent=15 // pred_region
        %p406 = scmp.lt.s32.totalorder %s25, 1
        %s407 = scalar_select %p406, %s25, 1
        %s408 = scalar_lea.vmem %s6, %s407
      $region44: #{_lambda_.4} parent=15 // pred_fallthru
        _
      // Predicated region
      $region45: #{_lambda_.4} parent=15 // pred_check
        %p409 = pneg %p231
      $region46: #{_lambda_.4} parent=15 // pred_check_branch
        %411 = sbr.rel (%p409) target = $region48
      $region47: #{_lambda_.4} parent=15 // pred_region
        %p412 = scmp.lt.s32.totalorder %s25, 1
        %s413 = scalar_select %p412, %s25, 1
        %s414 = smul.addr %s413, 4
        %s415 = smul.addr %s414, 8
        %s416 = scalar_lea.vmem %s7, %s415
      $region48: #{_lambda_.4} parent=15 // pred_fallthru
        _
      // Predicated region
      $region49: #{_lambda_.4} parent=15 // pred_check
        %p417 = pneg %p257
      $region50: #{_lambda_.4} parent=15 // pred_check_branch
        %419 = sbr.rel (%p417) target = $region52
      $region51: #{_lambda_.4} parent=15 // pred_region
        %p420 = scmp.lt.s32.totalorder %s25, 1
        %s421 = scalar_select %p420, %s25, 1
        %s422 = scalar_lea.vmem %s8, %s421
      $region52: #{_lambda_.4} parent=15 // pred_fallthru
        _
      // Predicated region
      $region53: #{_lambda_.4} parent=15 // pred_check
        %p423 = pneg %p283
      $region54: #{_lambda_.4} parent=15 // pred_check_branch
        %425 = sbr.rel (%p423) target = $region56
      $region55: #{_lambda_.4} parent=15 // pred_region
        %p426 = scmp.lt.s32.totalorder %s25, 1
        %s427 = scalar_select %p426, %s25, 1
        %s428 = smul.addr %s427, 8
        %s429 = smul.addr %s428, 8
        %s430 = scalar_lea.vmem %s9, %s429
      $region56: #{_lambda_.4} parent=15 // pred_fallthru
        _
      // Predicated region
      $region57: #{_lambda_.4} parent=15 // pred_check
        %p431 = pneg %p309
      $region58: #{_lambda_.4} parent=15 // pred_check_branch
        %433 = sbr.rel (%p431) target = $region60
      $region59: #{_lambda_.4} parent=15 // pred_region
        %p434 = scmp.lt.s32.totalorder %s25, 1
        %s435 = scalar_select %p434, %s25, 1
        %s436 = scalar_lea.vmem %s10, %s435
      $region60: #{_lambda_.4} parent=15 // pred_fallthru
        _
    $region16: #{_lambda_.4} parent=5 // pred_fallthru
      _
    %p437 = scmp.le.s32.totalorder 1, %s17
    %p438 = scmp.lt.s32.totalorder %s17, 5
    %p439 = pnand %p437, %p438
    %p440 = pneg %p439
    // Predicated region
    $region61: #{_lambda_.4} parent=5 // pred_check
      _
    $region62: #{_lambda_.4} parent=5 // pred_check_branch
      %442 = sbr.rel (%p439) target = $region64
    $region63: #{_lambda_.4} parent=5 // pred_region
      %s443 = ssub.s32 %s17, 1
      %p444 = scmp.lt.s32.totalorder %s26, 1
      %s445 = scalar_select %p444, %s26, 1
      %s446 = smul.addr %s445, 2
      %s447 = smul.addr %s446, 8
      %s448 = scalar_lea.vmem %s0, %s447
      %p449 = pneg %p55
      %p450 = pneg %p52
      %p451 = scmp.lt.s32.totalorder %s26, 1
      %s452 = scalar_select %p451, %s26, 1
      %s453 = scalar_lea.vmem %s1, %s452
      %p454 = pneg %p81
      %p455 = pneg %p78
      %p456 = scmp.lt.s32.totalorder %s27, 1
      %s457 = scalar_select %p456, %s27, 1
      %s458 = smul.addr %s457, 4
      %s459 = scalar_lea.vmem %s2, %s458
      %p460 = pneg %p107
      %p461 = pneg %p104
      %p462 = scmp.lt.s32.totalorder %s27, 1
      %s463 = scalar_select %p462, %s27, 1
      %s464 = smul.addr %s463, 4
      %s465 = smul.addr %s464, 8
      %s466 = scalar_lea.vmem %s3, %s465
      %p467 = pneg %p133
      %p468 = pneg %p130
      %p469 = scmp.lt.s32.totalorder %s27, 1
      %s470 = scalar_select %p469, %s27, 1
      %s471 = scalar_lea.vmem %s4, %s470
      %p472 = pneg %p159
      %p473 = pneg %p156
      %p474 = scmp.lt.s32.totalorder %s27, 1
      %s475 = scalar_select %p474, %s27, 1
      %s476 = smul.addr %s475, 4
      %s477 = smul.addr %s476, 8
      %s478 = scalar_lea.vmem %s5, %s477
      %p479 = pneg %p185
      %p480 = pneg %p182
      %p481 = scmp.lt.s32.totalorder %s27, 1
      %s482 = scalar_select %p481, %s27, 1
      %s483 = scalar_lea.vmem %s6, %s482
      %p484 = pneg %p211
      %p485 = pneg %p208
      %p486 = scmp.lt.s32.totalorder %s27, 1
      %s487 = scalar_select %p486, %s27, 1
      %s488 = smul.addr %s487, 4
      %s489 = smul.addr %s488, 8
      %s490 = scalar_lea.vmem %s7, %s489
      %p491 = pneg %p237
      %p492 = pneg %p234
      %p493 = scmp.lt.s32.totalorder %s27, 1
      %s494 = scalar_select %p493, %s27, 1
      %s495 = scalar_lea.vmem %s8, %s494
      %p496 = pneg %p263
      %p497 = pneg %p260
      %p498 = scmp.lt.s32.totalorder %s27, 1
      %s499 = scalar_select %p498, %s27, 1
      %s500 = smul.addr %s499, 8
      %s501 = smul.addr %s500, 8
      %s502 = scalar_lea.vmem %s9, %s501
      %p503 = pneg %p289
      %p504 = pneg %p286
      %p505 = scmp.lt.s32.totalorder %s27, 1
      %s506 = scalar_select %p505, %s27, 1
      %s507 = scalar_lea.vmem %s10, %s506
      %p508 = pneg %p315
      %p509 = pneg %p312
      %p510 = pneg %p341
      %p511 = pneg %p338
      %p512 = scmp.lt.s32.totalorder %s26, 1
      %s513 = scalar_select %p512, %s26, 1
      %s514 = smul.addr %s513, 2
      %s515 = smul.addr %s514, 8
      %s516 = scalar_lea.vmem %s11, %s515
      %p517 = scmp.lt.s32.totalorder %s26, 1
      %s518 = scalar_select %p517, %s26, 1
      %s519 = smul.addr %s518, 2
      %s520 = smul.addr %s519, 8
      %s521 = scalar_lea.vmem %s0, %s520
      %p522 = scmp.lt.s32.totalorder %s26, 1
      %s523 = scalar_select %p522, %s26, 1
      %s524 = scalar_lea.vmem %s1, %s523
      %p525 = scmp.lt.s32.totalorder %s27, 1
      %s526 = scalar_select %p525, %s27, 1
      %s527 = smul.addr %s526, 4
      %s528 = scalar_lea.vmem %s2, %s527
      %p529 = scmp.lt.s32.totalorder %s27, 1
      %s530 = scalar_select %p529, %s27, 1
      %s531 = smul.addr %s530, 4
      %s532 = smul.addr %s531, 8
      %s533 = scalar_lea.vmem %s3, %s532
      %p534 = scmp.lt.s32.totalorder %s27, 1
      %s535 = scalar_select %p534, %s27, 1
      %s536 = scalar_lea.vmem %s4, %s535
      %p537 = scmp.lt.s32.totalorder %s27, 1
      %s538 = scalar_select %p537, %s27, 1
      %s539 = smul.addr %s538, 4
      %s540 = smul.addr %s539, 8
      %s541 = scalar_lea.vmem %s5, %s540
      %p542 = scmp.lt.s32.totalorder %s27, 1
      %s543 = scalar_select %p542, %s27, 1
      %s544 = scalar_lea.vmem %s6, %s543
      %p545 = scmp.lt.s32.totalorder %s27, 1
      %s546 = scalar_select %p545, %s27, 1
      %s547 = smul.addr %s546, 4
      %s548 = smul.addr %s547, 8
      %s549 = scalar_lea.vmem %s7, %s548
      %p550 = scmp.lt.s32.totalorder %s27, 1
      %s551 = scalar_select %p550, %s27, 1
      %s552 = scalar_lea.vmem %s8, %s551
      %p553 = scmp.lt.s32.totalorder %s27, 1
      %s554 = scalar_select %p553, %s27, 1
      %s555 = smul.addr %s554, 8
      %s556 = smul.addr %s555, 8
      %s557 = scalar_lea.vmem %s9, %s556
      %p558 = scmp.lt.s32.totalorder %s27, 1
      %s559 = scalar_select %p558, %s27, 1
      %s560 = scalar_lea.vmem %s10, %s559
      %p561 = scmp.lt.s32.totalorder %s26, 1
      %s562 = scalar_select %p561, %s26, 1
      %s563 = smul.addr %s562, 2
      %s564 = smul.addr %s563, 8
      %s565 = scalar_lea.vmem %s11, %s564
      %p566 = scmp.eq.s32.totalorder %s27, 0
      // Predicated region
      $region65: #{_lambda_.4} parent=63 // pred_check
        %p567 = pneg %p566
      $region66: #{_lambda_.4} parent=63 // pred_check_branch
        %569 = sbr.rel (%p567) target = $region68
      $region67: #{_lambda_.4} parent=63 // pred_region
        %v570 = vld [vmem:[%s521] sm:$0xff]
        %v571 = vld [vmem:[%s521 + $0x8] sm:$0x7]
        %vm572 = vcmask 261120
        %573 = vst.msk [vmem:[#allocation2] sm:$0xff] %vm572, %v570
        %vm574 = vcmask 256000
        %575 = vst.msk [vmem:[#allocation2 + $0x8] sm:$0x7] %vm574, %v571
      $region68: #{_lambda_.4} parent=63 // pred_fallthru
        _
      %v576 = vld [vmem:[#allocation2] sm:$0xff]
      %v577 = vld [vmem:[#allocation2 + $0x8] sm:$0x7]
      %v578 = vld [vmem:[%s524] sm:$0x1]
      %v579 = vld [vmem:[%s528] sm:$0x1]
      %v580 = vld [vmem:[%s528 + $0x1] sm:$0x1]
      %v581 = vld [vmem:[%s528 + $0x2] sm:$0x1]
      %v582 = vld [vmem:[%s528 + $0x3] sm:$0x1]
      %vm583 = vcmask 261120
      %v584 = vsel %vm583, %v576, 0.0
      %585 = vadd.xlane.f32.xlu0 %v584
      %v586 = vpop.xlane.xlu0 %585
      %vm587 = vcmask 256000
      %v588 = vsel %vm587, %v577, 0.0
      %589 = vadd.xlane.f32.xlu0 %v588
      %v590 = vpop.xlane.xlu0 %589
      %v591 = vrcp.pop 32.0
      %v592 = vmul.f32 %v586, %v591
      %v593 = vmul.f32 %v590, %v591
      %v594 = vsub.f32 %v576, %v592
      %v595 = vsub.f32 %v577, %v593
      %v596 = vmul.f32 %v594, %v594
      %v597 = vmul.f32 %v595, %v595
      %v598 = vsel %vm583, %v596, 0.0
      %599 = vadd.xlane.f32.xlu0 %v598
      %v600 = vpop.xlane.xlu0 %599
      %v601 = vsel %vm587, %v597, 0.0
      %602 = vadd.xlane.f32.xlu0 %v601
      %v603 = vpop.xlane.xlu0 %602
      %v604 = vmul.f32 %v600, 0.032258064
      %v605 = vmul.f32 %v603, 0.032258064
      %v607 = vlaneseq
      %v608 = vshrl.u32 %v607, 7
      %v609 = vsub.s32 0, %v608
      %v610 = vrot.slane %v579, %v609
      %v612 = vmul.f32 %v610, %v594
      %v613 = vmul.f32 %v610, %v595
      %v614 = vrsqrt.pop %v604
      %v615 = vmul.f32 %v604, %v614
      %vm616 = vcmp.eq.f32.partialorder %v604, inf
      %v617 = vsel %vm616, %v604, %v615
      %vm618 = vcmp.eq.f32.partialorder %v604, 0.0
      %v619 = vand.u32 %v604, 2147483648
      %v620 = vsel %vm618, %v619, %v617
      %v621 = vrsqrt.pop %v605
      %v622 = vmul.f32 %v605, %v621
      %vm623 = vcmp.eq.f32.partialorder %v605, inf
      %v624 = vsel %vm623, %v605, %v622
      %vm625 = vcmp.eq.f32.partialorder %v605, 0.0
      %v626 = vand.u32 %v605, 2147483648
      %v627 = vsel %vm625, %v626, %v624
      %v628 = vadd.f32 %v620, 1e-06
      %v629 = vadd.f32 %v627, 1e-06
      %v630 = vrcp.pop %v628
      %v631 = vmul.f32 %v612, %v630
      %v632 = vrcp.pop %v629
      %v633 = vmul.f32 %v613, %v632
      %v635 = vlaneseq
      %v636 = vshrl.u32 %v635, 7
      %v637 = vsub.s32 0, %v636
      %v638 = vrot.slane %v580, %v637
      %v640 = vadd.f32 %v631, %v638
      %v641 = vadd.f32 %v633, %v638
      %v642 = vld [vmem:[%s533] sm:$0xff]
      %v643 = vld [vmem:[%s533 + $0x8] sm:$0xff]
      %v644 = vld [vmem:[%s533 + $0x10] sm:$0xff]
      %v645 = vld [vmem:[%s533 + $0x18] sm:$0xff]
      %v646 = vld [vmem:[%s536] sm:$0x1]
      %v647 = vld [vmem:[%s541] sm:$0xff]
      %v648 = vld [vmem:[%s541 + $0x8] sm:$0xff]
      %v649 = vld [vmem:[%s541 + $0x10] sm:$0xff]
      %v650 = vld [vmem:[%s541 + $0x18] sm:$0xff]
      %v651 = vld [vmem:[%s544] sm:$0x1]
      %v653 = vlaneseq
      %v654 = vshrl.u32 %v653, 7
      %v655 = vsub.s32 0, %v654
      %v656 = vrot.slane %v646, %v655
      %v659 = vsel %vm583, %v640, 0
      %v662 = vsel %vm583, %v641, 0
      %664 = vmatprep.subr.mxu0 0.0
      %665 = vmatpush1.msra.mxu0 %v642
      %666 = vmatprep.subr.mxu0 0.0
      %667 = vmatpush1.msra.mxu0 %v643
      %668 = vmatprep.subr.mxu0 0.0
      %669 = vmatpush1.msra.mxu0 %v644
      %670 = vmatprep.subr.mxu0 0.0
      %671 = vmatpush1.msra.mxu0 %v645
      %672 = vmatprep.subr.mxu0 0.0
      %673 = vmatpush1.msra.mxu0 0.0
      %674 = vmatprep.subr.mxu0 0.0
      %675 = vmatpush1.msra.mxu0 0.0
      %676 = vmatprep.subr.mxu0 0.0
      %677 = vmatpush1.msra.mxu0 0.0
      %678 = vmatprep.subr.mxu0 0.0
      %679 = vmatpush1.msra.mxu0 0.0
      %680 = vmatprep.subr.mxu0 0.0
      %681 = vmatpush1.msra.mxu0 0.0
      %682 = vmatprep.subr.mxu0 0.0
      %683 = vmatpush1.msra.mxu0 0.0
      %684 = vmatprep.subr.mxu0 0.0
      %685 = vmatpush1.msra.mxu0 0.0
      %686 = vmatprep.subr.mxu0 0.0
      %687 = vmatpush1.msra.mxu0 0.0
      %688 = vmatprep.subr.mxu0 0.0
      %689 = vmatpush1.msra.mxu0 0.0
      %690 = vmatprep.subr.mxu0 0.0
      %691 = vmatpush1.msra.mxu0 0.0
      %692 = vmatprep.subr.mxu0 0.0
      %693 = vmatpush1.msra.mxu0 0.0
      %694 = vmatprep.subr.mxu0 0.0
      %695 = vmatpush1.msra.mxu0 0.0
      %696 = vmatprep.subr.mxu0 0.0
      %697 = vmatpush1.msra.mxu0 0.0
      %698 = vmatprep.subr.mxu0 0.0
      %699 = vmatpush1.msra.mxu0 0.0
      %700 = vmatprep.subr.mxu0 0.0
      %701 = vmatpush1.msra.mxu0 0.0
      %702 = vmatprep.subr.mxu0 0.0
      %703 = vmatpush1.msra.mxu0 0.0
      %704 = vmatprep.subr.mxu0 0.0
      %705 = vmatpush1.msra.mxu0 0.0
      %706 = vmatprep.subr.mxu0 0.0
      %707 = vmatpush1.msra.mxu0 0.0
      %708 = vmatprep.subr.mxu0 0.0
      %709 = vmatpush1.msra.mxu0 0.0
      %710 = vmatprep.subr.mxu0 0.0
      %711 = vmatpush1.msra.mxu0 0.0
      %712 = vmatprep.subr.mxu0 0.0
      %713 = vmatpush1.msra.mxu0 0.0
      %714 = vmatprep.subr.mxu0 0.0
      %715 = vmatpush1.msra.mxu0 0.0
      %716 = vmatprep.subr.mxu0 0.0
      %717 = vmatpush1.msra.mxu0 0.0
      %718 = vmatprep.subr.mxu0 0.0
      %719 = vmatpush1.msra.mxu0 0.0
      %720 = vmatprep.subr.mxu0 0.0
      %721 = vmatpush1.msra.mxu0 0.0
      %722 = vmatprep.subr.mxu0 0.0
      %723 = vmatpush1.msra.mxu0 0.0
      %724 = vmatprep.subr.mxu0 0.0
      %725 = vmatpush1.msra.mxu0 0.0
      %726 = vmatprep.subr.mxu0 0.0
      %727 = vmatpush1.msra.mxu0 0.0
      %728 = vmatprep.mubr.f32.mxu0 0.0
      %729 = vmatmul.mubr.f32.gmra.mrb[0].mxu0 %v659
      %v730 = vpop.f32.mrb[0].mxu0
      %v731 = vadd.f32 %v656, %v730
      %v732 = vpop.f32.mrb[0].mxu0
      %733 = vmatprep.mubr.f32.mxu0 0.0
      %734 = vmatmul.mubr.f32.gmra.mrb[0].mxu0 %v662
      %v735 = vpop.f32.mrb[0].mxu0
      %v736 = vadd.f32 %v656, %v735
      %v737 = vpop.f32.mrb[0].mxu0
      %738 = vdwg.mxu0
      %v740 = vlaneseq
      %v741 = vshrl.u32 %v740, 7
      %v742 = vsub.s32 0, %v741
      %v743 = vrot.slane %v578, %v742
      %747 = vrot.lane.b32.xlu0 %v731, 96
      %v748 = vpop.permute.xlu0 %747
      %749 = vrot.lane.b32.xlu0 %v736, 96
      %v750 = vpop.permute.xlu0 %749
      %vm751 = vcmask 64512
      %v752 = vsel %vm751, %v731, 0
      %v754 = vsel %vm751, %v736, 0
      %v756 = vsel %vm751, %v748, 0
      %v758 = vsel %vm751, %v750, 0
      %760 = vmatprep.subr.mxu0 0.0
      %761 = vmatpush1.xpose.msra.mxu0 %v756
      %762 = vmatprep.subr.mxu0 0.0
      %763 = vmatpush1.xpose.msra.mxu0 %v758
      %764 = vmatprep.subr.mxu0 0.0
      %765 = vmatpush1.xpose.msra.mxu0 0.0
      %766 = vmatprep.subr.mxu0 0.0
      %767 = vmatpush1.xpose.msra.mxu0 0.0
      %768 = vmatprep.subr.mxu0 0.0
      %769 = vmatpush1.xpose.msra.mxu0 0.0
      %770 = vmatprep.subr.mxu0 0.0
      %771 = vmatpush1.xpose.msra.mxu0 0.0
      %772 = vmatprep.subr.mxu0 0.0
      %773 = vmatpush1.xpose.msra.mxu0 0.0
      %774 = vmatprep.subr.mxu0 0.0
      %775 = vmatpush1.xpose.msra.mxu0 0.0
      %776 = vmatprep.subr.mxu0 0.0
      %777 = vmatpush1.xpose.msra.mxu0 0.0
      %778 = vmatprep.subr.mxu0 0.0
      %779 = vmatpush1.xpose.msra.mxu0 0.0
      %780 = vmatprep.subr.mxu0 0.0
      %781 = vmatpush1.xpose.msra.mxu0 0.0
      %782 = vmatprep.subr.mxu0 0.0
      %783 = vmatpush1.xpose.msra.mxu0 0.0
      %784 = vmatprep.subr.mxu0 0.0
      %785 = vmatpush1.xpose.msra.mxu0 0.0
      %786 = vmatprep.subr.mxu0 0.0
      %787 = vmatpush1.xpose.msra.mxu0 0.0
      %788 = vmatprep.subr.mxu0 0.0
      %789 = vmatpush1.xpose.msra.mxu0 0.0
      %790 = vmatprep.subr.mxu0 0.0
      %791 = vmatpush1.xpose.msra.mxu0 0.0
      %792 = vmatprep.subr.mxu0 0.0
      %793 = vmatpush1.xpose.msra.mxu0 0.0
      %794 = vmatprep.subr.mxu0 0.0
      %795 = vmatpush1.xpose.msra.mxu0 0.0
      %796 = vmatprep.subr.mxu0 0.0
      %797 = vmatpush1.xpose.msra.mxu0 0.0
      %798 = vmatprep.subr.mxu0 0.0
      %799 = vmatpush1.xpose.msra.mxu0 0.0
      %800 = vmatprep.subr.mxu0 0.0
      %801 = vmatpush1.xpose.msra.mxu0 0.0
      %802 = vmatprep.subr.mxu0 0.0
      %803 = vmatpush1.xpose.msra.mxu0 0.0
      %804 = vmatprep.subr.mxu0 0.0
      %805 = vmatpush1.xpose.msra.mxu0 0.0
      %806 = vmatprep.subr.mxu0 0.0
      %807 = vmatpush1.xpose.msra.mxu0 0.0
      %808 = vmatprep.subr.mxu0 0.0
      %809 = vmatpush1.xpose.msra.mxu0 0.0
      %810 = vmatprep.subr.mxu0 0.0
      %811 = vmatpush1.xpose.msra.mxu0 0.0
      %812 = vmatprep.subr.mxu0 0.0
      %813 = vmatpush1.xpose.msra.mxu0 0.0
      %814 = vmatprep.subr.mxu0 0.0
      %815 = vmatpush1.xpose.msra.mxu0 0.0
      %816 = vmatprep.subr.mxu0 0.0
      %817 = vmatpush1.xpose.msra.mxu0 0.0
      %818 = vmatprep.subr.mxu0 0.0
      %819 = vmatpush1.xpose.msra.mxu0 0.0
      %820 = vmatprep.subr.mxu0 0.0
      %821 = vmatpush1.xpose.msra.mxu0 0.0
      %822 = vmatprep.subr.mxu0 0.0
      %823 = vmatpush1.xpose.msra.mxu0 0.0
      %824 = vmatprep.mubr.f32.mxu0 0.0
      %825 = vmatmul.mubr.f32.gmra.mrb[0].mxu0 %v752
      %v826 = vpop.f32.mrb[0].mxu0
      %v827 = vadd.f32 %v743, %v826
      %v828 = vpop.f32.mrb[0].mxu0
      %829 = vmatprep.mubr.f32.mxu0 0.0
      %830 = vmatmul.mubr.f32.gmra.mrb[0].mxu0 %v754
      %v831 = vpop.f32.mrb[0].mxu0
      %v832 = vadd.f32 %v743, %v831
      %v833 = vpop.f32.mrb[0].mxu0
      %834 = vdwg.mxu0
      %vm835 = vcmask 89088
      %v836 = vsel %vm835, %v827, -inf
      %837 = vmax.xlane.f32.xlu0 %v836
      %v838 = vpop.xlane.xlu0 %837
      %vm839 = vcmask 83968
      %v840 = vsel %vm839, %v832, -inf
      %841 = vmax.xlane.f32.xlu0 %v840
      %v842 = vpop.xlane.xlu0 %841
      %v843 = vsub.f32 %v827, %v838
      %v844 = vsub.f32 %v832, %v842
      %v845 = vmul.f32 %v843, 1.442695
      %v846 = vpow.pop %v845
      %v847 = vmul.f32 %v844, 1.442695
      %v848 = vpow.pop %v847
      %v849 = vsel %vm835, %v846, 0.0
      %850 = vadd.xlane.f32.xlu0 %v849
      %v851 = vpop.xlane.xlu0 %850
      %v852 = vsel %vm839, %v848, 0.0
      %853 = vadd.xlane.f32.xlu0 %v852
      %v854 = vpop.xlane.xlu0 %853
      %v855 = vrcp.pop %v851
      %v856 = vmul.f32 %v846, %v855
      %v857 = vrcp.pop %v854
      %v858 = vmul.f32 %v848, %v857
      %859 = vrot.lane.b32.xlu0 %v731, 64
      %v860 = vpop.permute.xlu0 %859
      %861 = vrot.lane.b32.xlu0 %v736, 64
      %v862 = vpop.permute.xlu0 %861
      %v865 = vsel %vm835, %v856, 0
      %v868 = vsel %vm835, %v858, 0
      %vm870 = vcmask 1042432
      %v871 = vsel %vm870, %v862, 0
      %873 = vmatprep.subr.mxu0 0.0
      %874 = vmatpush1.msra.mxu0 %v860
      %875 = vmatprep.subr.mxu0 0.0
      %876 = vmatpush1.msra.mxu0 %v871
      %877 = vmatprep.subr.mxu0 0.0
      %878 = vmatpush1.msra.mxu0 0.0
      %879 = vmatprep.subr.mxu0 0.0
      %880 = vmatpush1.msra.mxu0 0.0
      %881 = vmatprep.subr.mxu0 0.0
      %882 = vmatpush1.msra.mxu0 0.0
      %883 = vmatprep.subr.mxu0 0.0
      %884 = vmatpush1.msra.mxu0 0.0
      %885 = vmatprep.subr.mxu0 0.0
      %886 = vmatpush1.msra.mxu0 0.0
      %887 = vmatprep.subr.mxu0 0.0
      %888 = vmatpush1.msra.mxu0 0.0
      %889 = vmatprep.subr.mxu0 0.0
      %890 = vmatpush1.msra.mxu0 0.0
      %891 = vmatprep.subr.mxu0 0.0
      %892 = vmatpush1.msra.mxu0 0.0
      %893 = vmatprep.subr.mxu0 0.0
      %894 = vmatpush1.msra.mxu0 0.0
      %895 = vmatprep.subr.mxu0 0.0
      %896 = vmatpush1.msra.mxu0 0.0
      %897 = vmatprep.subr.mxu0 0.0
      %898 = vmatpush1.msra.mxu0 0.0
      %899 = vmatprep.subr.mxu0 0.0
      %900 = vmatpush1.msra.mxu0 0.0
      %901 = vmatprep.subr.mxu0 0.0
      %902 = vmatpush1.msra.mxu0 0.0
      %903 = vmatprep.subr.mxu0 0.0
      %904 = vmatpush1.msra.mxu0 0.0
      %905 = vmatprep.subr.mxu0 0.0
      %906 = vmatpush1.msra.mxu0 0.0
      %907 = vmatprep.subr.mxu0 0.0
      %908 = vmatpush1.msra.mxu0 0.0
      %909 = vmatprep.subr.mxu0 0.0
      %910 = vmatpush1.msra.mxu0 0.0
      %911 = vmatprep.subr.mxu0 0.0
      %912 = vmatpush1.msra.mxu0 0.0
      %913 = vmatprep.subr.mxu0 0.0
      %914 = vmatpush1.msra.mxu0 0.0
      %915 = vmatprep.subr.mxu0 0.0
      %916 = vmatpush1.msra.mxu0 0.0
      %917 = vmatprep.subr.mxu0 0.0
      %918 = vmatpush1.msra.mxu0 0.0
      %919 = vmatprep.subr.mxu0 0.0
      %920 = vmatpush1.msra.mxu0 0.0
      %921 = vmatprep.subr.mxu0 0.0
      %922 = vmatpush1.msra.mxu0 0.0
      %923 = vmatprep.subr.mxu0 0.0
      %924 = vmatpush1.msra.mxu0 0.0
      %925 = vmatprep.subr.mxu0 0.0
      %926 = vmatpush1.msra.mxu0 0.0
      %927 = vmatprep.subr.mxu0 0.0
      %928 = vmatpush1.msra.mxu0 0.0
      %929 = vmatprep.subr.mxu0 0.0
      %930 = vmatpush1.msra.mxu0 0.0
      %931 = vmatprep.subr.mxu0 0.0
      %932 = vmatpush1.msra.mxu0 0.0
      %933 = vmatprep.subr.mxu0 0.0
      %934 = vmatpush1.msra.mxu0 0.0
      %935 = vmatprep.subr.mxu0 0.0
      %936 = vmatpush1.msra.mxu0 0.0
      %937 = vmatprep.mubr.f32.mxu0 0.0
      %938 = vmatmul.mubr.f32.gmra.mrb[0].mxu0 %v865
      %v939 = vpop.f32.mrb[0].mxu0
      %v940 = vadd.f32 0.0, %v939
      %v941 = vpop.f32.mrb[0].mxu0
      %942 = vmatprep.mubr.f32.mxu0 0.0
      %943 = vmatmul.mubr.f32.gmra.mrb[0].mxu0 %v868
      %v944 = vpop.f32.mrb[0].mxu0
      %v945 = vadd.f32 0.0, %v944
      %v946 = vpop.f32.mrb[0].mxu0
      %947 = vdwg.mxu0
      %948 = vrot.lane.b32.xlu0 %v731, 120
      %v949 = vpop.permute.xlu0 %948
      %950 = vrot.lane.b32.xlu0 %v736, 120
      %v951 = vpop.permute.xlu0 %950
      %952 = vrot.lane.b32.xlu0 %v731, 88
      %v953 = vpop.permute.xlu0 %952
      %954 = vrot.lane.b32.xlu0 %v736, 88
      %v955 = vpop.permute.xlu0 %954
      %v956 = vsel %vm751, %v949, 0
      %v958 = vsel %vm751, %v951, 0
      %v960 = vsel %vm751, %v953, 0
      %v962 = vsel %vm751, %v955, 0
      %964 = vmatprep.subr.mxu0 0.0
      %965 = vmatpush1.xpose.msra.mxu0 %v960
      %966 = vmatprep.subr.mxu0 0.0
      %967 = vmatpush1.xpose.msra.mxu0 %v962
      %968 = vmatprep.subr.mxu0 0.0
      %969 = vmatpush1.xpose.msra.mxu0 0.0
      %970 = vmatprep.subr.mxu0 0.0
      %971 = vmatpush1.xpose.msra.mxu0 0.0
      %972 = vmatprep.subr.mxu0 0.0
      %973 = vmatpush1.xpose.msra.mxu0 0.0
      %974 = vmatprep.subr.mxu0 0.0
      %975 = vmatpush1.xpose.msra.mxu0 0.0
      %976 = vmatprep.subr.mxu0 0.0
      %977 = vmatpush1.xpose.msra.mxu0 0.0
      %978 = vmatprep.subr.mxu0 0.0
      %979 = vmatpush1.xpose.msra.mxu0 0.0
      %980 = vmatprep.subr.mxu0 0.0
      %981 = vmatpush1.xpose.msra.mxu0 0.0
      %982 = vmatprep.subr.mxu0 0.0
      %983 = vmatpush1.xpose.msra.mxu0 0.0
      %984 = vmatprep.subr.mxu0 0.0
      %985 = vmatpush1.xpose.msra.mxu0 0.0
      %986 = vmatprep.subr.mxu0 0.0
      %987 = vmatpush1.xpose.msra.mxu0 0.0
      %988 = vmatprep.subr.mxu0 0.0
      %989 = vmatpush1.xpose.msra.mxu0 0.0
      %990 = vmatprep.subr.mxu0 0.0
      %991 = vmatpush1.xpose.msra.mxu0 0.0
      %992 = vmatprep.subr.mxu0 0.0
      %993 = vmatpush1.xpose.msra.mxu0 0.0
      %994 = vmatprep.subr.mxu0 0.0
      %995 = vmatpush1.xpose.msra.mxu0 0.0
      %996 = vmatprep.subr.mxu0 0.0
      %997 = vmatpush1.xpose.msra.mxu0 0.0
      %998 = vmatprep.subr.mxu0 0.0
      %999 = vmatpush1.xpose.msra.mxu0 0.0
      %1000 = vmatprep.subr.mxu0 0.0
      %1001 = vmatpush1.xpose.msra.mxu0 0.0
      %1002 = vmatprep.subr.mxu0 0.0
      %1003 = vmatpush1.xpose.msra.mxu0 0.0
      %1004 = vmatprep.subr.mxu0 0.0
      %1005 = vmatpush1.xpose.msra.mxu0 0.0
      %1006 = vmatprep.subr.mxu0 0.0
      %1007 = vmatpush1.xpose.msra.mxu0 0.0
      %1008 = vmatprep.subr.mxu0 0.0
      %1009 = vmatpush1.xpose.msra.mxu0 0.0
      %1010 = vmatprep.subr.mxu0 0.0
      %1011 = vmatpush1.xpose.msra.mxu0 0.0
      %1012 = vmatprep.subr.mxu0 0.0
      %1013 = vmatpush1.xpose.msra.mxu0 0.0
      %1014 = vmatprep.subr.mxu0 0.0
      %1015 = vmatpush1.xpose.msra.mxu0 0.0
      %1016 = vmatprep.subr.mxu0 0.0
      %1017 = vmatpush1.xpose.msra.mxu0 0.0
      %1018 = vmatprep.subr.mxu0 0.0
      %1019 = vmatpush1.xpose.msra.mxu0 0.0
      %1020 = vmatprep.subr.mxu0 0.0
      %1021 = vmatpush1.xpose.msra.mxu0 0.0
      %1022 = vmatprep.subr.mxu0 0.0
      %1023 = vmatpush1.xpose.msra.mxu0 0.0
      %1024 = vmatprep.subr.mxu0 0.0
      %1025 = vmatpush1.xpose.msra.mxu0 0.0
      %1026 = vmatprep.subr.mxu0 0.0
      %1027 = vmatpush1.xpose.msra.mxu0 0.0
      %1028 = vmatprep.mubr.f32.mxu0 0.0
      %1029 = vmatmul.mubr.f32.gmra.mrb[0].mxu0 %v956
      %v1030 = vpop.f32.mrb[0].mxu0
      %v1031 = vadd.f32 %v743, %v1030
      %v1032 = vpop.f32.mrb[0].mxu0
      %1033 = vmatprep.mubr.f32.mxu0 0.0
      %1034 = vmatmul.mubr.f32.gmra.mrb[0].mxu0 %v958
      %v1035 = vpop.f32.mrb[0].mxu0
      %v1036 = vadd.f32 %v743, %v1035
      %v1037 = vpop.f32.mrb[0].mxu0
      %1038 = vdwg.mxu0
      %v1039 = vsel %vm835, %v1031, -inf
      %1040 = vmax.xlane.f32.xlu0 %v1039
      %v1041 = vpop.xlane.xlu0 %1040
      %v1042 = vsel %vm839, %v1036, -inf
      %1043 = vmax.xlane.f32.xlu0 %v1042
      %v1044 = vpop.xlane.xlu0 %1043
      %v1045 = vsub.f32 %v1031, %v1041
      %v1046 = vsub.f32 %v1036, %v1044
      %v1047 = vmul.f32 %v1045, 1.442695
      %v1048 = vpow.pop %v1047
      %v1049 = vmul.f32 %v1046, 1.442695
      %v1050 = vpow.pop %v1049
      %v1051 = vsel %vm835, %v1048, 0.0
      %1052 = vadd.xlane.f32.xlu0 %v1051
      %v1053 = vpop.xlane.xlu0 %1052
      %v1054 = vsel %vm839, %v1050, 0.0
      %1055 = vadd.xlane.f32.xlu0 %v1054
      %v1056 = vpop.xlane.xlu0 %1055
      %v1057 = vrcp.pop %v1053
      %v1058 = vmul.f32 %v1048, %v1057
      %v1059 = vrcp.pop %v1056
      %v1060 = vmul.f32 %v1050, %v1059
      %1061 = vrot.lane.b32.xlu0 %v731, 56
      %v1062 = vpop.permute.xlu0 %1061
      %1063 = vrot.lane.b32.xlu0 %v736, 56
      %v1064 = vpop.permute.xlu0 %1063
      %v1067 = vsel %vm835, %v1058, 0
      %v1070 = vsel %vm835, %v1060, 0
      %v1072 = vsel %vm870, %v1064, 0
      %1074 = vmatprep.subr.mxu0 0.0
      %1075 = vmatpush1.msra.mxu0 %v1062
      %1076 = vmatprep.subr.mxu0 0.0
      %1077 = vmatpush1.msra.mxu0 %v1072
      %1078 = vmatprep.subr.mxu0 0.0
      %1079 = vmatpush1.msra.mxu0 0.0
      %1080 = vmatprep.subr.mxu0 0.0
      %1081 = vmatpush1.msra.mxu0 0.0
      %1082 = vmatprep.subr.mxu0 0.0
      %1083 = vmatpush1.msra.mxu0 0.0
      %1084 = vmatprep.subr.mxu0 0.0
      %1085 = vmatpush1.msra.mxu0 0.0
      %1086 = vmatprep.subr.mxu0 0.0
      %1087 = vmatpush1.msra.mxu0 0.0
      %1088 = vmatprep.subr.mxu0 0.0
      %1089 = vmatpush1.msra.mxu0 0.0
      %1090 = vmatprep.subr.mxu0 0.0
      %1091 = vmatpush1.msra.mxu0 0.0
      %1092 = vmatprep.subr.mxu0 0.0
      %1093 = vmatpush1.msra.mxu0 0.0
      %1094 = vmatprep.subr.mxu0 0.0
      %1095 = vmatpush1.msra.mxu0 0.0
      %1096 = vmatprep.subr.mxu0 0.0
      %1097 = vmatpush1.msra.mxu0 0.0
      %1098 = vmatprep.subr.mxu0 0.0
      %1099 = vmatpush1.msra.mxu0 0.0
      %1100 = vmatprep.subr.mxu0 0.0
      %1101 = vmatpush1.msra.mxu0 0.0
      %1102 = vmatprep.subr.mxu0 0.0
      %1103 = vmatpush1.msra.mxu0 0.0
      %1104 = vmatprep.subr.mxu0 0.0
      %1105 = vmatpush1.msra.mxu0 0.0
      %1106 = vmatprep.subr.mxu0 0.0
      %1107 = vmatpush1.msra.mxu0 0.0
      %1108 = vmatprep.subr.mxu0 0.0
      %1109 = vmatpush1.msra.mxu0 0.0
      %1110 = vmatprep.subr.mxu0 0.0
      %1111 = vmatpush1.msra.mxu0 0.0
      %1112 = vmatprep.subr.mxu0 0.0
      %1113 = vmatpush1.msra.mxu0 0.0
      %1114 = vmatprep.subr.mxu0 0.0
      %1115 = vmatpush1.msra.mxu0 0.0
      %1116 = vmatprep.subr.mxu0 0.0
      %1117 = vmatpush1.msra.mxu0 0.0
      %1118 = vmatprep.subr.mxu0 0.0
      %1119 = vmatpush1.msra.mxu0 0.0
      %1120 = vmatprep.subr.mxu0 0.0
      %1121 = vmatpush1.msra.mxu0 0.0
      %1122 = vmatprep.subr.mxu0 0.0
      %1123 = vmatpush1.msra.mxu0 0.0
      %1124 = vmatprep.subr.mxu0 0.0
      %1125 = vmatpush1.msra.mxu0 0.0
      %1126 = vmatprep.subr.mxu0 0.0
      %1127 = vmatpush1.msra.mxu0 0.0
      %1128 = vmatprep.subr.mxu0 0.0
      %1129 = vmatpush1.msra.mxu0 0.0
      %1130 = vmatprep.subr.mxu0 0.0
      %1131 = vmatpush1.msra.mxu0 0.0
      %1132 = vmatprep.subr.mxu0 0.0
      %1133 = vmatpush1.msra.mxu0 0.0
      %1134 = vmatprep.subr.mxu0 0.0
      %1135 = vmatpush1.msra.mxu0 0.0
      %1136 = vmatprep.subr.mxu0 0.0
      %1137 = vmatpush1.msra.mxu0 0.0
      %1138 = vmatprep.mubr.f32.mxu0 0.0
      %1139 = vmatmul.mubr.f32.gmra.mrb[0].mxu0 %v1067
      %v1140 = vpop.f32.mrb[0].mxu0
      %v1141 = vadd.f32 0.0, %v1140
      %v1142 = vpop.f32.mrb[0].mxu0
      %1143 = vmatprep.mubr.f32.mxu0 0.0
      %1144 = vmatmul.mubr.f32.gmra.mrb[0].mxu0 %v1070
      %v1145 = vpop.f32.mrb[0].mxu0
      %v1146 = vadd.f32 0.0, %v1145
      %v1147 = vpop.f32.mrb[0].mxu0
      %1148 = vdwg.mxu0
      %1149 = vrot.lane.b32.xlu0 %v731, 112
      %v1150 = vpop.permute.xlu0 %1149
      %1151 = vrot.lane.b32.xlu0 %v736, 112
      %v1152 = vpop.permute.xlu0 %1151
      %1153 = vrot.lane.b32.xlu0 %v731, 80
      %v1154 = vpop.permute.xlu0 %1153
      %1155 = vrot.lane.b32.xlu0 %v736, 80
      %v1156 = vpop.permute.xlu0 %1155
      %v1157 = vsel %vm751, %v1150, 0
      %v1159 = vsel %vm751, %v1152, 0
      %v1161 = vsel %vm751, %v1154, 0
      %v1163 = vsel %vm751, %v1156, 0
      %1165 = vmatprep.subr.mxu0 0.0
      %1166 = vmatpush1.xpose.msra.mxu0 %v1161
      %1167 = vmatprep.subr.mxu0 0.0
      %1168 = vmatpush1.xpose.msra.mxu0 %v1163
      %1169 = vmatprep.subr.mxu0 0.0
      %1170 = vmatpush1.xpose.msra.mxu0 0.0
      %1171 = vmatprep.subr.mxu0 0.0
      %1172 = vmatpush1.xpose.msra.mxu0 0.0
      %1173 = vmatprep.subr.mxu0 0.0
      %1174 = vmatpush1.xpose.msra.mxu0 0.0
      %1175 = vmatprep.subr.mxu0 0.0
      %1176 = vmatpush1.xpose.msra.mxu0 0.0
      %1177 = vmatprep.subr.mxu0 0.0
      %1178 = vmatpush1.xpose.msra.mxu0 0.0
      %1179 = vmatprep.subr.mxu0 0.0
      %1180 = vmatpush1.xpose.msra.mxu0 0.0
      %1181 = vmatprep.subr.mxu0 0.0
      %1182 = vmatpush1.xpose.msra.mxu0 0.0
      %1183 = vmatprep.subr.mxu0 0.0
      %1184 = vmatpush1.xpose.msra.mxu0 0.0
      %1185 = vmatprep.subr.mxu0 0.0
      %1186 = vmatpush1.xpose.msra.mxu0 0.0
      %1187 = vmatprep.subr.mxu0 0.0
      %1188 = vmatpush1.xpose.msra.mxu0 0.0
      %1189 = vmatprep.subr.mxu0 0.0
      %1190 = vmatpush1.xpose.msra.mxu0 0.0
      %1191 = vmatprep.subr.mxu0 0.0
      %1192 = vmatpush1.xpose.msra.mxu0 0.0
      %1193 = vmatprep.subr.mxu0 0.0
      %1194 = vmatpush1.xpose.msra.mxu0 0.0
      %1195 = vmatprep.subr.mxu0 0.0
      %1196 = vmatpush1.xpose.msra.mxu0 0.0
      %1197 = vmatprep.subr.mxu0 0.0
      %1198 = vmatpush1.xpose.msra.mxu0 0.0
      %1199 = vmatprep.subr.mxu0 0.0
      %1200 = vmatpush1.xpose.msra.mxu0 0.0
      %1201 = vmatprep.subr.mxu0 0.0
      %1202 = vmatpush1.xpose.msra.mxu0 0.0
      %1203 = vmatprep.subr.mxu0 0.0
      %1204 = vmatpush1.xpose.msra.mxu0 0.0
      %1205 = vmatprep.subr.mxu0 0.0
      %1206 = vmatpush1.xpose.msra.mxu0 0.0
      %1207 = vmatprep.subr.mxu0 0.0
      %1208 = vmatpush1.xpose.msra.mxu0 0.0
      %1209 = vmatprep.subr.mxu0 0.0
      %1210 = vmatpush1.xpose.msra.mxu0 0.0
      %1211 = vmatprep.subr.mxu0 0.0
      %1212 = vmatpush1.xpose.msra.mxu0 0.0
      %1213 = vmatprep.subr.mxu0 0.0
      %1214 = vmatpush1.xpose.msra.mxu0 0.0
      %1215 = vmatprep.subr.mxu0 0.0
      %1216 = vmatpush1.xpose.msra.mxu0 0.0
      %1217 = vmatprep.subr.mxu0 0.0
      %1218 = vmatpush1.xpose.msra.mxu0 0.0
      %1219 = vmatprep.subr.mxu0 0.0
      %1220 = vmatpush1.xpose.msra.mxu0 0.0
      %1221 = vmatprep.subr.mxu0 0.0
      %1222 = vmatpush1.xpose.msra.mxu0 0.0
      %1223 = vmatprep.subr.mxu0 0.0
      %1224 = vmatpush1.xpose.msra.mxu0 0.0
      %1225 = vmatprep.subr.mxu0 0.0
      %1226 = vmatpush1.xpose.msra.mxu0 0.0
      %1227 = vmatprep.subr.mxu0 0.0
      %1228 = vmatpush1.xpose.msra.mxu0 0.0
      %1229 = vmatprep.mubr.f32.mxu0 0.0
      %1230 = vmatmul.mubr.f32.gmra.mrb[0].mxu0 %v1157
      %v1231 = vpop.f32.mrb[0].mxu0
      %v1232 = vadd.f32 %v743, %v1231
      %v1233 = vpop.f32.mrb[0].mxu0
      %1234 = vmatprep.mubr.f32.mxu0 0.0
      %1235 = vmatmul.mubr.f32.gmra.mrb[0].mxu0 %v1159
      %v1236 = vpop.f32.mrb[0].mxu0
      %v1237 = vadd.f32 %v743, %v1236
      %v1238 = vpop.f32.mrb[0].mxu0
      %1239 = vdwg.mxu0
      %v1240 = vsel %vm835, %v1232, -inf
      %1241 = vmax.xlane.f32.xlu0 %v1240
      %v1242 = vpop.xlane.xlu0 %1241
      %v1243 = vsel %vm839, %v1237, -inf
      %1244 = vmax.xlane.f32.xlu0 %v1243
      %v1245 = vpop.xlane.xlu0 %1244
      %v1246 = vsub.f32 %v1232, %v1242
      %v1247 = vsub.f32 %v1237, %v1245
      %v1248 = vmul.f32 %v1246, 1.442695
      %v1249 = vpow.pop %v1248
      %v1250 = vmul.f32 %v1247, 1.442695
      %v1251 = vpow.pop %v1250
      %v1252 = vsel %vm835, %v1249, 0.0
      %1253 = vadd.xlane.f32.xlu0 %v1252
      %v1254 = vpop.xlane.xlu0 %1253
      %v1255 = vsel %vm839, %v1251, 0.0
      %1256 = vadd.xlane.f32.xlu0 %v1255
      %v1257 = vpop.xlane.xlu0 %1256
      %v1258 = vrcp.pop %v1254
      %v1259 = vmul.f32 %v1249, %v1258
      %v1260 = vrcp.pop %v1257
      %v1261 = vmul.f32 %v1251, %v1260
      %1262 = vrot.lane.b32.xlu0 %v731, 48
      %v1263 = vpop.permute.xlu0 %1262
      %1264 = vrot.lane.b32.xlu0 %v736, 48
      %v1265 = vpop.permute.xlu0 %1264
      %v1268 = vsel %vm835, %v1259, 0
      %v1271 = vsel %vm835, %v1261, 0
      %v1273 = vsel %vm870, %v1265, 0
      %1275 = vmatprep.subr.mxu0 0.0
      %1276 = vmatpush1.msra.mxu0 %v1263
      %1277 = vmatprep.subr.mxu0 0.0
      %1278 = vmatpush1.msra.mxu0 %v1273
      %1279 = vmatprep.subr.mxu0 0.0
      %1280 = vmatpush1.msra.mxu0 0.0
      %1281 = vmatprep.subr.mxu0 0.0
      %1282 = vmatpush1.msra.mxu0 0.0
      %1283 = vmatprep.subr.mxu0 0.0
      %1284 = vmatpush1.msra.mxu0 0.0
      %1285 = vmatprep.subr.mxu0 0.0
      %1286 = vmatpush1.msra.mxu0 0.0
      %1287 = vmatprep.subr.mxu0 0.0
      %1288 = vmatpush1.msra.mxu0 0.0
      %1289 = vmatprep.subr.mxu0 0.0
      %1290 = vmatpush1.msra.mxu0 0.0
      %1291 = vmatprep.subr.mxu0 0.0
      %1292 = vmatpush1.msra.mxu0 0.0
      %1293 = vmatprep.subr.mxu0 0.0
      %1294 = vmatpush1.msra.mxu0 0.0
      %1295 = vmatprep.subr.mxu0 0.0
      %1296 = vmatpush1.msra.mxu0 0.0
      %1297 = vmatprep.subr.mxu0 0.0
      %1298 = vmatpush1.msra.mxu0 0.0
      %1299 = vmatprep.subr.mxu0 0.0
      %1300 = vmatpush1.msra.mxu0 0.0
      %1301 = vmatprep.subr.mxu0 0.0
      %1302 = vmatpush1.msra.mxu0 0.0
      %1303 = vmatprep.subr.mxu0 0.0
      %1304 = vmatpush1.msra.mxu0 0.0
      %1305 = vmatprep.subr.mxu0 0.0
      %1306 = vmatpush1.msra.mxu0 0.0
      %1307 = vmatprep.subr.mxu0 0.0
      %1308 = vmatpush1.msra.mxu0 0.0
      %1309 = vmatprep.subr.mxu0 0.0
      %1310 = vmatpush1.msra.mxu0 0.0
      %1311 = vmatprep.subr.mxu0 0.0
      %1312 = vmatpush1.msra.mxu0 0.0
      %1313 = vmatprep.subr.mxu0 0.0
      %1314 = vmatpush1.msra.mxu0 0.0
      %1315 = vmatprep.subr.mxu0 0.0
      %1316 = vmatpush1.msra.mxu0 0.0
      %1317 = vmatprep.subr.mxu0 0.0
      %1318 = vmatpush1.msra.mxu0 0.0
      %1319 = vmatprep.subr.mxu0 0.0
      %1320 = vmatpush1.msra.mxu0 0.0
      %1321 = vmatprep.subr.mxu0 0.0
      %1322 = vmatpush1.msra.mxu0 0.0
      %1323 = vmatprep.subr.mxu0 0.0
      %1324 = vmatpush1.msra.mxu0 0.0
      %1325 = vmatprep.subr.mxu0 0.0
      %1326 = vmatpush1.msra.mxu0 0.0
      %1327 = vmatprep.subr.mxu0 0.0
      %1328 = vmatpush1.msra.mxu0 0.0
      %1329 = vmatprep.subr.mxu0 0.0
      %1330 = vmatpush1.msra.mxu0 0.0
      %1331 = vmatprep.subr.mxu0 0.0
      %1332 = vmatpush1.msra.mxu0 0.0
      %1333 = vmatprep.subr.mxu0 0.0
      %1334 = vmatpush1.msra.mxu0 0.0
      %1335 = vmatprep.subr.mxu0 0.0
      %1336 = vmatpush1.msra.mxu0 0.0
      %1337 = vmatprep.subr.mxu0 0.0
      %1338 = vmatpush1.msra.mxu0 0.0
      %1339 = vmatprep.mubr.f32.mxu0 0.0
      %1340 = vmatmul.mubr.f32.gmra.mrb[0].mxu0 %v1268
      %v1341 = vpop.f32.mrb[0].mxu0
      %v1342 = vadd.f32 0.0, %v1341
      %v1343 = vpop.f32.mrb[0].mxu0
      %1344 = vmatprep.mubr.f32.mxu0 0.0
      %1345 = vmatmul.mubr.f32.gmra.mrb[0].mxu0 %v1271
      %v1346 = vpop.f32.mrb[0].mxu0
      %v1347 = vadd.f32 0.0, %v1346
      %v1348 = vpop.f32.mrb[0].mxu0
      %1349 = vdwg.mxu0
      %1350 = vrot.lane.b32.xlu0 %v731, 104
      %v1351 = vpop.permute.xlu0 %1350
      %1352 = vrot.lane.b32.xlu0 %v736, 104
      %v1353 = vpop.permute.xlu0 %1352
      %1354 = vrot.lane.b32.xlu0 %v731, 72
      %v1355 = vpop.permute.xlu0 %1354
      %1356 = vrot.lane.b32.xlu0 %v736, 72
      %v1357 = vpop.permute.xlu0 %1356
      %v1358 = vsel %vm751, %v1351, 0
      %v1360 = vsel %vm751, %v1353, 0
      %v1362 = vsel %vm751, %v1355, 0
      %v1364 = vsel %vm751, %v1357, 0
      %1366 = vmatprep.subr.mxu0 0.0
      %1367 = vmatpush1.xpose.msra.mxu0 %v1362
      %1368 = vmatprep.subr.mxu0 0.0
      %1369 = vmatpush1.xpose.msra.mxu0 %v1364
      %1370 = vmatprep.subr.mxu0 0.0
      %1371 = vmatpush1.xpose.msra.mxu0 0.0
      %1372 = vmatprep.subr.mxu0 0.0
      %1373 = vmatpush1.xpose.msra.mxu0 0.0
      %1374 = vmatprep.subr.mxu0 0.0
      %1375 = vmatpush1.xpose.msra.mxu0 0.0
      %1376 = vmatprep.subr.mxu0 0.0
      %1377 = vmatpush1.xpose.msra.mxu0 0.0
      %1378 = vmatprep.subr.mxu0 0.0
      %1379 = vmatpush1.xpose.msra.mxu0 0.0
      %1380 = vmatprep.subr.mxu0 0.0
      %1381 = vmatpush1.xpose.msra.mxu0 0.0
      %1382 = vmatprep.subr.mxu0 0.0
      %1383 = vmatpush1.xpose.msra.mxu0 0.0
      %1384 = vmatprep.subr.mxu0 0.0
      %1385 = vmatpush1.xpose.msra.mxu0 0.0
      %1386 = vmatprep.subr.mxu0 0.0
      %1387 = vmatpush1.xpose.msra.mxu0 0.0
      %1388 = vmatprep.subr.mxu0 0.0
      %1389 = vmatpush1.xpose.msra.mxu0 0.0
      %1390 = vmatprep.subr.mxu0 0.0
      %1391 = vmatpush1.xpose.msra.mxu0 0.0
      %1392 = vmatprep.subr.mxu0 0.0
      %1393 = vmatpush1.xpose.msra.mxu0 0.0
      %1394 = vmatprep.subr.mxu0 0.0
      %1395 = vmatpush1.xpose.msra.mxu0 0.0
      %1396 = vmatprep.subr.mxu0 0.0
      %1397 = vmatpush1.xpose.msra.mxu0 0.0
      %1398 = vmatprep.subr.mxu0 0.0
      %1399 = vmatpush1.xpose.msra.mxu0 0.0
      %1400 = vmatprep.subr.mxu0 0.0
      %1401 = vmatpush1.xpose.msra.mxu0 0.0
      %1402 = vmatprep.subr.mxu0 0.0
      %1403 = vmatpush1.xpose.msra.mxu0 0.0
      %1404 = vmatprep.subr.mxu0 0.0
      %1405 = vmatpush1.xpose.msra.mxu0 0.0
      %1406 = vmatprep.subr.mxu0 0.0
      %1407 = vmatpush1.xpose.msra.mxu0 0.0
      %1408 = vmatprep.subr.mxu0 0.0
      %1409 = vmatpush1.xpose.msra.mxu0 0.0
      %1410 = vmatprep.subr.mxu0 0.0
      %1411 = vmatpush1.xpose.msra.mxu0 0.0
      %1412 = vmatprep.subr.mxu0 0.0
      %1413 = vmatpush1.xpose.msra.mxu0 0.0
      %1414 = vmatprep.subr.mxu0 0.0
      %1415 = vmatpush1.xpose.msra.mxu0 0.0
      %1416 = vmatprep.subr.mxu0 0.0
      %1417 = vmatpush1.xpose.msra.mxu0 0.0
      %1418 = vmatprep.subr.mxu0 0.0
      %1419 = vmatpush1.xpose.msra.mxu0 0.0
      %1420 = vmatprep.subr.mxu0 0.0
      %1421 = vmatpush1.xpose.msra.mxu0 0.0
      %1422 = vmatprep.subr.mxu0 0.0
      %1423 = vmatpush1.xpose.msra.mxu0 0.0
      %1424 = vmatprep.subr.mxu0 0.0
      %1425 = vmatpush1.xpose.msra.mxu0 0.0
      %1426 = vmatprep.subr.mxu0 0.0
      %1427 = vmatpush1.xpose.msra.mxu0 0.0
      %1428 = vmatprep.subr.mxu0 0.0
      %1429 = vmatpush1.xpose.msra.mxu0 0.0
      %1430 = vmatprep.mubr.f32.mxu0 0.0
      %1431 = vmatmul.mubr.f32.gmra.mrb[0].mxu0 %v1358
      %v1432 = vpop.f32.mrb[0].mxu0
      %v1433 = vadd.f32 %v743, %v1432
      %v1434 = vpop.f32.mrb[0].mxu0
      %1435 = vmatprep.mubr.f32.mxu0 0.0
      %1436 = vmatmul.mubr.f32.gmra.mrb[0].mxu0 %v1360
      %v1437 = vpop.f32.mrb[0].mxu0
      %v1438 = vadd.f32 %v743, %v1437
      %v1439 = vpop.f32.mrb[0].mxu0
      %1440 = vdwg.mxu0
      %v1441 = vsel %vm835, %v1433, -inf
      %1442 = vmax.xlane.f32.xlu0 %v1441
      %v1443 = vpop.xlane.xlu0 %1442
      %v1444 = vsel %vm839, %v1438, -inf
      %1445 = vmax.xlane.f32.xlu0 %v1444
      %v1446 = vpop.xlane.xlu0 %1445
      %v1447 = vsub.f32 %v1433, %v1443
      %v1448 = vsub.f32 %v1438, %v1446
      %v1449 = vmul.f32 %v1447, 1.442695
      %v1450 = vpow.pop %v1449
      %v1451 = vmul.f32 %v1448, 1.442695
      %v1452 = vpow.pop %v1451
      %v1453 = vsel %vm835, %v1450, 0.0
      %1454 = vadd.xlane.f32.xlu0 %v1453
      %v1455 = vpop.xlane.xlu0 %1454
      %v1456 = vsel %vm839, %v1452, 0.0
      %1457 = vadd.xlane.f32.xlu0 %v1456
      %v1458 = vpop.xlane.xlu0 %1457
      %v1459 = vrcp.pop %v1455
      %v1460 = vmul.f32 %v1450, %v1459
      %v1461 = vrcp.pop %v1458
      %v1462 = vmul.f32 %v1452, %v1461
      %1463 = vrot.lane.b32.xlu0 %v731, 40
      %v1464 = vpop.permute.xlu0 %1463
      %1465 = vrot.lane.b32.xlu0 %v736, 40
      %v1466 = vpop.permute.xlu0 %1465
      %v1469 = vsel %vm835, %v1460, 0
      %v1472 = vsel %vm835, %v1462, 0
      %v1474 = vsel %vm870, %v1466, 0
      %1476 = vmatprep.subr.mxu0 0.0
      %1477 = vmatpush1.msra.mxu0 %v1464
      %1478 = vmatprep.subr.mxu0 0.0
      %1479 = vmatpush1.msra.mxu0 %v1474
      %1480 = vmatprep.subr.mxu0 0.0
      %1481 = vmatpush1.msra.mxu0 0.0
      %1482 = vmatprep.subr.mxu0 0.0
      %1483 = vmatpush1.msra.mxu0 0.0
      %1484 = vmatprep.subr.mxu0 0.0
      %1485 = vmatpush1.msra.mxu0 0.0
      %1486 = vmatprep.subr.mxu0 0.0
      %1487 = vmatpush1.msra.mxu0 0.0
      %1488 = vmatprep.subr.mxu0 0.0
      %1489 = vmatpush1.msra.mxu0 0.0
      %1490 = vmatprep.subr.mxu0 0.0
      %1491 = vmatpush1.msra.mxu0 0.0
      %1492 = vmatprep.subr.mxu0 0.0
      %1493 = vmatpush1.msra.mxu0 0.0
      %1494 = vmatprep.subr.mxu0 0.0
      %1495 = vmatpush1.msra.mxu0 0.0
      %1496 = vmatprep.subr.mxu0 0.0
      %1497 = vmatpush1.msra.mxu0 0.0
      %1498 = vmatprep.subr.mxu0 0.0
      %1499 = vmatpush1.msra.mxu0 0.0
      %1500 = vmatprep.subr.mxu0 0.0
      %1501 = vmatpush1.msra.mxu0 0.0
      %1502 = vmatprep.subr.mxu0 0.0
      %1503 = vmatpush1.msra.mxu0 0.0
      %1504 = vmatprep.subr.mxu0 0.0
      %1505 = vmatpush1.msra.mxu0 0.0
      %1506 = vmatprep.subr.mxu0 0.0
      %1507 = vmatpush1.msra.mxu0 0.0
      %1508 = vmatprep.subr.mxu0 0.0
      %1509 = vmatpush1.msra.mxu0 0.0
      %1510 = vmatprep.subr.mxu0 0.0
      %1511 = vmatpush1.msra.mxu0 0.0
      %1512 = vmatprep.subr.mxu0 0.0
      %1513 = vmatpush1.msra.mxu0 0.0
      %1514 = vmatprep.subr.mxu0 0.0
      %1515 = vmatpush1.msra.mxu0 0.0
      %1516 = vmatprep.subr.mxu0 0.0
      %1517 = vmatpush1.msra.mxu0 0.0
      %1518 = vmatprep.subr.mxu0 0.0
      %1519 = vmatpush1.msra.mxu0 0.0
      %1520 = vmatprep.subr.mxu0 0.0
      %1521 = vmatpush1.msra.mxu0 0.0
      %1522 = vmatprep.subr.mxu0 0.0
      %1523 = vmatpush1.msra.mxu0 0.0
      %1524 = vmatprep.subr.mxu0 0.0
      %1525 = vmatpush1.msra.mxu0 0.0
      %1526 = vmatprep.subr.mxu0 0.0
      %1527 = vmatpush1.msra.mxu0 0.0
      %1528 = vmatprep.subr.mxu0 0.0
      %1529 = vmatpush1.msra.mxu0 0.0
      %1530 = vmatprep.subr.mxu0 0.0
      %1531 = vmatpush1.msra.mxu0 0.0
      %1532 = vmatprep.subr.mxu0 0.0
      %1533 = vmatpush1.msra.mxu0 0.0
      %1534 = vmatprep.subr.mxu0 0.0
      %1535 = vmatpush1.msra.mxu0 0.0
      %1536 = vmatprep.subr.mxu0 0.0
      %1537 = vmatpush1.msra.mxu0 0.0
      %1538 = vmatprep.subr.mxu0 0.0
      %1539 = vmatpush1.msra.mxu0 0.0
      %1540 = vmatprep.mubr.f32.mxu0 0.0
      %1541 = vmatmul.mubr.f32.gmra.mrb[0].mxu0 %v1469
      %v1542 = vpop.f32.mrb[0].mxu0
      %v1543 = vadd.f32 0.0, %v1542
      %v1544 = vpop.f32.mrb[0].mxu0
      %1545 = vmatprep.mubr.f32.mxu0 0.0
      %1546 = vmatmul.mubr.f32.gmra.mrb[0].mxu0 %v1472
      %v1547 = vpop.f32.mrb[0].mxu0
      %v1548 = vadd.f32 0.0, %v1547
      %v1549 = vpop.f32.mrb[0].mxu0
      %1550 = vdwg.mxu0
      %1553 = vrot.lane.b32.xlu0 %v1141, 8
      %v1554 = vpop.permute.xlu0 %1553
      %1555 = vrot.lane.b32.xlu0 %v1146, 8
      %v1556 = vpop.permute.xlu0 %1555
      %1561 = vrot.lane.b32.xlu0 %v1342, 16
      %v1562 = vpop.permute.xlu0 %1561
      %1563 = vrot.lane.b32.xlu0 %v1347, 16
      %v1564 = vpop.permute.xlu0 %1563
      %1569 = vrot.lane.b32.xlu0 %v1543, 24
      %v1570 = vpop.permute.xlu0 %1569
      %1571 = vrot.lane.b32.xlu0 %v1548, 24
      %v1572 = vpop.permute.xlu0 %1571
      %v1575 = vsel %vm751, %v940, %v1554
      %v1576 = vsel %vm751, %v945, %v1556
      %vm1577 = vcmask 130048
      %v1578 = vsel %vm1577, %v1575, %v1562
      %v1579 = vsel %vm1577, %v1576, %v1564
      %vm1580 = vcmask 195584
      %v1581 = vsel %vm1580, %v1578, %v1570
      %v1582 = vsel %vm1580, %v1579, %v1572
      %v1584 = vlaneseq
      %v1585 = vshrl.u32 %v1584, 7
      %v1586 = vsub.s32 0, %v1585
      %v1587 = vrot.slane %v651, %v1586
      %v1590 = vsel %vm583, %v1581, 0
      %v1593 = vsel %vm583, %v1582, 0
      %1595 = vmatprep.subr.mxu0 0.0
      %1596 = vmatpush1.msra.mxu0 %v647
      %1597 = vmatprep.subr.mxu0 0.0
      %1598 = vmatpush1.msra.mxu0 %v648
      %1599 = vmatprep.subr.mxu0 0.0
      %1600 = vmatpush1.msra.mxu0 %v649
      %1601 = vmatprep.subr.mxu0 0.0
      %1602 = vmatpush1.msra.mxu0 %v650
      %1603 = vmatprep.subr.mxu0 0.0
      %1604 = vmatpush1.msra.mxu0 0.0
      %1605 = vmatprep.subr.mxu0 0.0
      %1606 = vmatpush1.msra.mxu0 0.0
      %1607 = vmatprep.subr.mxu0 0.0
      %1608 = vmatpush1.msra.mxu0 0.0
      %1609 = vmatprep.subr.mxu0 0.0
      %1610 = vmatpush1.msra.mxu0 0.0
      %1611 = vmatprep.subr.mxu0 0.0
      %1612 = vmatpush1.msra.mxu0 0.0
      %1613 = vmatprep.subr.mxu0 0.0
      %1614 = vmatpush1.msra.mxu0 0.0
      %1615 = vmatprep.subr.mxu0 0.0
      %1616 = vmatpush1.msra.mxu0 0.0
      %1617 = vmatprep.subr.mxu0 0.0
      %1618 = vmatpush1.msra.mxu0 0.0
      %1619 = vmatprep.subr.mxu0 0.0
      %1620 = vmatpush1.msra.mxu0 0.0
      %1621 = vmatprep.subr.mxu0 0.0
      %1622 = vmatpush1.msra.mxu0 0.0
      %1623 = vmatprep.subr.mxu0 0.0
      %1624 = vmatpush1.msra.mxu0 0.0
      %1625 = vmatprep.subr.mxu0 0.0
      %1626 = vmatpush1.msra.mxu0 0.0
      %1627 = vmatprep.subr.mxu0 0.0
      %1628 = vmatpush1.msra.mxu0 0.0
      %1629 = vmatprep.subr.mxu0 0.0
      %1630 = vmatpush1.msra.mxu0 0.0
      %1631 = vmatprep.subr.mxu0 0.0
      %1632 = vmatpush1.msra.mxu0 0.0
      %1633 = vmatprep.subr.mxu0 0.0
      %1634 = vmatpush1.msra.mxu0 0.0
      %1635 = vmatprep.subr.mxu0 0.0
      %1636 = vmatpush1.msra.mxu0 0.0
      %1637 = vmatprep.subr.mxu0 0.0
      %1638 = vmatpush1.msra.mxu0 0.0
      %1639 = vmatprep.subr.mxu0 0.0
      %1640 = vmatpush1.msra.mxu0 0.0
      %1641 = vmatprep.subr.mxu0 0.0
      %1642 = vmatpush1.msra.mxu0 0.0
      %1643 = vmatprep.subr.mxu0 0.0
      %1644 = vmatpush1.msra.mxu0 0.0
      %1645 = vmatprep.subr.mxu0 0.0
      %1646 = vmatpush1.msra.mxu0 0.0
      %1647 = vmatprep.subr.mxu0 0.0
      %1648 = vmatpush1.msra.mxu0 0.0
      %1649 = vmatprep.subr.mxu0 0.0
      %1650 = vmatpush1.msra.mxu0 0.0
      %1651 = vmatprep.subr.mxu0 0.0
      %1652 = vmatpush1.msra.mxu0 0.0
      %1653 = vmatprep.subr.mxu0 0.0
      %1654 = vmatpush1.msra.mxu0 0.0
      %1655 = vmatprep.subr.mxu0 0.0
      %1656 = vmatpush1.msra.mxu0 0.0
      %1657 = vmatprep.subr.mxu0 0.0
      %1658 = vmatpush1.msra.mxu0 0.0
      %1659 = vmatprep.mubr.f32.mxu0 0.0
      %1660 = vmatmul.mubr.f32.gmra.mrb[0].mxu0 %v1590
      %v1661 = vpop.f32.mrb[0].mxu0
      %v1662 = vadd.f32 %v1587, %v1661
      %v1663 = vpop.f32.mrb[0].mxu0
      %1664 = vmatprep.mubr.f32.mxu0 0.0
      %1665 = vmatmul.mubr.f32.gmra.mrb[0].mxu0 %v1593
      %v1666 = vpop.f32.mrb[0].mxu0
      %v1667 = vadd.f32 %v1587, %v1666
      %v1668 = vpop.f32.mrb[0].mxu0
      %1669 = vdwg.mxu0
      %v1670 = vadd.f32 %v576, %v1662
      %v1671 = vadd.f32 %v577, %v1667
      %v1672 = vsel %vm583, %v1670, 0.0
      %1673 = vadd.xlane.f32.xlu0 %v1672
      %v1674 = vpop.xlane.xlu0 %1673
      %v1675 = vsel %vm587, %v1671, 0.0
      %1676 = vadd.xlane.f32.xlu0 %v1675
      %v1677 = vpop.xlane.xlu0 %1676
      %v1678 = vmul.f32 %v1674, %v591
      %v1679 = vmul.f32 %v1677, %v591
      %v1680 = vsub.f32 %v1670, %v1678
      %v1681 = vsub.f32 %v1671, %v1679
      %v1682 = vmul.f32 %v1680, %v1680
      %v1683 = vmul.f32 %v1681, %v1681
      %v1684 = vsel %vm583, %v1682, 0.0
      %1685 = vadd.xlane.f32.xlu0 %v1684
      %v1686 = vpop.xlane.xlu0 %1685
      %v1687 = vsel %vm587, %v1683, 0.0
      %1688 = vadd.xlane.f32.xlu0 %v1687
      %v1689 = vpop.xlane.xlu0 %1688
      %v1690 = vmul.f32 %v1686, 0.032258064
      %v1691 = vmul.f32 %v1689, 0.032258064
      %v1693 = vlaneseq
      %v1694 = vshrl.u32 %v1693, 7
      %v1695 = vsub.s32 0, %v1694
      %v1696 = vrot.slane %v581, %v1695
      %v1698 = vmul.f32 %v1696, %v1680
      %v1699 = vmul.f32 %v1696, %v1681
      %v1700 = vrsqrt.pop %v1690
      %v1701 = vmul.f32 %v1690, %v1700
      %vm1702 = vcmp.eq.f32.partialorder %v1690, inf
      %v1703 = vsel %vm1702, %v1690, %v1701
      %vm1704 = vcmp.eq.f32.partialorder %v1690, 0.0
      %v1705 = vand.u32 %v1690, 2147483648
      %v1706 = vsel %vm1704, %v1705, %v1703
      %v1707 = vrsqrt.pop %v1691
      %v1708 = vmul.f32 %v1691, %v1707
      %vm1709 = vcmp.eq.f32.partialorder %v1691, inf
      %v1710 = vsel %vm1709, %v1691, %v1708
      %vm1711 = vcmp.eq.f32.partialorder %v1691, 0.0
      %v1712 = vand.u32 %v1691, 2147483648
      %v1713 = vsel %vm1711, %v1712, %v1710
      %v1714 = vadd.f32 %v1706, 1e-06
      %v1715 = vadd.f32 %v1713, 1e-06
      %v1716 = vrcp.pop %v1714
      %v1717 = vmul.f32 %v1698, %v1716
      %v1718 = vrcp.pop %v1715
      %v1719 = vmul.f32 %v1699, %v1718
      %v1721 = vlaneseq
      %v1722 = vshrl.u32 %v1721, 7
      %v1723 = vsub.s32 0, %v1722
      %v1724 = vrot.slane %v582, %v1723
      %v1726 = vadd.f32 %v1717, %v1724
      %v1727 = vadd.f32 %v1719, %v1724
      %v1728 = vld [vmem:[%s549] sm:$0xff]
      %v1729 = vld [vmem:[%s549 + $0x8] sm:$0xff]
      %v1730 = vld [vmem:[%s549 + $0x10] sm:$0xff]
      %v1731 = vld [vmem:[%s549 + $0x18] sm:$0xff]
      %v1732 = vld [vmem:[%s552] sm:$0x1]
      %v1733 = vld [vmem:[%s557] sm:$0xff]
      %v1734 = vld [vmem:[%s557 + $0x8] sm:$0xff]
      %v1735 = vld [vmem:[%s557 + $0x10] sm:$0xff]
      %v1736 = vld [vmem:[%s557 + $0x18] sm:$0xff]
      %v1737 = vld [vmem:[%s557 + $0x20] sm:$0xff]
      %v1738 = vld [vmem:[%s557 + $0x28] sm:$0xff]
      %v1739 = vld [vmem:[%s557 + $0x30] sm:$0xff]
      %v1740 = vld [vmem:[%s557 + $0x38] sm:$0xff]
      %v1741 = vld [vmem:[%s560] sm:$0x1]
      %v1743 = vlaneseq
      %v1744 = vshrl.u32 %v1743, 7
      %v1745 = vsub.s32 0, %v1744
      %v1746 = vrot.slane %v1732, %v1745
      %v1749 = vsel %vm583, %v1726, 0
      %v1752 = vsel %vm583, %v1727, 0
      %1754 = vmatprep.subr.mxu0 0.0
      %1755 = vmatpush1.msra.mxu0 %v1728
      %1756 = vmatprep.subr.mxu0 0.0
      %1757 = vmatpush1.msra.mxu0 %v1729
      %1758 = vmatprep.subr.mxu0 0.0
      %1759 = vmatpush1.msra.mxu0 %v1730
      %1760 = vmatprep.subr.mxu0 0.0
      %1761 = vmatpush1.msra.mxu0 %v1731
      %1762 = vmatprep.subr.mxu0 0.0
      %1763 = vmatpush1.msra.mxu0 0.0
      %1764 = vmatprep.subr.mxu0 0.0
      %1765 = vmatpush1.msra.mxu0 0.0
      %1766 = vmatprep.subr.mxu0 0.0
      %1767 = vmatpush1.msra.mxu0 0.0
      %1768 = vmatprep.subr.mxu0 0.0
      %1769 = vmatpush1.msra.mxu0 0.0
      %1770 = vmatprep.subr.mxu0 0.0
      %1771 = vmatpush1.msra.mxu0 0.0
      %1772 = vmatprep.subr.mxu0 0.0
      %1773 = vmatpush1.msra.mxu0 0.0
      %1774 = vmatprep.subr.mxu0 0.0
      %1775 = vmatpush1.msra.mxu0 0.0
      %1776 = vmatprep.subr.mxu0 0.0
      %1777 = vmatpush1.msra.mxu0 0.0
      %1778 = vmatprep.subr.mxu0 0.0
      %1779 = vmatpush1.msra.mxu0 0.0
      %1780 = vmatprep.subr.mxu0 0.0
      %1781 = vmatpush1.msra.mxu0 0.0
      %1782 = vmatprep.subr.mxu0 0.0
      %1783 = vmatpush1.msra.mxu0 0.0
      %1784 = vmatprep.subr.mxu0 0.0
      %1785 = vmatpush1.msra.mxu0 0.0
      %1786 = vmatprep.subr.mxu0 0.0
      %1787 = vmatpush1.msra.mxu0 0.0
      %1788 = vmatprep.subr.mxu0 0.0
      %1789 = vmatpush1.msra.mxu0 0.0
      %1790 = vmatprep.subr.mxu0 0.0
      %1791 = vmatpush1.msra.mxu0 0.0
      %1792 = vmatprep.subr.mxu0 0.0
      %1793 = vmatpush1.msra.mxu0 0.0
      %1794 = vmatprep.subr.mxu0 0.0
      %1795 = vmatpush1.msra.mxu0 0.0
      %1796 = vmatprep.subr.mxu0 0.0
      %1797 = vmatpush1.msra.mxu0 0.0
      %1798 = vmatprep.subr.mxu0 0.0
      %1799 = vmatpush1.msra.mxu0 0.0
      %1800 = vmatprep.subr.mxu0 0.0
      %1801 = vmatpush1.msra.mxu0 0.0
      %1802 = vmatprep.subr.mxu0 0.0
      %1803 = vmatpush1.msra.mxu0 0.0
      %1804 = vmatprep.subr.mxu0 0.0
      %1805 = vmatpush1.msra.mxu0 0.0
      %1806 = vmatprep.subr.mxu0 0.0
      %1807 = vmatpush1.msra.mxu0 0.0
      %1808 = vmatprep.subr.mxu0 0.0
      %1809 = vmatpush1.msra.mxu0 0.0
      %1810 = vmatprep.subr.mxu0 0.0
      %1811 = vmatpush1.msra.mxu0 0.0
      %1812 = vmatprep.subr.mxu0 0.0
      %1813 = vmatpush1.msra.mxu0 0.0
      %1814 = vmatprep.subr.mxu0 0.0
      %1815 = vmatpush1.msra.mxu0 0.0
      %1816 = vmatprep.subr.mxu0 0.0
      %1817 = vmatpush1.msra.mxu0 0.0
      %1818 = vmatprep.mubr.f32.mxu0 0.0
      %1819 = vmatmul.mubr.f32.gmra.mrb[0].mxu0 %v1749
      %v1820 = vpop.f32.mrb[0].mxu0
      %v1821 = vadd.f32 %v1746, %v1820
      %v1822 = vpop.f32.mrb[0].mxu0
      %1823 = vmatprep.mubr.f32.mxu0 0.0
      %1824 = vmatmul.mubr.f32.gmra.mrb[0].mxu0 %v1752
      %v1825 = vpop.f32.mrb[0].mxu0
      %v1826 = vadd.f32 %v1746, %v1825
      %v1827 = vpop.f32.mrb[0].mxu0
      %1828 = vdwg.mxu0
      %v1829 = vmax.f32 %v1821, 0.0
      %v1830 = vmax.f32 %v1826, 0.0
      %v1832 = vlaneseq
      %v1833 = vshrl.u32 %v1832, 7
      %v1834 = vsub.s32 0, %v1833
      %v1835 = vrot.slane %v1741, %v1834
      %vm1837 = vcmask 523264
      %v1839 = vsel %vm1837, %v1829, 0
      %v1842 = vsel %vm1837, %v1830, 0
      %1844 = vmatprep.subr.mxu0 0.0
      %1845 = vmatpush1.msra.mxu0 %v1733
      %1846 = vmatprep.subr.mxu0 0.0
      %1847 = vmatpush1.msra.mxu0 %v1734
      %1848 = vmatprep.subr.mxu0 0.0
      %1849 = vmatpush1.msra.mxu0 %v1735
      %1850 = vmatprep.subr.mxu0 0.0
      %1851 = vmatpush1.msra.mxu0 %v1736
      %1852 = vmatprep.subr.mxu0 0.0
      %1853 = vmatpush1.msra.mxu0 %v1737
      %1854 = vmatprep.subr.mxu0 0.0
      %1855 = vmatpush1.msra.mxu0 %v1738
      %1856 = vmatprep.subr.mxu0 0.0
      %1857 = vmatpush1.msra.mxu0 %v1739
      %1858 = vmatprep.subr.mxu0 0.0
      %1859 = vmatpush1.msra.mxu0 %v1740
      %1860 = vmatprep.subr.mxu0 0.0
      %1861 = vmatpush1.msra.mxu0 0.0
      %1862 = vmatprep.subr.mxu0 0.0
      %1863 = vmatpush1.msra.mxu0 0.0
      %1864 = vmatprep.subr.mxu0 0.0
      %1865 = vmatpush1.msra.mxu0 0.0
      %1866 = vmatprep.subr.mxu0 0.0
      %1867 = vmatpush1.msra.mxu0 0.0
      %1868 = vmatprep.subr.mxu0 0.0
      %1869 = vmatpush1.msra.mxu0 0.0
      %1870 = vmatprep.subr.mxu0 0.0
      %1871 = vmatpush1.msra.mxu0 0.0
      %1872 = vmatprep.subr.mxu0 0.0
      %1873 = vmatpush1.msra.mxu0 0.0
      %1874 = vmatprep.subr.mxu0 0.0
      %1875 = vmatpush1.msra.mxu0 0.0
      %1876 = vmatprep.subr.mxu0 0.0
      %1877 = vmatpush1.msra.mxu0 0.0
      %1878 = vmatprep.subr.mxu0 0.0
      %1879 = vmatpush1.msra.mxu0 0.0
      %1880 = vmatprep.subr.mxu0 0.0
      %1881 = vmatpush1.msra.mxu0 0.0
      %1882 = vmatprep.subr.mxu0 0.0
      %1883 = vmatpush1.msra.mxu0 0.0
      %1884 = vmatprep.subr.mxu0 0.0
      %1885 = vmatpush1.msra.mxu0 0.0
      %1886 = vmatprep.subr.mxu0 0.0
      %1887 = vmatpush1.msra.mxu0 0.0
      %1888 = vmatprep.subr.mxu0 0.0
      %1889 = vmatpush1.msra.mxu0 0.0
      %1890 = vmatprep.subr.mxu0 0.0
      %1891 = vmatpush1.msra.mxu0 0.0
      %1892 = vmatprep.subr.mxu0 0.0
      %1893 = vmatpush1.msra.mxu0 0.0
      %1894 = vmatprep.subr.mxu0 0.0
      %1895 = vmatpush1.msra.mxu0 0.0
      %1896 = vmatprep.subr.mxu0 0.0
      %1897 = vmatpush1.msra.mxu0 0.0
      %1898 = vmatprep.subr.mxu0 0.0
      %1899 = vmatpush1.msra.mxu0 0.0
      %1900 = vmatprep.subr.mxu0 0.0
      %1901 = vmatpush1.msra.mxu0 0.0
      %1902 = vmatprep.subr.mxu0 0.0
      %1903 = vmatpush1.msra.mxu0 0.0
      %1904 = vmatprep.subr.mxu0 0.0
      %1905 = vmatpush1.msra.mxu0 0.0
      %1906 = vmatprep.subr.mxu0 0.0
      %1907 = vmatpush1.msra.mxu0 0.0
      %1908 = vmatprep.mubr.f32.mxu0 0.0
      %1909 = vmatmul.mubr.f32.gmra.mrb[0].mxu0 %v1839
      %v1910 = vpop.f32.mrb[0].mxu0
      %v1911 = vadd.f32 %v1835, %v1910
      %v1912 = vpop.f32.mrb[0].mxu0
      %1913 = vmatprep.mubr.f32.mxu0 0.0
      %1914 = vmatmul.mubr.f32.gmra.mrb[0].mxu0 %v1842
      %v1915 = vpop.f32.mrb[0].mxu0
      %v1916 = vadd.f32 %v1835, %v1915
      %v1917 = vpop.f32.mrb[0].mxu0
      %1918 = vdwg.mxu0
      %v1919 = vadd.f32 %v1670, %v1911
      %v1920 = vadd.f32 %v1671, %v1916
      %1921 = vst.msk [vmem:[#allocation2] sm:$0xff] %vm583, %v1919
      %1922 = vst.msk [vmem:[#allocation2 + $0x8] sm:$0x7] %vm587, %v1920
      %p1923 = scmp.eq.s32.totalorder %s27, 1
      // Predicated region
      $region69: #{_lambda_.4} parent=63 // pred_check
        %p1924 = pneg %p1923
      $region70: #{_lambda_.4} parent=63 // pred_check_branch
        %1926 = sbr.rel (%p1924) target = $region72
      $region71: #{_lambda_.4} parent=63 // pred_region
        %1927 = vst.msk [vmem:[%s565] sm:$0xff] %vm583, %v1919
        %1928 = vst.msk [vmem:[%s565 + $0x8] sm:$0x7] %vm587, %v1920
      $region72: #{_lambda_.4} parent=63 // pred_fallthru
        _
      %p1929 = scmp.lt.s32.totalorder %s26, 1
      %s1930 = scalar_select %p1929, %s26, 1
      %s1931 = smul.addr %s1930, 2
      %s1932 = smul.addr %s1931, 8
      %s1933 = scalar_lea.vmem %s11, %s1932
      // Predicated region
      $region73: #{_lambda_.4} parent=63 // pred_check
        %p1934 = pneg %p338
      $region74: #{_lambda_.4} parent=63 // pred_check_branch
        %1936 = sbr.rel (%p1934) target = $region76
      $region75: #{_lambda_.4} parent=63 // pred_region
        _
      $region76: #{_lambda_.4} parent=63 // pred_fallthru
        _
    $region64: #{_lambda_.4} parent=5 // pred_fallthru
      _
    %p1937 = scmp.le.s32.totalorder 2, %s17
    // Predicated region
    $region77: #{_lambda_.4} parent=5 // pred_check
      %p1938 = pneg %p1937
    $region78: #{_lambda_.4} parent=5 // pred_check_branch
      %1940 = sbr.rel (%p1938) target = $region80
    $region79: #{_lambda_.4} parent=5 // pred_region
      %s1941 = ssub.s32 %s17, 2
      // Predicated region
      $region81: #{_lambda_.4} parent=79 // pred_check
        %p1942 = pneg %p344
      $region82: #{_lambda_.4} parent=79 // pred_check_branch
        %1944 = sbr.rel (%p1942) target = $region84
      $region83: #{_lambda_.4} parent=79 // pred_region
        %p1945 = scmp.lt.s32.totalorder %s28, 1
        %s1946 = scalar_select %p1945, %s28, 1
        %s1947 = smul.addr %s1946, 2
        %s1948 = smul.addr %s1947, 8
        %s1949 = scalar_lea.vmem %s11, %s1948
      $region84: #{_lambda_.4} parent=79 // pred_fallthru
        _
    $region80: #{_lambda_.4} parent=5 // pred_fallthru
      _
  $region6: #{_lambda_.4} parent=0 // loop_footer
    %s21 = sadd.s32 1, %s17
  $region7: #{_lambda_.4} parent=0 // loop_footer_branch
    %16 = sbr.rel target = $region3
  $region8: #{_lambda_.4} parent=0 // loop_exit
    _

// kernel: _lambda_.7
$region0: #{_lambda_.7}
  #allocation0 [shape = 'u32[]', space=smem, size = 0x4, offset = 0x4, fixed_abs, tag = 'smem constant byte address 0x4 - core index']
  #allocation1 [shape = 'u32[144,128]{1,0:T(1,128)}', space=vmem, size = 0x12000, scoped, tag = 'internal scratch']
  %s0 = inlined_call_operand.vmem [shape: f32[16,32], index: 0, kind: input, shape index: {}]
  %s1 = inlined_call_operand.vmem [shape: f32[1,32], index: 1, kind: input, shape index: {}]
  %s2 = inlined_call_operand.vmem [shape: f32[1,32], index: 2, kind: input, shape index: {}]
  %s3 = inlined_call_operand.vmem [shape: f32[32,28], index: 3, kind: input, shape index: {}]
  %s4 = inlined_call_operand.vmem [shape: f32[1,28], index: 4, kind: input, shape index: {}]
  %s5 = inlined_call_operand.hbm [shape: f32[16,28], index: 5, kind: output, shape index: {}]
  %s6 = sld [smem:[#allocation0]]
  $region30: #{_lambda_.7} parent=0
    _
  %s8 = ssub.s32 1, %s6
  %s9 = scalar_select 0, %s8, %s6
  $region1: #{_lambda_.7} parent=0
    #allocation2 [shape = 'u8[8192]{0}', space=vmem, size = 0x2000, scoped, tag = 'output window, operand 0, single buffered']
    #allocation3 [shape = 's32[1]{0}', space=sflag, size = 0x4, scoped, tag = 'scoped memory for _lambda_.7']
    %10 = vsyncpa [#allocation3], 0
    // Predicated region
    $region2: #{_lambda_.7} parent=1 // pred_check
      _
    $region3: #{_lambda_.7} parent=1 // pred_check_branch
      %12 = sbr.rel (0) target = $region5
    $region4: #{_lambda_.7} parent=1 // pred_region
      _
    $region5: #{_lambda_.7} parent=1 // pred_fallthru
      _
    // Predicated region
    $region6: #{_lambda_.7} parent=1 // pred_check
      _
    $region7: #{_lambda_.7} parent=1 // pred_check_branch
      %14 = sbr.rel (0) target = $region9
    $region8: #{_lambda_.7} parent=1 // pred_region
      _
    $region9: #{_lambda_.7} parent=1 // pred_fallthru
      _
    // Predicated region
    $region10: #{_lambda_.7} parent=1 // pred_check
      _
    $region11: #{_lambda_.7} parent=1 // pred_check_branch
      %16 = sbr.rel (0) target = $region13
    $region12: #{_lambda_.7} parent=1 // pred_region
      _
    $region13: #{_lambda_.7} parent=1 // pred_fallthru
      _
    // Predicated region
    $region14: #{_lambda_.7} parent=1 // pred_check
      _
    $region15: #{_lambda_.7} parent=1 // pred_check_branch
      %18 = sbr.rel (0) target = $region17
    $region16: #{_lambda_.7} parent=1 // pred_region
      _
    $region17: #{_lambda_.7} parent=1 // pred_fallthru
      _
    // Predicated region
    $region18: #{_lambda_.7} parent=1 // pred_check
      _
    $region19: #{_lambda_.7} parent=1 // pred_check_branch
      %20 = sbr.rel (0) target = $region21
    $region20: #{_lambda_.7} parent=1 // pred_region
      _
    $region21: #{_lambda_.7} parent=1 // pred_fallthru
      _
    %v21 = vld [vmem:[%s0] sm:$0xff]
    %v22 = vld [vmem:[%s0 + $0x8] sm:$0xff]
    %v23 = vld [vmem:[%s1] sm:$0x1]
    %v24 = vld [vmem:[%s2] sm:$0x1]
    %vm25 = vcmask 261120
    %v26 = vsel %vm25, %v21, 0.0
    %27 = vadd.xlane.f32.xlu0 %v26
    %v28 = vpop.xlane.xlu0 %27
    %v29 = vsel %vm25, %v22, 0.0
    %30 = vadd.xlane.f32.xlu0 %v29
    %v31 = vpop.xlane.xlu0 %30
    %v32 = vrcp.pop 32.0
    %v33 = vmul.f32 %v28, %v32
    %v34 = vmul.f32 %v31, %v32
    %v35 = vsub.f32 %v21, %v33
    %v36 = vsub.f32 %v22, %v34
    %v37 = vmul.f32 %v35, %v35
    %v38 = vmul.f32 %v36, %v36
    %v39 = vsel %vm25, %v37, 0.0
    %40 = vadd.xlane.f32.xlu0 %v39
    %v41 = vpop.xlane.xlu0 %40
    %v42 = vsel %vm25, %v38, 0.0
    %43 = vadd.xlane.f32.xlu0 %v42
    %v44 = vpop.xlane.xlu0 %43
    %v45 = vmul.f32 %v41, 0.032258064
    %v46 = vmul.f32 %v44, 0.032258064
    %v48 = vlaneseq
    %v49 = vshrl.u32 %v48, 7
    %v50 = vsub.s32 0, %v49
    %v51 = vrot.slane %v23, %v50
    %v53 = vmul.f32 %v51, %v35
    %v54 = vmul.f32 %v51, %v36
    %v55 = vrsqrt.pop %v45
    %v56 = vmul.f32 %v45, %v55
    %vm57 = vcmp.eq.f32.partialorder %v45, inf
    %v58 = vsel %vm57, %v45, %v56
    %vm59 = vcmp.eq.f32.partialorder %v45, 0.0
    %v60 = vand.u32 %v45, 2147483648
    %v61 = vsel %vm59, %v60, %v58
    %v62 = vrsqrt.pop %v46
    %v63 = vmul.f32 %v46, %v62
    %vm64 = vcmp.eq.f32.partialorder %v46, inf
    %v65 = vsel %vm64, %v46, %v63
    %vm66 = vcmp.eq.f32.partialorder %v46, 0.0
    %v67 = vand.u32 %v46, 2147483648
    %v68 = vsel %vm66, %v67, %v65
    %v69 = vadd.f32 %v61, 1e-06
    %v70 = vadd.f32 %v68, 1e-06
    %v71 = vrcp.pop %v69
    %v72 = vmul.f32 %v53, %v71
    %v73 = vrcp.pop %v70
    %v74 = vmul.f32 %v54, %v73
    %v76 = vlaneseq
    %v77 = vshrl.u32 %v76, 7
    %v78 = vsub.s32 0, %v77
    %v79 = vrot.slane %v24, %v78
    %v81 = vadd.f32 %v72, %v79
    %v82 = vadd.f32 %v74, %v79
    %v83 = vld [vmem:[%s3] sm:$0xff]
    %v84 = vld [vmem:[%s3 + $0x8] sm:$0xff]
    %v85 = vld [vmem:[%s3 + $0x10] sm:$0xff]
    %v86 = vld [vmem:[%s3 + $0x18] sm:$0xff]
    %v87 = vld [vmem:[%s4] sm:$0x1]
    %v89 = vlaneseq
    %v90 = vshrl.u32 %v89, 7
    %v91 = vsub.s32 0, %v90
    %v92 = vrot.slane %v87, %v91
    %v95 = vsel %vm25, %v81, 0
    %v98 = vsel %vm25, %v82, 0
    %100 = vmatprep.subr.mxu0 0.0
    %101 = vmatpush1.msra.mxu0 %v83
    %102 = vmatprep.subr.mxu0 0.0
    %103 = vmatpush1.msra.mxu0 %v84
    %104 = vmatprep.subr.mxu0 0.0
    %105 = vmatpush1.msra.mxu0 %v85
    %106 = vmatprep.subr.mxu0 0.0
    %107 = vmatpush1.msra.mxu0 %v86
    %108 = vmatprep.subr.mxu0 0.0
    %109 = vmatpush1.msra.mxu0 0.0
    %110 = vmatprep.subr.mxu0 0.0
    %111 = vmatpush1.msra.mxu0 0.0
    %112 = vmatprep.subr.mxu0 0.0
    %113 = vmatpush1.msra.mxu0 0.0
    %114 = vmatprep.subr.mxu0 0.0
    %115 = vmatpush1.msra.mxu0 0.0
    %116 = vmatprep.subr.mxu0 0.0
    %117 = vmatpush1.msra.mxu0 0.0
    %118 = vmatprep.subr.mxu0 0.0
    %119 = vmatpush1.msra.mxu0 0.0
    %120 = vmatprep.subr.mxu0 0.0
    %121 = vmatpush1.msra.mxu0 0.0
    %122 = vmatprep.subr.mxu0 0.0
    %123 = vmatpush1.msra.mxu0 0.0
    %124 = vmatprep.subr.mxu0 0.0
    %125 = vmatpush1.msra.mxu0 0.0
    %126 = vmatprep.subr.mxu0 0.0
    %127 = vmatpush1.msra.mxu0 0.0
    %128 = vmatprep.subr.mxu0 0.0
    %129 = vmatpush1.msra.mxu0 0.0
    %130 = vmatprep.subr.mxu0 0.0
    %131 = vmatpush1.msra.mxu0 0.0
    %132 = vmatprep.subr.mxu0 0.0
    %133 = vmatpush1.msra.mxu0 0.0
    %134 = vmatprep.subr.mxu0 0.0
    %135 = vmatpush1.msra.mxu0 0.0
    %136 = vmatprep.subr.mxu0 0.0
    %137 = vmatpush1.msra.mxu0 0.0
    %138 = vmatprep.subr.mxu0 0.0
    %139 = vmatpush1.msra.mxu0 0.0
    %140 = vmatprep.subr.mxu0 0.0
    %141 = vmatpush1.msra.mxu0 0.0
    %142 = vmatprep.subr.mxu0 0.0
    %143 = vmatpush1.msra.mxu0 0.0
    %144 = vmatprep.subr.mxu0 0.0
    %145 = vmatpush1.msra.mxu0 0.0
    %146 = vmatprep.subr.mxu0 0.0
    %147 = vmatpush1.msra.mxu0 0.0
    %148 = vmatprep.subr.mxu0 0.0
    %149 = vmatpush1.msra.mxu0 0.0
    %150 = vmatprep.subr.mxu0 0.0
    %151 = vmatpush1.msra.mxu0 0.0
    %152 = vmatprep.subr.mxu0 0.0
    %153 = vmatpush1.msra.mxu0 0.0
    %154 = vmatprep.subr.mxu0 0.0
    %155 = vmatpush1.msra.mxu0 0.0
    %156 = vmatprep.subr.mxu0 0.0
    %157 = vmatpush1.msra.mxu0 0.0
    %158 = vmatprep.subr.mxu0 0.0
    %159 = vmatpush1.msra.mxu0 0.0
    %160 = vmatprep.subr.mxu0 0.0
    %161 = vmatpush1.msra.mxu0 0.0
    %162 = vmatprep.subr.mxu0 0.0
    %163 = vmatpush1.msra.mxu0 0.0
    %164 = vmatprep.mubr.f32.mxu0 0.0
    %165 = vmatmul.mubr.f32.gmra.mrb[0].mxu0 %v95
    %v166 = vpop.f32.mrb[0].mxu0
    %v167 = vadd.f32 %v92, %v166
    %v168 = vpop.f32.mrb[0].mxu0
    %169 = vmatprep.mubr.f32.mxu0 0.0
    %170 = vmatmul.mubr.f32.gmra.mrb[0].mxu0 %v98
    %v171 = vpop.f32.mrb[0].mxu0
    %v172 = vadd.f32 %v92, %v171
    %v173 = vpop.f32.mrb[0].mxu0
    %174 = vdwg.mxu0
    %vm175 = vcmask 228352
    %176 = vst.msk [vmem:[#allocation2] sm:$0xff] %vm175, %v167
    %177 = vst.msk [vmem:[#allocation2 + $0x8] sm:$0xff] %vm175, %v172
    // Predicated region
    $region22: #{_lambda_.7} parent=1 // pred_check
      _
    $region23: #{_lambda_.7} parent=1 // pred_check_branch
      %179 = sbr.rel (0) target = $region25
    $region24: #{_lambda_.7} parent=1 // pred_region
      %s181 = ssub.s32 256, 256
      %182 = vsyncadd [#allocation3], %s181
      %s183 = sshll.u32 [#allocation2], 4
      %s184 = int_to_ptr.vmem [resolvable:$true] %s183
      %189 = dma.vmem_to_hbm [thread:$0]  %s184, 256, %s5, [#allocation3], 128, 128, 8
    $region25: #{_lambda_.7} parent=1 // pred_fallthru
      _
    // Predicated region
    $region26: #{_lambda_.7} parent=1 // pred_check
      _
    $region27: #{_lambda_.7} parent=1 // pred_check_branch
      %191 = sbr.rel (0) target = $region29
    $region28: #{_lambda_.7} parent=1 // pred_region
      %192 = dma.done [#allocation3], 256
    $region29: #{_lambda_.7} parent=1 // pred_fallthru
      _
    %193 = vsyncpa [#allocation3], 1

// kernel: _lambda_.6
$region0: #{_lambda_.6}
  #allocation0 [shape = 'u32[]', space=smem, size = 0x4, offset = 0x4, fixed_abs, tag = 'smem constant byte address 0x4 - core index']
  #allocation1 [shape = 'u32[144,128]{1,0:T(1,128)}', space=vmem, size = 0x12000, scoped, tag = 'internal scratch']
  #allocation2 [shape = 'f32[8,32]{1,0:T(8,128)}', space=vmem, size = 0x1000, scoped, tag = 'scratch operand']
  %s0 = inlined_call_operand.vmem [shape: f32[2,8,32], index: 0, kind: input, shape index: {}]
  %s1 = inlined_call_operand.vmem [shape: f32[2,11,32], index: 1, kind: input, shape index: {}]
  %s2 = inlined_call_operand.vmem [shape: f32[2,1,11], index: 2, kind: input, shape index: {}]
  %s3 = inlined_call_operand.vmem [shape: f32[2,8,8], index: 3, kind: input, shape index: {}]
  %s4 = inlined_call_operand.vmem [shape: f32[2,6,1,32], index: 4, kind: input, shape index: {}]
  %s5 = inlined_call_operand.vmem [shape: f32[2,32,96], index: 5, kind: input, shape index: {}]
  %s6 = inlined_call_operand.vmem [shape: f32[2,1,96], index: 6, kind: input, shape index: {}]
  %s7 = inlined_call_operand.vmem [shape: f32[2,32,32], index: 7, kind: input, shape index: {}]
  %s8 = inlined_call_operand.vmem [shape: f32[2,1,32], index: 8, kind: input, shape index: {}]
  %s9 = inlined_call_operand.vmem [shape: f32[2,32,96], index: 9, kind: input, shape index: {}]
  %s10 = inlined_call_operand.vmem [shape: f32[2,1,96], index: 10, kind: input, shape index: {}]
  %s11 = inlined_call_operand.vmem [shape: f32[2,32,32], index: 11, kind: input, shape index: {}]
  %s12 = inlined_call_operand.vmem [shape: f32[2,1,32], index: 12, kind: input, shape index: {}]
  %s13 = inlined_call_operand.vmem [shape: f32[2,32,64], index: 13, kind: input, shape index: {}]
  %s14 = inlined_call_operand.vmem [shape: f32[2,1,64], index: 14, kind: input, shape index: {}]
  %s15 = inlined_call_operand.vmem [shape: f32[2,64,32], index: 15, kind: input, shape index: {}]
  %s16 = inlined_call_operand.vmem [shape: f32[2,1,32], index: 16, kind: input, shape index: {}]
  %s17 = inlined_call_operand.vmem [shape: f32[2,8,32], index: 17, kind: output, shape index: {}]
  %s18 = sld [smem:[#allocation0]]
  $region109: #{_lambda_.6} parent=0
    _
  %s20 = ssub.s32 1, %s18
  %s21 = scalar_select 0, %s20, %s18
  loop: start=0, step=1, limit=6
  $region2: #{_lambda_.6} parent=0 // loop_pre_header
    _
  $region3: #{_lambda_.6} parent=0 // loop_header
    %s23 = sphi 0, %s27
    %p24 = scmp.ge.s32.totalorder %s23, 6
    %s30 = sphi 0, %s42
    %s31 = sphi 0, %s38
    %s32 = sphi 0, %s30
    %s33 = sphi 0, %s31
    %s34 = sphi 0, %s32
    %s35 = sphi 0, %s33
    %s45 = sphi 0, %s47
    %s48 = sphi 0, %s45
    %s49 = sphi 0, %s48
    %s65 = sphi 0, %s49
    %s71 = sphi 0, %s73
    %s74 = sphi 0, %s71
    %s75 = sphi 0, %s74
    %s91 = sphi 0, %s75
    %s97 = sphi 0, %s99
    %s100 = sphi 0, %s97
    %s101 = sphi 0, %s100
    %s117 = sphi 0, %s101
    %s123 = sphi 0, %s125
    %s126 = sphi 0, %s123
    %s127 = sphi 0, %s126
    %s143 = sphi 0, %s127
    %s149 = sphi 0, %s151
    %s152 = sphi 0, %s149
    %s153 = sphi 0, %s152
    %s169 = sphi 0, %s153
    %s175 = sphi 0, %s177
    %s178 = sphi 0, %s175
    %s179 = sphi 0, %s178
    %s195 = sphi 0, %s179
    %s201 = sphi 0, %s203
    %s204 = sphi 0, %s201
    %s205 = sphi 0, %s204
    %s221 = sphi 0, %s205
    %s227 = sphi 0, %s229
    %s230 = sphi 0, %s227
    %s231 = sphi 0, %s230
    %s247 = sphi 0, %s231
    %s253 = sphi 0, %s255
    %s256 = sphi 0, %s253
    %s257 = sphi 0, %s256
    %s273 = sphi 0, %s257
    %s279 = sphi 0, %s281
    %s282 = sphi 0, %s279
    %s283 = sphi 0, %s282
    %s299 = sphi 0, %s283
    %s305 = sphi 0, %s307
    %s308 = sphi 0, %s305
    %s309 = sphi 0, %s308
    %s325 = sphi 0, %s309
    %s331 = sphi 0, %s333
    %s334 = sphi 0, %s331
    %s335 = sphi 0, %s334
    %s351 = sphi 0, %s335
    %s357 = sphi 0, %s359
    %s360 = sphi 0, %s357
    %s361 = sphi 0, %s360
    %s377 = sphi 0, %s361
    %s383 = sphi 0, %s385
    %s386 = sphi 0, %s383
    %s387 = sphi 0, %s386
    %s403 = sphi 0, %s387
    %s409 = sphi 0, %s411
    %s412 = sphi 0, %s409
    %s413 = sphi 0, %s412
    %s429 = sphi 0, %s413
    %s435 = sphi 0, %s437
    %s438 = sphi 0, %s435
    %s439 = sphi 0, %s438
    %s455 = sphi 0, %s439
    %s461 = sphi 0, %s463
    %s464 = sphi 0, %s461
    %s465 = sphi 0, %s464
    %s481 = sphi 0, %s465
    %s487 = sphi 0, %s489
    %s490 = sphi 0, %s487
    %s491 = sphi 0, %s490
    %s507 = sphi 0, %s491
  $region4: #{_lambda_.6} parent=0 // loop_header_branch
    %26 = sbr.rel (%p24) target = $region8
  $region5: #{_lambda_.6} parent=0 // loop_body
    %s28 = ssub.s32 %s23, 1
    %s29 = ssub.s32 %s23, 2
    %s36 = sadd.s32 1, %s31
    %p37 = scmp.ge.s32.totalorder %s36, 2
    %s38 = scalar_select %p37, 0, %s36
    %s39 = sadd.s32 1, %s30
    %s40 = scalar_select %p37, %s39, %s30
    %p41 = scmp.ge.s32.totalorder %s40, 2
    %s42 = scalar_select %p41, 0, %s40
    %s43 = ssub.s32 %s30, %s42
    %p44 = scmp.eq.s32.totalorder %s43, 0
    %s46 = sadd.s32 %s45, 1
    %s47 = scalar_select %p44, %s45, %s46
    %p50 = pneg %p44
    %p51 = scmp.eq.s32.totalorder %s23, 3
    %p52 = por %p50, %p51
    %p53 = scmp.ne.s32.totalorder %s45, %s48
    %p54 = scmp.eq.s32.totalorder %s23, 0
    %p55 = por %p53, %p54
    %p56 = scmp.ne.s32.totalorder %s45, %s48
    %p57 = scmp.eq.s32.totalorder %s28, 3
    %p58 = por %p56, %p57
    %p59 = scmp.ne.s32.totalorder %s48, %s49
    %p60 = scmp.eq.s32.totalorder %s28, 0
    %p61 = por %p59, %p60
    %p62 = scmp.ne.s32.totalorder %s48, %s49
    %p63 = scmp.eq.s32.totalorder %s29, 3
    %p64 = por %p62, %p63
    %p66 = scmp.ne.s32.totalorder %s49, %s65
    %p67 = scmp.eq.s32.totalorder %s29, 0
    %p68 = por %p66, %p67
    %s69 = ssub.s32 %s30, %s42
    %p70 = scmp.eq.s32.totalorder %s69, 0
    %s72 = sadd.s32 %s71, 1
    %s73 = scalar_select %p70, %s71, %s72
    %p76 = pneg %p70
    %p77 = scmp.eq.s32.totalorder %s23, 3
    %p78 = por %p76, %p77
    %p79 = scmp.ne.s32.totalorder %s71, %s74
    %p80 = scmp.eq.s32.totalorder %s23, 0
    %p81 = por %p79, %p80
    %p82 = scmp.ne.s32.totalorder %s71, %s74
    %p83 = scmp.eq.s32.totalorder %s28, 3
    %p84 = por %p82, %p83
    %p85 = scmp.ne.s32.totalorder %s74, %s75
    %p86 = scmp.eq.s32.totalorder %s28, 0
    %p87 = por %p85, %p86
    %p88 = scmp.ne.s32.totalorder %s74, %s75
    %p89 = scmp.eq.s32.totalorder %s29, 3
    %p90 = por %p88, %p89
    %p92 = scmp.ne.s32.totalorder %s75, %s91
    %p93 = scmp.eq.s32.totalorder %s29, 0
    %p94 = por %p92, %p93
    %s95 = ssub.s32 %s30, %s42
    %p96 = scmp.eq.s32.totalorder %s95, 0
    %s98 = sadd.s32 %s97, 1
    %s99 = scalar_select %p96, %s97, %s98
    %p102 = pneg %p96
    %p103 = scmp.eq.s32.totalorder %s23, 3
    %p104 = por %p102, %p103
    %p105 = scmp.ne.s32.totalorder %s97, %s100
    %p106 = scmp.eq.s32.totalorder %s23, 0
    %p107 = por %p105, %p106
    %p108 = scmp.ne.s32.totalorder %s97, %s100
    %p109 = scmp.eq.s32.totalorder %s28, 3
    %p110 = por %p108, %p109
    %p111 = scmp.ne.s32.totalorder %s100, %s101
    %p112 = scmp.eq.s32.totalorder %s28, 0
    %p113 = por %p111, %p112
    %p114 = scmp.ne.s32.totalorder %s100, %s101
    %p115 = scmp.eq.s32.totalorder %s29, 3
    %p116 = por %p114, %p115
    %p118 = scmp.ne.s32.totalorder %s101, %s117
    %p119 = scmp.eq.s32.totalorder %s29, 0
    %p120 = por %p118, %p119
    %s121 = ssub.s32 %s30, %s42
    %p122 = scmp.eq.s32.totalorder %s121, 0
    %s124 = sadd.s32 %s123, 1
    %s125 = scalar_select %p122, %s123, %s124
    %p128 = pneg %p122
    %p129 = scmp.eq.s32.totalorder %s23, 3
    %p130 = por %p128, %p129
    %p131 = scmp.ne.s32.totalorder %s123, %s126
    %p132 = scmp.eq.s32.totalorder %s23, 0
    %p133 = por %p131, %p132
    %p134 = scmp.ne.s32.totalorder %s123, %s126
    %p135 = scmp.eq.s32.totalorder %s28, 3
    %p136 = por %p134, %p135
    %p137 = scmp.ne.s32.totalorder %s126, %s127
    %p138 = scmp.eq.s32.totalorder %s28, 0
    %p139 = por %p137, %p138
    %p140 = scmp.ne.s32.totalorder %s126, %s127
    %p141 = scmp.eq.s32.totalorder %s29, 3
    %p142 = por %p140, %p141
    %p144 = scmp.ne.s32.totalorder %s127, %s143
    %p145 = scmp.eq.s32.totalorder %s29, 0
    %p146 = por %p144, %p145
    %s147 = ssub.s32 %s31, %s38
    %p148 = scmp.eq.s32.totalorder %s147, 0
    %s150 = sadd.s32 %s149, 1
    %s151 = scalar_select %p148, %s149, %s150
    %p154 = pneg %p148
    %p155 = scmp.eq.s32.totalorder %s23, 3
    %p156 = por %p154, %p155
    %p157 = scmp.ne.s32.totalorder %s149, %s152
    %p158 = scmp.eq.s32.totalorder %s23, 0
    %p159 = por %p157, %p158
    %p160 = scmp.ne.s32.totalorder %s149, %s152
    %p161 = scmp.eq.s32.totalorder %s28, 3
    %p162 = por %p160, %p161
    %p163 = scmp.ne.s32.totalorder %s152, %s153
    %p164 = scmp.eq.s32.totalorder %s28, 0
    %p165 = por %p163, %p164
    %p166 = scmp.ne.s32.totalorder %s152, %s153
    %p167 = scmp.eq.s32.totalorder %s29, 3
    %p168 = por %p166, %p167
    %p170 = scmp.ne.s32.totalorder %s153, %s169
    %p171 = scmp.eq.s32.totalorder %s29, 0
    %p172 = por %p170, %p171
    %s173 = ssub.s32 %s31, %s38
    %p174 = scmp.eq.s32.totalorder %s173, 0
    %s176 = sadd.s32 %s175, 1
    %s177 = scalar_select %p174, %s175, %s176
    %p180 = pneg %p174
    %p181 = scmp.eq.s32.totalorder %s23, 3
    %p182 = por %p180, %p181
    %p183 = scmp.ne.s32.totalorder %s175, %s178
    %p184 = scmp.eq.s32.totalorder %s23, 0
    %p185 = por %p183, %p184
    %p186 = scmp.ne.s32.totalorder %s175, %s178
    %p187 = scmp.eq.s32.totalorder %s28, 3
    %p188 = por %p186, %p187
    %p189 = scmp.ne.s32.totalorder %s178, %s179
    %p190 = scmp.eq.s32.totalorder %s28, 0
    %p191 = por %p189, %p190
    %p192 = scmp.ne.s32.totalorder %s178, %s179
    %p193 = scmp.eq.s32.totalorder %s29, 3
    %p194 = por %p192, %p193
    %p196 = scmp.ne.s32.totalorder %s179, %s195
    %p197 = scmp.eq.s32.totalorder %s29, 0
    %p198 = por %p196, %p197
    %s199 = ssub.s32 %s31, %s38
    %p200 = scmp.eq.s32.totalorder %s199, 0
    %s202 = sadd.s32 %s201, 1
    %s203 = scalar_select %p200, %s201, %s202
    %p206 = pneg %p200
    %p207 = scmp.eq.s32.totalorder %s23, 3
    %p208 = por %p206, %p207
    %p209 = scmp.ne.s32.totalorder %s201, %s204
    %p210 = scmp.eq.s32.totalorder %s23, 0
    %p211 = por %p209, %p210
    %p212 = scmp.ne.s32.totalorder %s201, %s204
    %p213 = scmp.eq.s32.totalorder %s28, 3
    %p214 = por %p212, %p213
    %p215 = scmp.ne.s32.totalorder %s204, %s205
    %p216 = scmp.eq.s32.totalorder %s28, 0
    %p217 = por %p215, %p216
    %p218 = scmp.ne.s32.totalorder %s204, %s205
    %p219 = scmp.eq.s32.totalorder %s29, 3
    %p220 = por %p218, %p219
    %p222 = scmp.ne.s32.totalorder %s205, %s221
    %p223 = scmp.eq.s32.totalorder %s29, 0
    %p224 = por %p222, %p223
    %s225 = ssub.s32 %s31, %s38
    %p226 = scmp.eq.s32.totalorder %s225, 0
    %s228 = sadd.s32 %s227, 1
    %s229 = scalar_select %p226, %s227, %s228
    %p232 = pneg %p226
    %p233 = scmp.eq.s32.totalorder %s23, 3
    %p234 = por %p232, %p233
    %p235 = scmp.ne.s32.totalorder %s227, %s230
    %p236 = scmp.eq.s32.totalorder %s23, 0
    %p237 = por %p235, %p236
    %p238 = scmp.ne.s32.totalorder %s227, %s230
    %p239 = scmp.eq.s32.totalorder %s28, 3
    %p240 = por %p238, %p239
    %p241 = scmp.ne.s32.totalorder %s230, %s231
    %p242 = scmp.eq.s32.totalorder %s28, 0
    %p243 = por %p241, %p242
    %p244 = scmp.ne.s32.totalorder %s230, %s231
    %p245 = scmp.eq.s32.totalorder %s29, 3
    %p246 = por %p244, %p245
    %p248 = scmp.ne.s32.totalorder %s231, %s247
    %p249 = scmp.eq.s32.totalorder %s29, 0
    %p250 = por %p248, %p249
    %s251 = ssub.s32 %s31, %s38
    %p252 = scmp.eq.s32.totalorder %s251, 0
    %s254 = sadd.s32 %s253, 1
    %s255 = scalar_select %p252, %s253, %s254
    %p258 = pneg %p252
    %p259 = scmp.eq.s32.totalorder %s23, 3
    %p260 = por %p258, %p259
    %p261 = scmp.ne.s32.totalorder %s253, %s256
    %p262 = scmp.eq.s32.totalorder %s23, 0
    %p263 = por %p261, %p262
    %p264 = scmp.ne.s32.totalorder %s253, %s256
    %p265 = scmp.eq.s32.totalorder %s28, 3
    %p266 = por %p264, %p265
    %p267 = scmp.ne.s32.totalorder %s256, %s257
    %p268 = scmp.eq.s32.totalorder %s28, 0
    %p269 = por %p267, %p268
    %p270 = scmp.ne.s32.totalorder %s256, %s257
    %p271 = scmp.eq.s32.totalorder %s29, 3
    %p272 = por %p270, %p271
    %p274 = scmp.ne.s32.totalorder %s257, %s273
    %p275 = scmp.eq.s32.totalorder %s29, 0
    %p276 = por %p274, %p275
    %s277 = ssub.s32 %s31, %s38
    %p278 = scmp.eq.s32.totalorder %s277, 0
    %s280 = sadd.s32 %s279, 1
    %s281 = scalar_select %p278, %s279, %s280
    %p284 = pneg %p278
    %p285 = scmp.eq.s32.totalorder %s23, 3
    %p286 = por %p284, %p285
    %p287 = scmp.ne.s32.totalorder %s279, %s282
    %p288 = scmp.eq.s32.totalorder %s23, 0
    %p289 = por %p287, %p288
    %p290 = scmp.ne.s32.totalorder %s279, %s282
    %p291 = scmp.eq.s32.totalorder %s28, 3
    %p292 = por %p290, %p291
    %p293 = scmp.ne.s32.totalorder %s282, %s283
    %p294 = scmp.eq.s32.totalorder %s28, 0
    %p295 = por %p293, %p294
    %p296 = scmp.ne.s32.totalorder %s282, %s283
    %p297 = scmp.eq.s32.totalorder %s29, 3
    %p298 = por %p296, %p297
    %p300 = scmp.ne.s32.totalorder %s283, %s299
    %p301 = scmp.eq.s32.totalorder %s29, 0
    %p302 = por %p300, %p301
    %s303 = ssub.s32 %s31, %s38
    %p304 = scmp.eq.s32.totalorder %s303, 0
    %s306 = sadd.s32 %s305, 1
    %s307 = scalar_select %p304, %s305, %s306
    %p310 = pneg %p304
    %p311 = scmp.eq.s32.totalorder %s23, 3
    %p312 = por %p310, %p311
    %p313 = scmp.ne.s32.totalorder %s305, %s308
    %p314 = scmp.eq.s32.totalorder %s23, 0
    %p315 = por %p313, %p314
    %p316 = scmp.ne.s32.totalorder %s305, %s308
    %p317 = scmp.eq.s32.totalorder %s28, 3
    %p318 = por %p316, %p317
    %p319 = scmp.ne.s32.totalorder %s308, %s309
    %p320 = scmp.eq.s32.totalorder %s28, 0
    %p321 = por %p319, %p320
    %p322 = scmp.ne.s32.totalorder %s308, %s309
    %p323 = scmp.eq.s32.totalorder %s29, 3
    %p324 = por %p322, %p323
    %p326 = scmp.ne.s32.totalorder %s309, %s325
    %p327 = scmp.eq.s32.totalorder %s29, 0
    %p328 = por %p326, %p327
    %s329 = ssub.s32 %s31, %s38
    %p330 = scmp.eq.s32.totalorder %s329, 0
    %s332 = sadd.s32 %s331, 1
    %s333 = scalar_select %p330, %s331, %s332
    %p336 = pneg %p330
    %p337 = scmp.eq.s32.totalorder %s23, 3
    %p338 = por %p336, %p337
    %p339 = scmp.ne.s32.totalorder %s331, %s334
    %p340 = scmp.eq.s32.totalorder %s23, 0
    %p341 = por %p339, %p340
    %p342 = scmp.ne.s32.totalorder %s331, %s334
    %p343 = scmp.eq.s32.totalorder %s28, 3
    %p344 = por %p342, %p343
    %p345 = scmp.ne.s32.totalorder %s334, %s335
    %p346 = scmp.eq.s32.totalorder %s28, 0
    %p347 = por %p345, %p346
    %p348 = scmp.ne.s32.totalorder %s334, %s335
    %p349 = scmp.eq.s32.totalorder %s29, 3
    %p350 = por %p348, %p349
    %p352 = scmp.ne.s32.totalorder %s335, %s351
    %p353 = scmp.eq.s32.totalorder %s29, 0
    %p354 = por %p352, %p353
    %s355 = ssub.s32 %s31, %s38
    %p356 = scmp.eq.s32.totalorder %s355, 0
    %s358 = sadd.s32 %s357, 1
    %s359 = scalar_select %p356, %s357, %s358
    %p362 = pneg %p356
    %p363 = scmp.eq.s32.totalorder %s23, 3
    %p364 = por %p362, %p363
    %p365 = scmp.ne.s32.totalorder %s357, %s360
    %p366 = scmp.eq.s32.totalorder %s23, 0
    %p367 = por %p365, %p366
    %p368 = scmp.ne.s32.totalorder %s357, %s360
    %p369 = scmp.eq.s32.totalorder %s28, 3
    %p370 = por %p368, %p369
    %p371 = scmp.ne.s32.totalorder %s360, %s361
    %p372 = scmp.eq.s32.totalorder %s28, 0
    %p373 = por %p371, %p372
    %p374 = scmp.ne.s32.totalorder %s360, %s361
    %p375 = scmp.eq.s32.totalorder %s29, 3
    %p376 = por %p374, %p375
    %p378 = scmp.ne.s32.totalorder %s361, %s377
    %p379 = scmp.eq.s32.totalorder %s29, 0
    %p380 = por %p378, %p379
    %s381 = ssub.s32 %s31, %s38
    %p382 = scmp.eq.s32.totalorder %s381, 0
    %s384 = sadd.s32 %s383, 1
    %s385 = scalar_select %p382, %s383, %s384
    %p388 = pneg %p382
    %p389 = scmp.eq.s32.totalorder %s23, 3
    %p390 = por %p388, %p389
    %p391 = scmp.ne.s32.totalorder %s383, %s386
    %p392 = scmp.eq.s32.totalorder %s23, 0
    %p393 = por %p391, %p392
    %p394 = scmp.ne.s32.totalorder %s383, %s386
    %p395 = scmp.eq.s32.totalorder %s28, 3
    %p396 = por %p394, %p395
    %p397 = scmp.ne.s32.totalorder %s386, %s387
    %p398 = scmp.eq.s32.totalorder %s28, 0
    %p399 = por %p397, %p398
    %p400 = scmp.ne.s32.totalorder %s386, %s387
    %p401 = scmp.eq.s32.totalorder %s29, 3
    %p402 = por %p400, %p401
    %p404 = scmp.ne.s32.totalorder %s387, %s403
    %p405 = scmp.eq.s32.totalorder %s29, 0
    %p406 = por %p404, %p405
    %s407 = ssub.s32 %s31, %s38
    %p408 = scmp.eq.s32.totalorder %s407, 0
    %s410 = sadd.s32 %s409, 1
    %s411 = scalar_select %p408, %s409, %s410
    %p414 = pneg %p408
    %p415 = scmp.eq.s32.totalorder %s23, 3
    %p416 = por %p414, %p415
    %p417 = scmp.ne.s32.totalorder %s409, %s412
    %p418 = scmp.eq.s32.totalorder %s23, 0
    %p419 = por %p417, %p418
    %p420 = scmp.ne.s32.totalorder %s409, %s412
    %p421 = scmp.eq.s32.totalorder %s28, 3
    %p422 = por %p420, %p421
    %p423 = scmp.ne.s32.totalorder %s412, %s413
    %p424 = scmp.eq.s32.totalorder %s28, 0
    %p425 = por %p423, %p424
    %p426 = scmp.ne.s32.totalorder %s412, %s413
    %p427 = scmp.eq.s32.totalorder %s29, 3
    %p428 = por %p426, %p427
    %p430 = scmp.ne.s32.totalorder %s413, %s429
    %p431 = scmp.eq.s32.totalorder %s29, 0
    %p432 = por %p430, %p431
    %s433 = ssub.s32 %s31, %s38
    %p434 = scmp.eq.s32.totalorder %s433, 0
    %s436 = sadd.s32 %s435, 1
    %s437 = scalar_select %p434, %s435, %s436
    %p440 = pneg %p434
    %p441 = scmp.eq.s32.totalorder %s23, 3
    %p442 = por %p440, %p441
    %p443 = scmp.ne.s32.totalorder %s435, %s438
    %p444 = scmp.eq.s32.totalorder %s23, 0
    %p445 = por %p443, %p444
    %p446 = scmp.ne.s32.totalorder %s435, %s438
    %p447 = scmp.eq.s32.totalorder %s28, 3
    %p448 = por %p446, %p447
    %p449 = scmp.ne.s32.totalorder %s438, %s439
    %p450 = scmp.eq.s32.totalorder %s28, 0
    %p451 = por %p449, %p450
    %p452 = scmp.ne.s32.totalorder %s438, %s439
    %p453 = scmp.eq.s32.totalorder %s29, 3
    %p454 = por %p452, %p453
    %p456 = scmp.ne.s32.totalorder %s439, %s455
    %p457 = scmp.eq.s32.totalorder %s29, 0
    %p458 = por %p456, %p457
    %s459 = ssub.s32 %s31, %s38
    %p460 = scmp.eq.s32.totalorder %s459, 0
    %s462 = sadd.s32 %s461, 1
    %s463 = scalar_select %p460, %s461, %s462
    %p466 = pneg %p460
    %p467 = scmp.eq.s32.totalorder %s23, 3
    %p468 = por %p466, %p467
    %p469 = scmp.ne.s32.totalorder %s461, %s464
    %p470 = scmp.eq.s32.totalorder %s23, 0
    %p471 = por %p469, %p470
    %p472 = scmp.ne.s32.totalorder %s461, %s464
    %p473 = scmp.eq.s32.totalorder %s28, 3
    %p474 = por %p472, %p473
    %p475 = scmp.ne.s32.totalorder %s464, %s465
    %p476 = scmp.eq.s32.totalorder %s28, 0
    %p477 = por %p475, %p476
    %p478 = scmp.ne.s32.totalorder %s464, %s465
    %p479 = scmp.eq.s32.totalorder %s29, 3
    %p480 = por %p478, %p479
    %p482 = scmp.ne.s32.totalorder %s465, %s481
    %p483 = scmp.eq.s32.totalorder %s29, 0
    %p484 = por %p482, %p483
    %s485 = ssub.s32 %s30, %s42
    %p486 = scmp.eq.s32.totalorder %s485, 0
    %s488 = sadd.s32 %s487, 1
    %s489 = scalar_select %p486, %s487, %s488
    %p492 = pneg %p486
    %p493 = scmp.eq.s32.totalorder %s23, 3
    %p494 = por %p492, %p493
    %p495 = scmp.ne.s32.totalorder %s487, %s490
    %p496 = scmp.eq.s32.totalorder %s23, 0
    %p497 = por %p495, %p496
    %p498 = scmp.ne.s32.totalorder %s487, %s490
    %p499 = scmp.eq.s32.totalorder %s28, 3
    %p500 = por %p498, %p499
    %p501 = scmp.ne.s32.totalorder %s490, %s491
    %p502 = scmp.eq.s32.totalorder %s28, 0
    %p503 = por %p501, %p502
    %p504 = scmp.ne.s32.totalorder %s490, %s491
    %p505 = scmp.eq.s32.totalorder %s29, 3
    %p506 = por %p504, %p505
    %p508 = scmp.ne.s32.totalorder %s491, %s507
    %p509 = scmp.eq.s32.totalorder %s29, 0
    %p510 = por %p508, %p509
    %p511 = scmp.le.s32.totalorder 1, %s23
    %p512 = scmp.lt.s32.totalorder %s23, 5
    %p513 = pnand %p511, %p512
    %p514 = pneg %p513
    // Predicated region
    $region9: #{_lambda_.6} parent=5 // pred_check
      _
    $region10: #{_lambda_.6} parent=5 // pred_check_branch
      %516 = sbr.rel (%p513) target = $region12
    $region11: #{_lambda_.6} parent=5 // pred_region
      %s517 = ssub.s32 %s23, 1
    $region12: #{_lambda_.6} parent=5 // pred_fallthru
      _
    %p518 = scmp.lt.s32.totalorder %s23, 4
    // Predicated region
    $region13: #{_lambda_.6} parent=5 // pred_check
      %p519 = pneg %p518
    $region14: #{_lambda_.6} parent=5 // pred_check_branch
      %521 = sbr.rel (%p519) target = $region16
    $region15: #{_lambda_.6} parent=5 // pred_region
      // Predicated region
      $region17: #{_lambda_.6} parent=15 // pred_check
        %p522 = pneg %p55
      $region18: #{_lambda_.6} parent=15 // pred_check_branch
        %524 = sbr.rel (%p522) target = $region20
      $region19: #{_lambda_.6} parent=15 // pred_region
        %p525 = scmp.lt.s32.totalorder %s30, 1
        %s526 = scalar_select %p525, %s30, 1
        %s527 = smul.addr %s526, 8
        %s528 = scalar_lea.vmem %s0, %s527
      $region20: #{_lambda_.6} parent=15 // pred_fallthru
        _
      // Predicated region
      $region21: #{_lambda_.6} parent=15 // pred_check
        %p529 = pneg %p81
      $region22: #{_lambda_.6} parent=15 // pred_check_branch
        %531 = sbr.rel (%p529) target = $region24
      $region23: #{_lambda_.6} parent=15 // pred_region
        %p532 = scmp.lt.s32.totalorder %s30, 1
        %s533 = scalar_select %p532, %s30, 1
        %s534 = smul.addr %s533, 2
        %s535 = smul.addr %s534, 8
        %s536 = scalar_lea.vmem %s1, %s535
      $region24: #{_lambda_.6} parent=15 // pred_fallthru
        _
      // Predicated region
      $region25: #{_lambda_.6} parent=15 // pred_check
        %p537 = pneg %p107
      $region26: #{_lambda_.6} parent=15 // pred_check_branch
        %539 = sbr.rel (%p537) target = $region28
      $region27: #{_lambda_.6} parent=15 // pred_region
        %p540 = scmp.lt.s32.totalorder %s30, 1
        %s541 = scalar_select %p540, %s30, 1
        %s542 = scalar_lea.vmem %s2, %s541
      $region28: #{_lambda_.6} parent=15 // pred_fallthru
        _
      // Predicated region
      $region29: #{_lambda_.6} parent=15 // pred_check
        %p543 = pneg %p133
      $region30: #{_lambda_.6} parent=15 // pred_check_branch
        %545 = sbr.rel (%p543) target = $region32
      $region31: #{_lambda_.6} parent=15 // pred_region
        %p546 = scmp.lt.s32.totalorder %s30, 1
        %s547 = scalar_select %p546, %s30, 1
        %s548 = smul.addr %s547, 8
        %s549 = scalar_lea.vmem %s3, %s548
      $region32: #{_lambda_.6} parent=15 // pred_fallthru
        _
      // Predicated region
      $region33: #{_lambda_.6} parent=15 // pred_check
        %p550 = pneg %p159
      $region34: #{_lambda_.6} parent=15 // pred_check_branch
        %552 = sbr.rel (%p550) target = $region36
      $region35: #{_lambda_.6} parent=15 // pred_region
        %p553 = scmp.lt.s32.totalorder %s31, 1
        %s554 = scalar_select %p553, %s31, 1
        %s555 = smul.addr %s554, 6
        %s556 = scalar_lea.vmem %s4, %s555
      $region36: #{_lambda_.6} parent=15 // pred_fallthru
        _
      // Predicated region
      $region37: #{_lambda_.6} parent=15 // pred_check
        %p557 = pneg %p185
      $region38: #{_lambda_.6} parent=15 // pred_check_branch
        %559 = sbr.rel (%p557) target = $region40
      $region39: #{_lambda_.6} parent=15 // pred_region
        %p560 = scmp.lt.s32.totalorder %s31, 1
        %s561 = scalar_select %p560, %s31, 1
        %s562 = smul.addr %s561, 4
        %s563 = smul.addr %s562, 8
        %s564 = scalar_lea.vmem %s5, %s563
      $region40: #{_lambda_.6} parent=15 // pred_fallthru
        _
      // Predicated region
      $region41: #{_lambda_.6} parent=15 // pred_check
        %p565 = pneg %p211
      $region42: #{_lambda_.6} parent=15 // pred_check_branch
        %567 = sbr.rel (%p565) target = $region44
      $region43: #{_lambda_.6} parent=15 // pred_region
        %p568 = scmp.lt.s32.totalorder %s31, 1
        %s569 = scalar_select %p568, %s31, 1
        %s570 = scalar_lea.vmem %s6, %s569
      $region44: #{_lambda_.6} parent=15 // pred_fallthru
        _
      // Predicated region
      $region45: #{_lambda_.6} parent=15 // pred_check
        %p571 = pneg %p237
      $region46: #{_lambda_.6} parent=15 // pred_check_branch
        %573 = sbr.rel (%p571) target = $region48
      $region47: #{_lambda_.6} parent=15 // pred_region
        %p574 = scmp.lt.s32.totalorder %s31, 1
        %s575 = scalar_select %p574, %s31, 1
        %s576 = smul.addr %s575, 4
        %s577 = smul.addr %s576, 8
        %s578 = scalar_lea.vmem %s7, %s577
      $region48: #{_lambda_.6} parent=15 // pred_fallthru
        _
      // Predicated region
      $region49: #{_lambda_.6} parent=15 // pred_check
        %p579 = pneg %p263
      $region50: #{_lambda_.6} parent=15 // pred_check_branch
        %581 = sbr.rel (%p579) target = $region52
      $region51: #{_lambda_.6} parent=15 // pred_region
        %p582 = scmp.lt.s32.totalorder %s31, 1
        %s583 = scalar_select %p582, %s31, 1
        %s584 = scalar_lea.vmem %s8, %s583
      $region52: #{_lambda_.6} parent=15 // pred_fallthru
        _
      // Predicated region
      $region53: #{_lambda_.6} parent=15 // pred_check
        %p585 = pneg %p289
      $region54: #{_lambda_.6} parent=15 // pred_check_branch
        %587 = sbr.rel (%p585) target = $region56
      $region55: #{_lambda_.6} parent=15 // pred_region
        %p588 = scmp.lt.s32.totalorder %s31, 1
        %s589 = scalar_select %p588, %s31, 1
        %s590 = smul.addr %s589, 4
        %s591 = smul.addr %s590, 8
        %s592 = scalar_lea.vmem %s9, %s591
      $region56: #{_lambda_.6} parent=15 // pred_fallthru
        _
      // Predicated region
      $region57: #{_lambda_.6} parent=15 // pred_check
        %p593 = pneg %p315
      $region58: #{_lambda_.6} parent=15 // pred_check_branch
        %595 = sbr.rel (%p593) target = $region60
      $region59: #{_lambda_.6} parent=15 // pred_region
        %p596 = scmp.lt.s32.totalorder %s31, 1
        %s597 = scalar_select %p596, %s31, 1
        %s598 = scalar_lea.vmem %s10, %s597
      $region60: #{_lambda_.6} parent=15 // pred_fallthru
        _
      // Predicated region
      $region61: #{_lambda_.6} parent=15 // pred_check
        %p599 = pneg %p341
      $region62: #{_lambda_.6} parent=15 // pred_check_branch
        %601 = sbr.rel (%p599) target = $region64
      $region63: #{_lambda_.6} parent=15 // pred_region
        %p602 = scmp.lt.s32.totalorder %s31, 1
        %s603 = scalar_select %p602, %s31, 1
        %s604 = smul.addr %s603, 4
        %s605 = smul.addr %s604, 8
        %s606 = scalar_lea.vmem %s11, %s605
      $region64: #{_lambda_.6} parent=15 // pred_fallthru
        _
      // Predicated region
      $region65: #{_lambda_.6} parent=15 // pred_check
        %p607 = pneg %p367
      $region66: #{_lambda_.6} parent=15 // pred_check_branch
        %609 = sbr.rel (%p607) target = $region68
      $region67: #{_lambda_.6} parent=15 // pred_region
        %p610 = scmp.lt.s32.totalorder %s31, 1
        %s611 = scalar_select %p610, %s31, 1
        %s612 = scalar_lea.vmem %s12, %s611
      $region68: #{_lambda_.6} parent=15 // pred_fallthru
        _
      // Predicated region
      $region69: #{_lambda_.6} parent=15 // pred_check
        %p613 = pneg %p393
      $region70: #{_lambda_.6} parent=15 // pred_check_branch
        %615 = sbr.rel (%p613) target = $region72
      $region71: #{_lambda_.6} parent=15 // pred_region
        %p616 = scmp.lt.s32.totalorder %s31, 1
        %s617 = scalar_select %p616, %s31, 1
        %s618 = smul.addr %s617, 4
        %s619 = smul.addr %s618, 8
        %s620 = scalar_lea.vmem %s13, %s619
      $region72: #{_lambda_.6} parent=15 // pred_fallthru
        _
      // Predicated region
      $region73: #{_lambda_.6} parent=15 // pred_check
        %p621 = pneg %p419
      $region74: #{_lambda_.6} parent=15 // pred_check_branch
        %623 = sbr.rel (%p621) target = $region76
      $region75: #{_lambda_.6} parent=15 // pred_region
        %p624 = scmp.lt.s32.totalorder %s31, 1
        %s625 = scalar_select %p624, %s31, 1
        %s626 = scalar_lea.vmem %s14, %s625
      $region76: #{_lambda_.6} parent=15 // pred_fallthru
        _
      // Predicated region
      $region77: #{_lambda_.6} parent=15 // pred_check
        %p627 = pneg %p445
      $region78: #{_lambda_.6} parent=15 // pred_check_branch
        %629 = sbr.rel (%p627) target = $region80
      $region79: #{_lambda_.6} parent=15 // pred_region
        %p630 = scmp.lt.s32.totalorder %s31, 1
        %s631 = scalar_select %p630, %s31, 1
        %s632 = smul.addr %s631, 8
        %s633 = smul.addr %s632, 8
        %s634 = scalar_lea.vmem %s15, %s633
      $region80: #{_lambda_.6} parent=15 // pred_fallthru
        _
      // Predicated region
      $region81: #{_lambda_.6} parent=15 // pred_check
        %p635 = pneg %p471
      $region82: #{_lambda_.6} parent=15 // pred_check_branch
        %637 = sbr.rel (%p635) target = $region84
      $region83: #{_lambda_.6} parent=15 // pred_region
        %p638 = scmp.lt.s32.totalorder %s31, 1
        %s639 = scalar_select %p638, %s31, 1
        %s640 = scalar_lea.vmem %s16, %s639
      $region84: #{_lambda_.6} parent=15 // pred_fallthru
        _
    $region16: #{_lambda_.6} parent=5 // pred_fallthru
      _
    %p641 = scmp.le.s32.totalorder 1, %s23
    %p642 = scmp.lt.s32.totalorder %s23, 5
    %p643 = pnand %p641, %p642
    %p644 = pneg %p643
    // Predicated region
    $region85: #{_lambda_.6} parent=5 // pred_check
      _
    $region86: #{_lambda_.6} parent=5 // pred_check_branch
      %646 = sbr.rel (%p643) target = $region88
    $region87: #{_lambda_.6} parent=5 // pred_region
      %s647 = ssub.s32 %s23, 1
      %p648 = scmp.lt.s32.totalorder %s32, 1
      %s649 = scalar_select %p648, %s32, 1
      %s650 = smul.addr %s649, 8
      %s651 = scalar_lea.vmem %s0, %s650
      %p652 = pneg %p61
      %p653 = pneg %p58
      %p654 = scmp.lt.s32.totalorder %s32, 1
      %s655 = scalar_select %p654, %s32, 1
      %s656 = smul.addr %s655, 2
      %s657 = smul.addr %s656, 8
      %s658 = scalar_lea.vmem %s1, %s657
      %p659 = pneg %p87
      %p660 = pneg %p84
      %p661 = scmp.lt.s32.totalorder %s32, 1
      %s662 = scalar_select %p661, %s32, 1
      %s663 = scalar_lea.vmem %s2, %s662
      %p664 = pneg %p113
      %p665 = pneg %p110
      %p666 = scmp.lt.s32.totalorder %s32, 1
      %s667 = scalar_select %p666, %s32, 1
      %s668 = smul.addr %s667, 8
      %s669 = scalar_lea.vmem %s3, %s668
      %p670 = pneg %p139
      %p671 = pneg %p136
      %p672 = scmp.lt.s32.totalorder %s33, 1
      %s673 = scalar_select %p672, %s33, 1
      %s674 = smul.addr %s673, 6
      %s675 = scalar_lea.vmem %s4, %s674
      %p676 = pneg %p165
      %p677 = pneg %p162
      %p678 = scmp.lt.s32.totalorder %s33, 1
      %s679 = scalar_select %p678, %s33, 1
      %s680 = smul.addr %s679, 4
      %s681 = smul.addr %s680, 8
      %s682 = scalar_lea.vmem %s5, %s681
      %p683 = pneg %p191
      %p684 = pneg %p188
      %p685 = scmp.lt.s32.totalorder %s33, 1
      %s686 = scalar_select %p685, %s33, 1
      %s687 = scalar_lea.vmem %s6, %s686
      %p688 = pneg %p217
      %p689 = pneg %p214
      %p690 = scmp.lt.s32.totalorder %s33, 1
      %s691 = scalar_select %p690, %s33, 1
      %s692 = smul.addr %s691, 4
      %s693 = smul.addr %s692, 8
      %s694 = scalar_lea.vmem %s7, %s693
      %p695 = pneg %p243
      %p696 = pneg %p240
      %p697 = scmp.lt.s32.totalorder %s33, 1
      %s698 = scalar_select %p697, %s33, 1
      %s699 = scalar_lea.vmem %s8, %s698
      %p700 = pneg %p269
      %p701 = pneg %p266
      %p702 = scmp.lt.s32.totalorder %s33, 1
      %s703 = scalar_select %p702, %s33, 1
      %s704 = smul.addr %s703, 4
      %s705 = smul.addr %s704, 8
      %s706 = scalar_lea.vmem %s9, %s705
      %p707 = pneg %p295
      %p708 = pneg %p292
      %p709 = scmp.lt.s32.totalorder %s33, 1
      %s710 = scalar_select %p709, %s33, 1
      %s711 = scalar_lea.vmem %s10, %s710
      %p712 = pneg %p321
      %p713 = pneg %p318
      %p714 = scmp.lt.s32.totalorder %s33, 1
      %s715 = scalar_select %p714, %s33, 1
      %s716 = smul.addr %s715, 4
      %s717 = smul.addr %s716, 8
      %s718 = scalar_lea.vmem %s11, %s717
      %p719 = pneg %p347
      %p720 = pneg %p344
      %p721 = scmp.lt.s32.totalorder %s33, 1
      %s722 = scalar_select %p721, %s33, 1
      %s723 = scalar_lea.vmem %s12, %s722
      %p724 = pneg %p373
      %p725 = pneg %p370
      %p726 = scmp.lt.s32.totalorder %s33, 1
      %s727 = scalar_select %p726, %s33, 1
      %s728 = smul.addr %s727, 4
      %s729 = smul.addr %s728, 8
      %s730 = scalar_lea.vmem %s13, %s729
      %p731 = pneg %p399
      %p732 = pneg %p396
      %p733 = scmp.lt.s32.totalorder %s33, 1
      %s734 = scalar_select %p733, %s33, 1
      %s735 = scalar_lea.vmem %s14, %s734
      %p736 = pneg %p425
      %p737 = pneg %p422
      %p738 = scmp.lt.s32.totalorder %s33, 1
      %s739 = scalar_select %p738, %s33, 1
      %s740 = smul.addr %s739, 8
      %s741 = smul.addr %s740, 8
      %s742 = scalar_lea.vmem %s15, %s741
      %p743 = pneg %p451
      %p744 = pneg %p448
      %p745 = scmp.lt.s32.totalorder %s33, 1
      %s746 = scalar_select %p745, %s33, 1
      %s747 = scalar_lea.vmem %s16, %s746
      %p748 = pneg %p477
      %p749 = pneg %p474
      %p750 = pneg %p503
      %p751 = pneg %p500
      %p752 = scmp.lt.s32.totalorder %s32, 1
      %s753 = scalar_select %p752, %s32, 1
      %s754 = smul.addr %s753, 8
      %s755 = scalar_lea.vmem %s17, %s754
      %p756 = scmp.lt.s32.totalorder %s32, 1
      %s757 = scalar_select %p756, %s32, 1
      %s758 = smul.addr %s757, 8
      %s759 = scalar_lea.vmem %s0, %s758
      %p760 = scmp.lt.s32.totalorder %s32, 1
      %s761 = scalar_select %p760, %s32, 1
      %s762 = smul.addr %s761, 2
      %s763 = smul.addr %s762, 8
      %s764 = scalar_lea.vmem %s1, %s763
      %p765 = scmp.lt.s32.totalorder %s32, 1
      %s766 = scalar_select %p765, %s32, 1
      %s767 = scalar_lea.vmem %s2, %s766
      %p768 = scmp.lt.s32.totalorder %s32, 1
      %s769 = scalar_select %p768, %s32, 1
      %s770 = smul.addr %s769, 8
      %s771 = scalar_lea.vmem %s3, %s770
      %p772 = scmp.lt.s32.totalorder %s33, 1
      %s773 = scalar_select %p772, %s33, 1
      %s774 = smul.addr %s773, 6
      %s775 = scalar_lea.vmem %s4, %s774
      %p776 = scmp.lt.s32.totalorder %s33, 1
      %s777 = scalar_select %p776, %s33, 1
      %s778 = smul.addr %s777, 4
      %s779 = smul.addr %s778, 8
      %s780 = scalar_lea.vmem %s5, %s779
      %p781 = scmp.lt.s32.totalorder %s33, 1
      %s782 = scalar_select %p781, %s33, 1
      %s783 = scalar_lea.vmem %s6, %s782
      %p784 = scmp.lt.s32.totalorder %s33, 1
      %s785 = scalar_select %p784, %s33, 1
      %s786 = smul.addr %s785, 4
      %s787 = smul.addr %s786, 8
      %s788 = scalar_lea.vmem %s7, %s787
      %p789 = scmp.lt.s32.totalorder %s33, 1
      %s790 = scalar_select %p789, %s33, 1
      %s791 = scalar_lea.vmem %s8, %s790
      %p792 = scmp.lt.s32.totalorder %s33, 1
      %s793 = scalar_select %p792, %s33, 1
      %s794 = smul.addr %s793, 4
      %s795 = smul.addr %s794, 8
      %s796 = scalar_lea.vmem %s9, %s795
      %p797 = scmp.lt.s32.totalorder %s33, 1
      %s798 = scalar_select %p797, %s33, 1
      %s799 = scalar_lea.vmem %s10, %s798
      %p800 = scmp.lt.s32.totalorder %s33, 1
      %s801 = scalar_select %p800, %s33, 1
      %s802 = smul.addr %s801, 4
      %s803 = smul.addr %s802, 8
      %s804 = scalar_lea.vmem %s11, %s803
      %p805 = scmp.lt.s32.totalorder %s33, 1
      %s806 = scalar_select %p805, %s33, 1
      %s807 = scalar_lea.vmem %s12, %s806
      %p808 = scmp.lt.s32.totalorder %s33, 1
      %s809 = scalar_select %p808, %s33, 1
      %s810 = smul.addr %s809, 4
      %s811 = smul.addr %s810, 8
      %s812 = scalar_lea.vmem %s13, %s811
      %p813 = scmp.lt.s32.totalorder %s33, 1
      %s814 = scalar_select %p813, %s33, 1
      %s815 = scalar_lea.vmem %s14, %s814
      %p816 = scmp.lt.s32.totalorder %s33, 1
      %s817 = scalar_select %p816, %s33, 1
      %s818 = smul.addr %s817, 8
      %s819 = smul.addr %s818, 8
      %s820 = scalar_lea.vmem %s15, %s819
      %p821 = scmp.lt.s32.totalorder %s33, 1
      %s822 = scalar_select %p821, %s33, 1
      %s823 = scalar_lea.vmem %s16, %s822
      %p824 = scmp.lt.s32.totalorder %s32, 1
      %s825 = scalar_select %p824, %s32, 1
      %s826 = smul.addr %s825, 8
      %s827 = scalar_lea.vmem %s17, %s826
      %p828 = scmp.eq.s32.totalorder %s33, 0
      // Predicated region
      $region89: #{_lambda_.6} parent=87 // pred_check
        %p829 = pneg %p828
      $region90: #{_lambda_.6} parent=87 // pred_check_branch
        %831 = sbr.rel (%p829) target = $region92
      $region91: #{_lambda_.6} parent=87 // pred_region
        %v832 = vld [vmem:[%s759] sm:$0xff]
        %vm833 = vcmask 261120
        %834 = vst.msk [vmem:[#allocation2] sm:$0xff] %vm833, %v832
      $region92: #{_lambda_.6} parent=87 // pred_fallthru
        _
      %v835 = vld [vmem:[#allocation2] sm:$0xff]
      %v836 = vld [vmem:[%s764] sm:$0xff]
      %v837 = vld [vmem:[%s764 + $0x8] sm:$0x7]
      %v838 = vld [vmem:[%s767] sm:$0x1]
      %v839 = vld [vmem:[%s771] sm:$0xff]
      %v840 = vld [vmem:[%s775] sm:$0x1]
      %v841 = vld [vmem:[%s775 + $0x1] sm:$0x1]
      %v842 = vld [vmem:[%s775 + $0x2] sm:$0x1]
      %v843 = vld [vmem:[%s775 + $0x3] sm:$0x1]
      %v844 = vld [vmem:[%s775 + $0x4] sm:$0x1]
      %v845 = vld [vmem:[%s775 + $0x5] sm:$0x1]
      %vm846 = vcmask 261120
      %v847 = vsel %vm846, %v835, 0.0
      %848 = vadd.xlane.f32.xlu0 %v847
      %v849 = vpop.xlane.xlu0 %848
      %v850 = vrcp.pop 32.0
      %v851 = vmul.f32 %v849, %v850
      %v852 = vsub.f32 %v835, %v851
      %v853 = vmul.f32 %v852, %v852
      %v854 = vsel %vm846, %v853, 0.0
      %855 = vadd.xlane.f32.xlu0 %v854
      %v856 = vpop.xlane.xlu0 %855
      %v857 = vmul.f32 %v856, 0.032258064
      %v859 = vlaneseq
      %v860 = vshrl.u32 %v859, 7
      %v861 = vsub.s32 0, %v860
      %v862 = vrot.slane %v840, %v861
      %v864 = vmul.f32 %v862, %v852
      %v865 = vrsqrt.pop %v857
      %v866 = vmul.f32 %v857, %v865
      %vm867 = vcmp.eq.f32.partialorder %v857, inf
      %v868 = vsel %vm867, %v857, %v866
      %vm869 = vcmp.eq.f32.partialorder %v857, 0.0
      %v870 = vand.u32 %v857, 2147483648
      %v871 = vsel %vm869, %v870, %v868
      %v872 = vadd.f32 %v871, 1e-06
      %v873 = vrcp.pop %v872
      %v874 = vmul.f32 %v864, %v873
      %v876 = vlaneseq
      %v877 = vshrl.u32 %v876, 7
      %v878 = vsub.s32 0, %v877
      %v879 = vrot.slane %v841, %v878
      %v881 = vadd.f32 %v874, %v879
      %v882 = vld [vmem:[%s780] sm:$0xff]
      %v883 = vld [vmem:[%s780 + $0x8] sm:$0xff]
      %v884 = vld [vmem:[%s780 + $0x10] sm:$0xff]
      %v885 = vld [vmem:[%s780 + $0x18] sm:$0xff]
      %v886 = vld [vmem:[%s783] sm:$0x1]
      %v887 = vld [vmem:[%s788] sm:$0xff]
      %v888 = vld [vmem:[%s788 + $0x8] sm:$0xff]
      %v889 = vld [vmem:[%s788 + $0x10] sm:$0xff]
      %v890 = vld [vmem:[%s788 + $0x18] sm:$0xff]
      %v891 = vld [vmem:[%s791] sm:$0x1]
      %v893 = vlaneseq
      %v894 = vshrl.u32 %v893, 7
      %v895 = vsub.s32 0, %v894
      %v896 = vrot.slane %v886, %v895
      %v899 = vsel %vm846, %v881, 0
      %901 = vmatprep.subr.mxu0 0.0
      %902 = vmatpush1.msra.mxu0 %v882
      %903 = vmatprep.subr.mxu0 0.0
      %904 = vmatpush1.msra.mxu0 %v883
      %905 = vmatprep.subr.mxu0 0.0
      %906 = vmatpush1.msra.mxu0 %v884
      %907 = vmatprep.subr.mxu0 0.0
      %908 = vmatpush1.msra.mxu0 %v885
      %909 = vmatprep.subr.mxu0 0.0
      %910 = vmatpush1.msra.mxu0 0.0
      %911 = vmatprep.subr.mxu0 0.0
      %912 = vmatpush1.msra.mxu0 0.0
      %913 = vmatprep.subr.mxu0 0.0
      %914 = vmatpush1.msra.mxu0 0.0
      %915 = vmatprep.subr.mxu0 0.0
      %916 = vmatpush1.msra.mxu0 0.0
      %917 = vmatprep.subr.mxu0 0.0
      %918 = vmatpush1.msra.mxu0 0.0
      %919 = vmatprep.subr.mxu0 0.0
      %920 = vmatpush1.msra.mxu0 0.0
      %921 = vmatprep.subr.mxu0 0.0
      %922 = vmatpush1.msra.mxu0 0.0
      %923 = vmatprep.subr.mxu0 0.0
      %924 = vmatpush1.msra.mxu0 0.0
      %925 = vmatprep.subr.mxu0 0.0
      %926 = vmatpush1.msra.mxu0 0.0
      %927 = vmatprep.subr.mxu0 0.0
      %928 = vmatpush1.msra.mxu0 0.0
      %929 = vmatprep.subr.mxu0 0.0
      %930 = vmatpush1.msra.mxu0 0.0
      %931 = vmatprep.subr.mxu0 0.0
      %932 = vmatpush1.msra.mxu0 0.0
      %933 = vmatprep.subr.mxu0 0.0
      %934 = vmatpush1.msra.mxu0 0.0
      %935 = vmatprep.subr.mxu0 0.0
      %936 = vmatpush1.msra.mxu0 0.0
      %937 = vmatprep.subr.mxu0 0.0
      %938 = vmatpush1.msra.mxu0 0.0
      %939 = vmatprep.subr.mxu0 0.0
      %940 = vmatpush1.msra.mxu0 0.0
      %941 = vmatprep.subr.mxu0 0.0
      %942 = vmatpush1.msra.mxu0 0.0
      %943 = vmatprep.subr.mxu0 0.0
      %944 = vmatpush1.msra.mxu0 0.0
      %945 = vmatprep.subr.mxu0 0.0
      %946 = vmatpush1.msra.mxu0 0.0
      %947 = vmatprep.subr.mxu0 0.0
      %948 = vmatpush1.msra.mxu0 0.0
      %949 = vmatprep.subr.mxu0 0.0
      %950 = vmatpush1.msra.mxu0 0.0
      %951 = vmatprep.subr.mxu0 0.0
      %952 = vmatpush1.msra.mxu0 0.0
      %953 = vmatprep.subr.mxu0 0.0
      %954 = vmatpush1.msra.mxu0 0.0
      %955 = vmatprep.subr.mxu0 0.0
      %956 = vmatpush1.msra.mxu0 0.0
      %957 = vmatprep.subr.mxu0 0.0
      %958 = vmatpush1.msra.mxu0 0.0
      %959 = vmatprep.subr.mxu0 0.0
      %960 = vmatpush1.msra.mxu0 0.0
      %961 = vmatprep.subr.mxu0 0.0
      %962 = vmatpush1.msra.mxu0 0.0
      %963 = vmatprep.subr.mxu0 0.0
      %964 = vmatpush1.msra.mxu0 0.0
      %965 = vmatprep.mubr.f32.mxu0 0.0
      %966 = vmatmul.mubr.f32.gmra.mrb[0].mxu0 %v899
      %v967 = vpop.f32.mrb[0].mxu0
      %v968 = vadd.f32 %v896, %v967
      %v969 = vpop.f32.mrb[0].mxu0
      %970 = vdwg.mxu0
      %972 = vrot.lane.b32.xlu0 %v968, 96
      %v973 = vpop.permute.xlu0 %972
      %vm974 = vcmask 64512
      %v975 = vsel %vm974, %v968, 0
      %v977 = vsel %vm974, %v973, 0
      %979 = vmatprep.subr.mxu0 0.0
      %980 = vmatpush1.xpose.msra.mxu0 %v977
      %981 = vmatprep.subr.mxu0 0.0
      %982 = vmatpush1.xpose.msra.mxu0 0.0
      %983 = vmatprep.subr.mxu0 0.0
      %984 = vmatpush1.xpose.msra.mxu0 0.0
      %985 = vmatprep.subr.mxu0 0.0
      %986 = vmatpush1.xpose.msra.mxu0 0.0
      %987 = vmatprep.subr.mxu0 0.0
      %988 = vmatpush1.xpose.msra.mxu0 0.0
      %989 = vmatprep.subr.mxu0 0.0
      %990 = vmatpush1.xpose.msra.mxu0 0.0
      %991 = vmatprep.subr.mxu0 0.0
      %992 = vmatpush1.xpose.msra.mxu0 0.0
      %993 = vmatprep.subr.mxu0 0.0
      %994 = vmatpush1.xpose.msra.mxu0 0.0
      %995 = vmatprep.subr.mxu0 0.0
      %996 = vmatpush1.xpose.msra.mxu0 0.0
      %997 = vmatprep.subr.mxu0 0.0
      %998 = vmatpush1.xpose.msra.mxu0 0.0
      %999 = vmatprep.subr.mxu0 0.0
      %1000 = vmatpush1.xpose.msra.mxu0 0.0
      %1001 = vmatprep.subr.mxu0 0.0
      %1002 = vmatpush1.xpose.msra.mxu0 0.0
      %1003 = vmatprep.subr.mxu0 0.0
      %1004 = vmatpush1.xpose.msra.mxu0 0.0
      %1005 = vmatprep.subr.mxu0 0.0
      %1006 = vmatpush1.xpose.msra.mxu0 0.0
      %1007 = vmatprep.subr.mxu0 0.0
      %1008 = vmatpush1.xpose.msra.mxu0 0.0
      %1009 = vmatprep.subr.mxu0 0.0
      %1010 = vmatpush1.xpose.msra.mxu0 0.0
      %1011 = vmatprep.subr.mxu0 0.0
      %1012 = vmatpush1.xpose.msra.mxu0 0.0
      %1013 = vmatprep.subr.mxu0 0.0
      %1014 = vmatpush1.xpose.msra.mxu0 0.0
      %1015 = vmatprep.subr.mxu0 0.0
      %1016 = vmatpush1.xpose.msra.mxu0 0.0
      %1017 = vmatprep.subr.mxu0 0.0
      %1018 = vmatpush1.xpose.msra.mxu0 0.0
      %1019 = vmatprep.subr.mxu0 0.0
      %1020 = vmatpush1.xpose.msra.mxu0 0.0
      %1021 = vmatprep.subr.mxu0 0.0
      %1022 = vmatpush1.xpose.msra.mxu0 0.0
      %1023 = vmatprep.subr.mxu0 0.0
      %1024 = vmatpush1.xpose.msra.mxu0 0.0
      %1025 = vmatprep.subr.mxu0 0.0
      %1026 = vmatpush1.xpose.msra.mxu0 0.0
      %1027 = vmatprep.subr.mxu0 0.0
      %1028 = vmatpush1.xpose.msra.mxu0 0.0
      %1029 = vmatprep.subr.mxu0 0.0
      %1030 = vmatpush1.xpose.msra.mxu0 0.0
      %1031 = vmatprep.subr.mxu0 0.0
      %1032 = vmatpush1.xpose.msra.mxu0 0.0
      %1033 = vmatprep.subr.mxu0 0.0
      %1034 = vmatpush1.xpose.msra.mxu0 0.0
      %1035 = vmatprep.subr.mxu0 0.0
      %1036 = vmatpush1.xpose.msra.mxu0 0.0
      %1037 = vmatprep.subr.mxu0 0.0
      %1038 = vmatpush1.xpose.msra.mxu0 0.0
      %1039 = vmatprep.subr.mxu0 0.0
      %1040 = vmatpush1.xpose.msra.mxu0 0.0
      %1041 = vmatprep.subr.mxu0 0.0
      %1042 = vmatpush1.xpose.msra.mxu0 0.0
      %1043 = vmatprep.mubr.f32.mxu0 0.0
      %1044 = vmatmul.mubr.f32.gmra.mrb[0].mxu0 %v975
      %v1045 = vpop.f32.mrb[0].mxu0
      %v1046 = vadd.f32 %v839, %v1045
      %v1047 = vpop.f32.mrb[0].mxu0
      %1048 = vdwg.mxu0
      %v1049 = vsel %vm974, %v1046, -inf
      %1050 = vmax.xlane.f32.xlu0 %v1049
      %v1051 = vpop.xlane.xlu0 %1050
      %v1052 = vsub.f32 %v1046, %v1051
      %v1053 = vmul.f32 %v1052, 1.442695
      %v1054 = vpow.pop %v1053
      %v1055 = vsel %vm974, %v1054, 0.0
      %1056 = vadd.xlane.f32.xlu0 %v1055
      %v1057 = vpop.xlane.xlu0 %1056
      %v1058 = vrcp.pop %v1057
      %v1059 = vmul.f32 %v1054, %v1058
      %1060 = vrot.lane.b32.xlu0 %v968, 64
      %v1061 = vpop.permute.xlu0 %1060
      %v1064 = vsel %vm974, %v1059, 0
      %1066 = vmatprep.subr.mxu0 0.0
      %1067 = vmatpush1.msra.mxu0 %v1061
      %1068 = vmatprep.subr.mxu0 0.0
      %1069 = vmatpush1.msra.mxu0 0.0
      %1070 = vmatprep.subr.mxu0 0.0
      %1071 = vmatpush1.msra.mxu0 0.0
      %1072 = vmatprep.subr.mxu0 0.0
      %1073 = vmatpush1.msra.mxu0 0.0
      %1074 = vmatprep.subr.mxu0 0.0
      %1075 = vmatpush1.msra.mxu0 0.0
      %1076 = vmatprep.subr.mxu0 0.0
      %1077 = vmatpush1.msra.mxu0 0.0
      %1078 = vmatprep.subr.mxu0 0.0
      %1079 = vmatpush1.msra.mxu0 0.0
      %1080 = vmatprep.subr.mxu0 0.0
      %1081 = vmatpush1.msra.mxu0 0.0
      %1082 = vmatprep.subr.mxu0 0.0
      %1083 = vmatpush1.msra.mxu0 0.0
      %1084 = vmatprep.subr.mxu0 0.0
      %1085 = vmatpush1.msra.mxu0 0.0
      %1086 = vmatprep.subr.mxu0 0.0
      %1087 = vmatpush1.msra.mxu0 0.0
      %1088 = vmatprep.subr.mxu0 0.0
      %1089 = vmatpush1.msra.mxu0 0.0
      %1090 = vmatprep.subr.mxu0 0.0
      %1091 = vmatpush1.msra.mxu0 0.0
      %1092 = vmatprep.subr.mxu0 0.0
      %1093 = vmatpush1.msra.mxu0 0.0
      %1094 = vmatprep.subr.mxu0 0.0
      %1095 = vmatpush1.msra.mxu0 0.0
      %1096 = vmatprep.subr.mxu0 0.0
      %1097 = vmatpush1.msra.mxu0 0.0
      %1098 = vmatprep.subr.mxu0 0.0
      %1099 = vmatpush1.msra.mxu0 0.0
      %1100 = vmatprep.subr.mxu0 0.0
      %1101 = vmatpush1.msra.mxu0 0.0
      %1102 = vmatprep.subr.mxu0 0.0
      %1103 = vmatpush1.msra.mxu0 0.0
      %1104 = vmatprep.subr.mxu0 0.0
      %1105 = vmatpush1.msra.mxu0 0.0
      %1106 = vmatprep.subr.mxu0 0.0
      %1107 = vmatpush1.msra.mxu0 0.0
      %1108 = vmatprep.subr.mxu0 0.0
      %1109 = vmatpush1.msra.mxu0 0.0
      %1110 = vmatprep.subr.mxu0 0.0
      %1111 = vmatpush1.msra.mxu0 0.0
      %1112 = vmatprep.subr.mxu0 0.0
      %1113 = vmatpush1.msra.mxu0 0.0
      %1114 = vmatprep.subr.mxu0 0.0
      %1115 = vmatpush1.msra.mxu0 0.0
      %1116 = vmatprep.subr.mxu0 0.0
      %1117 = vmatpush1.msra.mxu0 0.0
      %1118 = vmatprep.subr.mxu0 0.0
      %1119 = vmatpush1.msra.mxu0 0.0
      %1120 = vmatprep.subr.mxu0 0.0
      %1121 = vmatpush1.msra.mxu0 0.0
      %1122 = vmatprep.subr.mxu0 0.0
      %1123 = vmatpush1.msra.mxu0 0.0
      %1124 = vmatprep.subr.mxu0 0.0
      %1125 = vmatpush1.msra.mxu0 0.0
      %1126 = vmatprep.subr.mxu0 0.0
      %1127 = vmatpush1.msra.mxu0 0.0
      %1128 = vmatprep.subr.mxu0 0.0
      %1129 = vmatpush1.msra.mxu0 0.0
      %1130 = vmatprep.mubr.f32.mxu0 0.0
      %1131 = vmatmul.mubr.f32.gmra.mrb[0].mxu0 %v1064
      %v1132 = vpop.f32.mrb[0].mxu0
      %v1133 = vadd.f32 0.0, %v1132
      %v1134 = vpop.f32.mrb[0].mxu0
      %1135 = vdwg.mxu0
      %1136 = vrot.lane.b32.xlu0 %v968, 120
      %v1137 = vpop.permute.xlu0 %1136
      %1138 = vrot.lane.b32.xlu0 %v968, 88
      %v1139 = vpop.permute.xlu0 %1138
      %v1140 = vsel %vm974, %v1137, 0
      %v1142 = vsel %vm974, %v1139, 0
      %1144 = vmatprep.subr.mxu0 0.0
      %1145 = vmatpush1.xpose.msra.mxu0 %v1142
      %1146 = vmatprep.subr.mxu0 0.0
      %1147 = vmatpush1.xpose.msra.mxu0 0.0
      %1148 = vmatprep.subr.mxu0 0.0
      %1149 = vmatpush1.xpose.msra.mxu0 0.0
      %1150 = vmatprep.subr.mxu0 0.0
      %1151 = vmatpush1.xpose.msra.mxu0 0.0
      %1152 = vmatprep.subr.mxu0 0.0
      %1153 = vmatpush1.xpose.msra.mxu0 0.0
      %1154 = vmatprep.subr.mxu0 0.0
      %1155 = vmatpush1.xpose.msra.mxu0 0.0
      %1156 = vmatprep.subr.mxu0 0.0
      %1157 = vmatpush1.xpose.msra.mxu0 0.0
      %1158 = vmatprep.subr.mxu0 0.0
      %1159 = vmatpush1.xpose.msra.mxu0 0.0
      %1160 = vmatprep.subr.mxu0 0.0
      %1161 = vmatpush1.xpose.msra.mxu0 0.0
      %1162 = vmatprep.subr.mxu0 0.0
      %1163 = vmatpush1.xpose.msra.mxu0 0.0
      %1164 = vmatprep.subr.mxu0 0.0
      %1165 = vmatpush1.xpose.msra.mxu0 0.0
      %1166 = vmatprep.subr.mxu0 0.0
      %1167 = vmatpush1.xpose.msra.mxu0 0.0
      %1168 = vmatprep.subr.mxu0 0.0
      %1169 = vmatpush1.xpose.msra.mxu0 0.0
      %1170 = vmatprep.subr.mxu0 0.0
      %1171 = vmatpush1.xpose.msra.mxu0 0.0
      %1172 = vmatprep.subr.mxu0 0.0
      %1173 = vmatpush1.xpose.msra.mxu0 0.0
      %1174 = vmatprep.subr.mxu0 0.0
      %1175 = vmatpush1.xpose.msra.mxu0 0.0
      %1176 = vmatprep.subr.mxu0 0.0
      %1177 = vmatpush1.xpose.msra.mxu0 0.0
      %1178 = vmatprep.subr.mxu0 0.0
      %1179 = vmatpush1.xpose.msra.mxu0 0.0
      %1180 = vmatprep.subr.mxu0 0.0
      %1181 = vmatpush1.xpose.msra.mxu0 0.0
      %1182 = vmatprep.subr.mxu0 0.0
      %1183 = vmatpush1.xpose.msra.mxu0 0.0
      %1184 = vmatprep.subr.mxu0 0.0
      %1185 = vmatpush1.xpose.msra.mxu0 0.0
      %1186 = vmatprep.subr.mxu0 0.0
      %1187 = vmatpush1.xpose.msra.mxu0 0.0
      %1188 = vmatprep.subr.mxu0 0.0
      %1189 = vmatpush1.xpose.msra.mxu0 0.0
      %1190 = vmatprep.subr.mxu0 0.0
      %1191 = vmatpush1.xpose.msra.mxu0 0.0
      %1192 = vmatprep.subr.mxu0 0.0
      %1193 = vmatpush1.xpose.msra.mxu0 0.0
      %1194 = vmatprep.subr.mxu0 0.0
      %1195 = vmatpush1.xpose.msra.mxu0 0.0
      %1196 = vmatprep.subr.mxu0 0.0
      %1197 = vmatpush1.xpose.msra.mxu0 0.0
      %1198 = vmatprep.subr.mxu0 0.0
      %1199 = vmatpush1.xpose.msra.mxu0 0.0
      %1200 = vmatprep.subr.mxu0 0.0
      %1201 = vmatpush1.xpose.msra.mxu0 0.0
      %1202 = vmatprep.subr.mxu0 0.0
      %1203 = vmatpush1.xpose.msra.mxu0 0.0
      %1204 = vmatprep.subr.mxu0 0.0
      %1205 = vmatpush1.xpose.msra.mxu0 0.0
      %1206 = vmatprep.subr.mxu0 0.0
      %1207 = vmatpush1.xpose.msra.mxu0 0.0
      %1208 = vmatprep.mubr.f32.mxu0 0.0
      %1209 = vmatmul.mubr.f32.gmra.mrb[0].mxu0 %v1140
      %v1210 = vpop.f32.mrb[0].mxu0
      %v1211 = vadd.f32 %v839, %v1210
      %v1212 = vpop.f32.mrb[0].mxu0
      %1213 = vdwg.mxu0
      %v1214 = vsel %vm974, %v1211, -inf
      %1215 = vmax.xlane.f32.xlu0 %v1214
      %v1216 = vpop.xlane.xlu0 %1215
      %v1217 = vsub.f32 %v1211, %v1216
      %v1218 = vmul.f32 %v1217, 1.442695
      %v1219 = vpow.pop %v1218
      %v1220 = vsel %vm974, %v1219, 0.0
      %1221 = vadd.xlane.f32.xlu0 %v1220
      %v1222 = vpop.xlane.xlu0 %1221
      %v1223 = vrcp.pop %v1222
      %v1224 = vmul.f32 %v1219, %v1223
      %1225 = vrot.lane.b32.xlu0 %v968, 56
      %v1226 = vpop.permute.xlu0 %1225
      %v1229 = vsel %vm974, %v1224, 0
      %1231 = vmatprep.subr.mxu0 0.0
      %1232 = vmatpush1.msra.mxu0 %v1226
      %1233 = vmatprep.subr.mxu0 0.0
      %1234 = vmatpush1.msra.mxu0 0.0
      %1235 = vmatprep.subr.mxu0 0.0
      %1236 = vmatpush1.msra.mxu0 0.0
      %1237 = vmatprep.subr.mxu0 0.0
      %1238 = vmatpush1.msra.mxu0 0.0
      %1239 = vmatprep.subr.mxu0 0.0
      %1240 = vmatpush1.msra.mxu0 0.0
      %1241 = vmatprep.subr.mxu0 0.0
      %1242 = vmatpush1.msra.mxu0 0.0
      %1243 = vmatprep.subr.mxu0 0.0
      %1244 = vmatpush1.msra.mxu0 0.0
      %1245 = vmatprep.subr.mxu0 0.0
      %1246 = vmatpush1.msra.mxu0 0.0
      %1247 = vmatprep.subr.mxu0 0.0
      %1248 = vmatpush1.msra.mxu0 0.0
      %1249 = vmatprep.subr.mxu0 0.0
      %1250 = vmatpush1.msra.mxu0 0.0
      %1251 = vmatprep.subr.mxu0 0.0
      %1252 = vmatpush1.msra.mxu0 0.0
      %1253 = vmatprep.subr.mxu0 0.0
      %1254 = vmatpush1.msra.mxu0 0.0
      %1255 = vmatprep.subr.mxu0 0.0
      %1256 = vmatpush1.msra.mxu0 0.0
      %1257 = vmatprep.subr.mxu0 0.0
      %1258 = vmatpush1.msra.mxu0 0.0
      %1259 = vmatprep.subr.mxu0 0.0
      %1260 = vmatpush1.msra.mxu0 0.0
      %1261 = vmatprep.subr.mxu0 0.0
      %1262 = vmatpush1.msra.mxu0 0.0
      %1263 = vmatprep.subr.mxu0 0.0
      %1264 = vmatpush1.msra.mxu0 0.0
      %1265 = vmatprep.subr.mxu0 0.0
      %1266 = vmatpush1.msra.mxu0 0.0
      %1267 = vmatprep.subr.mxu0 0.0
      %1268 = vmatpush1.msra.mxu0 0.0
      %1269 = vmatprep.subr.mxu0 0.0
      %1270 = vmatpush1.msra.mxu0 0.0
      %1271 = vmatprep.subr.mxu0 0.0
      %1272 = vmatpush1.msra.mxu0 0.0
      %1273 = vmatprep.subr.mxu0 0.0
      %1274 = vmatpush1.msra.mxu0 0.0
      %1275 = vmatprep.subr.mxu0 0.0
      %1276 = vmatpush1.msra.mxu0 0.0
      %1277 = vmatprep.subr.mxu0 0.0
      %1278 = vmatpush1.msra.mxu0 0.0
      %1279 = vmatprep.subr.mxu0 0.0
      %1280 = vmatpush1.msra.mxu0 0.0
      %1281 = vmatprep.subr.mxu0 0.0
      %1282 = vmatpush1.msra.mxu0 0.0
      %1283 = vmatprep.subr.mxu0 0.0
      %1284 = vmatpush1.msra.mxu0 0.0
      %1285 = vmatprep.subr.mxu0 0.0
      %1286 = vmatpush1.msra.mxu0 0.0
      %1287 = vmatprep.subr.mxu0 0.0
      %1288 = vmatpush1.msra.mxu0 0.0
      %1289 = vmatprep.subr.mxu0 0.0
      %1290 = vmatpush1.msra.mxu0 0.0
      %1291 = vmatprep.subr.mxu0 0.0
      %1292 = vmatpush1.msra.mxu0 0.0
      %1293 = vmatprep.subr.mxu0 0.0
      %1294 = vmatpush1.msra.mxu0 0.0
      %1295 = vmatprep.mubr.f32.mxu0 0.0
      %1296 = vmatmul.mubr.f32.gmra.mrb[0].mxu0 %v1229
      %v1297 = vpop.f32.mrb[0].mxu0
      %v1298 = vadd.f32 0.0, %v1297
      %v1299 = vpop.f32.mrb[0].mxu0
      %1300 = vdwg.mxu0
      %1301 = vrot.lane.b32.xlu0 %v968, 112
      %v1302 = vpop.permute.xlu0 %1301
      %1303 = vrot.lane.b32.xlu0 %v968, 80
      %v1304 = vpop.permute.xlu0 %1303
      %v1305 = vsel %vm974, %v1302, 0
      %v1307 = vsel %vm974, %v1304, 0
      %1309 = vmatprep.subr.mxu0 0.0
      %1310 = vmatpush1.xpose.msra.mxu0 %v1307
      %1311 = vmatprep.subr.mxu0 0.0
      %1312 = vmatpush1.xpose.msra.mxu0 0.0
      %1313 = vmatprep.subr.mxu0 0.0
      %1314 = vmatpush1.xpose.msra.mxu0 0.0
      %1315 = vmatprep.subr.mxu0 0.0
      %1316 = vmatpush1.xpose.msra.mxu0 0.0
      %1317 = vmatprep.subr.mxu0 0.0
      %1318 = vmatpush1.xpose.msra.mxu0 0.0
      %1319 = vmatprep.subr.mxu0 0.0
      %1320 = vmatpush1.xpose.msra.mxu0 0.0
      %1321 = vmatprep.subr.mxu0 0.0
      %1322 = vmatpush1.xpose.msra.mxu0 0.0
      %1323 = vmatprep.subr.mxu0 0.0
      %1324 = vmatpush1.xpose.msra.mxu0 0.0
      %1325 = vmatprep.subr.mxu0 0.0
      %1326 = vmatpush1.xpose.msra.mxu0 0.0
      %1327 = vmatprep.subr.mxu0 0.0
      %1328 = vmatpush1.xpose.msra.mxu0 0.0
      %1329 = vmatprep.subr.mxu0 0.0
      %1330 = vmatpush1.xpose.msra.mxu0 0.0
      %1331 = vmatprep.subr.mxu0 0.0
      %1332 = vmatpush1.xpose.msra.mxu0 0.0
      %1333 = vmatprep.subr.mxu0 0.0
      %1334 = vmatpush1.xpose.msra.mxu0 0.0
      %1335 = vmatprep.subr.mxu0 0.0
      %1336 = vmatpush1.xpose.msra.mxu0 0.0
      %1337 = vmatprep.subr.mxu0 0.0
      %1338 = vmatpush1.xpose.msra.mxu0 0.0
      %1339 = vmatprep.subr.mxu0 0.0
      %1340 = vmatpush1.xpose.msra.mxu0 0.0
      %1341 = vmatprep.subr.mxu0 0.0
      %1342 = vmatpush1.xpose.msra.mxu0 0.0
      %1343 = vmatprep.subr.mxu0 0.0
      %1344 = vmatpush1.xpose.msra.mxu0 0.0
      %1345 = vmatprep.subr.mxu0 0.0
      %1346 = vmatpush1.xpose.msra.mxu0 0.0
      %1347 = vmatprep.subr.mxu0 0.0
      %1348 = vmatpush1.xpose.msra.mxu0 0.0
      %1349 = vmatprep.subr.mxu0 0.0
      %1350 = vmatpush1.xpose.msra.mxu0 0.0
      %1351 = vmatprep.subr.mxu0 0.0
      %1352 = vmatpush1.xpose.msra.mxu0 0.0
      %1353 = vmatprep.subr.mxu0 0.0
      %1354 = vmatpush1.xpose.msra.mxu0 0.0
      %1355 = vmatprep.subr.mxu0 0.0
      %1356 = vmatpush1.xpose.msra.mxu0 0.0
      %1357 = vmatprep.subr.mxu0 0.0
      %1358 = vmatpush1.xpose.msra.mxu0 0.0
      %1359 = vmatprep.subr.mxu0 0.0
      %1360 = vmatpush1.xpose.msra.mxu0 0.0
      %1361 = vmatprep.subr.mxu0 0.0
      %1362 = vmatpush1.xpose.msra.mxu0 0.0
      %1363 = vmatprep.subr.mxu0 0.0
      %1364 = vmatpush1.xpose.msra.mxu0 0.0
      %1365 = vmatprep.subr.mxu0 0.0
      %1366 = vmatpush1.xpose.msra.mxu0 0.0
      %1367 = vmatprep.subr.mxu0 0.0
      %1368 = vmatpush1.xpose.msra.mxu0 0.0
      %1369 = vmatprep.subr.mxu0 0.0
      %1370 = vmatpush1.xpose.msra.mxu0 0.0
      %1371 = vmatprep.subr.mxu0 0.0
      %1372 = vmatpush1.xpose.msra.mxu0 0.0
      %1373 = vmatprep.mubr.f32.mxu0 0.0
      %1374 = vmatmul.mubr.f32.gmra.mrb[0].mxu0 %v1305
      %v1375 = vpop.f32.mrb[0].mxu0
      %v1376 = vadd.f32 %v839, %v1375
      %v1377 = vpop.f32.mrb[0].mxu0
      %1378 = vdwg.mxu0
      %v1379 = vsel %vm974, %v1376, -inf
      %1380 = vmax.xlane.f32.xlu0 %v1379
      %v1381 = vpop.xlane.xlu0 %1380
      %v1382 = vsub.f32 %v1376, %v1381
      %v1383 = vmul.f32 %v1382, 1.442695
      %v1384 = vpow.pop %v1383
      %v1385 = vsel %vm974, %v1384, 0.0
      %1386 = vadd.xlane.f32.xlu0 %v1385
      %v1387 = vpop.xlane.xlu0 %1386
      %v1388 = vrcp.pop %v1387
      %v1389 = vmul.f32 %v1384, %v1388
      %1390 = vrot.lane.b32.xlu0 %v968, 48
      %v1391 = vpop.permute.xlu0 %1390
      %v1394 = vsel %vm974, %v1389, 0
      %1396 = vmatprep.subr.mxu0 0.0
      %1397 = vmatpush1.msra.mxu0 %v1391
      %1398 = vmatprep.subr.mxu0 0.0
      %1399 = vmatpush1.msra.mxu0 0.0
      %1400 = vmatprep.subr.mxu0 0.0
      %1401 = vmatpush1.msra.mxu0 0.0
      %1402 = vmatprep.subr.mxu0 0.0
      %1403 = vmatpush1.msra.mxu0 0.0
      %1404 = vmatprep.subr.mxu0 0.0
      %1405 = vmatpush1.msra.mxu0 0.0
      %1406 = vmatprep.subr.mxu0 0.0
      %1407 = vmatpush1.msra.mxu0 0.0
      %1408 = vmatprep.subr.mxu0 0.0
      %1409 = vmatpush1.msra.mxu0 0.0
      %1410 = vmatprep.subr.mxu0 0.0
      %1411 = vmatpush1.msra.mxu0 0.0
      %1412 = vmatprep.subr.mxu0 0.0
      %1413 = vmatpush1.msra.mxu0 0.0
      %1414 = vmatprep.subr.mxu0 0.0
      %1415 = vmatpush1.msra.mxu0 0.0
      %1416 = vmatprep.subr.mxu0 0.0
      %1417 = vmatpush1.msra.mxu0 0.0
      %1418 = vmatprep.subr.mxu0 0.0
      %1419 = vmatpush1.msra.mxu0 0.0
      %1420 = vmatprep.subr.mxu0 0.0
      %1421 = vmatpush1.msra.mxu0 0.0
      %1422 = vmatprep.subr.mxu0 0.0
      %1423 = vmatpush1.msra.mxu0 0.0
      %1424 = vmatprep.subr.mxu0 0.0
      %1425 = vmatpush1.msra.mxu0 0.0
      %1426 = vmatprep.subr.mxu0 0.0
      %1427 = vmatpush1.msra.mxu0 0.0
      %1428 = vmatprep.subr.mxu0 0.0
      %1429 = vmatpush1.msra.mxu0 0.0
      %1430 = vmatprep.subr.mxu0 0.0
      %1431 = vmatpush1.msra.mxu0 0.0
      %1432 = vmatprep.subr.mxu0 0.0
      %1433 = vmatpush1.msra.mxu0 0.0
      %1434 = vmatprep.subr.mxu0 0.0
      %1435 = vmatpush1.msra.mxu0 0.0
      %1436 = vmatprep.subr.mxu0 0.0
      %1437 = vmatpush1.msra.mxu0 0.0
      %1438 = vmatprep.subr.mxu0 0.0
      %1439 = vmatpush1.msra.mxu0 0.0
      %1440 = vmatprep.subr.mxu0 0.0
      %1441 = vmatpush1.msra.mxu0 0.0
      %1442 = vmatprep.subr.mxu0 0.0
      %1443 = vmatpush1.msra.mxu0 0.0
      %1444 = vmatprep.subr.mxu0 0.0
      %1445 = vmatpush1.msra.mxu0 0.0
      %1446 = vmatprep.subr.mxu0 0.0
      %1447 = vmatpush1.msra.mxu0 0.0
      %1448 = vmatprep.subr.mxu0 0.0
      %1449 = vmatpush1.msra.mxu0 0.0
      %1450 = vmatprep.subr.mxu0 0.0
      %1451 = vmatpush1.msra.mxu0 0.0
      %1452 = vmatprep.subr.mxu0 0.0
      %1453 = vmatpush1.msra.mxu0 0.0
      %1454 = vmatprep.subr.mxu0 0.0
      %1455 = vmatpush1.msra.mxu0 0.0
      %1456 = vmatprep.subr.mxu0 0.0
      %1457 = vmatpush1.msra.mxu0 0.0
      %1458 = vmatprep.subr.mxu0 0.0
      %1459 = vmatpush1.msra.mxu0 0.0
      %1460 = vmatprep.mubr.f32.mxu0 0.0
      %1461 = vmatmul.mubr.f32.gmra.mrb[0].mxu0 %v1394
      %v1462 = vpop.f32.mrb[0].mxu0
      %v1463 = vadd.f32 0.0, %v1462
      %v1464 = vpop.f32.mrb[0].mxu0
      %1465 = vdwg.mxu0
      %1466 = vrot.lane.b32.xlu0 %v968, 104
      %v1467 = vpop.permute.xlu0 %1466
      %1468 = vrot.lane.b32.xlu0 %v968, 72
      %v1469 = vpop.permute.xlu0 %1468
      %v1470 = vsel %vm974, %v1467, 0
      %v1472 = vsel %vm974, %v1469, 0
      %1474 = vmatprep.subr.mxu0 0.0
      %1475 = vmatpush1.xpose.msra.mxu0 %v1472
      %1476 = vmatprep.subr.mxu0 0.0
      %1477 = vmatpush1.xpose.msra.mxu0 0.0
      %1478 = vmatprep.subr.mxu0 0.0
      %1479 = vmatpush1.xpose.msra.mxu0 0.0
      %1480 = vmatprep.subr.mxu0 0.0
      %1481 = vmatpush1.xpose.msra.mxu0 0.0
      %1482 = vmatprep.subr.mxu0 0.0
      %1483 = vmatpush1.xpose.msra.mxu0 0.0
      %1484 = vmatprep.subr.mxu0 0.0
      %1485 = vmatpush1.xpose.msra.mxu0 0.0
      %1486 = vmatprep.subr.mxu0 0.0
      %1487 = vmatpush1.xpose.msra.mxu0 0.0
      %1488 = vmatprep.subr.mxu0 0.0
      %1489 = vmatpush1.xpose.msra.mxu0 0.0
      %1490 = vmatprep.subr.mxu0 0.0
      %1491 = vmatpush1.xpose.msra.mxu0 0.0
      %1492 = vmatprep.subr.mxu0 0.0
      %1493 = vmatpush1.xpose.msra.mxu0 0.0
      %1494 = vmatprep.subr.mxu0 0.0
      %1495 = vmatpush1.xpose.msra.mxu0 0.0
      %1496 = vmatprep.subr.mxu0 0.0
      %1497 = vmatpush1.xpose.msra.mxu0 0.0
      %1498 = vmatprep.subr.mxu0 0.0
      %1499 = vmatpush1.xpose.msra.mxu0 0.0
      %1500 = vmatprep.subr.mxu0 0.0
      %1501 = vmatpush1.xpose.msra.mxu0 0.0
      %1502 = vmatprep.subr.mxu0 0.0
      %1503 = vmatpush1.xpose.msra.mxu0 0.0
      %1504 = vmatprep.subr.mxu0 0.0
      %1505 = vmatpush1.xpose.msra.mxu0 0.0
      %1506 = vmatprep.subr.mxu0 0.0
      %1507 = vmatpush1.xpose.msra.mxu0 0.0
      %1508 = vmatprep.subr.mxu0 0.0
      %1509 = vmatpush1.xpose.msra.mxu0 0.0
      %1510 = vmatprep.subr.mxu0 0.0
      %1511 = vmatpush1.xpose.msra.mxu0 0.0
      %1512 = vmatprep.subr.mxu0 0.0
      %1513 = vmatpush1.xpose.msra.mxu0 0.0
      %1514 = vmatprep.subr.mxu0 0.0
      %1515 = vmatpush1.xpose.msra.mxu0 0.0
      %1516 = vmatprep.subr.mxu0 0.0
      %1517 = vmatpush1.xpose.msra.mxu0 0.0
      %1518 = vmatprep.subr.mxu0 0.0
      %1519 = vmatpush1.xpose.msra.mxu0 0.0
      %1520 = vmatprep.subr.mxu0 0.0
      %1521 = vmatpush1.xpose.msra.mxu0 0.0
      %1522 = vmatprep.subr.mxu0 0.0
      %1523 = vmatpush1.xpose.msra.mxu0 0.0
      %1524 = vmatprep.subr.mxu0 0.0
      %1525 = vmatpush1.xpose.msra.mxu0 0.0
      %1526 = vmatprep.subr.mxu0 0.0
      %1527 = vmatpush1.xpose.msra.mxu0 0.0
      %1528 = vmatprep.subr.mxu0 0.0
      %1529 = vmatpush1.xpose.msra.mxu0 0.0
      %1530 = vmatprep.subr.mxu0 0.0
      %1531 = vmatpush1.xpose.msra.mxu0 0.0
      %1532 = vmatprep.subr.mxu0 0.0
      %1533 = vmatpush1.xpose.msra.mxu0 0.0
      %1534 = vmatprep.subr.mxu0 0.0
      %1535 = vmatpush1.xpose.msra.mxu0 0.0
      %1536 = vmatprep.subr.mxu0 0.0
      %1537 = vmatpush1.xpose.msra.mxu0 0.0
      %1538 = vmatprep.mubr.f32.mxu0 0.0
      %1539 = vmatmul.mubr.f32.gmra.mrb[0].mxu0 %v1470
      %v1540 = vpop.f32.mrb[0].mxu0
      %v1541 = vadd.f32 %v839, %v1540
      %v1542 = vpop.f32.mrb[0].mxu0
      %1543 = vdwg.mxu0
      %v1544 = vsel %vm974, %v1541, -inf
      %1545 = vmax.xlane.f32.xlu0 %v1544
      %v1546 = vpop.xlane.xlu0 %1545
      %v1547 = vsub.f32 %v1541, %v1546
      %v1548 = vmul.f32 %v1547, 1.442695
      %v1549 = vpow.pop %v1548
      %v1550 = vsel %vm974, %v1549, 0.0
      %1551 = vadd.xlane.f32.xlu0 %v1550
      %v1552 = vpop.xlane.xlu0 %1551
      %v1553 = vrcp.pop %v1552
      %v1554 = vmul.f32 %v1549, %v1553
      %1555 = vrot.lane.b32.xlu0 %v968, 40
      %v1556 = vpop.permute.xlu0 %1555
      %v1559 = vsel %vm974, %v1554, 0
      %1561 = vmatprep.subr.mxu0 0.0
      %1562 = vmatpush1.msra.mxu0 %v1556
      %1563 = vmatprep.subr.mxu0 0.0
      %1564 = vmatpush1.msra.mxu0 0.0
      %1565 = vmatprep.subr.mxu0 0.0
      %1566 = vmatpush1.msra.mxu0 0.0
      %1567 = vmatprep.subr.mxu0 0.0
      %1568 = vmatpush1.msra.mxu0 0.0
      %1569 = vmatprep.subr.mxu0 0.0
      %1570 = vmatpush1.msra.mxu0 0.0
      %1571 = vmatprep.subr.mxu0 0.0
      %1572 = vmatpush1.msra.mxu0 0.0
      %1573 = vmatprep.subr.mxu0 0.0
      %1574 = vmatpush1.msra.mxu0 0.0
      %1575 = vmatprep.subr.mxu0 0.0
      %1576 = vmatpush1.msra.mxu0 0.0
      %1577 = vmatprep.subr.mxu0 0.0
      %1578 = vmatpush1.msra.mxu0 0.0
      %1579 = vmatprep.subr.mxu0 0.0
      %1580 = vmatpush1.msra.mxu0 0.0
      %1581 = vmatprep.subr.mxu0 0.0
      %1582 = vmatpush1.msra.mxu0 0.0
      %1583 = vmatprep.subr.mxu0 0.0
      %1584 = vmatpush1.msra.mxu0 0.0
      %1585 = vmatprep.subr.mxu0 0.0
      %1586 = vmatpush1.msra.mxu0 0.0
      %1587 = vmatprep.subr.mxu0 0.0
      %1588 = vmatpush1.msra.mxu0 0.0
      %1589 = vmatprep.subr.mxu0 0.0
      %1590 = vmatpush1.msra.mxu0 0.0
      %1591 = vmatprep.subr.mxu0 0.0
      %1592 = vmatpush1.msra.mxu0 0.0
      %1593 = vmatprep.subr.mxu0 0.0
      %1594 = vmatpush1.msra.mxu0 0.0
      %1595 = vmatprep.subr.mxu0 0.0
      %1596 = vmatpush1.msra.mxu0 0.0
      %1597 = vmatprep.subr.mxu0 0.0
      %1598 = vmatpush1.msra.mxu0 0.0
      %1599 = vmatprep.subr.mxu0 0.0
      %1600 = vmatpush1.msra.mxu0 0.0
      %1601 = vmatprep.subr.mxu0 0.0
      %1602 = vmatpush1.msra.mxu0 0.0
      %1603 = vmatprep.subr.mxu0 0.0
      %1604 = vmatpush1.msra.mxu0 0.0
      %1605 = vmatprep.subr.mxu0 0.0
      %1606 = vmatpush1.msra.mxu0 0.0
      %1607 = vmatprep.subr.mxu0 0.0
      %1608 = vmatpush1.msra.mxu0 0.0
      %1609 = vmatprep.subr.mxu0 0.0
      %1610 = vmatpush1.msra.mxu0 0.0
      %1611 = vmatprep.subr.mxu0 0.0
      %1612 = vmatpush1.msra.mxu0 0.0
      %1613 = vmatprep.subr.mxu0 0.0
      %1614 = vmatpush1.msra.mxu0 0.0
      %1615 = vmatprep.subr.mxu0 0.0
      %1616 = vmatpush1.msra.mxu0 0.0
      %1617 = vmatprep.subr.mxu0 0.0
      %1618 = vmatpush1.msra.mxu0 0.0
      %1619 = vmatprep.subr.mxu0 0.0
      %1620 = vmatpush1.msra.mxu0 0.0
      %1621 = vmatprep.subr.mxu0 0.0
      %1622 = vmatpush1.msra.mxu0 0.0
      %1623 = vmatprep.subr.mxu0 0.0
      %1624 = vmatpush1.msra.mxu0 0.0
      %1625 = vmatprep.mubr.f32.mxu0 0.0
      %1626 = vmatmul.mubr.f32.gmra.mrb[0].mxu0 %v1559
      %v1627 = vpop.f32.mrb[0].mxu0
      %v1628 = vadd.f32 0.0, %v1627
      %v1629 = vpop.f32.mrb[0].mxu0
      %1630 = vdwg.mxu0
      %1632 = vrot.lane.b32.xlu0 %v1298, 8
      %v1633 = vpop.permute.xlu0 %1632
      %1636 = vrot.lane.b32.xlu0 %v1463, 16
      %v1637 = vpop.permute.xlu0 %1636
      %1640 = vrot.lane.b32.xlu0 %v1628, 24
      %v1641 = vpop.permute.xlu0 %1640
      %v1643 = vsel %vm974, %v1133, %v1633
      %vm1644 = vcmask 130048
      %v1645 = vsel %vm1644, %v1643, %v1637
      %vm1646 = vcmask 195584
      %v1647 = vsel %vm1646, %v1645, %v1641
      %v1649 = vlaneseq
      %v1650 = vshrl.u32 %v1649, 7
      %v1651 = vsub.s32 0, %v1650
      %v1652 = vrot.slane %v891, %v1651
      %v1655 = vsel %vm846, %v1647, 0
      %1657 = vmatprep.subr.mxu0 0.0
      %1658 = vmatpush1.msra.mxu0 %v887
      %1659 = vmatprep.subr.mxu0 0.0
      %1660 = vmatpush1.msra.mxu0 %v888
      %1661 = vmatprep.subr.mxu0 0.0
      %1662 = vmatpush1.msra.mxu0 %v889
      %1663 = vmatprep.subr.mxu0 0.0
      %1664 = vmatpush1.msra.mxu0 %v890
      %1665 = vmatprep.subr.mxu0 0.0
      %1666 = vmatpush1.msra.mxu0 0.0
      %1667 = vmatprep.subr.mxu0 0.0
      %1668 = vmatpush1.msra.mxu0 0.0
      %1669 = vmatprep.subr.mxu0 0.0
      %1670 = vmatpush1.msra.mxu0 0.0
      %1671 = vmatprep.subr.mxu0 0.0
      %1672 = vmatpush1.msra.mxu0 0.0
      %1673 = vmatprep.subr.mxu0 0.0
      %1674 = vmatpush1.msra.mxu0 0.0
      %1675 = vmatprep.subr.mxu0 0.0
      %1676 = vmatpush1.msra.mxu0 0.0
      %1677 = vmatprep.subr.mxu0 0.0
      %1678 = vmatpush1.msra.mxu0 0.0
      %1679 = vmatprep.subr.mxu0 0.0
      %1680 = vmatpush1.msra.mxu0 0.0
      %1681 = vmatprep.subr.mxu0 0.0
      %1682 = vmatpush1.msra.mxu0 0.0
      %1683 = vmatprep.subr.mxu0 0.0
      %1684 = vmatpush1.msra.mxu0 0.0
      %1685 = vmatprep.subr.mxu0 0.0
      %1686 = vmatpush1.msra.mxu0 0.0
      %1687 = vmatprep.subr.mxu0 0.0
      %1688 = vmatpush1.msra.mxu0 0.0
      %1689 = vmatprep.subr.mxu0 0.0
      %1690 = vmatpush1.msra.mxu0 0.0
      %1691 = vmatprep.subr.mxu0 0.0
      %1692 = vmatpush1.msra.mxu0 0.0
      %1693 = vmatprep.subr.mxu0 0.0
      %1694 = vmatpush1.msra.mxu0 0.0
      %1695 = vmatprep.subr.mxu0 0.0
      %1696 = vmatpush1.msra.mxu0 0.0
      %1697 = vmatprep.subr.mxu0 0.0
      %1698 = vmatpush1.msra.mxu0 0.0
      %1699 = vmatprep.subr.mxu0 0.0
      %1700 = vmatpush1.msra.mxu0 0.0
      %1701 = vmatprep.subr.mxu0 0.0
      %1702 = vmatpush1.msra.mxu0 0.0
      %1703 = vmatprep.subr.mxu0 0.0
      %1704 = vmatpush1.msra.mxu0 0.0
      %1705 = vmatprep.subr.mxu0 0.0
      %1706 = vmatpush1.msra.mxu0 0.0
      %1707 = vmatprep.subr.mxu0 0.0
      %1708 = vmatpush1.msra.mxu0 0.0
      %1709 = vmatprep.subr.mxu0 0.0
      %1710 = vmatpush1.msra.mxu0 0.0
      %1711 = vmatprep.subr.mxu0 0.0
      %1712 = vmatpush1.msra.mxu0 0.0
      %1713 = vmatprep.subr.mxu0 0.0
      %1714 = vmatpush1.msra.mxu0 0.0
      %1715 = vmatprep.subr.mxu0 0.0
      %1716 = vmatpush1.msra.mxu0 0.0
      %1717 = vmatprep.subr.mxu0 0.0
      %1718 = vmatpush1.msra.mxu0 0.0
      %1719 = vmatprep.subr.mxu0 0.0
      %1720 = vmatpush1.msra.mxu0 0.0
      %1721 = vmatprep.mubr.f32.mxu0 0.0
      %1722 = vmatmul.mubr.f32.gmra.mrb[0].mxu0 %v1655
      %v1723 = vpop.f32.mrb[0].mxu0
      %v1724 = vadd.f32 %v1652, %v1723
      %v1725 = vpop.f32.mrb[0].mxu0
      %1726 = vdwg.mxu0
      %v1727 = vadd.f32 %v835, %v1724
      %v1728 = vsel %vm846, %v1727, 0.0
      %1729 = vadd.xlane.f32.xlu0 %v1728
      %v1730 = vpop.xlane.xlu0 %1729
      %v1731 = vmul.f32 %v1730, %v850
      %v1732 = vsub.f32 %v1727, %v1731
      %v1733 = vmul.f32 %v1732, %v1732
      %v1734 = vsel %vm846, %v1733, 0.0
      %1735 = vadd.xlane.f32.xlu0 %v1734
      %v1736 = vpop.xlane.xlu0 %1735
      %v1737 = vmul.f32 %v1736, 0.032258064
      %v1739 = vlaneseq
      %v1740 = vshrl.u32 %v1739, 7
      %v1741 = vsub.s32 0, %v1740
      %v1742 = vrot.slane %v842, %v1741
      %v1744 = vmul.f32 %v1742, %v1732
      %v1745 = vrsqrt.pop %v1737
      %v1746 = vmul.f32 %v1737, %v1745
      %vm1747 = vcmp.eq.f32.partialorder %v1737, inf
      %v1748 = vsel %vm1747, %v1737, %v1746
      %vm1749 = vcmp.eq.f32.partialorder %v1737, 0.0
      %v1750 = vand.u32 %v1737, 2147483648
      %v1751 = vsel %vm1749, %v1750, %v1748
      %v1752 = vadd.f32 %v1751, 1e-06
      %v1753 = vrcp.pop %v1752
      %v1754 = vmul.f32 %v1744, %v1753
      %v1756 = vlaneseq
      %v1757 = vshrl.u32 %v1756, 7
      %v1758 = vsub.s32 0, %v1757
      %v1759 = vrot.slane %v843, %v1758
      %v1761 = vadd.f32 %v1754, %v1759
      %v1762 = vld [vmem:[%s796] sm:$0xff]
      %v1763 = vld [vmem:[%s796 + $0x8] sm:$0xff]
      %v1764 = vld [vmem:[%s796 + $0x10] sm:$0xff]
      %v1765 = vld [vmem:[%s796 + $0x18] sm:$0xff]
      %v1766 = vld [vmem:[%s799] sm:$0x1]
      %v1767 = vld [vmem:[%s804] sm:$0xff]
      %v1768 = vld [vmem:[%s804 + $0x8] sm:$0xff]
      %v1769 = vld [vmem:[%s804 + $0x10] sm:$0xff]
      %v1770 = vld [vmem:[%s804 + $0x18] sm:$0xff]
      %v1771 = vld [vmem:[%s807] sm:$0x1]
      %v1773 = vlaneseq
      %v1774 = vshrl.u32 %v1773, 7
      %v1775 = vsub.s32 0, %v1774
      %v1776 = vrot.slane %v1766, %v1775
      %v1779 = vsel %vm846, %v1761, 0
      %1781 = vmatprep.subr.mxu0 0.0
      %1782 = vmatpush1.msra.mxu0 %v1762
      %1783 = vmatprep.subr.mxu0 0.0
      %1784 = vmatpush1.msra.mxu0 %v1763
      %1785 = vmatprep.subr.mxu0 0.0
      %1786 = vmatpush1.msra.mxu0 %v1764
      %1787 = vmatprep.subr.mxu0 0.0
      %1788 = vmatpush1.msra.mxu0 %v1765
      %1789 = vmatprep.subr.mxu0 0.0
      %1790 = vmatpush1.msra.mxu0 0.0
      %1791 = vmatprep.subr.mxu0 0.0
      %1792 = vmatpush1.msra.mxu0 0.0
      %1793 = vmatprep.subr.mxu0 0.0
      %1794 = vmatpush1.msra.mxu0 0.0
      %1795 = vmatprep.subr.mxu0 0.0
      %1796 = vmatpush1.msra.mxu0 0.0
      %1797 = vmatprep.subr.mxu0 0.0
      %1798 = vmatpush1.msra.mxu0 0.0
      %1799 = vmatprep.subr.mxu0 0.0
      %1800 = vmatpush1.msra.mxu0 0.0
      %1801 = vmatprep.subr.mxu0 0.0
      %1802 = vmatpush1.msra.mxu0 0.0
      %1803 = vmatprep.subr.mxu0 0.0
      %1804 = vmatpush1.msra.mxu0 0.0
      %1805 = vmatprep.subr.mxu0 0.0
      %1806 = vmatpush1.msra.mxu0 0.0
      %1807 = vmatprep.subr.mxu0 0.0
      %1808 = vmatpush1.msra.mxu0 0.0
      %1809 = vmatprep.subr.mxu0 0.0
      %1810 = vmatpush1.msra.mxu0 0.0
      %1811 = vmatprep.subr.mxu0 0.0
      %1812 = vmatpush1.msra.mxu0 0.0
      %1813 = vmatprep.subr.mxu0 0.0
      %1814 = vmatpush1.msra.mxu0 0.0
      %1815 = vmatprep.subr.mxu0 0.0
      %1816 = vmatpush1.msra.mxu0 0.0
      %1817 = vmatprep.subr.mxu0 0.0
      %1818 = vmatpush1.msra.mxu0 0.0
      %1819 = vmatprep.subr.mxu0 0.0
      %1820 = vmatpush1.msra.mxu0 0.0
      %1821 = vmatprep.subr.mxu0 0.0
      %1822 = vmatpush1.msra.mxu0 0.0
      %1823 = vmatprep.subr.mxu0 0.0
      %1824 = vmatpush1.msra.mxu0 0.0
      %1825 = vmatprep.subr.mxu0 0.0
      %1826 = vmatpush1.msra.mxu0 0.0
      %1827 = vmatprep.subr.mxu0 0.0
      %1828 = vmatpush1.msra.mxu0 0.0
      %1829 = vmatprep.subr.mxu0 0.0
      %1830 = vmatpush1.msra.mxu0 0.0
      %1831 = vmatprep.subr.mxu0 0.0
      %1832 = vmatpush1.msra.mxu0 0.0
      %1833 = vmatprep.subr.mxu0 0.0
      %1834 = vmatpush1.msra.mxu0 0.0
      %1835 = vmatprep.subr.mxu0 0.0
      %1836 = vmatpush1.msra.mxu0 0.0
      %1837 = vmatprep.subr.mxu0 0.0
      %1838 = vmatpush1.msra.mxu0 0.0
      %1839 = vmatprep.subr.mxu0 0.0
      %1840 = vmatpush1.msra.mxu0 0.0
      %1841 = vmatprep.subr.mxu0 0.0
      %1842 = vmatpush1.msra.mxu0 0.0
      %1843 = vmatprep.subr.mxu0 0.0
      %1844 = vmatpush1.msra.mxu0 0.0
      %1845 = vmatprep.mubr.f32.mxu0 0.0
      %1846 = vmatmul.mubr.f32.gmra.mrb[0].mxu0 %v1779
      %v1847 = vpop.f32.mrb[0].mxu0
      %v1848 = vadd.f32 %v1776, %v1847
      %v1849 = vpop.f32.mrb[0].mxu0
      %1850 = vdwg.mxu0
      %1855 = vrot.lane.b32.xlu0 %v1762, 96
      %v1856 = vpop.permute.xlu0 %1855
      %1857 = vrot.lane.b32.xlu0 %v1763, 96
      %v1858 = vpop.permute.xlu0 %1857
      %1859 = vrot.lane.b32.xlu0 %v1764, 96
      %v1860 = vpop.permute.xlu0 %1859
      %1861 = vrot.lane.b32.xlu0 %v1765, 96
      %v1862 = vpop.permute.xlu0 %1861
      %1867 = vrot.lane.b32.xlu0 %v1776, 96
      %v1868 = vpop.permute.xlu0 %1867
      %v1871 = vsel %vm846, %v836, 0
      %v1874 = vsel %vm846, %v837, 0
      %1876 = vmatprep.subr.mxu0 0.0
      %1877 = vmatpush1.msra.mxu0 %v1856
      %1878 = vmatprep.subr.mxu0 0.0
      %1879 = vmatpush1.msra.mxu0 %v1858
      %1880 = vmatprep.subr.mxu0 0.0
      %1881 = vmatpush1.msra.mxu0 %v1860
      %1882 = vmatprep.subr.mxu0 0.0
      %1883 = vmatpush1.msra.mxu0 %v1862
      %1884 = vmatprep.subr.mxu0 0.0
      %1885 = vmatpush1.msra.mxu0 0.0
      %1886 = vmatprep.subr.mxu0 0.0
      %1887 = vmatpush1.msra.mxu0 0.0
      %1888 = vmatprep.subr.mxu0 0.0
      %1889 = vmatpush1.msra.mxu0 0.0
      %1890 = vmatprep.subr.mxu0 0.0
      %1891 = vmatpush1.msra.mxu0 0.0
      %1892 = vmatprep.subr.mxu0 0.0
      %1893 = vmatpush1.msra.mxu0 0.0
      %1894 = vmatprep.subr.mxu0 0.0
      %1895 = vmatpush1.msra.mxu0 0.0
      %1896 = vmatprep.subr.mxu0 0.0
      %1897 = vmatpush1.msra.mxu0 0.0
      %1898 = vmatprep.subr.mxu0 0.0
      %1899 = vmatpush1.msra.mxu0 0.0
      %1900 = vmatprep.subr.mxu0 0.0
      %1901 = vmatpush1.msra.mxu0 0.0
      %1902 = vmatprep.subr.mxu0 0.0
      %1903 = vmatpush1.msra.mxu0 0.0
      %1904 = vmatprep.subr.mxu0 0.0
      %1905 = vmatpush1.msra.mxu0 0.0
      %1906 = vmatprep.subr.mxu0 0.0
      %1907 = vmatpush1.msra.mxu0 0.0
      %1908 = vmatprep.subr.mxu0 0.0
      %1909 = vmatpush1.msra.mxu0 0.0
      %1910 = vmatprep.subr.mxu0 0.0
      %1911 = vmatpush1.msra.mxu0 0.0
      %1912 = vmatprep.subr.mxu0 0.0
      %1913 = vmatpush1.msra.mxu0 0.0
      %1914 = vmatprep.subr.mxu0 0.0
      %1915 = vmatpush1.msra.mxu0 0.0
      %1916 = vmatprep.subr.mxu0 0.0
      %1917 = vmatpush1.msra.mxu0 0.0
      %1918 = vmatprep.subr.mxu0 0.0
      %1919 = vmatpush1.msra.mxu0 0.0
      %1920 = vmatprep.subr.mxu0 0.0
      %1921 = vmatpush1.msra.mxu0 0.0
      %1922 = vmatprep.subr.mxu0 0.0
      %1923 = vmatpush1.msra.mxu0 0.0
      %1924 = vmatprep.subr.mxu0 0.0
      %1925 = vmatpush1.msra.mxu0 0.0
      %1926 = vmatprep.subr.mxu0 0.0
      %1927 = vmatpush1.msra.mxu0 0.0
      %1928 = vmatprep.subr.mxu0 0.0
      %1929 = vmatpush1.msra.mxu0 0.0
      %1930 = vmatprep.subr.mxu0 0.0
      %1931 = vmatpush1.msra.mxu0 0.0
      %1932 = vmatprep.subr.mxu0 0.0
      %1933 = vmatpush1.msra.mxu0 0.0
      %1934 = vmatprep.subr.mxu0 0.0
      %1935 = vmatpush1.msra.mxu0 0.0
      %1936 = vmatprep.subr.mxu0 0.0
      %1937 = vmatpush1.msra.mxu0 0.0
      %1938 = vmatprep.subr.mxu0 0.0
      %1939 = vmatpush1.msra.mxu0 0.0
      %1940 = vmatprep.mubr.f32.mxu0 0.0
      %1941 = vmatmul.mubr.f32.gmra.mrb[0].mxu0 %v1871
      %v1942 = vpop.f32.mrb[0].mxu0
      %v1943 = vadd.f32 %v1868, %v1942
      %v1944 = vpop.f32.mrb[0].mxu0
      %1945 = vmatprep.mubr.f32.mxu0 0.0
      %1946 = vmatmul.mubr.f32.gmra.mrb[0].mxu0 %v1874
      %v1947 = vpop.f32.mrb[0].mxu0
      %v1948 = vadd.f32 %v1868, %v1947
      %v1949 = vpop.f32.mrb[0].mxu0
      %1950 = vdwg.mxu0
      %v1952 = vlaneseq
      %v1953 = vshrl.u32 %v1952, 7
      %v1954 = vsub.s32 0, %v1953
      %v1955 = vrot.slane %v838, %v1954
      %v1958 = vsel %vm974, %v1848, 0
      %v1961 = vsel %vm974, %v1943, 0
      %v1964 = vsel %vm974, %v1948, 0
      %1966 = vmatprep.subr.mxu0 0.0
      %1967 = vmatpush1.xpose.msra.mxu0 %v1961
      %1968 = vmatprep.subr.mxu0 0.0
      %1969 = vmatpush1.xpose.msra.mxu0 %v1964
      %1970 = vmatprep.subr.mxu0 0.0
      %1971 = vmatpush1.xpose.msra.mxu0 0.0
      %1972 = vmatprep.subr.mxu0 0.0
      %1973 = vmatpush1.xpose.msra.mxu0 0.0
      %1974 = vmatprep.subr.mxu0 0.0
      %1975 = vmatpush1.xpose.msra.mxu0 0.0
      %1976 = vmatprep.subr.mxu0 0.0
      %1977 = vmatpush1.xpose.msra.mxu0 0.0
      %1978 = vmatprep.subr.mxu0 0.0
      %1979 = vmatpush1.xpose.msra.mxu0 0.0
      %1980 = vmatprep.subr.mxu0 0.0
      %1981 = vmatpush1.xpose.msra.mxu0 0.0
      %1982 = vmatprep.subr.mxu0 0.0
      %1983 = vmatpush1.xpose.msra.mxu0 0.0
      %1984 = vmatprep.subr.mxu0 0.0
      %1985 = vmatpush1.xpose.msra.mxu0 0.0
      %1986 = vmatprep.subr.mxu0 0.0
      %1987 = vmatpush1.xpose.msra.mxu0 0.0
      %1988 = vmatprep.subr.mxu0 0.0
      %1989 = vmatpush1.xpose.msra.mxu0 0.0
      %1990 = vmatprep.subr.mxu0 0.0
      %1991 = vmatpush1.xpose.msra.mxu0 0.0
      %1992 = vmatprep.subr.mxu0 0.0
      %1993 = vmatpush1.xpose.msra.mxu0 0.0
      %1994 = vmatprep.subr.mxu0 0.0
      %1995 = vmatpush1.xpose.msra.mxu0 0.0
      %1996 = vmatprep.subr.mxu0 0.0
      %1997 = vmatpush1.xpose.msra.mxu0 0.0
      %1998 = vmatprep.subr.mxu0 0.0
      %1999 = vmatpush1.xpose.msra.mxu0 0.0
      %2000 = vmatprep.subr.mxu0 0.0
      %2001 = vmatpush1.xpose.msra.mxu0 0.0
      %2002 = vmatprep.subr.mxu0 0.0
      %2003 = vmatpush1.xpose.msra.mxu0 0.0
      %2004 = vmatprep.subr.mxu0 0.0
      %2005 = vmatpush1.xpose.msra.mxu0 0.0
      %2006 = vmatprep.subr.mxu0 0.0
      %2007 = vmatpush1.xpose.msra.mxu0 0.0
      %2008 = vmatprep.subr.mxu0 0.0
      %2009 = vmatpush1.xpose.msra.mxu0 0.0
      %2010 = vmatprep.subr.mxu0 0.0
      %2011 = vmatpush1.xpose.msra.mxu0 0.0
      %2012 = vmatprep.subr.mxu0 0.0
      %2013 = vmatpush1.xpose.msra.mxu0 0.0
      %2014 = vmatprep.subr.mxu0 0.0
      %2015 = vmatpush1.xpose.msra.mxu0 0.0
      %2016 = vmatprep.subr.mxu0 0.0
      %2017 = vmatpush1.xpose.msra.mxu0 0.0
      %2018 = vmatprep.subr.mxu0 0.0
      %2019 = vmatpush1.xpose.msra.mxu0 0.0
      %2020 = vmatprep.subr.mxu0 0.0
      %2021 = vmatpush1.xpose.msra.mxu0 0.0
      %2022 = vmatprep.subr.mxu0 0.0
      %2023 = vmatpush1.xpose.msra.mxu0 0.0
      %2024 = vmatprep.subr.mxu0 0.0
      %2025 = vmatpush1.xpose.msra.mxu0 0.0
      %2026 = vmatprep.subr.mxu0 0.0
      %2027 = vmatpush1.xpose.msra.mxu0 0.0
      %2028 = vmatprep.subr.mxu0 0.0
      %2029 = vmatpush1.xpose.msra.mxu0 0.0
      %2030 = vmatprep.mubr.f32.mxu0 0.0
      %2031 = vmatmul.mubr.f32.gmra.mrb[0].mxu0 %v1958
      %v2032 = vpop.f32.mrb[0].mxu0
      %v2033 = vadd.f32 %v1955, %v2032
      %v2034 = vpop.f32.mrb[0].mxu0
      %2035 = vdwg.mxu0
      %vm2036 = vcmask 89088
      %v2037 = vsel %vm2036, %v2033, -inf
      %2038 = vmax.xlane.f32.xlu0 %v2037
      %v2039 = vpop.xlane.xlu0 %2038
      %v2040 = vsub.f32 %v2033, %v2039
      %v2041 = vmul.f32 %v2040, 1.442695
      %v2042 = vpow.pop %v2041
      %v2043 = vsel %vm2036, %v2042, 0.0
      %2044 = vadd.xlane.f32.xlu0 %v2043
      %v2045 = vpop.xlane.xlu0 %2044
      %v2046 = vrcp.pop %v2045
      %v2047 = vmul.f32 %v2042, %v2046
      %2048 = vrot.lane.b32.xlu0 %v1943, 96
      %v2049 = vpop.permute.xlu0 %2048
      %2050 = vrot.lane.b32.xlu0 %v1948, 96
      %v2051 = vpop.permute.xlu0 %2050
      %v2054 = vsel %vm2036, %v2047, 0
      %vm2056 = vcmask 1042432
      %v2057 = vsel %vm2056, %v2051, 0
      %2059 = vmatprep.subr.mxu0 0.0
      %2060 = vmatpush1.msra.mxu0 %v2049
      %2061 = vmatprep.subr.mxu0 0.0
      %2062 = vmatpush1.msra.mxu0 %v2057
      %2063 = vmatprep.subr.mxu0 0.0
      %2064 = vmatpush1.msra.mxu0 0.0
      %2065 = vmatprep.subr.mxu0 0.0
      %2066 = vmatpush1.msra.mxu0 0.0
      %2067 = vmatprep.subr.mxu0 0.0
      %2068 = vmatpush1.msra.mxu0 0.0
      %2069 = vmatprep.subr.mxu0 0.0
      %2070 = vmatpush1.msra.mxu0 0.0
      %2071 = vmatprep.subr.mxu0 0.0
      %2072 = vmatpush1.msra.mxu0 0.0
      %2073 = vmatprep.subr.mxu0 0.0
      %2074 = vmatpush1.msra.mxu0 0.0
      %2075 = vmatprep.subr.mxu0 0.0
      %2076 = vmatpush1.msra.mxu0 0.0
      %2077 = vmatprep.subr.mxu0 0.0
      %2078 = vmatpush1.msra.mxu0 0.0
      %2079 = vmatprep.subr.mxu0 0.0
      %2080 = vmatpush1.msra.mxu0 0.0
      %2081 = vmatprep.subr.mxu0 0.0
      %2082 = vmatpush1.msra.mxu0 0.0
      %2083 = vmatprep.subr.mxu0 0.0
      %2084 = vmatpush1.msra.mxu0 0.0
      %2085 = vmatprep.subr.mxu0 0.0
      %2086 = vmatpush1.msra.mxu0 0.0
      %2087 = vmatprep.subr.mxu0 0.0
      %2088 = vmatpush1.msra.mxu0 0.0
      %2089 = vmatprep.subr.mxu0 0.0
      %2090 = vmatpush1.msra.mxu0 0.0
      %2091 = vmatprep.subr.mxu0 0.0
      %2092 = vmatpush1.msra.mxu0 0.0
      %2093 = vmatprep.subr.mxu0 0.0
      %2094 = vmatpush1.msra.mxu0 0.0
      %2095 = vmatprep.subr.mxu0 0.0
      %2096 = vmatpush1.msra.mxu0 0.0
      %2097 = vmatprep.subr.mxu0 0.0
      %2098 = vmatpush1.msra.mxu0 0.0
      %2099 = vmatprep.subr.mxu0 0.0
      %2100 = vmatpush1.msra.mxu0 0.0
      %2101 = vmatprep.subr.mxu0 0.0
      %2102 = vmatpush1.msra.mxu0 0.0
      %2103 = vmatprep.subr.mxu0 0.0
      %2104 = vmatpush1.msra.mxu0 0.0
      %2105 = vmatprep.subr.mxu0 0.0
      %2106 = vmatpush1.msra.mxu0 0.0
      %2107 = vmatprep.subr.mxu0 0.0
      %2108 = vmatpush1.msra.mxu0 0.0
      %2109 = vmatprep.subr.mxu0 0.0
      %2110 = vmatpush1.msra.mxu0 0.0
      %2111 = vmatprep.subr.mxu0 0.0
      %2112 = vmatpush1.msra.mxu0 0.0
      %2113 = vmatprep.subr.mxu0 0.0
      %2114 = vmatpush1.msra.mxu0 0.0
      %2115 = vmatprep.subr.mxu0 0.0
      %2116 = vmatpush1.msra.mxu0 0.0
      %2117 = vmatprep.subr.mxu0 0.0
      %2118 = vmatpush1.msra.mxu0 0.0
      %2119 = vmatprep.subr.mxu0 0.0
      %2120 = vmatpush1.msra.mxu0 0.0
      %2121 = vmatprep.subr.mxu0 0.0
      %2122 = vmatpush1.msra.mxu0 0.0
      %2123 = vmatprep.mubr.f32.mxu0 0.0
      %2124 = vmatmul.mubr.f32.gmra.mrb[0].mxu0 %v2054
      %v2125 = vpop.f32.mrb[0].mxu0
      %v2126 = vadd.f32 0.0, %v2125
      %v2127 = vpop.f32.mrb[0].mxu0
      %2128 = vdwg.mxu0
      %2129 = vrot.lane.b32.xlu0 %v1848, 120
      %v2130 = vpop.permute.xlu0 %2129
      %2131 = vrot.lane.b32.xlu0 %v1943, 120
      %v2132 = vpop.permute.xlu0 %2131
      %2133 = vrot.lane.b32.xlu0 %v1948, 120
      %v2134 = vpop.permute.xlu0 %2133
      %v2135 = vsel %vm974, %v2130, 0
      %v2137 = vsel %vm974, %v2132, 0
      %v2139 = vsel %vm974, %v2134, 0
      %2141 = vmatprep.subr.mxu0 0.0
      %2142 = vmatpush1.xpose.msra.mxu0 %v2137
      %2143 = vmatprep.subr.mxu0 0.0
      %2144 = vmatpush1.xpose.msra.mxu0 %v2139
      %2145 = vmatprep.subr.mxu0 0.0
      %2146 = vmatpush1.xpose.msra.mxu0 0.0
      %2147 = vmatprep.subr.mxu0 0.0
      %2148 = vmatpush1.xpose.msra.mxu0 0.0
      %2149 = vmatprep.subr.mxu0 0.0
      %2150 = vmatpush1.xpose.msra.mxu0 0.0
      %2151 = vmatprep.subr.mxu0 0.0
      %2152 = vmatpush1.xpose.msra.mxu0 0.0
      %2153 = vmatprep.subr.mxu0 0.0
      %2154 = vmatpush1.xpose.msra.mxu0 0.0
      %2155 = vmatprep.subr.mxu0 0.0
      %2156 = vmatpush1.xpose.msra.mxu0 0.0
      %2157 = vmatprep.subr.mxu0 0.0
      %2158 = vmatpush1.xpose.msra.mxu0 0.0
      %2159 = vmatprep.subr.mxu0 0.0
      %2160 = vmatpush1.xpose.msra.mxu0 0.0
      %2161 = vmatprep.subr.mxu0 0.0
      %2162 = vmatpush1.xpose.msra.mxu0 0.0
      %2163 = vmatprep.subr.mxu0 0.0
      %2164 = vmatpush1.xpose.msra.mxu0 0.0
      %2165 = vmatprep.subr.mxu0 0.0
      %2166 = vmatpush1.xpose.msra.mxu0 0.0
      %2167 = vmatprep.subr.mxu0 0.0
      %2168 = vmatpush1.xpose.msra.mxu0 0.0
      %2169 = vmatprep.subr.mxu0 0.0
      %2170 = vmatpush1.xpose.msra.mxu0 0.0
      %2171 = vmatprep.subr.mxu0 0.0
      %2172 = vmatpush1.xpose.msra.mxu0 0.0
      %2173 = vmatprep.subr.mxu0 0.0
      %2174 = vmatpush1.xpose.msra.mxu0 0.0
      %2175 = vmatprep.subr.mxu0 0.0
      %2176 = vmatpush1.xpose.msra.mxu0 0.0
      %2177 = vmatprep.subr.mxu0 0.0
      %2178 = vmatpush1.xpose.msra.mxu0 0.0
      %2179 = vmatprep.subr.mxu0 0.0
      %2180 = vmatpush1.xpose.msra.mxu0 0.0
      %2181 = vmatprep.subr.mxu0 0.0
      %2182 = vmatpush1.xpose.msra.mxu0 0.0
      %2183 = vmatprep.subr.mxu0 0.0
      %2184 = vmatpush1.xpose.msra.mxu0 0.0
      %2185 = vmatprep.subr.mxu0 0.0
      %2186 = vmatpush1.xpose.msra.mxu0 0.0
      %2187 = vmatprep.subr.mxu0 0.0
      %2188 = vmatpush1.xpose.msra.mxu0 0.0
      %2189 = vmatprep.subr.mxu0 0.0
      %2190 = vmatpush1.xpose.msra.mxu0 0.0
      %2191 = vmatprep.subr.mxu0 0.0
      %2192 = vmatpush1.xpose.msra.mxu0 0.0
      %2193 = vmatprep.subr.mxu0 0.0
      %2194 = vmatpush1.xpose.msra.mxu0 0.0
      %2195 = vmatprep.subr.mxu0 0.0
      %2196 = vmatpush1.xpose.msra.mxu0 0.0
      %2197 = vmatprep.subr.mxu0 0.0
      %2198 = vmatpush1.xpose.msra.mxu0 0.0
      %2199 = vmatprep.subr.mxu0 0.0
      %2200 = vmatpush1.xpose.msra.mxu0 0.0
      %2201 = vmatprep.subr.mxu0 0.0
      %2202 = vmatpush1.xpose.msra.mxu0 0.0
      %2203 = vmatprep.subr.mxu0 0.0
      %2204 = vmatpush1.xpose.msra.mxu0 0.0
      %2205 = vmatprep.mubr.f32.mxu0 0.0
      %2206 = vmatmul.mubr.f32.gmra.mrb[0].mxu0 %v2135
      %v2207 = vpop.f32.mrb[0].mxu0
      %v2208 = vadd.f32 %v1955, %v2207
      %v2209 = vpop.f32.mrb[0].mxu0
      %2210 = vdwg.mxu0
      %v2211 = vsel %vm2036, %v2208, -inf
      %2212 = vmax.xlane.f32.xlu0 %v2211
      %v2213 = vpop.xlane.xlu0 %2212
      %v2214 = vsub.f32 %v2208, %v2213
      %v2215 = vmul.f32 %v2214, 1.442695
      %v2216 = vpow.pop %v2215
      %v2217 = vsel %vm2036, %v2216, 0.0
      %2218 = vadd.xlane.f32.xlu0 %v2217
      %v2219 = vpop.xlane.xlu0 %2218
      %v2220 = vrcp.pop %v2219
      %v2221 = vmul.f32 %v2216, %v2220
      %2222 = vrot.lane.b32.xlu0 %v1943, 88
      %v2223 = vpop.permute.xlu0 %2222
      %2224 = vrot.lane.b32.xlu0 %v1948, 88
      %v2225 = vpop.permute.xlu0 %2224
      %v2228 = vsel %vm2036, %v2221, 0
      %v2230 = vsel %vm2056, %v2225, 0
      %2232 = vmatprep.subr.mxu0 0.0
      %2233 = vmatpush1.msra.mxu0 %v2223
      %2234 = vmatprep.subr.mxu0 0.0
      %2235 = vmatpush1.msra.mxu0 %v2230
      %2236 = vmatprep.subr.mxu0 0.0
      %2237 = vmatpush1.msra.mxu0 0.0
      %2238 = vmatprep.subr.mxu0 0.0
      %2239 = vmatpush1.msra.mxu0 0.0
      %2240 = vmatprep.subr.mxu0 0.0
      %2241 = vmatpush1.msra.mxu0 0.0
      %2242 = vmatprep.subr.mxu0 0.0
      %2243 = vmatpush1.msra.mxu0 0.0
      %2244 = vmatprep.subr.mxu0 0.0
      %2245 = vmatpush1.msra.mxu0 0.0
      %2246 = vmatprep.subr.mxu0 0.0
      %2247 = vmatpush1.msra.mxu0 0.0
      %2248 = vmatprep.subr.mxu0 0.0
      %2249 = vmatpush1.msra.mxu0 0.0
      %2250 = vmatprep.subr.mxu0 0.0
      %2251 = vmatpush1.msra.mxu0 0.0
      %2252 = vmatprep.subr.mxu0 0.0
      %2253 = vmatpush1.msra.mxu0 0.0
      %2254 = vmatprep.subr.mxu0 0.0
      %2255 = vmatpush1.msra.mxu0 0.0
      %2256 = vmatprep.subr.mxu0 0.0
      %2257 = vmatpush1.msra.mxu0 0.0
      %2258 = vmatprep.subr.mxu0 0.0
      %2259 = vmatpush1.msra.mxu0 0.0
      %2260 = vmatprep.subr.mxu0 0.0
      %2261 = vmatpush1.msra.mxu0 0.0
      %2262 = vmatprep.subr.mxu0 0.0
      %2263 = vmatpush1.msra.mxu0 0.0
      %2264 = vmatprep.subr.mxu0 0.0
      %2265 = vmatpush1.msra.mxu0 0.0
      %2266 = vmatprep.subr.mxu0 0.0
      %2267 = vmatpush1.msra.mxu0 0.0
      %2268 = vmatprep.subr.mxu0 0.0
      %2269 = vmatpush1.msra.mxu0 0.0
      %2270 = vmatprep.subr.mxu0 0.0
      %2271 = vmatpush1.msra.mxu0 0.0
      %2272 = vmatprep.subr.mxu0 0.0
      %2273 = vmatpush1.msra.mxu0 0.0
      %2274 = vmatprep.subr.mxu0 0.0
      %2275 = vmatpush1.msra.mxu0 0.0
      %2276 = vmatprep.subr.mxu0 0.0
      %2277 = vmatpush1.msra.mxu0 0.0
      %2278 = vmatprep.subr.mxu0 0.0
      %2279 = vmatpush1.msra.mxu0 0.0
      %2280 = vmatprep.subr.mxu0 0.0
      %2281 = vmatpush1.msra.mxu0 0.0
      %2282 = vmatprep.subr.mxu0 0.0
      %2283 = vmatpush1.msra.mxu0 0.0
      %2284 = vmatprep.subr.mxu0 0.0
      %2285 = vmatpush1.msra.mxu0 0.0
      %2286 = vmatprep.subr.mxu0 0.0
      %2287 = vmatpush1.msra.mxu0 0.0
      %2288 = vmatprep.subr.mxu0 0.0
      %2289 = vmatpush1.msra.mxu0 0.0
      %2290 = vmatprep.subr.mxu0 0.0
      %2291 = vmatpush1.msra.mxu0 0.0
      %2292 = vmatprep.subr.mxu0 0.0
      %2293 = vmatpush1.msra.mxu0 0.0
      %2294 = vmatprep.subr.mxu0 0.0
      %2295 = vmatpush1.msra.mxu0 0.0
      %2296 = vmatprep.mubr.f32.mxu0 0.0
      %2297 = vmatmul.mubr.f32.gmra.mrb[0].mxu0 %v2228
      %v2298 = vpop.f32.mrb[0].mxu0
      %v2299 = vadd.f32 0.0, %v2298
      %v2300 = vpop.f32.mrb[0].mxu0
      %2301 = vdwg.mxu0
      %2302 = vrot.lane.b32.xlu0 %v1848, 112
      %v2303 = vpop.permute.xlu0 %2302
      %2304 = vrot.lane.b32.xlu0 %v1943, 112
      %v2305 = vpop.permute.xlu0 %2304
      %2306 = vrot.lane.b32.xlu0 %v1948, 112
      %v2307 = vpop.permute.xlu0 %2306
      %v2308 = vsel %vm974, %v2303, 0
      %v2310 = vsel %vm974, %v2305, 0
      %v2312 = vsel %vm974, %v2307, 0
      %2314 = vmatprep.subr.mxu0 0.0
      %2315 = vmatpush1.xpose.msra.mxu0 %v2310
      %2316 = vmatprep.subr.mxu0 0.0
      %2317 = vmatpush1.xpose.msra.mxu0 %v2312
      %2318 = vmatprep.subr.mxu0 0.0
      %2319 = vmatpush1.xpose.msra.mxu0 0.0
      %2320 = vmatprep.subr.mxu0 0.0
      %2321 = vmatpush1.xpose.msra.mxu0 0.0
      %2322 = vmatprep.subr.mxu0 0.0
      %2323 = vmatpush1.xpose.msra.mxu0 0.0
      %2324 = vmatprep.subr.mxu0 0.0
      %2325 = vmatpush1.xpose.msra.mxu0 0.0
      %2326 = vmatprep.subr.mxu0 0.0
      %2327 = vmatpush1.xpose.msra.mxu0 0.0
      %2328 = vmatprep.subr.mxu0 0.0
      %2329 = vmatpush1.xpose.msra.mxu0 0.0
      %2330 = vmatprep.subr.mxu0 0.0
      %2331 = vmatpush1.xpose.msra.mxu0 0.0
      %2332 = vmatprep.subr.mxu0 0.0
      %2333 = vmatpush1.xpose.msra.mxu0 0.0
      %2334 = vmatprep.subr.mxu0 0.0
      %2335 = vmatpush1.xpose.msra.mxu0 0.0
      %2336 = vmatprep.subr.mxu0 0.0
      %2337 = vmatpush1.xpose.msra.mxu0 0.0
      %2338 = vmatprep.subr.mxu0 0.0
      %2339 = vmatpush1.xpose.msra.mxu0 0.0
      %2340 = vmatprep.subr.mxu0 0.0
      %2341 = vmatpush1.xpose.msra.mxu0 0.0
      %2342 = vmatprep.subr.mxu0 0.0
      %2343 = vmatpush1.xpose.msra.mxu0 0.0
      %2344 = vmatprep.subr.mxu0 0.0
      %2345 = vmatpush1.xpose.msra.mxu0 0.0
      %2346 = vmatprep.subr.mxu0 0.0
      %2347 = vmatpush1.xpose.msra.mxu0 0.0
      %2348 = vmatprep.subr.mxu0 0.0
      %2349 = vmatpush1.xpose.msra.mxu0 0.0
      %2350 = vmatprep.subr.mxu0 0.0
      %2351 = vmatpush1.xpose.msra.mxu0 0.0
      %2352 = vmatprep.subr.mxu0 0.0
      %2353 = vmatpush1.xpose.msra.mxu0 0.0
      %2354 = vmatprep.subr.mxu0 0.0
      %2355 = vmatpush1.xpose.msra.mxu0 0.0
      %2356 = vmatprep.subr.mxu0 0.0
      %2357 = vmatpush1.xpose.msra.mxu0 0.0
      %2358 = vmatprep.subr.mxu0 0.0
      %2359 = vmatpush1.xpose.msra.mxu0 0.0
      %2360 = vmatprep.subr.mxu0 0.0
      %2361 = vmatpush1.xpose.msra.mxu0 0.0
      %2362 = vmatprep.subr.mxu0 0.0
      %2363 = vmatpush1.xpose.msra.mxu0 0.0
      %2364 = vmatprep.subr.mxu0 0.0
      %2365 = vmatpush1.xpose.msra.mxu0 0.0
      %2366 = vmatprep.subr.mxu0 0.0
      %2367 = vmatpush1.xpose.msra.mxu0 0.0
      %2368 = vmatprep.subr.mxu0 0.0
      %2369 = vmatpush1.xpose.msra.mxu0 0.0
      %2370 = vmatprep.subr.mxu0 0.0
      %2371 = vmatpush1.xpose.msra.mxu0 0.0
      %2372 = vmatprep.subr.mxu0 0.0
      %2373 = vmatpush1.xpose.msra.mxu0 0.0
      %2374 = vmatprep.subr.mxu0 0.0
      %2375 = vmatpush1.xpose.msra.mxu0 0.0
      %2376 = vmatprep.subr.mxu0 0.0
      %2377 = vmatpush1.xpose.msra.mxu0 0.0
      %2378 = vmatprep.mubr.f32.mxu0 0.0
      %2379 = vmatmul.mubr.f32.gmra.mrb[0].mxu0 %v2308
      %v2380 = vpop.f32.mrb[0].mxu0
      %v2381 = vadd.f32 %v1955, %v2380
      %v2382 = vpop.f32.mrb[0].mxu0
      %2383 = vdwg.mxu0
      %v2384 = vsel %vm2036, %v2381, -inf
      %2385 = vmax.xlane.f32.xlu0 %v2384
      %v2386 = vpop.xlane.xlu0 %2385
      %v2387 = vsub.f32 %v2381, %v2386
      %v2388 = vmul.f32 %v2387, 1.442695
      %v2389 = vpow.pop %v2388
      %v2390 = vsel %vm2036, %v2389, 0.0
      %2391 = vadd.xlane.f32.xlu0 %v2390
      %v2392 = vpop.xlane.xlu0 %2391
      %v2393 = vrcp.pop %v2392
      %v2394 = vmul.f32 %v2389, %v2393
      %2395 = vrot.lane.b32.xlu0 %v1943, 80
      %v2396 = vpop.permute.xlu0 %2395
      %2397 = vrot.lane.b32.xlu0 %v1948, 80
      %v2398 = vpop.permute.xlu0 %2397
      %v2401 = vsel %vm2036, %v2394, 0
      %v2403 = vsel %vm2056, %v2398, 0
      %2405 = vmatprep.subr.mxu0 0.0
      %2406 = vmatpush1.msra.mxu0 %v2396
      %2407 = vmatprep.subr.mxu0 0.0
      %2408 = vmatpush1.msra.mxu0 %v2403
      %2409 = vmatprep.subr.mxu0 0.0
      %2410 = vmatpush1.msra.mxu0 0.0
      %2411 = vmatprep.subr.mxu0 0.0
      %2412 = vmatpush1.msra.mxu0 0.0
      %2413 = vmatprep.subr.mxu0 0.0
      %2414 = vmatpush1.msra.mxu0 0.0
      %2415 = vmatprep.subr.mxu0 0.0
      %2416 = vmatpush1.msra.mxu0 0.0
      %2417 = vmatprep.subr.mxu0 0.0
      %2418 = vmatpush1.msra.mxu0 0.0
      %2419 = vmatprep.subr.mxu0 0.0
      %2420 = vmatpush1.msra.mxu0 0.0
      %2421 = vmatprep.subr.mxu0 0.0
      %2422 = vmatpush1.msra.mxu0 0.0
      %2423 = vmatprep.subr.mxu0 0.0
      %2424 = vmatpush1.msra.mxu0 0.0
      %2425 = vmatprep.subr.mxu0 0.0
      %2426 = vmatpush1.msra.mxu0 0.0
      %2427 = vmatprep.subr.mxu0 0.0
      %2428 = vmatpush1.msra.mxu0 0.0
      %2429 = vmatprep.subr.mxu0 0.0
      %2430 = vmatpush1.msra.mxu0 0.0
      %2431 = vmatprep.subr.mxu0 0.0
      %2432 = vmatpush1.msra.mxu0 0.0
      %2433 = vmatprep.subr.mxu0 0.0
      %2434 = vmatpush1.msra.mxu0 0.0
      %2435 = vmatprep.subr.mxu0 0.0
      %2436 = vmatpush1.msra.mxu0 0.0
      %2437 = vmatprep.subr.mxu0 0.0
      %2438 = vmatpush1.msra.mxu0 0.0
      %2439 = vmatprep.subr.mxu0 0.0
      %2440 = vmatpush1.msra.mxu0 0.0
      %2441 = vmatprep.subr.mxu0 0.0
      %2442 = vmatpush1.msra.mxu0 0.0
      %2443 = vmatprep.subr.mxu0 0.0
      %2444 = vmatpush1.msra.mxu0 0.0
      %2445 = vmatprep.subr.mxu0 0.0
      %2446 = vmatpush1.msra.mxu0 0.0
      %2447 = vmatprep.subr.mxu0 0.0
      %2448 = vmatpush1.msra.mxu0 0.0
      %2449 = vmatprep.subr.mxu0 0.0
      %2450 = vmatpush1.msra.mxu0 0.0
      %2451 = vmatprep.subr.mxu0 0.0
      %2452 = vmatpush1.msra.mxu0 0.0
      %2453 = vmatprep.subr.mxu0 0.0
      %2454 = vmatpush1.msra.mxu0 0.0
      %2455 = vmatprep.subr.mxu0 0.0
      %2456 = vmatpush1.msra.mxu0 0.0
      %2457 = vmatprep.subr.mxu0 0.0
      %2458 = vmatpush1.msra.mxu0 0.0
      %2459 = vmatprep.subr.mxu0 0.0
      %2460 = vmatpush1.msra.mxu0 0.0
      %2461 = vmatprep.subr.mxu0 0.0
      %2462 = vmatpush1.msra.mxu0 0.0
      %2463 = vmatprep.subr.mxu0 0.0
      %2464 = vmatpush1.msra.mxu0 0.0
      %2465 = vmatprep.subr.mxu0 0.0
      %2466 = vmatpush1.msra.mxu0 0.0
      %2467 = vmatprep.subr.mxu0 0.0
      %2468 = vmatpush1.msra.mxu0 0.0
      %2469 = vmatprep.mubr.f32.mxu0 0.0
      %2470 = vmatmul.mubr.f32.gmra.mrb[0].mxu0 %v2401
      %v2471 = vpop.f32.mrb[0].mxu0
      %v2472 = vadd.f32 0.0, %v2471
      %v2473 = vpop.f32.mrb[0].mxu0
      %2474 = vdwg.mxu0
      %2475 = vrot.lane.b32.xlu0 %v1848, 104
      %v2476 = vpop.permute.xlu0 %2475
      %2477 = vrot.lane.b32.xlu0 %v1943, 104
      %v2478 = vpop.permute.xlu0 %2477
      %2479 = vrot.lane.b32.xlu0 %v1948, 104
      %v2480 = vpop.permute.xlu0 %2479
      %v2481 = vsel %vm974, %v2476, 0
      %v2483 = vsel %vm974, %v2478, 0
      %v2485 = vsel %vm974, %v2480, 0
      %2487 = vmatprep.subr.mxu0 0.0
      %2488 = vmatpush1.xpose.msra.mxu0 %v2483
      %2489 = vmatprep.subr.mxu0 0.0
      %2490 = vmatpush1.xpose.msra.mxu0 %v2485
      %2491 = vmatprep.subr.mxu0 0.0
      %2492 = vmatpush1.xpose.msra.mxu0 0.0
      %2493 = vmatprep.subr.mxu0 0.0
      %2494 = vmatpush1.xpose.msra.mxu0 0.0
      %2495 = vmatprep.subr.mxu0 0.0
      %2496 = vmatpush1.xpose.msra.mxu0 0.0
      %2497 = vmatprep.subr.mxu0 0.0
      %2498 = vmatpush1.xpose.msra.mxu0 0.0
      %2499 = vmatprep.subr.mxu0 0.0
      %2500 = vmatpush1.xpose.msra.mxu0 0.0
      %2501 = vmatprep.subr.mxu0 0.0
      %2502 = vmatpush1.xpose.msra.mxu0 0.0
      %2503 = vmatprep.subr.mxu0 0.0
      %2504 = vmatpush1.xpose.msra.mxu0 0.0
      %2505 = vmatprep.subr.mxu0 0.0
      %2506 = vmatpush1.xpose.msra.mxu0 0.0
      %2507 = vmatprep.subr.mxu0 0.0
      %2508 = vmatpush1.xpose.msra.mxu0 0.0
      %2509 = vmatprep.subr.mxu0 0.0
      %2510 = vmatpush1.xpose.msra.mxu0 0.0
      %2511 = vmatprep.subr.mxu0 0.0
      %2512 = vmatpush1.xpose.msra.mxu0 0.0
      %2513 = vmatprep.subr.mxu0 0.0
      %2514 = vmatpush1.xpose.msra.mxu0 0.0
      %2515 = vmatprep.subr.mxu0 0.0
      %2516 = vmatpush1.xpose.msra.mxu0 0.0
      %2517 = vmatprep.subr.mxu0 0.0
      %2518 = vmatpush1.xpose.msra.mxu0 0.0
      %2519 = vmatprep.subr.mxu0 0.0
      %2520 = vmatpush1.xpose.msra.mxu0 0.0
      %2521 = vmatprep.subr.mxu0 0.0
      %2522 = vmatpush1.xpose.msra.mxu0 0.0
      %2523 = vmatprep.subr.mxu0 0.0
      %2524 = vmatpush1.xpose.msra.mxu0 0.0
      %2525 = vmatprep.subr.mxu0 0.0
      %2526 = vmatpush1.xpose.msra.mxu0 0.0
      %2527 = vmatprep.subr.mxu0 0.0
      %2528 = vmatpush1.xpose.msra.mxu0 0.0
      %2529 = vmatprep.subr.mxu0 0.0
      %2530 = vmatpush1.xpose.msra.mxu0 0.0
      %2531 = vmatprep.subr.mxu0 0.0
      %2532 = vmatpush1.xpose.msra.mxu0 0.0
      %2533 = vmatprep.subr.mxu0 0.0
      %2534 = vmatpush1.xpose.msra.mxu0 0.0
      %2535 = vmatprep.subr.mxu0 0.0
      %2536 = vmatpush1.xpose.msra.mxu0 0.0
      %2537 = vmatprep.subr.mxu0 0.0
      %2538 = vmatpush1.xpose.msra.mxu0 0.0
      %2539 = vmatprep.subr.mxu0 0.0
      %2540 = vmatpush1.xpose.msra.mxu0 0.0
      %2541 = vmatprep.subr.mxu0 0.0
      %2542 = vmatpush1.xpose.msra.mxu0 0.0
      %2543 = vmatprep.subr.mxu0 0.0
      %2544 = vmatpush1.xpose.msra.mxu0 0.0
      %2545 = vmatprep.subr.mxu0 0.0
      %2546 = vmatpush1.xpose.msra.mxu0 0.0
      %2547 = vmatprep.subr.mxu0 0.0
      %2548 = vmatpush1.xpose.msra.mxu0 0.0
      %2549 = vmatprep.subr.mxu0 0.0
      %2550 = vmatpush1.xpose.msra.mxu0 0.0
      %2551 = vmatprep.mubr.f32.mxu0 0.0
      %2552 = vmatmul.mubr.f32.gmra.mrb[0].mxu0 %v2481
      %v2553 = vpop.f32.mrb[0].mxu0
      %v2554 = vadd.f32 %v1955, %v2553
      %v2555 = vpop.f32.mrb[0].mxu0
      %2556 = vdwg.mxu0
      %v2557 = vsel %vm2036, %v2554, -inf
      %2558 = vmax.xlane.f32.xlu0 %v2557
      %v2559 = vpop.xlane.xlu0 %2558
      %v2560 = vsub.f32 %v2554, %v2559
      %v2561 = vmul.f32 %v2560, 1.442695
      %v2562 = vpow.pop %v2561
      %v2563 = vsel %vm2036, %v2562, 0.0
      %2564 = vadd.xlane.f32.xlu0 %v2563
      %v2565 = vpop.xlane.xlu0 %2564
      %v2566 = vrcp.pop %v2565
      %v2567 = vmul.f32 %v2562, %v2566
      %2568 = vrot.lane.b32.xlu0 %v1943, 72
      %v2569 = vpop.permute.xlu0 %2568
      %2570 = vrot.lane.b32.xlu0 %v1948, 72
      %v2571 = vpop.permute.xlu0 %2570
      %v2574 = vsel %vm2036, %v2567, 0
      %v2576 = vsel %vm2056, %v2571, 0
      %2578 = vmatprep.subr.mxu0 0.0
      %2579 = vmatpush1.msra.mxu0 %v2569
      %2580 = vmatprep.subr.mxu0 0.0
      %2581 = vmatpush1.msra.mxu0 %v2576
      %2582 = vmatprep.subr.mxu0 0.0
      %2583 = vmatpush1.msra.mxu0 0.0
      %2584 = vmatprep.subr.mxu0 0.0
      %2585 = vmatpush1.msra.mxu0 0.0
      %2586 = vmatprep.subr.mxu0 0.0
      %2587 = vmatpush1.msra.mxu0 0.0
      %2588 = vmatprep.subr.mxu0 0.0
      %2589 = vmatpush1.msra.mxu0 0.0
      %2590 = vmatprep.subr.mxu0 0.0
      %2591 = vmatpush1.msra.mxu0 0.0
      %2592 = vmatprep.subr.mxu0 0.0
      %2593 = vmatpush1.msra.mxu0 0.0
      %2594 = vmatprep.subr.mxu0 0.0
      %2595 = vmatpush1.msra.mxu0 0.0
      %2596 = vmatprep.subr.mxu0 0.0
      %2597 = vmatpush1.msra.mxu0 0.0
      %2598 = vmatprep.subr.mxu0 0.0
      %2599 = vmatpush1.msra.mxu0 0.0
      %2600 = vmatprep.subr.mxu0 0.0
      %2601 = vmatpush1.msra.mxu0 0.0
      %2602 = vmatprep.subr.mxu0 0.0
      %2603 = vmatpush1.msra.mxu0 0.0
      %2604 = vmatprep.subr.mxu0 0.0
      %2605 = vmatpush1.msra.mxu0 0.0
      %2606 = vmatprep.subr.mxu0 0.0
      %2607 = vmatpush1.msra.mxu0 0.0
      %2608 = vmatprep.subr.mxu0 0.0
      %2609 = vmatpush1.msra.mxu0 0.0
      %2610 = vmatprep.subr.mxu0 0.0
      %2611 = vmatpush1.msra.mxu0 0.0
      %2612 = vmatprep.subr.mxu0 0.0
      %2613 = vmatpush1.msra.mxu0 0.0
      %2614 = vmatprep.subr.mxu0 0.0
      %2615 = vmatpush1.msra.mxu0 0.0
      %2616 = vmatprep.subr.mxu0 0.0
      %2617 = vmatpush1.msra.mxu0 0.0
      %2618 = vmatprep.subr.mxu0 0.0
      %2619 = vmatpush1.msra.mxu0 0.0
      %2620 = vmatprep.subr.mxu0 0.0
      %2621 = vmatpush1.msra.mxu0 0.0
      %2622 = vmatprep.subr.mxu0 0.0
      %2623 = vmatpush1.msra.mxu0 0.0
      %2624 = vmatprep.subr.mxu0 0.0
      %2625 = vmatpush1.msra.mxu0 0.0
      %2626 = vmatprep.subr.mxu0 0.0
      %2627 = vmatpush1.msra.mxu0 0.0
      %2628 = vmatprep.subr.mxu0 0.0
      %2629 = vmatpush1.msra.mxu0 0.0
      %2630 = vmatprep.subr.mxu0 0.0
      %2631 = vmatpush1.msra.mxu0 0.0
      %2632 = vmatprep.subr.mxu0 0.0
      %2633 = vmatpush1.msra.mxu0 0.0
      %2634 = vmatprep.subr.mxu0 0.0
      %2635 = vmatpush1.msra.mxu0 0.0
      %2636 = vmatprep.subr.mxu0 0.0
      %2637 = vmatpush1.msra.mxu0 0.0
      %2638 = vmatprep.subr.mxu0 0.0
      %2639 = vmatpush1.msra.mxu0 0.0
      %2640 = vmatprep.subr.mxu0 0.0
      %2641 = vmatpush1.msra.mxu0 0.0
      %2642 = vmatprep.mubr.f32.mxu0 0.0
      %2643 = vmatmul.mubr.f32.gmra.mrb[0].mxu0 %v2574
      %v2644 = vpop.f32.mrb[0].mxu0
      %v2645 = vadd.f32 0.0, %v2644
      %v2646 = vpop.f32.mrb[0].mxu0
      %2647 = vdwg.mxu0
      %2649 = vrot.lane.b32.xlu0 %v2299, 8
      %v2650 = vpop.permute.xlu0 %2649
      %2653 = vrot.lane.b32.xlu0 %v2472, 16
      %v2654 = vpop.permute.xlu0 %2653
      %2657 = vrot.lane.b32.xlu0 %v2645, 24
      %v2658 = vpop.permute.xlu0 %2657
      %v2660 = vsel %vm974, %v2126, %v2650
      %v2661 = vsel %vm1644, %v2660, %v2654
      %v2662 = vsel %vm1646, %v2661, %v2658
      %v2664 = vlaneseq
      %v2665 = vshrl.u32 %v2664, 7
      %v2666 = vsub.s32 0, %v2665
      %v2667 = vrot.slane %v1771, %v2666
      %v2670 = vsel %vm846, %v2662, 0
      %2672 = vmatprep.subr.mxu0 0.0
      %2673 = vmatpush1.msra.mxu0 %v1767
      %2674 = vmatprep.subr.mxu0 0.0
      %2675 = vmatpush1.msra.mxu0 %v1768
      %2676 = vmatprep.subr.mxu0 0.0
      %2677 = vmatpush1.msra.mxu0 %v1769
      %2678 = vmatprep.subr.mxu0 0.0
      %2679 = vmatpush1.msra.mxu0 %v1770
      %2680 = vmatprep.subr.mxu0 0.0
      %2681 = vmatpush1.msra.mxu0 0.0
      %2682 = vmatprep.subr.mxu0 0.0
      %2683 = vmatpush1.msra.mxu0 0.0
      %2684 = vmatprep.subr.mxu0 0.0
      %2685 = vmatpush1.msra.mxu0 0.0
      %2686 = vmatprep.subr.mxu0 0.0
      %2687 = vmatpush1.msra.mxu0 0.0
      %2688 = vmatprep.subr.mxu0 0.0
      %2689 = vmatpush1.msra.mxu0 0.0
      %2690 = vmatprep.subr.mxu0 0.0
      %2691 = vmatpush1.msra.mxu0 0.0
      %2692 = vmatprep.subr.mxu0 0.0
      %2693 = vmatpush1.msra.mxu0 0.0
      %2694 = vmatprep.subr.mxu0 0.0
      %2695 = vmatpush1.msra.mxu0 0.0
      %2696 = vmatprep.subr.mxu0 0.0
      %2697 = vmatpush1.msra.mxu0 0.0
      %2698 = vmatprep.subr.mxu0 0.0
      %2699 = vmatpush1.msra.mxu0 0.0
      %2700 = vmatprep.subr.mxu0 0.0
      %2701 = vmatpush1.msra.mxu0 0.0
      %2702 = vmatprep.subr.mxu0 0.0
      %2703 = vmatpush1.msra.mxu0 0.0
      %2704 = vmatprep.subr.mxu0 0.0
      %2705 = vmatpush1.msra.mxu0 0.0
      %2706 = vmatprep.subr.mxu0 0.0
      %2707 = vmatpush1.msra.mxu0 0.0
      %2708 = vmatprep.subr.mxu0 0.0
      %2709 = vmatpush1.msra.mxu0 0.0
      %2710 = vmatprep.subr.mxu0 0.0
      %2711 = vmatpush1.msra.mxu0 0.0
      %2712 = vmatprep.subr.mxu0 0.0
      %2713 = vmatpush1.msra.mxu0 0.0
      %2714 = vmatprep.subr.mxu0 0.0
      %2715 = vmatpush1.msra.mxu0 0.0
      %2716 = vmatprep.subr.mxu0 0.0
      %2717 = vmatpush1.msra.mxu0 0.0
      %2718 = vmatprep.subr.mxu0 0.0
      %2719 = vmatpush1.msra.mxu0 0.0
      %2720 = vmatprep.subr.mxu0 0.0
      %2721 = vmatpush1.msra.mxu0 0.0
      %2722 = vmatprep.subr.mxu0 0.0
      %2723 = vmatpush1.msra.mxu0 0.0
      %2724 = vmatprep.subr.mxu0 0.0
      %2725 = vmatpush1.msra.mxu0 0.0
      %2726 = vmatprep.subr.mxu0 0.0
      %2727 = vmatpush1.msra.mxu0 0.0
      %2728 = vmatprep.subr.mxu0 0.0
      %2729 = vmatpush1.msra.mxu0 0.0
      %2730 = vmatprep.subr.mxu0 0.0
      %2731 = vmatpush1.msra.mxu0 0.0
      %2732 = vmatprep.subr.mxu0 0.0
      %2733 = vmatpush1.msra.mxu0 0.0
      %2734 = vmatprep.subr.mxu0 0.0
      %2735 = vmatpush1.msra.mxu0 0.0
      %2736 = vmatprep.mubr.f32.mxu0 0.0
      %2737 = vmatmul.mubr.f32.gmra.mrb[0].mxu0 %v2670
      %v2738 = vpop.f32.mrb[0].mxu0
      %v2739 = vadd.f32 %v2667, %v2738
      %v2740 = vpop.f32.mrb[0].mxu0
      %2741 = vdwg.mxu0
      %v2742 = vadd.f32 %v1727, %v2739
      %v2743 = vsel %vm846, %v2742, 0.0
      %2744 = vadd.xlane.f32.xlu0 %v2743
      %v2745 = vpop.xlane.xlu0 %2744
      %v2746 = vmul.f32 %v2745, %v850
      %v2747 = vsub.f32 %v2742, %v2746
      %v2748 = vmul.f32 %v2747, %v2747
      %v2749 = vsel %vm846, %v2748, 0.0
      %2750 = vadd.xlane.f32.xlu0 %v2749
      %v2751 = vpop.xlane.xlu0 %2750
      %v2752 = vmul.f32 %v2751, 0.032258064
      %v2754 = vlaneseq
      %v2755 = vshrl.u32 %v2754, 7
      %v2756 = vsub.s32 0, %v2755
      %v2757 = vrot.slane %v844, %v2756
      %v2759 = vmul.f32 %v2757, %v2747
      %v2760 = vrsqrt.pop %v2752
      %v2761 = vmul.f32 %v2752, %v2760
      %vm2762 = vcmp.eq.f32.partialorder %v2752, inf
      %v2763 = vsel %vm2762, %v2752, %v2761
      %vm2764 = vcmp.eq.f32.partialorder %v2752, 0.0
      %v2765 = vand.u32 %v2752, 2147483648
      %v2766 = vsel %vm2764, %v2765, %v2763
      %v2767 = vadd.f32 %v2766, 1e-06
      %v2768 = vrcp.pop %v2767
      %v2769 = vmul.f32 %v2759, %v2768
      %v2771 = vlaneseq
      %v2772 = vshrl.u32 %v2771, 7
      %v2773 = vsub.s32 0, %v2772
      %v2774 = vrot.slane %v845, %v2773
      %v2776 = vadd.f32 %v2769, %v2774
      %v2777 = vld [vmem:[%s812] sm:$0xff]
      %v2778 = vld [vmem:[%s812 + $0x8] sm:$0xff]
      %v2779 = vld [vmem:[%s812 + $0x10] sm:$0xff]
      %v2780 = vld [vmem:[%s812 + $0x18] sm:$0xff]
      %v2781 = vld [vmem:[%s815] sm:$0x1]
      %v2782 = vld [vmem:[%s820] sm:$0xff]
      %v2783 = vld [vmem:[%s820 + $0x8] sm:$0xff]
      %v2784 = vld [vmem:[%s820 + $0x10] sm:$0xff]
      %v2785 = vld [vmem:[%s820 + $0x18] sm:$0xff]
      %v2786 = vld [vmem:[%s820 + $0x20] sm:$0xff]
      %v2787 = vld [vmem:[%s820 + $0x28] sm:$0xff]
      %v2788 = vld [vmem:[%s820 + $0x30] sm:$0xff]
      %v2789 = vld [vmem:[%s820 + $0x38] sm:$0xff]
      %v2790 = vld [vmem:[%s823] sm:$0x1]
      %v2792 = vlaneseq
      %v2793 = vshrl.u32 %v2792, 7
      %v2794 = vsub.s32 0, %v2793
      %v2795 = vrot.slane %v2781, %v2794
      %v2798 = vsel %vm846, %v2776, 0
      %2800 = vmatprep.subr.mxu0 0.0
      %2801 = vmatpush1.msra.mxu0 %v2777
      %2802 = vmatprep.subr.mxu0 0.0
      %2803 = vmatpush1.msra.mxu0 %v2778
      %2804 = vmatprep.subr.mxu0 0.0
      %2805 = vmatpush1.msra.mxu0 %v2779
      %2806 = vmatprep.subr.mxu0 0.0
      %2807 = vmatpush1.msra.mxu0 %v2780
      %2808 = vmatprep.subr.mxu0 0.0
      %2809 = vmatpush1.msra.mxu0 0.0
      %2810 = vmatprep.subr.mxu0 0.0
      %2811 = vmatpush1.msra.mxu0 0.0
      %2812 = vmatprep.subr.mxu0 0.0
      %2813 = vmatpush1.msra.mxu0 0.0
      %2814 = vmatprep.subr.mxu0 0.0
      %2815 = vmatpush1.msra.mxu0 0.0
      %2816 = vmatprep.subr.mxu0 0.0
      %2817 = vmatpush1.msra.mxu0 0.0
      %2818 = vmatprep.subr.mxu0 0.0
      %2819 = vmatpush1.msra.mxu0 0.0
      %2820 = vmatprep.subr.mxu0 0.0
      %2821 = vmatpush1.msra.mxu0 0.0
      %2822 = vmatprep.subr.mxu0 0.0
      %2823 = vmatpush1.msra.mxu0 0.0
      %2824 = vmatprep.subr.mxu0 0.0
      %2825 = vmatpush1.msra.mxu0 0.0
      %2826 = vmatprep.subr.mxu0 0.0
      %2827 = vmatpush1.msra.mxu0 0.0
      %2828 = vmatprep.subr.mxu0 0.0
      %2829 = vmatpush1.msra.mxu0 0.0
      %2830 = vmatprep.subr.mxu0 0.0
      %2831 = vmatpush1.msra.mxu0 0.0
      %2832 = vmatprep.subr.mxu0 0.0
      %2833 = vmatpush1.msra.mxu0 0.0
      %2834 = vmatprep.subr.mxu0 0.0
      %2835 = vmatpush1.msra.mxu0 0.0
      %2836 = vmatprep.subr.mxu0 0.0
      %2837 = vmatpush1.msra.mxu0 0.0
      %2838 = vmatprep.subr.mxu0 0.0
      %2839 = vmatpush1.msra.mxu0 0.0
      %2840 = vmatprep.subr.mxu0 0.0
      %2841 = vmatpush1.msra.mxu0 0.0
      %2842 = vmatprep.subr.mxu0 0.0
      %2843 = vmatpush1.msra.mxu0 0.0
      %2844 = vmatprep.subr.mxu0 0.0
      %2845 = vmatpush1.msra.mxu0 0.0
      %2846 = vmatprep.subr.mxu0 0.0
      %2847 = vmatpush1.msra.mxu0 0.0
      %2848 = vmatprep.subr.mxu0 0.0
      %2849 = vmatpush1.msra.mxu0 0.0
      %2850 = vmatprep.subr.mxu0 0.0
      %2851 = vmatpush1.msra.mxu0 0.0
      %2852 = vmatprep.subr.mxu0 0.0
      %2853 = vmatpush1.msra.mxu0 0.0
      %2854 = vmatprep.subr.mxu0 0.0
      %2855 = vmatpush1.msra.mxu0 0.0
      %2856 = vmatprep.subr.mxu0 0.0
      %2857 = vmatpush1.msra.mxu0 0.0
      %2858 = vmatprep.subr.mxu0 0.0
      %2859 = vmatpush1.msra.mxu0 0.0
      %2860 = vmatprep.subr.mxu0 0.0
      %2861 = vmatpush1.msra.mxu0 0.0
      %2862 = vmatprep.subr.mxu0 0.0
      %2863 = vmatpush1.msra.mxu0 0.0
      %2864 = vmatprep.mubr.f32.mxu0 0.0
      %2865 = vmatmul.mubr.f32.gmra.mrb[0].mxu0 %v2798
      %v2866 = vpop.f32.mrb[0].mxu0
      %v2867 = vadd.f32 %v2795, %v2866
      %v2868 = vpop.f32.mrb[0].mxu0
      %2869 = vdwg.mxu0
      %v2870 = vmax.f32 %v2867, 0.0
      %v2872 = vlaneseq
      %v2873 = vshrl.u32 %v2872, 7
      %v2874 = vsub.s32 0, %v2873
      %v2875 = vrot.slane %v2790, %v2874
      %vm2877 = vcmask 523264
      %v2879 = vsel %vm2877, %v2870, 0
      %2881 = vmatprep.subr.mxu0 0.0
      %2882 = vmatpush1.msra.mxu0 %v2782
      %2883 = vmatprep.subr.mxu0 0.0
      %2884 = vmatpush1.msra.mxu0 %v2783
      %2885 = vmatprep.subr.mxu0 0.0
      %2886 = vmatpush1.msra.mxu0 %v2784
      %2887 = vmatprep.subr.mxu0 0.0
      %2888 = vmatpush1.msra.mxu0 %v2785
      %2889 = vmatprep.subr.mxu0 0.0
      %2890 = vmatpush1.msra.mxu0 %v2786
      %2891 = vmatprep.subr.mxu0 0.0
      %2892 = vmatpush1.msra.mxu0 %v2787
      %2893 = vmatprep.subr.mxu0 0.0
      %2894 = vmatpush1.msra.mxu0 %v2788
      %2895 = vmatprep.subr.mxu0 0.0
      %2896 = vmatpush1.msra.mxu0 %v2789
      %2897 = vmatprep.subr.mxu0 0.0
      %2898 = vmatpush1.msra.mxu0 0.0
      %2899 = vmatprep.subr.mxu0 0.0
      %2900 = vmatpush1.msra.mxu0 0.0
      %2901 = vmatprep.subr.mxu0 0.0
      %2902 = vmatpush1.msra.mxu0 0.0
      %2903 = vmatprep.subr.mxu0 0.0
      %2904 = vmatpush1.msra.mxu0 0.0
      %2905 = vmatprep.subr.mxu0 0.0
      %2906 = vmatpush1.msra.mxu0 0.0
      %2907 = vmatprep.subr.mxu0 0.0
      %2908 = vmatpush1.msra.mxu0 0.0
      %2909 = vmatprep.subr.mxu0 0.0
      %2910 = vmatpush1.msra.mxu0 0.0
      %2911 = vmatprep.subr.mxu0 0.0
      %2912 = vmatpush1.msra.mxu0 0.0
      %2913 = vmatprep.subr.mxu0 0.0
      %2914 = vmatpush1.msra.mxu0 0.0
      %2915 = vmatprep.subr.mxu0 0.0
      %2916 = vmatpush1.msra.mxu0 0.0
      %2917 = vmatprep.subr.mxu0 0.0
      %2918 = vmatpush1.msra.mxu0 0.0
      %2919 = vmatprep.subr.mxu0 0.0
      %2920 = vmatpush1.msra.mxu0 0.0
      %2921 = vmatprep.subr.mxu0 0.0
      %2922 = vmatpush1.msra.mxu0 0.0
      %2923 = vmatprep.subr.mxu0 0.0
      %2924 = vmatpush1.msra.mxu0 0.0
      %2925 = vmatprep.subr.mxu0 0.0
      %2926 = vmatpush1.msra.mxu0 0.0
      %2927 = vmatprep.subr.mxu0 0.0
      %2928 = vmatpush1.msra.mxu0 0.0
      %2929 = vmatprep.subr.mxu0 0.0
      %2930 = vmatpush1.msra.mxu0 0.0
      %2931 = vmatprep.subr.mxu0 0.0
      %2932 = vmatpush1.msra.mxu0 0.0
      %2933 = vmatprep.subr.mxu0 0.0
      %2934 = vmatpush1.msra.mxu0 0.0
      %2935 = vmatprep.subr.mxu0 0.0
      %2936 = vmatpush1.msra.mxu0 0.0
      %2937 = vmatprep.subr.mxu0 0.0
      %2938 = vmatpush1.msra.mxu0 0.0
      %2939 = vmatprep.subr.mxu0 0.0
      %2940 = vmatpush1.msra.mxu0 0.0
      %2941 = vmatprep.subr.mxu0 0.0
      %2942 = vmatpush1.msra.mxu0 0.0
      %2943 = vmatprep.subr.mxu0 0.0
      %2944 = vmatpush1.msra.mxu0 0.0
      %2945 = vmatprep.mubr.f32.mxu0 0.0
      %2946 = vmatmul.mubr.f32.gmra.mrb[0].mxu0 %v2879
      %v2947 = vpop.f32.mrb[0].mxu0
      %v2948 = vadd.f32 %v2875, %v2947
      %v2949 = vpop.f32.mrb[0].mxu0
      %2950 = vdwg.mxu0
      %v2951 = vadd.f32 %v2742, %v2948
      %2952 = vst.msk [vmem:[#allocation2] sm:$0xff] %vm846, %v2951
      %p2953 = scmp.eq.s32.totalorder %s33, 1
      // Predicated region
      $region93: #{_lambda_.6} parent=87 // pred_check
        %p2954 = pneg %p2953
      $region94: #{_lambda_.6} parent=87 // pred_check_branch
        %2956 = sbr.rel (%p2954) target = $region96
      $region95: #{_lambda_.6} parent=87 // pred_region
        %2957 = vst.msk [vmem:[%s827] sm:$0xff] %vm846, %v2951
      $region96: #{_lambda_.6} parent=87 // pred_fallthru
        _
      %p2958 = scmp.lt.s32.totalorder %s32, 1
      %s2959 = scalar_select %p2958, %s32, 1
      %s2960 = smul.addr %s2959, 8
      %s2961 = scalar_lea.vmem %s17, %s2960
      // Predicated region
      $region97: #{_lambda_.6} parent=87 // pred_check
        %p2962 = pneg %p500
      $region98: #{_lambda_.6} parent=87 // pred_check_branch
        %2964 = sbr.rel (%p2962) target = $region100
      $region99: #{_lambda_.6} parent=87 // pred_region
        _
      $region100: #{_lambda_.6} parent=87 // pred_fallthru
        _
    $region88: #{_lambda_.6} parent=5 // pred_fallthru
      _
    %p2965 = scmp.le.s32.totalorder 2, %s23
    // Predicated region
    $region101: #{_lambda_.6} parent=5 // pred_check
      %p2966 = pneg %p2965
    $region102: #{_lambda_.6} parent=5 // pred_check_branch
      %2968 = sbr.rel (%p2966) target = $region104
    $region103: #{_lambda_.6} parent=5 // pred_region
      %s2969 = ssub.s32 %s23, 2
      // Predicated region
      $region105: #{_lambda_.6} parent=103 // pred_check
        %p2970 = pneg %p506
      $region106: #{_lambda_.6} parent=103 // pred_check_branch
        %2972 = sbr.rel (%p2970) target = $region108
      $region107: #{_lambda_.6} parent=103 // pred_region
        %p2973 = scmp.lt.s32.totalorder %s34, 1
        %s2974 = scalar_select %p2973, %s34, 1
        %s2975 = smul.addr %s2974, 8
        %s2976 = scalar_lea.vmem %s17, %s2975
      $region108: #{_lambda_.6} parent=103 // pred_fallthru
        _
    $region104: #{_lambda_.6} parent=5 // pred_fallthru
      _
  $region6: #{_lambda_.6} parent=0 // loop_footer
    %s27 = sadd.s32 1, %s23
  $region7: #{_lambda_.6} parent=0 // loop_footer_branch
    %22 = sbr.rel target = $region3
  $region8: #{_lambda_.6} parent=0 // loop_exit
    _

</llo_original>
